<compile_context>
chip_gen: v5e
topology: v5e:2x2
jax: 0.10.0
libtpu: 0.0.40
codegen_flags: <defaults>
</compile_context>

<pallas_src>
import jax
import jax.numpy as jnp
from jax.experimental import pallas as pl
from jax.experimental.pallas import tpu as pltpu

IN_FEATURES = 196608   # from nn.Linear(196608, 10)
OUT_FEATURES = 10


def linear_kernel(x_ref, w_ref, b_ref, o_ref):
    j = pl.program_id(1)           # step along the K-reduction axis
    steps = pl.num_programs(1)

    @pl.when(j == 0)
    def _init():
        o_ref[...] = jnp.zeros_like(o_ref)

    # x_ref: (B, tk) bf16, w_ref: (N, tk) bf16 -> contract shared (last) K axis
    # with f32 accumulation on the MXU.
    o_ref[...] += jax.lax.dot_general(
        x_ref[...],
        w_ref[...],
        dimension_numbers=(((1,), (1,)), ((), ())),
        preferred_element_type=jnp.float32,
    )

    # Fold the bias into the final K step; only split 0 adds it so it is
    # applied exactly once even when the K range is split across TensorCores.
    @pl.when((j == steps - 1) & (pl.program_id(0) == 0))
    def _bias():
        o_ref[...] += b_ref[...].astype(jnp.float32)


def _num_tc_splits():
    """2-way K split only on 2-TensorCore chips (v7x); 1 otherwise."""
    try:
        kind = jax.devices()[0].device_kind.lower()
        return 2 if "7" in kind else 1
    except Exception:
        return 1


def linear_pallas(x, w, b, *, tk=None, num_splits=None):
    """y = x @ w.T + b  with x:[B,K], w:[N,K] (native PyTorch layout), b:[N]."""
    B, K = x.shape
    N, Kw = w.shape
    assert K == Kw, "feature dims must match"

    if num_splits is None:
        num_splits = _num_tc_splits()
    if tk is None:
        # v7x: 2 splits x 2 steps of 49152; v5e/v6e: 1 split x 3 steps of 65536.
        tk = 49152 if num_splits == 2 else 65536
    if K % (tk * num_splits) != 0:
        # Robust fallback for non-standard K: single split, single step.
        num_splits, tk = 1, K
    steps = K // (tk * num_splits)        # K-steps per split

    out_dtype = x.dtype
    # bf16 streaming (halves HBM bytes); f32 accumulate keeps numerics sane.
    x_bf = x if x.dtype == jnp.bfloat16 else x.astype(jnp.bfloat16)
    w_bf = w if w.dtype == jnp.bfloat16 else w.astype(jnp.bfloat16)
    b2 = b.reshape(1, N).astype(jnp.float32)

    # Output spec: with a single split the kernel writes the final biased
    # (B, N) directly (no epilogue); with 2 splits it emits per-split partials.
    if num_splits == 1:
        out_shape = jax.ShapeDtypeStruct((B, N), jnp.float32)
        out_spec = pl.BlockSpec((B, N), lambda c, j: (0, 0))
    else:
        out_shape = jax.ShapeDtypeStruct((num_splits, B, N), jnp.float32)
        out_spec = pl.BlockSpec((None, B, N), lambda c, j: (c, 0, 0))

    cost = pl.CostEstimate(
        flops=2 * B * K * N,
        transcendentals=0,
        bytes_accessed=(N * K * 2) + (B * K * 2) + (num_splits * B * N * 4) + N * 4,
    )

    result = pl.pallas_call(
        linear_kernel,
        out_shape=out_shape,
        grid_spec=pltpu.PrefetchScalarGridSpec(
            num_scalar_prefetch=0,
            grid=(num_splits, steps),
            in_specs=[
                # activation tile: [B, tk] bf16
                pl.BlockSpec((B, tk), lambda c, j: (0, c * steps + j)),
                # weight tile, lane-dense [N, tk] bf16 (no transpose)
                pl.BlockSpec((N, tk), lambda c, j: (0, c * steps + j)),
                # bias: tiny (1, N) block, same every step
                pl.BlockSpec((1, N), lambda c, j: (0, 0)),
            ],
            out_specs=out_spec,
        ),
        compiler_params=pltpu.CompilerParams(
            # split axis may be sharded across TensorCores (v7x);
            # K axis is a sequential reduction.
            dimension_semantics=("parallel", "arbitrary"),
            vmem_limit_bytes=32 * 1024 * 1024,  # ~3-8 MiB actually needed
        ),
        cost_estimate=cost,
    )(x_bf, w_bf, b2)

    if num_splits == 1:
        y = result                      # bias already folded in-kernel
    else:
        y = result.sum(axis=0)          # tiny (2, B, N) combine on v7x only
    return y.astype(out_dtype)


if __name__ == "__main__":
    key = jax.random.PRNGKey(0)
    kx, kw, kb = jax.random.split(key, 3)

    B = 2
    # PyTorch-style uniform(-1/sqrt(K), 1/sqrt(K)) init, deterministic.
    bound = 1.0 / (IN_FEATURES ** 0.5)
    w_f32 = jax.random.uniform(
        kw, (OUT_FEATURES, IN_FEATURES), jnp.float32, -bound, bound
    )
    b = jax.random.uniform(kb, (OUT_FEATURES,), jnp.float32, -bound, bound)
    x = jax.random.normal(kx, (B, IN_FEATURES), jnp.float32)

    # Weight stored in bf16 (one-time cast, outside the hot path).
    w = w_f32.astype(jnp.bfloat16)

    fwd = jax.jit(linear_pallas)
    y = fwd(x, w, b)
    jax.block_until_ready(y)

    assert y.shape == (B, OUT_FEATURES)

    # Matched-precision reference (bf16 inputs, f32 accumulate): tight check.
    y_ref_bf16 = (
        jnp.dot(x.astype(jnp.bfloat16), w.T, preferred_element_type=jnp.float32)
        + b[None, :]
    )
    assert jnp.allclose(y, y_ref_bf16, atol=2e-3, rtol=2e-3)

    # Full-f32 reference: relaxed check (bf16 weight/activation quantization).
    y_ref_f32 = x @ w_f32.T + b[None, :]
    assert jnp.allclose(y, y_ref_f32, atol=3e-2, rtol=3e-2)

    print("KERNEL_OK")
</pallas_src>

<mosaic_0001>
module attributes {stable_mosaic.version = 11 : i64} {
  func.func @linear_kernel(%arg0: i32, %arg1: i32, %arg2: memref<2x65536xbf16, #tpu.memory_space<vmem>>, %arg3: memref<10x65536xbf16, #tpu.memory_space<vmem>>, %arg4: memref<1x10xf32, #tpu.memory_space<vmem>>, %arg5: memref<2x10xf32, #tpu.memory_space<vmem>>) attributes {dimension_semantics = [#tpu.dimension_semantics<parallel>, #tpu.dimension_semantics<arbitrary>], iteration_bounds = array<i64: 1, 3>, scalar_prefetch = 0 : i64, scratch_operands = 0 : i64, tpu.core_type = #tpu.core_type<tc>, window_params = [{transform_indices = @transform_0, window_bounds = array<i64: 2, 65536>}, {transform_indices = @transform_1, window_bounds = array<i64: 10, 65536>}, {pipeline_mode = #tpu.pipeline_mode<synchronous>, transform_indices = @transform_2, window_bounds = array<i64: 1, 10>}, {pipeline_mode = #tpu.pipeline_mode<synchronous>, transform_indices = @transform_3, window_bounds = array<i64: 2, 10>}]} {
    %c0_i32 = arith.constant 0 : i32
    %0 = arith.cmpi eq, %arg1, %c0_i32 : i32
    %1 = arith.extui %0 : i1 to i32
    %c0_i32_0 = arith.constant 0 : i32
    %2 = arith.cmpi ne, %1, %c0_i32_0 : i32
    scf.if %2 {
      %cst_10 = arith.constant 0.000000e+00 : f32
      %14 = vector.broadcast %cst_10 : f32 to vector<2x10xf32>
      %c0_11 = arith.constant 0 : index
      %c0_12 = arith.constant 0 : index
      %15 = vector.load %arg5[%c0_11, %c0_12] : memref<2x10xf32, #tpu.memory_space<vmem>>, vector<2x10xf32>
      tpu.vector_store %arg5[%c0_11, %c0_12], %14 {strides = array<i32>} : memref<2x10xf32, #tpu.memory_space<vmem>>, vector<2x10xf32>,
    } else {
    }
    %c0 = arith.constant 0 : index
    %c0_1 = arith.constant 0 : index
    %3 = vector.load %arg5[%c0, %c0_1] : memref<2x10xf32, #tpu.memory_space<vmem>>, vector<2x10xf32>
    %c0_2 = arith.constant 0 : index
    %c0_3 = arith.constant 0 : index
    %4 = vector.load %arg2[%c0_2, %c0_3] : memref<2x65536xbf16, #tpu.memory_space<vmem>>, vector<2x65536xbf16>
    %c0_4 = arith.constant 0 : index
    %c0_5 = arith.constant 0 : index
    %5 = vector.load %arg3[%c0_4, %c0_5] : memref<10x65536xbf16, #tpu.memory_space<vmem>>, vector<10x65536xbf16>
    %cst = arith.constant dense<0.000000e+00> : vector<2x10xf32>
    %6 = tpu.matmul %4, %5, %cst {dimension_numbers = #tpu.dot_dimension_numbers<[1], [1], [0], [0], [0, 0, 1, 0], [], []>} : vector<2x65536xbf16>, vector<10x65536xbf16>, vector<2x10xf32> -> vector<2x10xf32>
    %7 = arith.addf %3, %6 : vector<2x10xf32>
    %c0_6 = arith.constant 0 : index
    %c0_7 = arith.constant 0 : index
    %8 = vector.load %arg5[%c0_6, %c0_7] : memref<2x10xf32, #tpu.memory_space<vmem>>, vector<2x10xf32>
    tpu.vector_store %arg5[%c0_6, %c0_7], %7 {strides = array<i32>} : memref<2x10xf32, #tpu.memory_space<vmem>>, vector<2x10xf32>,
    %c2_i32 = arith.constant 2 : i32
    %9 = arith.cmpi eq, %arg1, %c2_i32 : i32
    %c0_i32_8 = arith.constant 0 : i32
    %10 = arith.cmpi eq, %arg0, %c0_i32_8 : i32
    %11 = arith.andi %9, %10 : i1
    %12 = arith.extui %11 : i1 to i32
    %c0_i32_9 = arith.constant 0 : i32
    %13 = arith.cmpi ne, %12, %c0_i32_9 : i32
    scf.if %13 {
      %c0_10 = arith.constant 0 : index
      %c0_11 = arith.constant 0 : index
      %14 = vector.load %arg5[%c0_10, %c0_11] : memref<2x10xf32, #tpu.memory_space<vmem>>, vector<2x10xf32>
      %c0_12 = arith.constant 0 : index
      %c0_13 = arith.constant 0 : index
      %15 = vector.load %arg4[%c0_12, %c0_13] : memref<1x10xf32, #tpu.memory_space<vmem>>, vector<1x10xf32>
      %16 = vector.broadcast %15 : vector<1x10xf32> to vector<2x10xf32>
      %17 = arith.addf %14, %16 : vector<2x10xf32>
      %c0_14 = arith.constant 0 : index
      %c0_15 = arith.constant 0 : index
      %18 = vector.load %arg5[%c0_14, %c0_15] : memref<2x10xf32, #tpu.memory_space<vmem>>, vector<2x10xf32>
      tpu.vector_store %arg5[%c0_14, %c0_15], %17 {strides = array<i32>} : memref<2x10xf32, #tpu.memory_space<vmem>>, vector<2x10xf32>,
    } else {
    }
    return
  }
  func.func @transform_0(%arg0: i32, %arg1: i32) -> (i32, i32) {
    %c3_i32 = arith.constant 3 : i32
    %0 = arith.muli %arg0, %c3_i32 : i32
    %1 = arith.addi %0, %arg1 : i32
    %c0_i32 = arith.constant 0 : i32
    %c0_i32_0 = arith.constant 0 : i32
    return %c0_i32, %1 : i32, i32
  }
  func.func @transform_1(%arg0: i32, %arg1: i32) -> (i32, i32) {
    %c3_i32 = arith.constant 3 : i32
    %0 = arith.muli %arg0, %c3_i32 : i32
    %1 = arith.addi %0, %arg1 : i32
    %c0_i32 = arith.constant 0 : i32
    %c0_i32_0 = arith.constant 0 : i32
    return %c0_i32, %1 : i32, i32
  }
  func.func @transform_2(%arg0: i32, %arg1: i32) -> (i32, i32) {
    %c0_i32 = arith.constant 0 : i32
    %c0_i32_0 = arith.constant 0 : i32
    %c0_i32_1 = arith.constant 0 : i32
    return %c0_i32, %c0_i32_0 : i32, i32
  }
  func.func @transform_3(%arg0: i32, %arg1: i32) -> (i32, i32) {
    %c0_i32 = arith.constant 0 : i32
    %c0_i32_0 = arith.constant 0 : i32
    %c0_i32_1 = arith.constant 0 : i32
    return %c0_i32, %c0_i32_0 : i32, i32
  }
}

</mosaic_0001>

<llo_original>
// kernel: linear_pallas.1
$region0: #{linear_pallas.1}
  #allocation0 [shape = 'u32[]', space=smem, size = 0x4, offset = 0x4, fixed_abs, tag = 'smem constant byte address 0x4 - core index']
  #allocation1 [shape = 'u32[72,128]{1,0:T(1,128)}', space=vmem, size = 0x9000, scoped, tag = 'internal scratch']
  %s0 = inlined_call_operand.vmem [shape: bf16[2,196608], index: 0, kind: input, shape index: {}]
  %s1 = inlined_call_operand.hbm [shape: bf16[10,196608], index: 1, kind: input, shape index: {}]
  %s2 = inlined_call_operand.hbm [shape: f32[1,10], index: 2, kind: input, shape index: {}]
  %s3 = inlined_call_operand.hbm [shape: f32[2,10], index: 3, kind: output, shape index: {}]
  %s4 = sld [smem:[#allocation0]]
  $region61: #{linear_pallas.1} parent=0
    _
  %s6 = ssub.s32 1, %s4
  %s7 = scalar_select 0, %s6, %s4
  $region1: #{linear_pallas.1} parent=0
    #allocation2 [shape = 'u8[4194304]{0}', space=vmem, size = 0x400000, scoped, tag = 'input window, operand 1']
    #allocation3 [shape = 's32[2]{0}', space=sflag, size = 0x8, scoped, tag = 'scoped memory for linear_pallas.1']
    #allocation4 [shape = 's32[2]{0}', space=sflag, size = 0x8, scoped, tag = 'scoped memory for linear_pallas.1']
    #allocation5 [shape = 'u8[512]{0}', space=vmem, size = 0x400, scoped, tag = 'input window, operand 2, single buffered']
    #allocation6 [shape = 's32[1]{0}', space=sflag, size = 0x4, scoped, tag = 'scoped memory for linear_pallas.1']
    #allocation7 [shape = 'u8[1024]{0}', space=vmem, size = 0x400, scoped, tag = 'output window, operand 0, single buffered']
    %8 = vsyncpa [#allocation3], 0
    %s9 = scalar_lea.sflag [#allocation3], 1
    %10 = vsyncpa %s9, 0
    %11 = vsyncpa [#allocation6], 0
    %12 = vsyncpa [#allocation4], 0
    loop: start=0, step=1, limit=5
    $region2: #{linear_pallas.1} parent=1 // loop_pre_header
      _
    $region3: #{linear_pallas.1} parent=1 // loop_header
      %s14 = sphi 0, %s18
      %p15 = scmp.ge.s32.totalorder %s14, 5
      %s21 = sphi 0, %s33
      %s22 = sphi 0, %s29
      %s23 = sphi 0, %s21
      %s24 = sphi 0, %s22
      %s25 = sphi 0, %s23
      %s26 = sphi 0, %s24
      %s40 = sphi 0, %s42
      %s43 = sphi 0, %s40
      %s44 = sphi 0, %s43
      %s60 = sphi 0, %s44
      %s70 = sphi 0, %s72
      %s73 = sphi 0, %s70
      %s74 = sphi 0, %s73
      %s90 = sphi 0, %s74
      %s94 = sphi 0, %s94
      %s96 = sphi 0, %s94
      %s97 = sphi 0, %s96
      %s111 = sphi 0, %s97
      %s115 = sphi 0, %s115
      %s117 = sphi 0, %s115
      %s118 = sphi 0, %s117
      %s132 = sphi 0, %s118
    $region4: #{linear_pallas.1} parent=1 // loop_header_branch
      %17 = sbr.rel (%p15) target = $region8
    $region5: #{linear_pallas.1} parent=1 // loop_body
      %s19 = ssub.s32 %s14, 1
      %s20 = ssub.s32 %s14, 2
      %s27 = sadd.s32 1, %s22
      %p28 = scmp.ge.s32.totalorder %s27, 3
      %s29 = scalar_select %p28, 0, %s27
      %s30 = sadd.s32 1, %s21
      %s31 = scalar_select %p28, %s30, %s21
      %p32 = scmp.ge.s32.totalorder %s31, 1
      %s33 = scalar_select %p32, 0, %s31
      %s34 = smul.u32 %s21, 3
      %s35 = sadd.s32 %s34, %s22
      %s36 = smul.u32 %s33, 3
      %s37 = sadd.s32 %s36, %s29
      %s38 = ssub.s32 %s35, %s37
      %p39 = scmp.eq.s32.totalorder %s38, 0
      %s41 = sadd.s32 %s40, 1
      %s42 = scalar_select %p39, %s40, %s41
      %p45 = pneg %p39
      %p46 = scmp.eq.s32.totalorder %s14, 2
      %p47 = por %p45, %p46
      %p48 = scmp.ne.s32.totalorder %s40, %s43
      %p49 = scmp.eq.s32.totalorder %s14, 0
      %p50 = por %p48, %p49
      %p51 = scmp.ne.s32.totalorder %s40, %s43
      %p52 = scmp.eq.s32.totalorder %s19, 2
      %p53 = por %p51, %p52
      %p54 = scmp.ne.s32.totalorder %s43, %s44
      %p55 = scmp.eq.s32.totalorder %s19, 0
      %p56 = por %p54, %p55
      %p57 = scmp.ne.s32.totalorder %s43, %s44
      %p58 = scmp.eq.s32.totalorder %s20, 2
      %p59 = por %p57, %p58
      %p61 = scmp.ne.s32.totalorder %s44, %s60
      %p62 = scmp.eq.s32.totalorder %s20, 0
      %p63 = por %p61, %p62
      %s64 = smul.u32 %s21, 3
      %s65 = sadd.s32 %s64, %s22
      %s66 = smul.u32 %s33, 3
      %s67 = sadd.s32 %s66, %s29
      %s68 = ssub.s32 %s65, %s67
      %p69 = scmp.eq.s32.totalorder %s68, 0
      %s71 = sadd.s32 %s70, 1
      %s72 = scalar_select %p69, %s70, %s71
      %p75 = pneg %p69
      %p76 = scmp.eq.s32.totalorder %s14, 2
      %p77 = por %p75, %p76
      %p78 = scmp.ne.s32.totalorder %s70, %s73
      %p79 = scmp.eq.s32.totalorder %s14, 0
      %p80 = por %p78, %p79
      %p81 = scmp.ne.s32.totalorder %s70, %s73
      %p82 = scmp.eq.s32.totalorder %s19, 2
      %p83 = por %p81, %p82
      %p84 = scmp.ne.s32.totalorder %s73, %s74
      %p85 = scmp.eq.s32.totalorder %s19, 0
      %p86 = por %p84, %p85
      %p87 = scmp.ne.s32.totalorder %s73, %s74
      %p88 = scmp.eq.s32.totalorder %s20, 2
      %p89 = por %p87, %p88
      %p91 = scmp.ne.s32.totalorder %s74, %s90
      %p92 = scmp.eq.s32.totalorder %s20, 0
      %p93 = por %p91, %p92
      %s95 = sadd.s32 %s94, 1
      %p98 = scmp.eq.s32.totalorder %s14, 2
      %p99 = scmp.ne.s32.totalorder %s94, %s96
      %p100 = scmp.eq.s32.totalorder %s14, 0
      %p101 = por %p99, %p100
      %p102 = scmp.ne.s32.totalorder %s94, %s96
      %p103 = scmp.eq.s32.totalorder %s19, 2
      %p104 = por %p102, %p103
      %p105 = scmp.ne.s32.totalorder %s96, %s97
      %p106 = scmp.eq.s32.totalorder %s19, 0
      %p107 = por %p105, %p106
      %p108 = scmp.ne.s32.totalorder %s96, %s97
      %p109 = scmp.eq.s32.totalorder %s20, 2
      %p110 = por %p108, %p109
      %p112 = scmp.ne.s32.totalorder %s97, %s111
      %p113 = scmp.eq.s32.totalorder %s20, 0
      %p114 = por %p112, %p113
      %s116 = sadd.s32 %s115, 1
      %p119 = scmp.eq.s32.totalorder %s14, 2
      %p120 = scmp.ne.s32.totalorder %s115, %s117
      %p121 = scmp.eq.s32.totalorder %s14, 0
      %p122 = por %p120, %p121
      %p123 = scmp.ne.s32.totalorder %s115, %s117
      %p124 = scmp.eq.s32.totalorder %s19, 2
      %p125 = por %p123, %p124
      %p126 = scmp.ne.s32.totalorder %s117, %s118
      %p127 = scmp.eq.s32.totalorder %s19, 0
      %p128 = por %p126, %p127
      %p129 = scmp.ne.s32.totalorder %s117, %s118
      %p130 = scmp.eq.s32.totalorder %s20, 2
      %p131 = por %p129, %p130
      %p133 = scmp.ne.s32.totalorder %s118, %s132
      %p134 = scmp.eq.s32.totalorder %s20, 0
      %p135 = por %p133, %p134
      %p136 = scmp.le.s32.totalorder 1, %s14
      %p137 = scmp.lt.s32.totalorder %s14, 4
      %p138 = pnand %p136, %p137
      %p139 = pneg %p138
      // Predicated region
      $region9: #{linear_pallas.1} parent=5 // pred_check
        _
      $region10: #{linear_pallas.1} parent=5 // pred_check_branch
        %141 = sbr.rel (%p138) target = $region12
      $region11: #{linear_pallas.1} parent=5 // pred_region
        %s142 = ssub.s32 %s14, 1
        // Predicated region
        $region13: #{linear_pallas.1} parent=11 // pred_check
          %p143 = pneg %p107
        $region14: #{linear_pallas.1} parent=11 // pred_check_branch
          %145 = sbr.rel (%p143) target = $region16
        $region15: #{linear_pallas.1} parent=11 // pred_region
          %147 = vsyncadd [#allocation6], 0
          %s149 = sshll.u32 %s2, 4
          %s150 = int_to_ptr.hbm [resolvable:$true] %s149
          %s151 = sshll.u32 [#allocation5], 4
          %s152 = int_to_ptr.vmem [resolvable:$true] %s151
          %154 = dma.hbm_to_vmem [thread:$0]  %s150, 16, %s152, [#allocation6]
        $region16: #{linear_pallas.1} parent=11 // pred_fallthru
          _
      $region12: #{linear_pallas.1} parent=5 // pred_fallthru
        _
      %p155 = scmp.lt.s32.totalorder %s14, 3
      // Predicated region
      $region17: #{linear_pallas.1} parent=5 // pred_check
        %p156 = pneg %p155
      $region18: #{linear_pallas.1} parent=5 // pred_check_branch
        %158 = sbr.rel (%p156) target = $region20
      $region19: #{linear_pallas.1} parent=5 // pred_region
        // Predicated region
        $region21: #{linear_pallas.1} parent=19 // pred_check
          %p159 = pneg %p50
        $region22: #{linear_pallas.1} parent=19 // pred_check_branch
          %161 = sbr.rel (%p159) target = $region24
        $region23: #{linear_pallas.1} parent=19 // pred_region
          %s162 = smul.u32 %s21, 3
          %s163 = sadd.s32 %s162, %s22
          %s164 = smul.u32 512, %s163
          %p165 = scmp.lt.s32.totalorder %s164, 1535
          %s166 = scalar_select %p165, %s164, 1535
          %s167 = scalar_lea.vmem %s0, %s166
          %s168 = smul.u32 %s21, 3
          %s169 = sadd.s32 %s168, %s22
          %s170 = smul.u32 512, %s169
        $region24: #{linear_pallas.1} parent=19 // pred_fallthru
          _
        // Predicated region
        $region25: #{linear_pallas.1} parent=19 // pred_check
          %p171 = pneg %p80
        $region26: #{linear_pallas.1} parent=19 // pred_check_branch
          %173 = sbr.rel (%p171) target = $region28
        $region27: #{linear_pallas.1} parent=19 // pred_region
          %s174 = sand.u32 %s70, 1
          %s175 = scalar_lea.sflag [#allocation3], %s174
          %s176 = sand.u32 %s70, 1
          %s177 = smul.addr %s176, 4096
          %s178 = scalar_lea.vmem [#allocation2], %s177
          %s179 = smul.u32 %s21, 3
          %s180 = sadd.s32 %s179, %s22
          %s181 = smul.u32 512, %s180
          %183 = vsyncadd %s175, 0
          %s184 = smul.addr %s181, 4
          %s185 = scalar_lea.hbm %s1, %s184
          %s186 = sshll.u32 %s185, 4
          %s187 = int_to_ptr.hbm [resolvable:$true] %s186
          %s188 = sshll.u32 %s178, 4
          %s189 = int_to_ptr.vmem [resolvable:$true] %s188
          %194 = dma.hbm_to_vmem [thread:$0]  %s187, 65536, %s189, %s175, 98304, 32768, 2048
        $region28: #{linear_pallas.1} parent=19 // pred_fallthru
          _
      $region20: #{linear_pallas.1} parent=5 // pred_fallthru
        _
      %p195 = scmp.le.s32.totalorder 1, %s14
      %p196 = scmp.lt.s32.totalorder %s14, 4
      %p197 = pnand %p195, %p196
      %p198 = pneg %p197
      // Predicated region
      $region29: #{linear_pallas.1} parent=5 // pred_check
        _
      $region30: #{linear_pallas.1} parent=5 // pred_check_branch
        %200 = sbr.rel (%p197) target = $region32
      $region31: #{linear_pallas.1} parent=5 // pred_region
        %s201 = ssub.s32 %s14, 1
        %s202 = sand.u32 %s73, 1
        %s203 = scalar_lea.sflag [#allocation3], %s202
        %s204 = sand.u32 %s73, 1
        %s205 = smul.addr %s204, 4096
        %s206 = scalar_lea.vmem [#allocation2], %s205
        // Predicated region
        $region33: #{linear_pallas.1} parent=31 // pred_check
          %p207 = pneg %p86
        $region34: #{linear_pallas.1} parent=31 // pred_check_branch
          %209 = sbr.rel (%p207) target = $region36
        $region35: #{linear_pallas.1} parent=31 // pred_region
          %211 = dma.done %s203, 65536
        $region36: #{linear_pallas.1} parent=31 // pred_fallthru
          _
        // Predicated region
        $region37: #{linear_pallas.1} parent=31 // pred_check
          %p212 = pneg %p107
        $region38: #{linear_pallas.1} parent=31 // pred_check_branch
          %214 = sbr.rel (%p212) target = $region40
        $region39: #{linear_pallas.1} parent=31 // pred_region
          %216 = dma.done [#allocation6], 16
        $region40: #{linear_pallas.1} parent=31 // pred_fallthru
          _
        %s217 = smul.u32 %s23, 3
        %s218 = sadd.s32 %s217, %s24
        %s219 = smul.u32 512, %s218
        %p220 = scmp.lt.s32.totalorder %s219, 1535
        %s221 = scalar_select %p220, %s219, 1535
        %s222 = scalar_lea.vmem %s0, %s221
        %p223 = pneg %p56
        %p224 = pneg %p53
        %s225 = sand.u32 %s73, 1
        %s226 = scalar_lea.sflag [#allocation3], %s225
        %s227 = sand.u32 %s73, 1
        %s228 = smul.addr %s227, 4096
        %s229 = scalar_lea.vmem [#allocation2], %s228
        %p230 = pneg %p86
        %p231 = pneg %p83
        %p232 = pneg %p107
        %p233 = pneg %p104
        %p234 = pneg %p128
        %p235 = pneg %p125
        %s236 = smul.u32 %s23, 3
        %s237 = sadd.s32 %s236, %s24
        %s238 = smul.u32 512, %s237
        %p239 = scmp.lt.s32.totalorder %s238, 1535
        %s240 = scalar_select %p239, %s238, 1535
        %s241 = scalar_lea.vmem %s0, %s240
        %s242 = smul.u32 %s23, 3
        %s243 = sadd.s32 %s242, %s24
        %s244 = smul.u32 512, %s243
        %s245 = smul.u32 %s23, 3
        %s246 = sadd.s32 %s245, %s24
        %s247 = smul.u32 512, %s246
        %p249 = scmp.eq.s32.totalorder %s24, 0
        // Predicated region
        $region41: #{linear_pallas.1} parent=31 // pred_check
          %p250 = pneg %p249
        $region42: #{linear_pallas.1} parent=31 // pred_check_branch
          %252 = sbr.rel (%p250) target = $region44
        $region43: #{linear_pallas.1} parent=31 // pred_region
          %vm253 = vcmask 74752
          %254 = vst.msk [vmem:[#allocation7] sm:$0x3] %vm253, 0.0
        $region44: #{linear_pallas.1} parent=31 // pred_fallthru
          _
        %v255 = vld [vmem:[#allocation7] sm:$0x3]
        %v256 = vld [vmem:[%s241] sm:$0xff]
        %v257 = vld [vmem:[%s241 + $0x8] sm:$0xff]
        %v258 = vld [vmem:[%s241 + $0x10] sm:$0xff]
        %v259 = vld [vmem:[%s241 + $0x18] sm:$0xff]
        %v260 = vld [vmem:[%s241 + $0x20] sm:$0xff]
        %v261 = vld [vmem:[%s241 + $0x28] sm:$0xff]
        %v262 = vld [vmem:[%s241 + $0x30] sm:$0xff]
        %v263 = vld [vmem:[%s241 + $0x38] sm:$0xff]
        %v264 = vld [vmem:[%s241 + $0x40] sm:$0xff]
        %v265 = vld [vmem:[%s241 + $0x48] sm:$0xff]
        %v266 = vld [vmem:[%s241 + $0x50] sm:$0xff]
        %v267 = vld [vmem:[%s241 + $0x58] sm:$0xff]
        %v268 = vld [vmem:[%s241 + $0x60] sm:$0xff]
        %v269 = vld [vmem:[%s241 + $0x68] sm:$0xff]
        %v270 = vld [vmem:[%s241 + $0x70] sm:$0xff]
        %v271 = vld [vmem:[%s241 + $0x78] sm:$0xff]
        %v272 = vld [vmem:[%s241 + $0x80] sm:$0xff]
        %v273 = vld [vmem:[%s241 + $0x88] sm:$0xff]
        %v274 = vld [vmem:[%s241 + $0x90] sm:$0xff]
        %v275 = vld [vmem:[%s241 + $0x98] sm:$0xff]
        %v276 = vld [vmem:[%s241 + $0xa0] sm:$0xff]
        %v277 = vld [vmem:[%s241 + $0xa8] sm:$0xff]
        %v278 = vld [vmem:[%s241 + $0xb0] sm:$0xff]
        %v279 = vld [vmem:[%s241 + $0xb8] sm:$0xff]
        %v280 = vld [vmem:[%s241 + $0xc0] sm:$0xff]
        %v281 = vld [vmem:[%s241 + $0xc8] sm:$0xff]
        %v282 = vld [vmem:[%s241 + $0xd0] sm:$0xff]
        %v283 = vld [vmem:[%s241 + $0xd8] sm:$0xff]
        %v284 = vld [vmem:[%s241 + $0xe0] sm:$0xff]
        %v285 = vld [vmem:[%s241 + $0xe8] sm:$0xff]
        %v286 = vld [vmem:[%s241 + $0xf0] sm:$0xff]
        %v287 = vld [vmem:[%s241 + $0xf8] sm:$0xff]
        %v288 = vld [vmem:[%s241 + $0x100] sm:$0xff]
        %v289 = vld [vmem:[%s241 + $0x108] sm:$0xff]
        %v290 = vld [vmem:[%s241 + $0x110] sm:$0xff]
        %v291 = vld [vmem:[%s241 + $0x118] sm:$0xff]
        %v292 = vld [vmem:[%s241 + $0x120] sm:$0xff]
        %v293 = vld [vmem:[%s241 + $0x128] sm:$0xff]
        %v294 = vld [vmem:[%s241 + $0x130] sm:$0xff]
        %v295 = vld [vmem:[%s241 + $0x138] sm:$0xff]
        %v296 = vld [vmem:[%s241 + $0x140] sm:$0xff]
        %v297 = vld [vmem:[%s241 + $0x148] sm:$0xff]
        %v298 = vld [vmem:[%s241 + $0x150] sm:$0xff]
        %v299 = vld [vmem:[%s241 + $0x158] sm:$0xff]
        %v300 = vld [vmem:[%s241 + $0x160] sm:$0xff]
        %v301 = vld [vmem:[%s241 + $0x168] sm:$0xff]
        %v302 = vld [vmem:[%s241 + $0x170] sm:$0xff]
        %v303 = vld [vmem:[%s241 + $0x178] sm:$0xff]
        %v304 = vld [vmem:[%s241 + $0x180] sm:$0xff]
        %v305 = vld [vmem:[%s241 + $0x188] sm:$0xff]
        %v306 = vld [vmem:[%s241 + $0x190] sm:$0xff]
        %v307 = vld [vmem:[%s241 + $0x198] sm:$0xff]
        %v308 = vld [vmem:[%s241 + $0x1a0] sm:$0xff]
        %v309 = vld [vmem:[%s241 + $0x1a8] sm:$0xff]
        %v310 = vld [vmem:[%s241 + $0x1b0] sm:$0xff]
        %v311 = vld [vmem:[%s241 + $0x1b8] sm:$0xff]
        %v312 = vld [vmem:[%s241 + $0x1c0] sm:$0xff]
        %v313 = vld [vmem:[%s241 + $0x1c8] sm:$0xff]
        %v314 = vld [vmem:[%s241 + $0x1d0] sm:$0xff]
        %v315 = vld [vmem:[%s241 + $0x1d8] sm:$0xff]
        %v316 = vld [vmem:[%s241 + $0x1e0] sm:$0xff]
        %v317 = vld [vmem:[%s241 + $0x1e8] sm:$0xff]
        %v318 = vld [vmem:[%s241 + $0x1f0] sm:$0xff]
        %v319 = vld [vmem:[%s241 + $0x1f8] sm:$0xff]
        %v320 = vld [vmem:[%s206] sm:$0xff]
        %v321 = vld [vmem:[%s206 + $0x8] sm:$0xff]
        %v322 = vld [vmem:[%s206 + $0x10] sm:$0xff]
        %v323 = vld [vmem:[%s206 + $0x18] sm:$0xff]
        %v324 = vld [vmem:[%s206 + $0x20] sm:$0xff]
        %v325 = vld [vmem:[%s206 + $0x28] sm:$0xff]
        %v326 = vld [vmem:[%s206 + $0x30] sm:$0xff]
        %v327 = vld [vmem:[%s206 + $0x38] sm:$0xff]
        %v328 = vld [vmem:[%s206 + $0x40] sm:$0xff]
        %v329 = vld [vmem:[%s206 + $0x48] sm:$0xff]
        %v330 = vld [vmem:[%s206 + $0x50] sm:$0xff]
        %v331 = vld [vmem:[%s206 + $0x58] sm:$0xff]
        %v332 = vld [vmem:[%s206 + $0x60] sm:$0xff]
        %v333 = vld [vmem:[%s206 + $0x68] sm:$0xff]
        %v334 = vld [vmem:[%s206 + $0x70] sm:$0xff]
        %v335 = vld [vmem:[%s206 + $0x78] sm:$0xff]
        %v336 = vld [vmem:[%s206 + $0x80] sm:$0xff]
        %v337 = vld [vmem:[%s206 + $0x88] sm:$0xff]
        %v338 = vld [vmem:[%s206 + $0x90] sm:$0xff]
        %v339 = vld [vmem:[%s206 + $0x98] sm:$0xff]
        %v340 = vld [vmem:[%s206 + $0xa0] sm:$0xff]
        %v341 = vld [vmem:[%s206 + $0xa8] sm:$0xff]
        %v342 = vld [vmem:[%s206 + $0xb0] sm:$0xff]
        %v343 = vld [vmem:[%s206 + $0xb8] sm:$0xff]
        %v344 = vld [vmem:[%s206 + $0xc0] sm:$0xff]
        %v345 = vld [vmem:[%s206 + $0xc8] sm:$0xff]
        %v346 = vld [vmem:[%s206 + $0xd0] sm:$0xff]
        %v347 = vld [vmem:[%s206 + $0xd8] sm:$0xff]
        %v348 = vld [vmem:[%s206 + $0xe0] sm:$0xff]
        %v349 = vld [vmem:[%s206 + $0xe8] sm:$0xff]
        %v350 = vld [vmem:[%s206 + $0xf0] sm:$0xff]
        %v351 = vld [vmem:[%s206 + $0xf8] sm:$0xff]
        %v352 = vld [vmem:[%s206 + $0x100] sm:$0xff]
        %v353 = vld [vmem:[%s206 + $0x108] sm:$0xff]
        %v354 = vld [vmem:[%s206 + $0x110] sm:$0xff]
        %v355 = vld [vmem:[%s206 + $0x118] sm:$0xff]
        %v356 = vld [vmem:[%s206 + $0x120] sm:$0xff]
        %v357 = vld [vmem:[%s206 + $0x128] sm:$0xff]
        %v358 = vld [vmem:[%s206 + $0x130] sm:$0xff]
        %v359 = vld [vmem:[%s206 + $0x138] sm:$0xff]
        %v360 = vld [vmem:[%s206 + $0x140] sm:$0xff]
        %v361 = vld [vmem:[%s206 + $0x148] sm:$0xff]
        %v362 = vld [vmem:[%s206 + $0x150] sm:$0xff]
        %v363 = vld [vmem:[%s206 + $0x158] sm:$0xff]
        %v364 = vld [vmem:[%s206 + $0x160] sm:$0xff]
        %v365 = vld [vmem:[%s206 + $0x168] sm:$0xff]
        %v366 = vld [vmem:[%s206 + $0x170] sm:$0xff]
        %v367 = vld [vmem:[%s206 + $0x178] sm:$0xff]
        %v368 = vld [vmem:[%s206 + $0x180] sm:$0xff]
        %v369 = vld [vmem:[%s206 + $0x188] sm:$0xff]
        %v370 = vld [vmem:[%s206 + $0x190] sm:$0xff]
        %v371 = vld [vmem:[%s206 + $0x198] sm:$0xff]
        %v372 = vld [vmem:[%s206 + $0x1a0] sm:$0xff]
        %v373 = vld [vmem:[%s206 + $0x1a8] sm:$0xff]
        %v374 = vld [vmem:[%s206 + $0x1b0] sm:$0xff]
        %v375 = vld [vmem:[%s206 + $0x1b8] sm:$0xff]
        %v376 = vld [vmem:[%s206 + $0x1c0] sm:$0xff]
        %v377 = vld [vmem:[%s206 + $0x1c8] sm:$0xff]
        %v378 = vld [vmem:[%s206 + $0x1d0] sm:$0xff]
        %v379 = vld [vmem:[%s206 + $0x1d8] sm:$0xff]
        %v380 = vld [vmem:[%s206 + $0x1e0] sm:$0xff]
        %v381 = vld [vmem:[%s206 + $0x1e8] sm:$0xff]
        %v382 = vld [vmem:[%s206 + $0x1f0] sm:$0xff]
        %v383 = vld [vmem:[%s206 + $0x1f8] sm:$0xff]
        %v384 = vld [vmem:[%s206 + $0x200] sm:$0xff]
        %v385 = vld [vmem:[%s206 + $0x208] sm:$0xff]
        %v386 = vld [vmem:[%s206 + $0x210] sm:$0xff]
        %v387 = vld [vmem:[%s206 + $0x218] sm:$0xff]
        %v388 = vld [vmem:[%s206 + $0x220] sm:$0xff]
        %v389 = vld [vmem:[%s206 + $0x228] sm:$0xff]
        %v390 = vld [vmem:[%s206 + $0x230] sm:$0xff]
        %v391 = vld [vmem:[%s206 + $0x238] sm:$0xff]
        %v392 = vld [vmem:[%s206 + $0x240] sm:$0xff]
        %v393 = vld [vmem:[%s206 + $0x248] sm:$0xff]
        %v394 = vld [vmem:[%s206 + $0x250] sm:$0xff]
        %v395 = vld [vmem:[%s206 + $0x258] sm:$0xff]
        %v396 = vld [vmem:[%s206 + $0x260] sm:$0xff]
        %v397 = vld [vmem:[%s206 + $0x268] sm:$0xff]
        %v398 = vld [vmem:[%s206 + $0x270] sm:$0xff]
        %v399 = vld [vmem:[%s206 + $0x278] sm:$0xff]
        %v400 = vld [vmem:[%s206 + $0x280] sm:$0xff]
        %v401 = vld [vmem:[%s206 + $0x288] sm:$0xff]
        %v402 = vld [vmem:[%s206 + $0x290] sm:$0xff]
        %v403 = vld [vmem:[%s206 + $0x298] sm:$0xff]
        %v404 = vld [vmem:[%s206 + $0x2a0] sm:$0xff]
        %v405 = vld [vmem:[%s206 + $0x2a8] sm:$0xff]
        %v406 = vld [vmem:[%s206 + $0x2b0] sm:$0xff]
        %v407 = vld [vmem:[%s206 + $0x2b8] sm:$0xff]
        %v408 = vld [vmem:[%s206 + $0x2c0] sm:$0xff]
        %v409 = vld [vmem:[%s206 + $0x2c8] sm:$0xff]
        %v410 = vld [vmem:[%s206 + $0x2d0] sm:$0xff]
        %v411 = vld [vmem:[%s206 + $0x2d8] sm:$0xff]
        %v412 = vld [vmem:[%s206 + $0x2e0] sm:$0xff]
        %v413 = vld [vmem:[%s206 + $0x2e8] sm:$0xff]
        %v414 = vld [vmem:[%s206 + $0x2f0] sm:$0xff]
        %v415 = vld [vmem:[%s206 + $0x2f8] sm:$0xff]
        %v416 = vld [vmem:[%s206 + $0x300] sm:$0xff]
        %v417 = vld [vmem:[%s206 + $0x308] sm:$0xff]
        %v418 = vld [vmem:[%s206 + $0x310] sm:$0xff]
        %v419 = vld [vmem:[%s206 + $0x318] sm:$0xff]
        %v420 = vld [vmem:[%s206 + $0x320] sm:$0xff]
        %v421 = vld [vmem:[%s206 + $0x328] sm:$0xff]
        %v422 = vld [vmem:[%s206 + $0x330] sm:$0xff]
        %v423 = vld [vmem:[%s206 + $0x338] sm:$0xff]
        %v424 = vld [vmem:[%s206 + $0x340] sm:$0xff]
        %v425 = vld [vmem:[%s206 + $0x348] sm:$0xff]
        %v426 = vld [vmem:[%s206 + $0x350] sm:$0xff]
        %v427 = vld [vmem:[%s206 + $0x358] sm:$0xff]
        %v428 = vld [vmem:[%s206 + $0x360] sm:$0xff]
        %v429 = vld [vmem:[%s206 + $0x368] sm:$0xff]
        %v430 = vld [vmem:[%s206 + $0x370] sm:$0xff]
        %v431 = vld [vmem:[%s206 + $0x378] sm:$0xff]
        %v432 = vld [vmem:[%s206 + $0x380] sm:$0xff]
        %v433 = vld [vmem:[%s206 + $0x388] sm:$0xff]
        %v434 = vld [vmem:[%s206 + $0x390] sm:$0xff]
        %v435 = vld [vmem:[%s206 + $0x398] sm:$0xff]
        %v436 = vld [vmem:[%s206 + $0x3a0] sm:$0xff]
        %v437 = vld [vmem:[%s206 + $0x3a8] sm:$0xff]
        %v438 = vld [vmem:[%s206 + $0x3b0] sm:$0xff]
        %v439 = vld [vmem:[%s206 + $0x3b8] sm:$0xff]
        %v440 = vld [vmem:[%s206 + $0x3c0] sm:$0xff]
        %v441 = vld [vmem:[%s206 + $0x3c8] sm:$0xff]
        %v442 = vld [vmem:[%s206 + $0x3d0] sm:$0xff]
        %v443 = vld [vmem:[%s206 + $0x3d8] sm:$0xff]
        %v444 = vld [vmem:[%s206 + $0x3e0] sm:$0xff]
        %v445 = vld [vmem:[%s206 + $0x3e8] sm:$0xff]
        %v446 = vld [vmem:[%s206 + $0x3f0] sm:$0xff]
        %v447 = vld [vmem:[%s206 + $0x3f8] sm:$0xff]
        %v448 = vld [vmem:[%s206 + $0x400] sm:$0xff]
        %v449 = vld [vmem:[%s206 + $0x408] sm:$0xff]
        %v450 = vld [vmem:[%s206 + $0x410] sm:$0xff]
        %v451 = vld [vmem:[%s206 + $0x418] sm:$0xff]
        %v452 = vld [vmem:[%s206 + $0x420] sm:$0xff]
        %v453 = vld [vmem:[%s206 + $0x428] sm:$0xff]
        %v454 = vld [vmem:[%s206 + $0x430] sm:$0xff]
        %v455 = vld [vmem:[%s206 + $0x438] sm:$0xff]
        %v456 = vld [vmem:[%s206 + $0x440] sm:$0xff]
        %v457 = vld [vmem:[%s206 + $0x448] sm:$0xff]
        %v458 = vld [vmem:[%s206 + $0x450] sm:$0xff]
        %v459 = vld [vmem:[%s206 + $0x458] sm:$0xff]
        %v460 = vld [vmem:[%s206 + $0x460] sm:$0xff]
        %v461 = vld [vmem:[%s206 + $0x468] sm:$0xff]
        %v462 = vld [vmem:[%s206 + $0x470] sm:$0xff]
        %v463 = vld [vmem:[%s206 + $0x478] sm:$0xff]
        %v464 = vld [vmem:[%s206 + $0x480] sm:$0xff]
        %v465 = vld [vmem:[%s206 + $0x488] sm:$0xff]
        %v466 = vld [vmem:[%s206 + $0x490] sm:$0xff]
        %v467 = vld [vmem:[%s206 + $0x498] sm:$0xff]
        %v468 = vld [vmem:[%s206 + $0x4a0] sm:$0xff]
        %v469 = vld [vmem:[%s206 + $0x4a8] sm:$0xff]
        %v470 = vld [vmem:[%s206 + $0x4b0] sm:$0xff]
        %v471 = vld [vmem:[%s206 + $0x4b8] sm:$0xff]
        %v472 = vld [vmem:[%s206 + $0x4c0] sm:$0xff]
        %v473 = vld [vmem:[%s206 + $0x4c8] sm:$0xff]
        %v474 = vld [vmem:[%s206 + $0x4d0] sm:$0xff]
        %v475 = vld [vmem:[%s206 + $0x4d8] sm:$0xff]
        %v476 = vld [vmem:[%s206 + $0x4e0] sm:$0xff]
        %v477 = vld [vmem:[%s206 + $0x4e8] sm:$0xff]
        %v478 = vld [vmem:[%s206 + $0x4f0] sm:$0xff]
        %v479 = vld [vmem:[%s206 + $0x4f8] sm:$0xff]
        %v480 = vld [vmem:[%s206 + $0x500] sm:$0xff]
        %v481 = vld [vmem:[%s206 + $0x508] sm:$0xff]
        %v482 = vld [vmem:[%s206 + $0x510] sm:$0xff]
        %v483 = vld [vmem:[%s206 + $0x518] sm:$0xff]
        %v484 = vld [vmem:[%s206 + $0x520] sm:$0xff]
        %v485 = vld [vmem:[%s206 + $0x528] sm:$0xff]
        %v486 = vld [vmem:[%s206 + $0x530] sm:$0xff]
        %v487 = vld [vmem:[%s206 + $0x538] sm:$0xff]
        %v488 = vld [vmem:[%s206 + $0x540] sm:$0xff]
        %v489 = vld [vmem:[%s206 + $0x548] sm:$0xff]
        %v490 = vld [vmem:[%s206 + $0x550] sm:$0xff]
        %v491 = vld [vmem:[%s206 + $0x558] sm:$0xff]
        %v492 = vld [vmem:[%s206 + $0x560] sm:$0xff]
        %v493 = vld [vmem:[%s206 + $0x568] sm:$0xff]
        %v494 = vld [vmem:[%s206 + $0x570] sm:$0xff]
        %v495 = vld [vmem:[%s206 + $0x578] sm:$0xff]
        %v496 = vld [vmem:[%s206 + $0x580] sm:$0xff]
        %v497 = vld [vmem:[%s206 + $0x588] sm:$0xff]
        %v498 = vld [vmem:[%s206 + $0x590] sm:$0xff]
        %v499 = vld [vmem:[%s206 + $0x598] sm:$0xff]
        %v500 = vld [vmem:[%s206 + $0x5a0] sm:$0xff]
        %v501 = vld [vmem:[%s206 + $0x5a8] sm:$0xff]
        %v502 = vld [vmem:[%s206 + $0x5b0] sm:$0xff]
        %v503 = vld [vmem:[%s206 + $0x5b8] sm:$0xff]
        %v504 = vld [vmem:[%s206 + $0x5c0] sm:$0xff]
        %v505 = vld [vmem:[%s206 + $0x5c8] sm:$0xff]
        %v506 = vld [vmem:[%s206 + $0x5d0] sm:$0xff]
        %v507 = vld [vmem:[%s206 + $0x5d8] sm:$0xff]
        %v508 = vld [vmem:[%s206 + $0x5e0] sm:$0xff]
        %v509 = vld [vmem:[%s206 + $0x5e8] sm:$0xff]
        %v510 = vld [vmem:[%s206 + $0x5f0] sm:$0xff]
        %v511 = vld [vmem:[%s206 + $0x5f8] sm:$0xff]
        %v512 = vld [vmem:[%s206 + $0x600] sm:$0xff]
        %v513 = vld [vmem:[%s206 + $0x608] sm:$0xff]
        %v514 = vld [vmem:[%s206 + $0x610] sm:$0xff]
        %v515 = vld [vmem:[%s206 + $0x618] sm:$0xff]
        %v516 = vld [vmem:[%s206 + $0x620] sm:$0xff]
        %v517 = vld [vmem:[%s206 + $0x628] sm:$0xff]
        %v518 = vld [vmem:[%s206 + $0x630] sm:$0xff]
        %v519 = vld [vmem:[%s206 + $0x638] sm:$0xff]
        %v520 = vld [vmem:[%s206 + $0x640] sm:$0xff]
        %v521 = vld [vmem:[%s206 + $0x648] sm:$0xff]
        %v522 = vld [vmem:[%s206 + $0x650] sm:$0xff]
        %v523 = vld [vmem:[%s206 + $0x658] sm:$0xff]
        %v524 = vld [vmem:[%s206 + $0x660] sm:$0xff]
        %v525 = vld [vmem:[%s206 + $0x668] sm:$0xff]
        %v526 = vld [vmem:[%s206 + $0x670] sm:$0xff]
        %v527 = vld [vmem:[%s206 + $0x678] sm:$0xff]
        %v528 = vld [vmem:[%s206 + $0x680] sm:$0xff]
        %v529 = vld [vmem:[%s206 + $0x688] sm:$0xff]
        %v530 = vld [vmem:[%s206 + $0x690] sm:$0xff]
        %v531 = vld [vmem:[%s206 + $0x698] sm:$0xff]
        %v532 = vld [vmem:[%s206 + $0x6a0] sm:$0xff]
        %v533 = vld [vmem:[%s206 + $0x6a8] sm:$0xff]
        %v534 = vld [vmem:[%s206 + $0x6b0] sm:$0xff]
        %v535 = vld [vmem:[%s206 + $0x6b8] sm:$0xff]
        %v536 = vld [vmem:[%s206 + $0x6c0] sm:$0xff]
        %v537 = vld [vmem:[%s206 + $0x6c8] sm:$0xff]
        %v538 = vld [vmem:[%s206 + $0x6d0] sm:$0xff]
        %v539 = vld [vmem:[%s206 + $0x6d8] sm:$0xff]
        %v540 = vld [vmem:[%s206 + $0x6e0] sm:$0xff]
        %v541 = vld [vmem:[%s206 + $0x6e8] sm:$0xff]
        %v542 = vld [vmem:[%s206 + $0x6f0] sm:$0xff]
        %v543 = vld [vmem:[%s206 + $0x6f8] sm:$0xff]
        %v544 = vld [vmem:[%s206 + $0x700] sm:$0xff]
        %v545 = vld [vmem:[%s206 + $0x708] sm:$0xff]
        %v546 = vld [vmem:[%s206 + $0x710] sm:$0xff]
        %v547 = vld [vmem:[%s206 + $0x718] sm:$0xff]
        %v548 = vld [vmem:[%s206 + $0x720] sm:$0xff]
        %v549 = vld [vmem:[%s206 + $0x728] sm:$0xff]
        %v550 = vld [vmem:[%s206 + $0x730] sm:$0xff]
        %v551 = vld [vmem:[%s206 + $0x738] sm:$0xff]
        %v552 = vld [vmem:[%s206 + $0x740] sm:$0xff]
        %v553 = vld [vmem:[%s206 + $0x748] sm:$0xff]
        %v554 = vld [vmem:[%s206 + $0x750] sm:$0xff]
        %v555 = vld [vmem:[%s206 + $0x758] sm:$0xff]
        %v556 = vld [vmem:[%s206 + $0x760] sm:$0xff]
        %v557 = vld [vmem:[%s206 + $0x768] sm:$0xff]
        %v558 = vld [vmem:[%s206 + $0x770] sm:$0xff]
        %v559 = vld [vmem:[%s206 + $0x778] sm:$0xff]
        %v560 = vld [vmem:[%s206 + $0x780] sm:$0xff]
        %v561 = vld [vmem:[%s206 + $0x788] sm:$0xff]
        %v562 = vld [vmem:[%s206 + $0x790] sm:$0xff]
        %v563 = vld [vmem:[%s206 + $0x798] sm:$0xff]
        %v564 = vld [vmem:[%s206 + $0x7a0] sm:$0xff]
        %v565 = vld [vmem:[%s206 + $0x7a8] sm:$0xff]
        %v566 = vld [vmem:[%s206 + $0x7b0] sm:$0xff]
        %v567 = vld [vmem:[%s206 + $0x7b8] sm:$0xff]
        %v568 = vld [vmem:[%s206 + $0x7c0] sm:$0xff]
        %v569 = vld [vmem:[%s206 + $0x7c8] sm:$0xff]
        %v570 = vld [vmem:[%s206 + $0x7d0] sm:$0xff]
        %v571 = vld [vmem:[%s206 + $0x7d8] sm:$0xff]
        %v572 = vld [vmem:[%s206 + $0x7e0] sm:$0xff]
        %v573 = vld [vmem:[%s206 + $0x7e8] sm:$0xff]
        %v574 = vld [vmem:[%s206 + $0x7f0] sm:$0xff]
        %v575 = vld [vmem:[%s206 + $0x7f8] sm:$0xff]
        %v576 = vld [vmem:[%s206 + $0x800] sm:$0x11]
        %v577 = vld [vmem:[%s206 + $0x808] sm:$0x11]
        %v578 = vld [vmem:[%s206 + $0x810] sm:$0x11]
        %v579 = vld [vmem:[%s206 + $0x818] sm:$0x11]
        %v580 = vld [vmem:[%s206 + $0x820] sm:$0x11]
        %v581 = vld [vmem:[%s206 + $0x828] sm:$0x11]
        %v582 = vld [vmem:[%s206 + $0x830] sm:$0x11]
        %v583 = vld [vmem:[%s206 + $0x838] sm:$0x11]
        %v584 = vld [vmem:[%s206 + $0x840] sm:$0x11]
        %v585 = vld [vmem:[%s206 + $0x848] sm:$0x11]
        %v586 = vld [vmem:[%s206 + $0x850] sm:$0x11]
        %v587 = vld [vmem:[%s206 + $0x858] sm:$0x11]
        %v588 = vld [vmem:[%s206 + $0x860] sm:$0x11]
        %v589 = vld [vmem:[%s206 + $0x868] sm:$0x11]
        %v590 = vld [vmem:[%s206 + $0x870] sm:$0x11]
        %v591 = vld [vmem:[%s206 + $0x878] sm:$0x11]
        %v592 = vld [vmem:[%s206 + $0x880] sm:$0x11]
        %v593 = vld [vmem:[%s206 + $0x888] sm:$0x11]
        %v594 = vld [vmem:[%s206 + $0x890] sm:$0x11]
        %v595 = vld [vmem:[%s206 + $0x898] sm:$0x11]
        %v596 = vld [vmem:[%s206 + $0x8a0] sm:$0x11]
        %v597 = vld [vmem:[%s206 + $0x8a8] sm:$0x11]
        %v598 = vld [vmem:[%s206 + $0x8b0] sm:$0x11]
        %v599 = vld [vmem:[%s206 + $0x8b8] sm:$0x11]
        %v600 = vld [vmem:[%s206 + $0x8c0] sm:$0x11]
        %v601 = vld [vmem:[%s206 + $0x8c8] sm:$0x11]
        %v602 = vld [vmem:[%s206 + $0x8d0] sm:$0x11]
        %v603 = vld [vmem:[%s206 + $0x8d8] sm:$0x11]
        %v604 = vld [vmem:[%s206 + $0x8e0] sm:$0x11]
        %v605 = vld [vmem:[%s206 + $0x8e8] sm:$0x11]
        %v606 = vld [vmem:[%s206 + $0x8f0] sm:$0x11]
        %v607 = vld [vmem:[%s206 + $0x8f8] sm:$0x11]
        %v608 = vld [vmem:[%s206 + $0x900] sm:$0x11]
        %v609 = vld [vmem:[%s206 + $0x908] sm:$0x11]
        %v610 = vld [vmem:[%s206 + $0x910] sm:$0x11]
        %v611 = vld [vmem:[%s206 + $0x918] sm:$0x11]
        %v612 = vld [vmem:[%s206 + $0x920] sm:$0x11]
        %v613 = vld [vmem:[%s206 + $0x928] sm:$0x11]
        %v614 = vld [vmem:[%s206 + $0x930] sm:$0x11]
        %v615 = vld [vmem:[%s206 + $0x938] sm:$0x11]
        %v616 = vld [vmem:[%s206 + $0x940] sm:$0x11]
        %v617 = vld [vmem:[%s206 + $0x948] sm:$0x11]
        %v618 = vld [vmem:[%s206 + $0x950] sm:$0x11]
        %v619 = vld [vmem:[%s206 + $0x958] sm:$0x11]
        %v620 = vld [vmem:[%s206 + $0x960] sm:$0x11]
        %v621 = vld [vmem:[%s206 + $0x968] sm:$0x11]
        %v622 = vld [vmem:[%s206 + $0x970] sm:$0x11]
        %v623 = vld [vmem:[%s206 + $0x978] sm:$0x11]
        %v624 = vld [vmem:[%s206 + $0x980] sm:$0x11]
        %v625 = vld [vmem:[%s206 + $0x988] sm:$0x11]
        %v626 = vld [vmem:[%s206 + $0x990] sm:$0x11]
        %v627 = vld [vmem:[%s206 + $0x998] sm:$0x11]
        %v628 = vld [vmem:[%s206 + $0x9a0] sm:$0x11]
        %v629 = vld [vmem:[%s206 + $0x9a8] sm:$0x11]
        %v630 = vld [vmem:[%s206 + $0x9b0] sm:$0x11]
        %v631 = vld [vmem:[%s206 + $0x9b8] sm:$0x11]
        %v632 = vld [vmem:[%s206 + $0x9c0] sm:$0x11]
        %v633 = vld [vmem:[%s206 + $0x9c8] sm:$0x11]
        %v634 = vld [vmem:[%s206 + $0x9d0] sm:$0x11]
        %v635 = vld [vmem:[%s206 + $0x9d8] sm:$0x11]
        %v636 = vld [vmem:[%s206 + $0x9e0] sm:$0x11]
        %v637 = vld [vmem:[%s206 + $0x9e8] sm:$0x11]
        %v638 = vld [vmem:[%s206 + $0x9f0] sm:$0x11]
        %v639 = vld [vmem:[%s206 + $0x9f8] sm:$0x11]
        %v640 = vld [vmem:[%s206 + $0xa00] sm:$0x11]
        %v641 = vld [vmem:[%s206 + $0xa08] sm:$0x11]
        %v642 = vld [vmem:[%s206 + $0xa10] sm:$0x11]
        %v643 = vld [vmem:[%s206 + $0xa18] sm:$0x11]
        %v644 = vld [vmem:[%s206 + $0xa20] sm:$0x11]
        %v645 = vld [vmem:[%s206 + $0xa28] sm:$0x11]
        %v646 = vld [vmem:[%s206 + $0xa30] sm:$0x11]
        %v647 = vld [vmem:[%s206 + $0xa38] sm:$0x11]
        %v648 = vld [vmem:[%s206 + $0xa40] sm:$0x11]
        %v649 = vld [vmem:[%s206 + $0xa48] sm:$0x11]
        %v650 = vld [vmem:[%s206 + $0xa50] sm:$0x11]
        %v651 = vld [vmem:[%s206 + $0xa58] sm:$0x11]
        %v652 = vld [vmem:[%s206 + $0xa60] sm:$0x11]
        %v653 = vld [vmem:[%s206 + $0xa68] sm:$0x11]
        %v654 = vld [vmem:[%s206 + $0xa70] sm:$0x11]
        %v655 = vld [vmem:[%s206 + $0xa78] sm:$0x11]
        %v656 = vld [vmem:[%s206 + $0xa80] sm:$0x11]
        %v657 = vld [vmem:[%s206 + $0xa88] sm:$0x11]
        %v658 = vld [vmem:[%s206 + $0xa90] sm:$0x11]
        %v659 = vld [vmem:[%s206 + $0xa98] sm:$0x11]
        %v660 = vld [vmem:[%s206 + $0xaa0] sm:$0x11]
        %v661 = vld [vmem:[%s206 + $0xaa8] sm:$0x11]
        %v662 = vld [vmem:[%s206 + $0xab0] sm:$0x11]
        %v663 = vld [vmem:[%s206 + $0xab8] sm:$0x11]
        %v664 = vld [vmem:[%s206 + $0xac0] sm:$0x11]
        %v665 = vld [vmem:[%s206 + $0xac8] sm:$0x11]
        %v666 = vld [vmem:[%s206 + $0xad0] sm:$0x11]
        %v667 = vld [vmem:[%s206 + $0xad8] sm:$0x11]
        %v668 = vld [vmem:[%s206 + $0xae0] sm:$0x11]
        %v669 = vld [vmem:[%s206 + $0xae8] sm:$0x11]
        %v670 = vld [vmem:[%s206 + $0xaf0] sm:$0x11]
        %v671 = vld [vmem:[%s206 + $0xaf8] sm:$0x11]
        %v672 = vld [vmem:[%s206 + $0xb00] sm:$0x11]
        %v673 = vld [vmem:[%s206 + $0xb08] sm:$0x11]
        %v674 = vld [vmem:[%s206 + $0xb10] sm:$0x11]
        %v675 = vld [vmem:[%s206 + $0xb18] sm:$0x11]
        %v676 = vld [vmem:[%s206 + $0xb20] sm:$0x11]
        %v677 = vld [vmem:[%s206 + $0xb28] sm:$0x11]
        %v678 = vld [vmem:[%s206 + $0xb30] sm:$0x11]
        %v679 = vld [vmem:[%s206 + $0xb38] sm:$0x11]
        %v680 = vld [vmem:[%s206 + $0xb40] sm:$0x11]
        %v681 = vld [vmem:[%s206 + $0xb48] sm:$0x11]
        %v682 = vld [vmem:[%s206 + $0xb50] sm:$0x11]
        %v683 = vld [vmem:[%s206 + $0xb58] sm:$0x11]
        %v684 = vld [vmem:[%s206 + $0xb60] sm:$0x11]
        %v685 = vld [vmem:[%s206 + $0xb68] sm:$0x11]
        %v686 = vld [vmem:[%s206 + $0xb70] sm:$0x11]
        %v687 = vld [vmem:[%s206 + $0xb78] sm:$0x11]
        %v688 = vld [vmem:[%s206 + $0xb80] sm:$0x11]
        %v689 = vld [vmem:[%s206 + $0xb88] sm:$0x11]
        %v690 = vld [vmem:[%s206 + $0xb90] sm:$0x11]
        %v691 = vld [vmem:[%s206 + $0xb98] sm:$0x11]
        %v692 = vld [vmem:[%s206 + $0xba0] sm:$0x11]
        %v693 = vld [vmem:[%s206 + $0xba8] sm:$0x11]
        %v694 = vld [vmem:[%s206 + $0xbb0] sm:$0x11]
        %v695 = vld [vmem:[%s206 + $0xbb8] sm:$0x11]
        %v696 = vld [vmem:[%s206 + $0xbc0] sm:$0x11]
        %v697 = vld [vmem:[%s206 + $0xbc8] sm:$0x11]
        %v698 = vld [vmem:[%s206 + $0xbd0] sm:$0x11]
        %v699 = vld [vmem:[%s206 + $0xbd8] sm:$0x11]
        %v700 = vld [vmem:[%s206 + $0xbe0] sm:$0x11]
        %v701 = vld [vmem:[%s206 + $0xbe8] sm:$0x11]
        %v702 = vld [vmem:[%s206 + $0xbf0] sm:$0x11]
        %v703 = vld [vmem:[%s206 + $0xbf8] sm:$0x11]
        %v704 = vld [vmem:[%s206 + $0xc00] sm:$0x11]
        %v705 = vld [vmem:[%s206 + $0xc08] sm:$0x11]
        %v706 = vld [vmem:[%s206 + $0xc10] sm:$0x11]
        %v707 = vld [vmem:[%s206 + $0xc18] sm:$0x11]
        %v708 = vld [vmem:[%s206 + $0xc20] sm:$0x11]
        %v709 = vld [vmem:[%s206 + $0xc28] sm:$0x11]
        %v710 = vld [vmem:[%s206 + $0xc30] sm:$0x11]
        %v711 = vld [vmem:[%s206 + $0xc38] sm:$0x11]
        %v712 = vld [vmem:[%s206 + $0xc40] sm:$0x11]
        %v713 = vld [vmem:[%s206 + $0xc48] sm:$0x11]
        %v714 = vld [vmem:[%s206 + $0xc50] sm:$0x11]
        %v715 = vld [vmem:[%s206 + $0xc58] sm:$0x11]
        %v716 = vld [vmem:[%s206 + $0xc60] sm:$0x11]
        %v717 = vld [vmem:[%s206 + $0xc68] sm:$0x11]
        %v718 = vld [vmem:[%s206 + $0xc70] sm:$0x11]
        %v719 = vld [vmem:[%s206 + $0xc78] sm:$0x11]
        %v720 = vld [vmem:[%s206 + $0xc80] sm:$0x11]
        %v721 = vld [vmem:[%s206 + $0xc88] sm:$0x11]
        %v722 = vld [vmem:[%s206 + $0xc90] sm:$0x11]
        %v723 = vld [vmem:[%s206 + $0xc98] sm:$0x11]
        %v724 = vld [vmem:[%s206 + $0xca0] sm:$0x11]
        %v725 = vld [vmem:[%s206 + $0xca8] sm:$0x11]
        %v726 = vld [vmem:[%s206 + $0xcb0] sm:$0x11]
        %v727 = vld [vmem:[%s206 + $0xcb8] sm:$0x11]
        %v728 = vld [vmem:[%s206 + $0xcc0] sm:$0x11]
        %v729 = vld [vmem:[%s206 + $0xcc8] sm:$0x11]
        %v730 = vld [vmem:[%s206 + $0xcd0] sm:$0x11]
        %v731 = vld [vmem:[%s206 + $0xcd8] sm:$0x11]
        %v732 = vld [vmem:[%s206 + $0xce0] sm:$0x11]
        %v733 = vld [vmem:[%s206 + $0xce8] sm:$0x11]
        %v734 = vld [vmem:[%s206 + $0xcf0] sm:$0x11]
        %v735 = vld [vmem:[%s206 + $0xcf8] sm:$0x11]
        %v736 = vld [vmem:[%s206 + $0xd00] sm:$0x11]
        %v737 = vld [vmem:[%s206 + $0xd08] sm:$0x11]
        %v738 = vld [vmem:[%s206 + $0xd10] sm:$0x11]
        %v739 = vld [vmem:[%s206 + $0xd18] sm:$0x11]
        %v740 = vld [vmem:[%s206 + $0xd20] sm:$0x11]
        %v741 = vld [vmem:[%s206 + $0xd28] sm:$0x11]
        %v742 = vld [vmem:[%s206 + $0xd30] sm:$0x11]
        %v743 = vld [vmem:[%s206 + $0xd38] sm:$0x11]
        %v744 = vld [vmem:[%s206 + $0xd40] sm:$0x11]
        %v745 = vld [vmem:[%s206 + $0xd48] sm:$0x11]
        %v746 = vld [vmem:[%s206 + $0xd50] sm:$0x11]
        %v747 = vld [vmem:[%s206 + $0xd58] sm:$0x11]
        %v748 = vld [vmem:[%s206 + $0xd60] sm:$0x11]
        %v749 = vld [vmem:[%s206 + $0xd68] sm:$0x11]
        %v750 = vld [vmem:[%s206 + $0xd70] sm:$0x11]
        %v751 = vld [vmem:[%s206 + $0xd78] sm:$0x11]
        %v752 = vld [vmem:[%s206 + $0xd80] sm:$0x11]
        %v753 = vld [vmem:[%s206 + $0xd88] sm:$0x11]
        %v754 = vld [vmem:[%s206 + $0xd90] sm:$0x11]
        %v755 = vld [vmem:[%s206 + $0xd98] sm:$0x11]
        %v756 = vld [vmem:[%s206 + $0xda0] sm:$0x11]
        %v757 = vld [vmem:[%s206 + $0xda8] sm:$0x11]
        %v758 = vld [vmem:[%s206 + $0xdb0] sm:$0x11]
        %v759 = vld [vmem:[%s206 + $0xdb8] sm:$0x11]
        %v760 = vld [vmem:[%s206 + $0xdc0] sm:$0x11]
        %v761 = vld [vmem:[%s206 + $0xdc8] sm:$0x11]
        %v762 = vld [vmem:[%s206 + $0xdd0] sm:$0x11]
        %v763 = vld [vmem:[%s206 + $0xdd8] sm:$0x11]
        %v764 = vld [vmem:[%s206 + $0xde0] sm:$0x11]
        %v765 = vld [vmem:[%s206 + $0xde8] sm:$0x11]
        %v766 = vld [vmem:[%s206 + $0xdf0] sm:$0x11]
        %v767 = vld [vmem:[%s206 + $0xdf8] sm:$0x11]
        %v768 = vld [vmem:[%s206 + $0xe00] sm:$0x11]
        %v769 = vld [vmem:[%s206 + $0xe08] sm:$0x11]
        %v770 = vld [vmem:[%s206 + $0xe10] sm:$0x11]
        %v771 = vld [vmem:[%s206 + $0xe18] sm:$0x11]
        %v772 = vld [vmem:[%s206 + $0xe20] sm:$0x11]
        %v773 = vld [vmem:[%s206 + $0xe28] sm:$0x11]
        %v774 = vld [vmem:[%s206 + $0xe30] sm:$0x11]
        %v775 = vld [vmem:[%s206 + $0xe38] sm:$0x11]
        %v776 = vld [vmem:[%s206 + $0xe40] sm:$0x11]
        %v777 = vld [vmem:[%s206 + $0xe48] sm:$0x11]
        %v778 = vld [vmem:[%s206 + $0xe50] sm:$0x11]
        %v779 = vld [vmem:[%s206 + $0xe58] sm:$0x11]
        %v780 = vld [vmem:[%s206 + $0xe60] sm:$0x11]
        %v781 = vld [vmem:[%s206 + $0xe68] sm:$0x11]
        %v782 = vld [vmem:[%s206 + $0xe70] sm:$0x11]
        %v783 = vld [vmem:[%s206 + $0xe78] sm:$0x11]
        %v784 = vld [vmem:[%s206 + $0xe80] sm:$0x11]
        %v785 = vld [vmem:[%s206 + $0xe88] sm:$0x11]
        %v786 = vld [vmem:[%s206 + $0xe90] sm:$0x11]
        %v787 = vld [vmem:[%s206 + $0xe98] sm:$0x11]
        %v788 = vld [vmem:[%s206 + $0xea0] sm:$0x11]
        %v789 = vld [vmem:[%s206 + $0xea8] sm:$0x11]
        %v790 = vld [vmem:[%s206 + $0xeb0] sm:$0x11]
        %v791 = vld [vmem:[%s206 + $0xeb8] sm:$0x11]
        %v792 = vld [vmem:[%s206 + $0xec0] sm:$0x11]
        %v793 = vld [vmem:[%s206 + $0xec8] sm:$0x11]
        %v794 = vld [vmem:[%s206 + $0xed0] sm:$0x11]
        %v795 = vld [vmem:[%s206 + $0xed8] sm:$0x11]
        %v796 = vld [vmem:[%s206 + $0xee0] sm:$0x11]
        %v797 = vld [vmem:[%s206 + $0xee8] sm:$0x11]
        %v798 = vld [vmem:[%s206 + $0xef0] sm:$0x11]
        %v799 = vld [vmem:[%s206 + $0xef8] sm:$0x11]
        %v800 = vld [vmem:[%s206 + $0xf00] sm:$0x11]
        %v801 = vld [vmem:[%s206 + $0xf08] sm:$0x11]
        %v802 = vld [vmem:[%s206 + $0xf10] sm:$0x11]
        %v803 = vld [vmem:[%s206 + $0xf18] sm:$0x11]
        %v804 = vld [vmem:[%s206 + $0xf20] sm:$0x11]
        %v805 = vld [vmem:[%s206 + $0xf28] sm:$0x11]
        %v806 = vld [vmem:[%s206 + $0xf30] sm:$0x11]
        %v807 = vld [vmem:[%s206 + $0xf38] sm:$0x11]
        %v808 = vld [vmem:[%s206 + $0xf40] sm:$0x11]
        %v809 = vld [vmem:[%s206 + $0xf48] sm:$0x11]
        %v810 = vld [vmem:[%s206 + $0xf50] sm:$0x11]
        %v811 = vld [vmem:[%s206 + $0xf58] sm:$0x11]
        %v812 = vld [vmem:[%s206 + $0xf60] sm:$0x11]
        %v813 = vld [vmem:[%s206 + $0xf68] sm:$0x11]
        %v814 = vld [vmem:[%s206 + $0xf70] sm:$0x11]
        %v815 = vld [vmem:[%s206 + $0xf78] sm:$0x11]
        %v816 = vld [vmem:[%s206 + $0xf80] sm:$0x11]
        %v817 = vld [vmem:[%s206 + $0xf88] sm:$0x11]
        %v818 = vld [vmem:[%s206 + $0xf90] sm:$0x11]
        %v819 = vld [vmem:[%s206 + $0xf98] sm:$0x11]
        %v820 = vld [vmem:[%s206 + $0xfa0] sm:$0x11]
        %v821 = vld [vmem:[%s206 + $0xfa8] sm:$0x11]
        %v822 = vld [vmem:[%s206 + $0xfb0] sm:$0x11]
        %v823 = vld [vmem:[%s206 + $0xfb8] sm:$0x11]
        %v824 = vld [vmem:[%s206 + $0xfc0] sm:$0x11]
        %v825 = vld [vmem:[%s206 + $0xfc8] sm:$0x11]
        %v826 = vld [vmem:[%s206 + $0xfd0] sm:$0x11]
        %v827 = vld [vmem:[%s206 + $0xfd8] sm:$0x11]
        %v828 = vld [vmem:[%s206 + $0xfe0] sm:$0x11]
        %v829 = vld [vmem:[%s206 + $0xfe8] sm:$0x11]
        %v830 = vld [vmem:[%s206 + $0xff0] sm:$0x11]
        %v831 = vld [vmem:[%s206 + $0xff8] sm:$0x11]
        %833 = vst [vmem:[#allocation1] ss:$9 sm:$0xff] %v256
        %v834 = vld [vmem:[#allocation1] sm:$0xff]
        %v835 = vld [vmem:[#allocation1 + $0x9] sm:$0xff]
        %v836 = vld [vmem:[#allocation1 + $0x12] sm:$0xff]
        %v837 = vld [vmem:[#allocation1 + $0x1b] sm:$0xff]
        %v838 = vld [vmem:[#allocation1 + $0x24] sm:$0xff]
        %v839 = vld [vmem:[#allocation1 + $0x2d] sm:$0xff]
        %v840 = vld [vmem:[#allocation1 + $0x36] sm:$0xff]
        %v841 = vld [vmem:[#allocation1 + $0x3f] sm:$0xff]
        %843 = vst [vmem:[#allocation1] ss:$9 sm:$0xff] %v257
        %v844 = vld [vmem:[#allocation1] sm:$0xff]
        %v845 = vld [vmem:[#allocation1 + $0x9] sm:$0xff]
        %v846 = vld [vmem:[#allocation1 + $0x12] sm:$0xff]
        %v847 = vld [vmem:[#allocation1 + $0x1b] sm:$0xff]
        %v848 = vld [vmem:[#allocation1 + $0x24] sm:$0xff]
        %v849 = vld [vmem:[#allocation1 + $0x2d] sm:$0xff]
        %v850 = vld [vmem:[#allocation1 + $0x36] sm:$0xff]
        %v851 = vld [vmem:[#allocation1 + $0x3f] sm:$0xff]
        %853 = vst [vmem:[#allocation1] ss:$9 sm:$0xff] %v258
        %v854 = vld [vmem:[#allocation1] sm:$0xff]
        %v855 = vld [vmem:[#allocation1 + $0x9] sm:$0xff]
        %v856 = vld [vmem:[#allocation1 + $0x12] sm:$0xff]
        %v857 = vld [vmem:[#allocation1 + $0x1b] sm:$0xff]
        %v858 = vld [vmem:[#allocation1 + $0x24] sm:$0xff]
        %v859 = vld [vmem:[#allocation1 + $0x2d] sm:$0xff]
        %v860 = vld [vmem:[#allocation1 + $0x36] sm:$0xff]
        %v861 = vld [vmem:[#allocation1 + $0x3f] sm:$0xff]
        %863 = vst [vmem:[#allocation1] ss:$9 sm:$0xff] %v259
        %v864 = vld [vmem:[#allocation1] sm:$0xff]
        %v865 = vld [vmem:[#allocation1 + $0x9] sm:$0xff]
        %v866 = vld [vmem:[#allocation1 + $0x12] sm:$0xff]
        %v867 = vld [vmem:[#allocation1 + $0x1b] sm:$0xff]
        %v868 = vld [vmem:[#allocation1 + $0x24] sm:$0xff]
        %v869 = vld [vmem:[#allocation1 + $0x2d] sm:$0xff]
        %v870 = vld [vmem:[#allocation1 + $0x36] sm:$0xff]
        %v871 = vld [vmem:[#allocation1 + $0x3f] sm:$0xff]
        %873 = vst [vmem:[#allocation1] ss:$9 sm:$0xff] %v260
        %v874 = vld [vmem:[#allocation1] sm:$0xff]
        %v875 = vld [vmem:[#allocation1 + $0x9] sm:$0xff]
        %v876 = vld [vmem:[#allocation1 + $0x12] sm:$0xff]
        %v877 = vld [vmem:[#allocation1 + $0x1b] sm:$0xff]
        %v878 = vld [vmem:[#allocation1 + $0x24] sm:$0xff]
        %v879 = vld [vmem:[#allocation1 + $0x2d] sm:$0xff]
        %v880 = vld [vmem:[#allocation1 + $0x36] sm:$0xff]
        %v881 = vld [vmem:[#allocation1 + $0x3f] sm:$0xff]
        %883 = vst [vmem:[#allocation1] ss:$9 sm:$0xff] %v261
        %v884 = vld [vmem:[#allocation1] sm:$0xff]
        %v885 = vld [vmem:[#allocation1 + $0x9] sm:$0xff]
        %v886 = vld [vmem:[#allocation1 + $0x12] sm:$0xff]
        %v887 = vld [vmem:[#allocation1 + $0x1b] sm:$0xff]
        %v888 = vld [vmem:[#allocation1 + $0x24] sm:$0xff]
        %v889 = vld [vmem:[#allocation1 + $0x2d] sm:$0xff]
        %v890 = vld [vmem:[#allocation1 + $0x36] sm:$0xff]
        %v891 = vld [vmem:[#allocation1 + $0x3f] sm:$0xff]
        %893 = vst [vmem:[#allocation1] ss:$9 sm:$0xff] %v262
        %v894 = vld [vmem:[#allocation1] sm:$0xff]
        %v895 = vld [vmem:[#allocation1 + $0x9] sm:$0xff]
        %v896 = vld [vmem:[#allocation1 + $0x12] sm:$0xff]
        %v897 = vld [vmem:[#allocation1 + $0x1b] sm:$0xff]
        %v898 = vld [vmem:[#allocation1 + $0x24] sm:$0xff]
        %v899 = vld [vmem:[#allocation1 + $0x2d] sm:$0xff]
        %v900 = vld [vmem:[#allocation1 + $0x36] sm:$0xff]
        %v901 = vld [vmem:[#allocation1 + $0x3f] sm:$0xff]
        %903 = vst [vmem:[#allocation1] ss:$9 sm:$0xff] %v263
        %v904 = vld [vmem:[#allocation1] sm:$0xff]
        %v905 = vld [vmem:[#allocation1 + $0x9] sm:$0xff]
        %v906 = vld [vmem:[#allocation1 + $0x12] sm:$0xff]
        %v907 = vld [vmem:[#allocation1 + $0x1b] sm:$0xff]
        %v908 = vld [vmem:[#allocation1 + $0x24] sm:$0xff]
        %v909 = vld [vmem:[#allocation1 + $0x2d] sm:$0xff]
        %v910 = vld [vmem:[#allocation1 + $0x36] sm:$0xff]
        %v911 = vld [vmem:[#allocation1 + $0x3f] sm:$0xff]
        %913 = vst [vmem:[#allocation1] ss:$9 sm:$0xff] %v264
        %v914 = vld [vmem:[#allocation1] sm:$0xff]
        %v915 = vld [vmem:[#allocation1 + $0x9] sm:$0xff]
        %v916 = vld [vmem:[#allocation1 + $0x12] sm:$0xff]
        %v917 = vld [vmem:[#allocation1 + $0x1b] sm:$0xff]
        %v918 = vld [vmem:[#allocation1 + $0x24] sm:$0xff]
        %v919 = vld [vmem:[#allocation1 + $0x2d] sm:$0xff]
        %v920 = vld [vmem:[#allocation1 + $0x36] sm:$0xff]
        %v921 = vld [vmem:[#allocation1 + $0x3f] sm:$0xff]
        %923 = vst [vmem:[#allocation1] ss:$9 sm:$0xff] %v265
        %v924 = vld [vmem:[#allocation1] sm:$0xff]
        %v925 = vld [vmem:[#allocation1 + $0x9] sm:$0xff]
        %v926 = vld [vmem:[#allocation1 + $0x12] sm:$0xff]
        %v927 = vld [vmem:[#allocation1 + $0x1b] sm:$0xff]
        %v928 = vld [vmem:[#allocation1 + $0x24] sm:$0xff]
        %v929 = vld [vmem:[#allocation1 + $0x2d] sm:$0xff]
        %v930 = vld [vmem:[#allocation1 + $0x36] sm:$0xff]
        %v931 = vld [vmem:[#allocation1 + $0x3f] sm:$0xff]
        %933 = vst [vmem:[#allocation1] ss:$9 sm:$0xff] %v266
        %v934 = vld [vmem:[#allocation1] sm:$0xff]
        %v935 = vld [vmem:[#allocation1 + $0x9] sm:$0xff]
        %v936 = vld [vmem:[#allocation1 + $0x12] sm:$0xff]
        %v937 = vld [vmem:[#allocation1 + $0x1b] sm:$0xff]
        %v938 = vld [vmem:[#allocation1 + $0x24] sm:$0xff]
        %v939 = vld [vmem:[#allocation1 + $0x2d] sm:$0xff]
        %v940 = vld [vmem:[#allocation1 + $0x36] sm:$0xff]
        %v941 = vld [vmem:[#allocation1 + $0x3f] sm:$0xff]
        %943 = vst [vmem:[#allocation1] ss:$9 sm:$0xff] %v267
        %v944 = vld [vmem:[#allocation1] sm:$0xff]
        %v945 = vld [vmem:[#allocation1 + $0x9] sm:$0xff]
        %v946 = vld [vmem:[#allocation1 + $0x12] sm:$0xff]
        %v947 = vld [vmem:[#allocation1 + $0x1b] sm:$0xff]
        %v948 = vld [vmem:[#allocation1 + $0x24] sm:$0xff]
        %v949 = vld [vmem:[#allocation1 + $0x2d] sm:$0xff]
        %v950 = vld [vmem:[#allocation1 + $0x36] sm:$0xff]
        %v951 = vld [vmem:[#allocation1 + $0x3f] sm:$0xff]
        %953 = vst [vmem:[#allocation1] ss:$9 sm:$0xff] %v268
        %v954 = vld [vmem:[#allocation1] sm:$0xff]
        %v955 = vld [vmem:[#allocation1 + $0x9] sm:$0xff]
        %v956 = vld [vmem:[#allocation1 + $0x12] sm:$0xff]
        %v957 = vld [vmem:[#allocation1 + $0x1b] sm:$0xff]
        %v958 = vld [vmem:[#allocation1 + $0x24] sm:$0xff]
        %v959 = vld [vmem:[#allocation1 + $0x2d] sm:$0xff]
        %v960 = vld [vmem:[#allocation1 + $0x36] sm:$0xff]
        %v961 = vld [vmem:[#allocation1 + $0x3f] sm:$0xff]
        %963 = vst [vmem:[#allocation1] ss:$9 sm:$0xff] %v269
        %v964 = vld [vmem:[#allocation1] sm:$0xff]
        %v965 = vld [vmem:[#allocation1 + $0x9] sm:$0xff]
        %v966 = vld [vmem:[#allocation1 + $0x12] sm:$0xff]
        %v967 = vld [vmem:[#allocation1 + $0x1b] sm:$0xff]
        %v968 = vld [vmem:[#allocation1 + $0x24] sm:$0xff]
        %v969 = vld [vmem:[#allocation1 + $0x2d] sm:$0xff]
        %v970 = vld [vmem:[#allocation1 + $0x36] sm:$0xff]
        %v971 = vld [vmem:[#allocation1 + $0x3f] sm:$0xff]
        %973 = vst [vmem:[#allocation1] ss:$9 sm:$0xff] %v270
        %v974 = vld [vmem:[#allocation1] sm:$0xff]
        %v975 = vld [vmem:[#allocation1 + $0x9] sm:$0xff]
        %v976 = vld [vmem:[#allocation1 + $0x12] sm:$0xff]
        %v977 = vld [vmem:[#allocation1 + $0x1b] sm:$0xff]
        %v978 = vld [vmem:[#allocation1 + $0x24] sm:$0xff]
        %v979 = vld [vmem:[#allocation1 + $0x2d] sm:$0xff]
        %v980 = vld [vmem:[#allocation1 + $0x36] sm:$0xff]
        %v981 = vld [vmem:[#allocation1 + $0x3f] sm:$0xff]
        %983 = vst [vmem:[#allocation1] ss:$9 sm:$0xff] %v271
        %v984 = vld [vmem:[#allocation1] sm:$0xff]
        %v985 = vld [vmem:[#allocation1 + $0x9] sm:$0xff]
        %v986 = vld [vmem:[#allocation1 + $0x12] sm:$0xff]
        %v987 = vld [vmem:[#allocation1 + $0x1b] sm:$0xff]
        %v988 = vld [vmem:[#allocation1 + $0x24] sm:$0xff]
        %v989 = vld [vmem:[#allocation1 + $0x2d] sm:$0xff]
        %v990 = vld [vmem:[#allocation1 + $0x36] sm:$0xff]
        %v991 = vld [vmem:[#allocation1 + $0x3f] sm:$0xff]
        %993 = vst [vmem:[#allocation1] ss:$9 sm:$0xff] %v272
        %v994 = vld [vmem:[#allocation1] sm:$0xff]
        %v995 = vld [vmem:[#allocation1 + $0x9] sm:$0xff]
        %v996 = vld [vmem:[#allocation1 + $0x12] sm:$0xff]
        %v997 = vld [vmem:[#allocation1 + $0x1b] sm:$0xff]
        %v998 = vld [vmem:[#allocation1 + $0x24] sm:$0xff]
        %v999 = vld [vmem:[#allocation1 + $0x2d] sm:$0xff]
        %v1000 = vld [vmem:[#allocation1 + $0x36] sm:$0xff]
        %v1001 = vld [vmem:[#allocation1 + $0x3f] sm:$0xff]
        %1003 = vst [vmem:[#allocation1] ss:$9 sm:$0xff] %v273
        %v1004 = vld [vmem:[#allocation1] sm:$0xff]
        %v1005 = vld [vmem:[#allocation1 + $0x9] sm:$0xff]
        %v1006 = vld [vmem:[#allocation1 + $0x12] sm:$0xff]
        %v1007 = vld [vmem:[#allocation1 + $0x1b] sm:$0xff]
        %v1008 = vld [vmem:[#allocation1 + $0x24] sm:$0xff]
        %v1009 = vld [vmem:[#allocation1 + $0x2d] sm:$0xff]
        %v1010 = vld [vmem:[#allocation1 + $0x36] sm:$0xff]
        %v1011 = vld [vmem:[#allocation1 + $0x3f] sm:$0xff]
        %1013 = vst [vmem:[#allocation1] ss:$9 sm:$0xff] %v274
        %v1014 = vld [vmem:[#allocation1] sm:$0xff]
        %v1015 = vld [vmem:[#allocation1 + $0x9] sm:$0xff]
        %v1016 = vld [vmem:[#allocation1 + $0x12] sm:$0xff]
        %v1017 = vld [vmem:[#allocation1 + $0x1b] sm:$0xff]
        %v1018 = vld [vmem:[#allocation1 + $0x24] sm:$0xff]
        %v1019 = vld [vmem:[#allocation1 + $0x2d] sm:$0xff]
        %v1020 = vld [vmem:[#allocation1 + $0x36] sm:$0xff]
        %v1021 = vld [vmem:[#allocation1 + $0x3f] sm:$0xff]
        %1023 = vst [vmem:[#allocation1] ss:$9 sm:$0xff] %v275
        %v1024 = vld [vmem:[#allocation1] sm:$0xff]
        %v1025 = vld [vmem:[#allocation1 + $0x9] sm:$0xff]
        %v1026 = vld [vmem:[#allocation1 + $0x12] sm:$0xff]
        %v1027 = vld [vmem:[#allocation1 + $0x1b] sm:$0xff]
        %v1028 = vld [vmem:[#allocation1 + $0x24] sm:$0xff]
        %v1029 = vld [vmem:[#allocation1 + $0x2d] sm:$0xff]
        %v1030 = vld [vmem:[#allocation1 + $0x36] sm:$0xff]
        %v1031 = vld [vmem:[#allocation1 + $0x3f] sm:$0xff]
        %1033 = vst [vmem:[#allocation1] ss:$9 sm:$0xff] %v276
        %v1034 = vld [vmem:[#allocation1] sm:$0xff]
        %v1035 = vld [vmem:[#allocation1 + $0x9] sm:$0xff]
        %v1036 = vld [vmem:[#allocation1 + $0x12] sm:$0xff]
        %v1037 = vld [vmem:[#allocation1 + $0x1b] sm:$0xff]
        %v1038 = vld [vmem:[#allocation1 + $0x24] sm:$0xff]
        %v1039 = vld [vmem:[#allocation1 + $0x2d] sm:$0xff]
        %v1040 = vld [vmem:[#allocation1 + $0x36] sm:$0xff]
        %v1041 = vld [vmem:[#allocation1 + $0x3f] sm:$0xff]
        %1043 = vst [vmem:[#allocation1] ss:$9 sm:$0xff] %v277
        %v1044 = vld [vmem:[#allocation1] sm:$0xff]
        %v1045 = vld [vmem:[#allocation1 + $0x9] sm:$0xff]
        %v1046 = vld [vmem:[#allocation1 + $0x12] sm:$0xff]
        %v1047 = vld [vmem:[#allocation1 + $0x1b] sm:$0xff]
        %v1048 = vld [vmem:[#allocation1 + $0x24] sm:$0xff]
        %v1049 = vld [vmem:[#allocation1 + $0x2d] sm:$0xff]
        %v1050 = vld [vmem:[#allocation1 + $0x36] sm:$0xff]
        %v1051 = vld [vmem:[#allocation1 + $0x3f] sm:$0xff]
        %1053 = vst [vmem:[#allocation1] ss:$9 sm:$0xff] %v278
        %v1054 = vld [vmem:[#allocation1] sm:$0xff]
        %v1055 = vld [vmem:[#allocation1 + $0x9] sm:$0xff]
        %v1056 = vld [vmem:[#allocation1 + $0x12] sm:$0xff]
        %v1057 = vld [vmem:[#allocation1 + $0x1b] sm:$0xff]
        %v1058 = vld [vmem:[#allocation1 + $0x24] sm:$0xff]
        %v1059 = vld [vmem:[#allocation1 + $0x2d] sm:$0xff]
        %v1060 = vld [vmem:[#allocation1 + $0x36] sm:$0xff]
        %v1061 = vld [vmem:[#allocation1 + $0x3f] sm:$0xff]
        %1063 = vst [vmem:[#allocation1] ss:$9 sm:$0xff] %v279
        %v1064 = vld [vmem:[#allocation1] sm:$0xff]
        %v1065 = vld [vmem:[#allocation1 + $0x9] sm:$0xff]
        %v1066 = vld [vmem:[#allocation1 + $0x12] sm:$0xff]
        %v1067 = vld [vmem:[#allocation1 + $0x1b] sm:$0xff]
        %v1068 = vld [vmem:[#allocation1 + $0x24] sm:$0xff]
        %v1069 = vld [vmem:[#allocation1 + $0x2d] sm:$0xff]
        %v1070 = vld [vmem:[#allocation1 + $0x36] sm:$0xff]
        %v1071 = vld [vmem:[#allocation1 + $0x3f] sm:$0xff]
        %1073 = vst [vmem:[#allocation1] ss:$9 sm:$0xff] %v280
        %v1074 = vld [vmem:[#allocation1] sm:$0xff]
        %v1075 = vld [vmem:[#allocation1 + $0x9] sm:$0xff]
        %v1076 = vld [vmem:[#allocation1 + $0x12] sm:$0xff]
        %v1077 = vld [vmem:[#allocation1 + $0x1b] sm:$0xff]
        %v1078 = vld [vmem:[#allocation1 + $0x24] sm:$0xff]
        %v1079 = vld [vmem:[#allocation1 + $0x2d] sm:$0xff]
        %v1080 = vld [vmem:[#allocation1 + $0x36] sm:$0xff]
        %v1081 = vld [vmem:[#allocation1 + $0x3f] sm:$0xff]
        %1083 = vst [vmem:[#allocation1] ss:$9 sm:$0xff] %v281
        %v1084 = vld [vmem:[#allocation1] sm:$0xff]
        %v1085 = vld [vmem:[#allocation1 + $0x9] sm:$0xff]
        %v1086 = vld [vmem:[#allocation1 + $0x12] sm:$0xff]
        %v1087 = vld [vmem:[#allocation1 + $0x1b] sm:$0xff]
        %v1088 = vld [vmem:[#allocation1 + $0x24] sm:$0xff]
        %v1089 = vld [vmem:[#allocation1 + $0x2d] sm:$0xff]
        %v1090 = vld [vmem:[#allocation1 + $0x36] sm:$0xff]
        %v1091 = vld [vmem:[#allocation1 + $0x3f] sm:$0xff]
        %1093 = vst [vmem:[#allocation1] ss:$9 sm:$0xff] %v282
        %v1094 = vld [vmem:[#allocation1] sm:$0xff]
        %v1095 = vld [vmem:[#allocation1 + $0x9] sm:$0xff]
        %v1096 = vld [vmem:[#allocation1 + $0x12] sm:$0xff]
        %v1097 = vld [vmem:[#allocation1 + $0x1b] sm:$0xff]
        %v1098 = vld [vmem:[#allocation1 + $0x24] sm:$0xff]
        %v1099 = vld [vmem:[#allocation1 + $0x2d] sm:$0xff]
        %v1100 = vld [vmem:[#allocation1 + $0x36] sm:$0xff]
        %v1101 = vld [vmem:[#allocation1 + $0x3f] sm:$0xff]
        %1103 = vst [vmem:[#allocation1] ss:$9 sm:$0xff] %v283
        %v1104 = vld [vmem:[#allocation1] sm:$0xff]
        %v1105 = vld [vmem:[#allocation1 + $0x9] sm:$0xff]
        %v1106 = vld [vmem:[#allocation1 + $0x12] sm:$0xff]
        %v1107 = vld [vmem:[#allocation1 + $0x1b] sm:$0xff]
        %v1108 = vld [vmem:[#allocation1 + $0x24] sm:$0xff]
        %v1109 = vld [vmem:[#allocation1 + $0x2d] sm:$0xff]
        %v1110 = vld [vmem:[#allocation1 + $0x36] sm:$0xff]
        %v1111 = vld [vmem:[#allocation1 + $0x3f] sm:$0xff]
        %1113 = vst [vmem:[#allocation1] ss:$9 sm:$0xff] %v284
        %v1114 = vld [vmem:[#allocation1] sm:$0xff]
        %v1115 = vld [vmem:[#allocation1 + $0x9] sm:$0xff]
        %v1116 = vld [vmem:[#allocation1 + $0x12] sm:$0xff]
        %v1117 = vld [vmem:[#allocation1 + $0x1b] sm:$0xff]
        %v1118 = vld [vmem:[#allocation1 + $0x24] sm:$0xff]
        %v1119 = vld [vmem:[#allocation1 + $0x2d] sm:$0xff]
        %v1120 = vld [vmem:[#allocation1 + $0x36] sm:$0xff]
        %v1121 = vld [vmem:[#allocation1 + $0x3f] sm:$0xff]
        %1123 = vst [vmem:[#allocation1] ss:$9 sm:$0xff] %v285
        %v1124 = vld [vmem:[#allocation1] sm:$0xff]
        %v1125 = vld [vmem:[#allocation1 + $0x9] sm:$0xff]
        %v1126 = vld [vmem:[#allocation1 + $0x12] sm:$0xff]
        %v1127 = vld [vmem:[#allocation1 + $0x1b] sm:$0xff]
        %v1128 = vld [vmem:[#allocation1 + $0x24] sm:$0xff]
        %v1129 = vld [vmem:[#allocation1 + $0x2d] sm:$0xff]
        %v1130 = vld [vmem:[#allocation1 + $0x36] sm:$0xff]
        %v1131 = vld [vmem:[#allocation1 + $0x3f] sm:$0xff]
        %1133 = vst [vmem:[#allocation1] ss:$9 sm:$0xff] %v286
        %v1134 = vld [vmem:[#allocation1] sm:$0xff]
        %v1135 = vld [vmem:[#allocation1 + $0x9] sm:$0xff]
        %v1136 = vld [vmem:[#allocation1 + $0x12] sm:$0xff]
        %v1137 = vld [vmem:[#allocation1 + $0x1b] sm:$0xff]
        %v1138 = vld [vmem:[#allocation1 + $0x24] sm:$0xff]
        %v1139 = vld [vmem:[#allocation1 + $0x2d] sm:$0xff]
        %v1140 = vld [vmem:[#allocation1 + $0x36] sm:$0xff]
        %v1141 = vld [vmem:[#allocation1 + $0x3f] sm:$0xff]
        %1143 = vst [vmem:[#allocation1] ss:$9 sm:$0xff] %v287
        %v1144 = vld [vmem:[#allocation1] sm:$0xff]
        %v1145 = vld [vmem:[#allocation1 + $0x9] sm:$0xff]
        %v1146 = vld [vmem:[#allocation1 + $0x12] sm:$0xff]
        %v1147 = vld [vmem:[#allocation1 + $0x1b] sm:$0xff]
        %v1148 = vld [vmem:[#allocation1 + $0x24] sm:$0xff]
        %v1149 = vld [vmem:[#allocation1 + $0x2d] sm:$0xff]
        %v1150 = vld [vmem:[#allocation1 + $0x36] sm:$0xff]
        %v1151 = vld [vmem:[#allocation1 + $0x3f] sm:$0xff]
        %1153 = vst [vmem:[#allocation1] ss:$9 sm:$0xff] %v288
        %v1154 = vld [vmem:[#allocation1] sm:$0xff]
        %v1155 = vld [vmem:[#allocation1 + $0x9] sm:$0xff]
        %v1156 = vld [vmem:[#allocation1 + $0x12] sm:$0xff]
        %v1157 = vld [vmem:[#allocation1 + $0x1b] sm:$0xff]
        %v1158 = vld [vmem:[#allocation1 + $0x24] sm:$0xff]
        %v1159 = vld [vmem:[#allocation1 + $0x2d] sm:$0xff]
        %v1160 = vld [vmem:[#allocation1 + $0x36] sm:$0xff]
        %v1161 = vld [vmem:[#allocation1 + $0x3f] sm:$0xff]
        %1163 = vst [vmem:[#allocation1] ss:$9 sm:$0xff] %v289
        %v1164 = vld [vmem:[#allocation1] sm:$0xff]
        %v1165 = vld [vmem:[#allocation1 + $0x9] sm:$0xff]
        %v1166 = vld [vmem:[#allocation1 + $0x12] sm:$0xff]
        %v1167 = vld [vmem:[#allocation1 + $0x1b] sm:$0xff]
        %v1168 = vld [vmem:[#allocation1 + $0x24] sm:$0xff]
        %v1169 = vld [vmem:[#allocation1 + $0x2d] sm:$0xff]
        %v1170 = vld [vmem:[#allocation1 + $0x36] sm:$0xff]
        %v1171 = vld [vmem:[#allocation1 + $0x3f] sm:$0xff]
        %1173 = vst [vmem:[#allocation1] ss:$9 sm:$0xff] %v290
        %v1174 = vld [vmem:[#allocation1] sm:$0xff]
        %v1175 = vld [vmem:[#allocation1 + $0x9] sm:$0xff]
        %v1176 = vld [vmem:[#allocation1 + $0x12] sm:$0xff]
        %v1177 = vld [vmem:[#allocation1 + $0x1b] sm:$0xff]
        %v1178 = vld [vmem:[#allocation1 + $0x24] sm:$0xff]
        %v1179 = vld [vmem:[#allocation1 + $0x2d] sm:$0xff]
        %v1180 = vld [vmem:[#allocation1 + $0x36] sm:$0xff]
        %v1181 = vld [vmem:[#allocation1 + $0x3f] sm:$0xff]
        %1183 = vst [vmem:[#allocation1] ss:$9 sm:$0xff] %v291
        %v1184 = vld [vmem:[#allocation1] sm:$0xff]
        %v1185 = vld [vmem:[#allocation1 + $0x9] sm:$0xff]
        %v1186 = vld [vmem:[#allocation1 + $0x12] sm:$0xff]
        %v1187 = vld [vmem:[#allocation1 + $0x1b] sm:$0xff]
        %v1188 = vld [vmem:[#allocation1 + $0x24] sm:$0xff]
        %v1189 = vld [vmem:[#allocation1 + $0x2d] sm:$0xff]
        %v1190 = vld [vmem:[#allocation1 + $0x36] sm:$0xff]
        %v1191 = vld [vmem:[#allocation1 + $0x3f] sm:$0xff]
        %1193 = vst [vmem:[#allocation1] ss:$9 sm:$0xff] %v292
        %v1194 = vld [vmem:[#allocation1] sm:$0xff]
        %v1195 = vld [vmem:[#allocation1 + $0x9] sm:$0xff]
        %v1196 = vld [vmem:[#allocation1 + $0x12] sm:$0xff]
        %v1197 = vld [vmem:[#allocation1 + $0x1b] sm:$0xff]
        %v1198 = vld [vmem:[#allocation1 + $0x24] sm:$0xff]
        %v1199 = vld [vmem:[#allocation1 + $0x2d] sm:$0xff]
        %v1200 = vld [vmem:[#allocation1 + $0x36] sm:$0xff]
        %v1201 = vld [vmem:[#allocation1 + $0x3f] sm:$0xff]
        %1203 = vst [vmem:[#allocation1] ss:$9 sm:$0xff] %v293
        %v1204 = vld [vmem:[#allocation1] sm:$0xff]
        %v1205 = vld [vmem:[#allocation1 + $0x9] sm:$0xff]
        %v1206 = vld [vmem:[#allocation1 + $0x12] sm:$0xff]
        %v1207 = vld [vmem:[#allocation1 + $0x1b] sm:$0xff]
        %v1208 = vld [vmem:[#allocation1 + $0x24] sm:$0xff]
        %v1209 = vld [vmem:[#allocation1 + $0x2d] sm:$0xff]
        %v1210 = vld [vmem:[#allocation1 + $0x36] sm:$0xff]
        %v1211 = vld [vmem:[#allocation1 + $0x3f] sm:$0xff]
        %1213 = vst [vmem:[#allocation1] ss:$9 sm:$0xff] %v294
        %v1214 = vld [vmem:[#allocation1] sm:$0xff]
        %v1215 = vld [vmem:[#allocation1 + $0x9] sm:$0xff]
        %v1216 = vld [vmem:[#allocation1 + $0x12] sm:$0xff]
        %v1217 = vld [vmem:[#allocation1 + $0x1b] sm:$0xff]
        %v1218 = vld [vmem:[#allocation1 + $0x24] sm:$0xff]
        %v1219 = vld [vmem:[#allocation1 + $0x2d] sm:$0xff]
        %v1220 = vld [vmem:[#allocation1 + $0x36] sm:$0xff]
        %v1221 = vld [vmem:[#allocation1 + $0x3f] sm:$0xff]
        %1223 = vst [vmem:[#allocation1] ss:$9 sm:$0xff] %v295
        %v1224 = vld [vmem:[#allocation1] sm:$0xff]
        %v1225 = vld [vmem:[#allocation1 + $0x9] sm:$0xff]
        %v1226 = vld [vmem:[#allocation1 + $0x12] sm:$0xff]
        %v1227 = vld [vmem:[#allocation1 + $0x1b] sm:$0xff]
        %v1228 = vld [vmem:[#allocation1 + $0x24] sm:$0xff]
        %v1229 = vld [vmem:[#allocation1 + $0x2d] sm:$0xff]
        %v1230 = vld [vmem:[#allocation1 + $0x36] sm:$0xff]
        %v1231 = vld [vmem:[#allocation1 + $0x3f] sm:$0xff]
        %1233 = vst [vmem:[#allocation1] ss:$9 sm:$0xff] %v296
        %v1234 = vld [vmem:[#allocation1] sm:$0xff]
        %v1235 = vld [vmem:[#allocation1 + $0x9] sm:$0xff]
        %v1236 = vld [vmem:[#allocation1 + $0x12] sm:$0xff]
        %v1237 = vld [vmem:[#allocation1 + $0x1b] sm:$0xff]
        %v1238 = vld [vmem:[#allocation1 + $0x24] sm:$0xff]
        %v1239 = vld [vmem:[#allocation1 + $0x2d] sm:$0xff]
        %v1240 = vld [vmem:[#allocation1 + $0x36] sm:$0xff]
        %v1241 = vld [vmem:[#allocation1 + $0x3f] sm:$0xff]
        %1243 = vst [vmem:[#allocation1] ss:$9 sm:$0xff] %v297
        %v1244 = vld [vmem:[#allocation1] sm:$0xff]
        %v1245 = vld [vmem:[#allocation1 + $0x9] sm:$0xff]
        %v1246 = vld [vmem:[#allocation1 + $0x12] sm:$0xff]
        %v1247 = vld [vmem:[#allocation1 + $0x1b] sm:$0xff]
        %v1248 = vld [vmem:[#allocation1 + $0x24] sm:$0xff]
        %v1249 = vld [vmem:[#allocation1 + $0x2d] sm:$0xff]
        %v1250 = vld [vmem:[#allocation1 + $0x36] sm:$0xff]
        %v1251 = vld [vmem:[#allocation1 + $0x3f] sm:$0xff]
        %1253 = vst [vmem:[#allocation1] ss:$9 sm:$0xff] %v298
        %v1254 = vld [vmem:[#allocation1] sm:$0xff]
        %v1255 = vld [vmem:[#allocation1 + $0x9] sm:$0xff]
        %v1256 = vld [vmem:[#allocation1 + $0x12] sm:$0xff]
        %v1257 = vld [vmem:[#allocation1 + $0x1b] sm:$0xff]
        %v1258 = vld [vmem:[#allocation1 + $0x24] sm:$0xff]
        %v1259 = vld [vmem:[#allocation1 + $0x2d] sm:$0xff]
        %v1260 = vld [vmem:[#allocation1 + $0x36] sm:$0xff]
        %v1261 = vld [vmem:[#allocation1 + $0x3f] sm:$0xff]
        %1263 = vst [vmem:[#allocation1] ss:$9 sm:$0xff] %v299
        %v1264 = vld [vmem:[#allocation1] sm:$0xff]
        %v1265 = vld [vmem:[#allocation1 + $0x9] sm:$0xff]
        %v1266 = vld [vmem:[#allocation1 + $0x12] sm:$0xff]
        %v1267 = vld [vmem:[#allocation1 + $0x1b] sm:$0xff]
        %v1268 = vld [vmem:[#allocation1 + $0x24] sm:$0xff]
        %v1269 = vld [vmem:[#allocation1 + $0x2d] sm:$0xff]
        %v1270 = vld [vmem:[#allocation1 + $0x36] sm:$0xff]
        %v1271 = vld [vmem:[#allocation1 + $0x3f] sm:$0xff]
        %1273 = vst [vmem:[#allocation1] ss:$9 sm:$0xff] %v300
        %v1274 = vld [vmem:[#allocation1] sm:$0xff]
        %v1275 = vld [vmem:[#allocation1 + $0x9] sm:$0xff]
        %v1276 = vld [vmem:[#allocation1 + $0x12] sm:$0xff]
        %v1277 = vld [vmem:[#allocation1 + $0x1b] sm:$0xff]
        %v1278 = vld [vmem:[#allocation1 + $0x24] sm:$0xff]
        %v1279 = vld [vmem:[#allocation1 + $0x2d] sm:$0xff]
        %v1280 = vld [vmem:[#allocation1 + $0x36] sm:$0xff]
        %v1281 = vld [vmem:[#allocation1 + $0x3f] sm:$0xff]
        %1283 = vst [vmem:[#allocation1] ss:$9 sm:$0xff] %v301
        %v1284 = vld [vmem:[#allocation1] sm:$0xff]
        %v1285 = vld [vmem:[#allocation1 + $0x9] sm:$0xff]
        %v1286 = vld [vmem:[#allocation1 + $0x12] sm:$0xff]
        %v1287 = vld [vmem:[#allocation1 + $0x1b] sm:$0xff]
        %v1288 = vld [vmem:[#allocation1 + $0x24] sm:$0xff]
        %v1289 = vld [vmem:[#allocation1 + $0x2d] sm:$0xff]
        %v1290 = vld [vmem:[#allocation1 + $0x36] sm:$0xff]
        %v1291 = vld [vmem:[#allocation1 + $0x3f] sm:$0xff]
        %1293 = vst [vmem:[#allocation1] ss:$9 sm:$0xff] %v302
        %v1294 = vld [vmem:[#allocation1] sm:$0xff]
        %v1295 = vld [vmem:[#allocation1 + $0x9] sm:$0xff]
        %v1296 = vld [vmem:[#allocation1 + $0x12] sm:$0xff]
        %v1297 = vld [vmem:[#allocation1 + $0x1b] sm:$0xff]
        %v1298 = vld [vmem:[#allocation1 + $0x24] sm:$0xff]
        %v1299 = vld [vmem:[#allocation1 + $0x2d] sm:$0xff]
        %v1300 = vld [vmem:[#allocation1 + $0x36] sm:$0xff]
        %v1301 = vld [vmem:[#allocation1 + $0x3f] sm:$0xff]
        %1303 = vst [vmem:[#allocation1] ss:$9 sm:$0xff] %v303
        %v1304 = vld [vmem:[#allocation1] sm:$0xff]
        %v1305 = vld [vmem:[#allocation1 + $0x9] sm:$0xff]
        %v1306 = vld [vmem:[#allocation1 + $0x12] sm:$0xff]
        %v1307 = vld [vmem:[#allocation1 + $0x1b] sm:$0xff]
        %v1308 = vld [vmem:[#allocation1 + $0x24] sm:$0xff]
        %v1309 = vld [vmem:[#allocation1 + $0x2d] sm:$0xff]
        %v1310 = vld [vmem:[#allocation1 + $0x36] sm:$0xff]
        %v1311 = vld [vmem:[#allocation1 + $0x3f] sm:$0xff]
        %1313 = vst [vmem:[#allocation1] ss:$9 sm:$0xff] %v304
        %v1314 = vld [vmem:[#allocation1] sm:$0xff]
        %v1315 = vld [vmem:[#allocation1 + $0x9] sm:$0xff]
        %v1316 = vld [vmem:[#allocation1 + $0x12] sm:$0xff]
        %v1317 = vld [vmem:[#allocation1 + $0x1b] sm:$0xff]
        %v1318 = vld [vmem:[#allocation1 + $0x24] sm:$0xff]
        %v1319 = vld [vmem:[#allocation1 + $0x2d] sm:$0xff]
        %v1320 = vld [vmem:[#allocation1 + $0x36] sm:$0xff]
        %v1321 = vld [vmem:[#allocation1 + $0x3f] sm:$0xff]
        %1323 = vst [vmem:[#allocation1] ss:$9 sm:$0xff] %v305
        %v1324 = vld [vmem:[#allocation1] sm:$0xff]
        %v1325 = vld [vmem:[#allocation1 + $0x9] sm:$0xff]
        %v1326 = vld [vmem:[#allocation1 + $0x12] sm:$0xff]
        %v1327 = vld [vmem:[#allocation1 + $0x1b] sm:$0xff]
        %v1328 = vld [vmem:[#allocation1 + $0x24] sm:$0xff]
        %v1329 = vld [vmem:[#allocation1 + $0x2d] sm:$0xff]
        %v1330 = vld [vmem:[#allocation1 + $0x36] sm:$0xff]
        %v1331 = vld [vmem:[#allocation1 + $0x3f] sm:$0xff]
        %1333 = vst [vmem:[#allocation1] ss:$9 sm:$0xff] %v306
        %v1334 = vld [vmem:[#allocation1] sm:$0xff]
        %v1335 = vld [vmem:[#allocation1 + $0x9] sm:$0xff]
        %v1336 = vld [vmem:[#allocation1 + $0x12] sm:$0xff]
        %v1337 = vld [vmem:[#allocation1 + $0x1b] sm:$0xff]
        %v1338 = vld [vmem:[#allocation1 + $0x24] sm:$0xff]
        %v1339 = vld [vmem:[#allocation1 + $0x2d] sm:$0xff]
        %v1340 = vld [vmem:[#allocation1 + $0x36] sm:$0xff]
        %v1341 = vld [vmem:[#allocation1 + $0x3f] sm:$0xff]
        %1343 = vst [vmem:[#allocation1] ss:$9 sm:$0xff] %v307
        %v1344 = vld [vmem:[#allocation1] sm:$0xff]
        %v1345 = vld [vmem:[#allocation1 + $0x9] sm:$0xff]
        %v1346 = vld [vmem:[#allocation1 + $0x12] sm:$0xff]
        %v1347 = vld [vmem:[#allocation1 + $0x1b] sm:$0xff]
        %v1348 = vld [vmem:[#allocation1 + $0x24] sm:$0xff]
        %v1349 = vld [vmem:[#allocation1 + $0x2d] sm:$0xff]
        %v1350 = vld [vmem:[#allocation1 + $0x36] sm:$0xff]
        %v1351 = vld [vmem:[#allocation1 + $0x3f] sm:$0xff]
        %1353 = vst [vmem:[#allocation1] ss:$9 sm:$0xff] %v308
        %v1354 = vld [vmem:[#allocation1] sm:$0xff]
        %v1355 = vld [vmem:[#allocation1 + $0x9] sm:$0xff]
        %v1356 = vld [vmem:[#allocation1 + $0x12] sm:$0xff]
        %v1357 = vld [vmem:[#allocation1 + $0x1b] sm:$0xff]
        %v1358 = vld [vmem:[#allocation1 + $0x24] sm:$0xff]
        %v1359 = vld [vmem:[#allocation1 + $0x2d] sm:$0xff]
        %v1360 = vld [vmem:[#allocation1 + $0x36] sm:$0xff]
        %v1361 = vld [vmem:[#allocation1 + $0x3f] sm:$0xff]
        %1363 = vst [vmem:[#allocation1] ss:$9 sm:$0xff] %v309
        %v1364 = vld [vmem:[#allocation1] sm:$0xff]
        %v1365 = vld [vmem:[#allocation1 + $0x9] sm:$0xff]
        %v1366 = vld [vmem:[#allocation1 + $0x12] sm:$0xff]
        %v1367 = vld [vmem:[#allocation1 + $0x1b] sm:$0xff]
        %v1368 = vld [vmem:[#allocation1 + $0x24] sm:$0xff]
        %v1369 = vld [vmem:[#allocation1 + $0x2d] sm:$0xff]
        %v1370 = vld [vmem:[#allocation1 + $0x36] sm:$0xff]
        %v1371 = vld [vmem:[#allocation1 + $0x3f] sm:$0xff]
        %1373 = vst [vmem:[#allocation1] ss:$9 sm:$0xff] %v310
        %v1374 = vld [vmem:[#allocation1] sm:$0xff]
        %v1375 = vld [vmem:[#allocation1 + $0x9] sm:$0xff]
        %v1376 = vld [vmem:[#allocation1 + $0x12] sm:$0xff]
        %v1377 = vld [vmem:[#allocation1 + $0x1b] sm:$0xff]
        %v1378 = vld [vmem:[#allocation1 + $0x24] sm:$0xff]
        %v1379 = vld [vmem:[#allocation1 + $0x2d] sm:$0xff]
        %v1380 = vld [vmem:[#allocation1 + $0x36] sm:$0xff]
        %v1381 = vld [vmem:[#allocation1 + $0x3f] sm:$0xff]
        %1383 = vst [vmem:[#allocation1] ss:$9 sm:$0xff] %v311
        %v1384 = vld [vmem:[#allocation1] sm:$0xff]
        %v1385 = vld [vmem:[#allocation1 + $0x9] sm:$0xff]
        %v1386 = vld [vmem:[#allocation1 + $0x12] sm:$0xff]
        %v1387 = vld [vmem:[#allocation1 + $0x1b] sm:$0xff]
        %v1388 = vld [vmem:[#allocation1 + $0x24] sm:$0xff]
        %v1389 = vld [vmem:[#allocation1 + $0x2d] sm:$0xff]
        %v1390 = vld [vmem:[#allocation1 + $0x36] sm:$0xff]
        %v1391 = vld [vmem:[#allocation1 + $0x3f] sm:$0xff]
        %1393 = vst [vmem:[#allocation1] ss:$9 sm:$0xff] %v312
        %v1394 = vld [vmem:[#allocation1] sm:$0xff]
        %v1395 = vld [vmem:[#allocation1 + $0x9] sm:$0xff]
        %v1396 = vld [vmem:[#allocation1 + $0x12] sm:$0xff]
        %v1397 = vld [vmem:[#allocation1 + $0x1b] sm:$0xff]
        %v1398 = vld [vmem:[#allocation1 + $0x24] sm:$0xff]
        %v1399 = vld [vmem:[#allocation1 + $0x2d] sm:$0xff]
        %v1400 = vld [vmem:[#allocation1 + $0x36] sm:$0xff]
        %v1401 = vld [vmem:[#allocation1 + $0x3f] sm:$0xff]
        %1403 = vst [vmem:[#allocation1] ss:$9 sm:$0xff] %v313
        %v1404 = vld [vmem:[#allocation1] sm:$0xff]
        %v1405 = vld [vmem:[#allocation1 + $0x9] sm:$0xff]
        %v1406 = vld [vmem:[#allocation1 + $0x12] sm:$0xff]
        %v1407 = vld [vmem:[#allocation1 + $0x1b] sm:$0xff]
        %v1408 = vld [vmem:[#allocation1 + $0x24] sm:$0xff]
        %v1409 = vld [vmem:[#allocation1 + $0x2d] sm:$0xff]
        %v1410 = vld [vmem:[#allocation1 + $0x36] sm:$0xff]
        %v1411 = vld [vmem:[#allocation1 + $0x3f] sm:$0xff]
        %1413 = vst [vmem:[#allocation1] ss:$9 sm:$0xff] %v314
        %v1414 = vld [vmem:[#allocation1] sm:$0xff]
        %v1415 = vld [vmem:[#allocation1 + $0x9] sm:$0xff]
        %v1416 = vld [vmem:[#allocation1 + $0x12] sm:$0xff]
        %v1417 = vld [vmem:[#allocation1 + $0x1b] sm:$0xff]
        %v1418 = vld [vmem:[#allocation1 + $0x24] sm:$0xff]
        %v1419 = vld [vmem:[#allocation1 + $0x2d] sm:$0xff]
        %v1420 = vld [vmem:[#allocation1 + $0x36] sm:$0xff]
        %v1421 = vld [vmem:[#allocation1 + $0x3f] sm:$0xff]
        %1423 = vst [vmem:[#allocation1] ss:$9 sm:$0xff] %v315
        %v1424 = vld [vmem:[#allocation1] sm:$0xff]
        %v1425 = vld [vmem:[#allocation1 + $0x9] sm:$0xff]
        %v1426 = vld [vmem:[#allocation1 + $0x12] sm:$0xff]
        %v1427 = vld [vmem:[#allocation1 + $0x1b] sm:$0xff]
        %v1428 = vld [vmem:[#allocation1 + $0x24] sm:$0xff]
        %v1429 = vld [vmem:[#allocation1 + $0x2d] sm:$0xff]
        %v1430 = vld [vmem:[#allocation1 + $0x36] sm:$0xff]
        %v1431 = vld [vmem:[#allocation1 + $0x3f] sm:$0xff]
        %1433 = vst [vmem:[#allocation1] ss:$9 sm:$0xff] %v316
        %v1434 = vld [vmem:[#allocation1] sm:$0xff]
        %v1435 = vld [vmem:[#allocation1 + $0x9] sm:$0xff]
        %v1436 = vld [vmem:[#allocation1 + $0x12] sm:$0xff]
        %v1437 = vld [vmem:[#allocation1 + $0x1b] sm:$0xff]
        %v1438 = vld [vmem:[#allocation1 + $0x24] sm:$0xff]
        %v1439 = vld [vmem:[#allocation1 + $0x2d] sm:$0xff]
        %v1440 = vld [vmem:[#allocation1 + $0x36] sm:$0xff]
        %v1441 = vld [vmem:[#allocation1 + $0x3f] sm:$0xff]
        %1443 = vst [vmem:[#allocation1] ss:$9 sm:$0xff] %v317
        %v1444 = vld [vmem:[#allocation1] sm:$0xff]
        %v1445 = vld [vmem:[#allocation1 + $0x9] sm:$0xff]
        %v1446 = vld [vmem:[#allocation1 + $0x12] sm:$0xff]
        %v1447 = vld [vmem:[#allocation1 + $0x1b] sm:$0xff]
        %v1448 = vld [vmem:[#allocation1 + $0x24] sm:$0xff]
        %v1449 = vld [vmem:[#allocation1 + $0x2d] sm:$0xff]
        %v1450 = vld [vmem:[#allocation1 + $0x36] sm:$0xff]
        %v1451 = vld [vmem:[#allocation1 + $0x3f] sm:$0xff]
        %1453 = vst [vmem:[#allocation1] ss:$9 sm:$0xff] %v318
        %v1454 = vld [vmem:[#allocation1] sm:$0xff]
        %v1455 = vld [vmem:[#allocation1 + $0x9] sm:$0xff]
        %v1456 = vld [vmem:[#allocation1 + $0x12] sm:$0xff]
        %v1457 = vld [vmem:[#allocation1 + $0x1b] sm:$0xff]
        %v1458 = vld [vmem:[#allocation1 + $0x24] sm:$0xff]
        %v1459 = vld [vmem:[#allocation1 + $0x2d] sm:$0xff]
        %v1460 = vld [vmem:[#allocation1 + $0x36] sm:$0xff]
        %v1461 = vld [vmem:[#allocation1 + $0x3f] sm:$0xff]
        %1463 = vst [vmem:[#allocation1] ss:$9 sm:$0xff] %v319
        %v1464 = vld [vmem:[#allocation1] sm:$0xff]
        %v1465 = vld [vmem:[#allocation1 + $0x9] sm:$0xff]
        %v1466 = vld [vmem:[#allocation1 + $0x12] sm:$0xff]
        %v1467 = vld [vmem:[#allocation1 + $0x1b] sm:$0xff]
        %v1468 = vld [vmem:[#allocation1 + $0x24] sm:$0xff]
        %v1469 = vld [vmem:[#allocation1 + $0x2d] sm:$0xff]
        %v1470 = vld [vmem:[#allocation1 + $0x36] sm:$0xff]
        %v1471 = vld [vmem:[#allocation1 + $0x3f] sm:$0xff]
        %v2496 = vunpack.c.l.b16 %v320
        %v2497 = vunpack.c.h.b16 %v320
        %v2498 = vunpack.c.l.b16 %v321
        %v2499 = vunpack.c.h.b16 %v321
        %v2500 = vunpack.c.l.b16 %v322
        %v2501 = vunpack.c.h.b16 %v322
        %v2502 = vunpack.c.l.b16 %v323
        %v2503 = vunpack.c.h.b16 %v323
        %v2504 = vunpack.c.l.b16 %v324
        %v2505 = vunpack.c.h.b16 %v324
        %v2506 = vunpack.c.l.b16 %v325
        %v2507 = vunpack.c.h.b16 %v325
        %v2508 = vunpack.c.l.b16 %v326
        %v2509 = vunpack.c.h.b16 %v326
        %v2510 = vunpack.c.l.b16 %v327
        %v2511 = vunpack.c.h.b16 %v327
        %v2512 = vunpack.c.l.b16 %v328
        %v2513 = vunpack.c.h.b16 %v328
        %v2514 = vunpack.c.l.b16 %v329
        %v2515 = vunpack.c.h.b16 %v329
        %v2516 = vunpack.c.l.b16 %v330
        %v2517 = vunpack.c.h.b16 %v330
        %v2518 = vunpack.c.l.b16 %v331
        %v2519 = vunpack.c.h.b16 %v331
        %v2520 = vunpack.c.l.b16 %v332
        %v2521 = vunpack.c.h.b16 %v332
        %v2522 = vunpack.c.l.b16 %v333
        %v2523 = vunpack.c.h.b16 %v333
        %v2524 = vunpack.c.l.b16 %v334
        %v2525 = vunpack.c.h.b16 %v334
        %v2526 = vunpack.c.l.b16 %v335
        %v2527 = vunpack.c.h.b16 %v335
        %v2528 = vunpack.c.l.b16 %v336
        %v2529 = vunpack.c.h.b16 %v336
        %v2530 = vunpack.c.l.b16 %v337
        %v2531 = vunpack.c.h.b16 %v337
        %v2532 = vunpack.c.l.b16 %v338
        %v2533 = vunpack.c.h.b16 %v338
        %v2534 = vunpack.c.l.b16 %v339
        %v2535 = vunpack.c.h.b16 %v339
        %v2536 = vunpack.c.l.b16 %v340
        %v2537 = vunpack.c.h.b16 %v340
        %v2538 = vunpack.c.l.b16 %v341
        %v2539 = vunpack.c.h.b16 %v341
        %v2540 = vunpack.c.l.b16 %v342
        %v2541 = vunpack.c.h.b16 %v342
        %v2542 = vunpack.c.l.b16 %v343
        %v2543 = vunpack.c.h.b16 %v343
        %v2544 = vunpack.c.l.b16 %v344
        %v2545 = vunpack.c.h.b16 %v344
        %v2546 = vunpack.c.l.b16 %v345
        %v2547 = vunpack.c.h.b16 %v345
        %v2548 = vunpack.c.l.b16 %v346
        %v2549 = vunpack.c.h.b16 %v346
        %v2550 = vunpack.c.l.b16 %v347
        %v2551 = vunpack.c.h.b16 %v347
        %v2552 = vunpack.c.l.b16 %v348
        %v2553 = vunpack.c.h.b16 %v348
        %v2554 = vunpack.c.l.b16 %v349
        %v2555 = vunpack.c.h.b16 %v349
        %v2556 = vunpack.c.l.b16 %v350
        %v2557 = vunpack.c.h.b16 %v350
        %v2558 = vunpack.c.l.b16 %v351
        %v2559 = vunpack.c.h.b16 %v351
        %v2560 = vunpack.c.l.b16 %v352
        %v2561 = vunpack.c.h.b16 %v352
        %v2562 = vunpack.c.l.b16 %v353
        %v2563 = vunpack.c.h.b16 %v353
        %v2564 = vunpack.c.l.b16 %v354
        %v2565 = vunpack.c.h.b16 %v354
        %v2566 = vunpack.c.l.b16 %v355
        %v2567 = vunpack.c.h.b16 %v355
        %v2568 = vunpack.c.l.b16 %v356
        %v2569 = vunpack.c.h.b16 %v356
        %v2570 = vunpack.c.l.b16 %v357
        %v2571 = vunpack.c.h.b16 %v357
        %v2572 = vunpack.c.l.b16 %v358
        %v2573 = vunpack.c.h.b16 %v358
        %v2574 = vunpack.c.l.b16 %v359
        %v2575 = vunpack.c.h.b16 %v359
        %v2576 = vunpack.c.l.b16 %v360
        %v2577 = vunpack.c.h.b16 %v360
        %v2578 = vunpack.c.l.b16 %v361
        %v2579 = vunpack.c.h.b16 %v361
        %v2580 = vunpack.c.l.b16 %v362
        %v2581 = vunpack.c.h.b16 %v362
        %v2582 = vunpack.c.l.b16 %v363
        %v2583 = vunpack.c.h.b16 %v363
        %v2584 = vunpack.c.l.b16 %v364
        %v2585 = vunpack.c.h.b16 %v364
        %v2586 = vunpack.c.l.b16 %v365
        %v2587 = vunpack.c.h.b16 %v365
        %v2588 = vunpack.c.l.b16 %v366
        %v2589 = vunpack.c.h.b16 %v366
        %v2590 = vunpack.c.l.b16 %v367
        %v2591 = vunpack.c.h.b16 %v367
        %v2592 = vunpack.c.l.b16 %v368
        %v2593 = vunpack.c.h.b16 %v368
        %v2594 = vunpack.c.l.b16 %v369
        %v2595 = vunpack.c.h.b16 %v369
        %v2596 = vunpack.c.l.b16 %v370
        %v2597 = vunpack.c.h.b16 %v370
        %v2598 = vunpack.c.l.b16 %v371
        %v2599 = vunpack.c.h.b16 %v371
        %v2600 = vunpack.c.l.b16 %v372
        %v2601 = vunpack.c.h.b16 %v372
        %v2602 = vunpack.c.l.b16 %v373
        %v2603 = vunpack.c.h.b16 %v373
        %v2604 = vunpack.c.l.b16 %v374
        %v2605 = vunpack.c.h.b16 %v374
        %v2606 = vunpack.c.l.b16 %v375
        %v2607 = vunpack.c.h.b16 %v375
        %v2608 = vunpack.c.l.b16 %v376
        %v2609 = vunpack.c.h.b16 %v376
        %v2610 = vunpack.c.l.b16 %v377
        %v2611 = vunpack.c.h.b16 %v377
        %v2612 = vunpack.c.l.b16 %v378
        %v2613 = vunpack.c.h.b16 %v378
        %v2614 = vunpack.c.l.b16 %v379
        %v2615 = vunpack.c.h.b16 %v379
        %v2616 = vunpack.c.l.b16 %v380
        %v2617 = vunpack.c.h.b16 %v380
        %v2618 = vunpack.c.l.b16 %v381
        %v2619 = vunpack.c.h.b16 %v381
        %v2620 = vunpack.c.l.b16 %v382
        %v2621 = vunpack.c.h.b16 %v382
        %v2622 = vunpack.c.l.b16 %v383
        %v2623 = vunpack.c.h.b16 %v383
        %v2624 = vunpack.c.l.b16 %v384
        %v2625 = vunpack.c.h.b16 %v384
        %v2626 = vunpack.c.l.b16 %v385
        %v2627 = vunpack.c.h.b16 %v385
        %v2628 = vunpack.c.l.b16 %v386
        %v2629 = vunpack.c.h.b16 %v386
        %v2630 = vunpack.c.l.b16 %v387
        %v2631 = vunpack.c.h.b16 %v387
        %v2632 = vunpack.c.l.b16 %v388
        %v2633 = vunpack.c.h.b16 %v388
        %v2634 = vunpack.c.l.b16 %v389
        %v2635 = vunpack.c.h.b16 %v389
        %v2636 = vunpack.c.l.b16 %v390
        %v2637 = vunpack.c.h.b16 %v390
        %v2638 = vunpack.c.l.b16 %v391
        %v2639 = vunpack.c.h.b16 %v391
        %v2640 = vunpack.c.l.b16 %v392
        %v2641 = vunpack.c.h.b16 %v392
        %v2642 = vunpack.c.l.b16 %v393
        %v2643 = vunpack.c.h.b16 %v393
        %v2644 = vunpack.c.l.b16 %v394
        %v2645 = vunpack.c.h.b16 %v394
        %v2646 = vunpack.c.l.b16 %v395
        %v2647 = vunpack.c.h.b16 %v395
        %v2648 = vunpack.c.l.b16 %v396
        %v2649 = vunpack.c.h.b16 %v396
        %v2650 = vunpack.c.l.b16 %v397
        %v2651 = vunpack.c.h.b16 %v397
        %v2652 = vunpack.c.l.b16 %v398
        %v2653 = vunpack.c.h.b16 %v398
        %v2654 = vunpack.c.l.b16 %v399
        %v2655 = vunpack.c.h.b16 %v399
        %v2656 = vunpack.c.l.b16 %v400
        %v2657 = vunpack.c.h.b16 %v400
        %v2658 = vunpack.c.l.b16 %v401
        %v2659 = vunpack.c.h.b16 %v401
        %v2660 = vunpack.c.l.b16 %v402
        %v2661 = vunpack.c.h.b16 %v402
        %v2662 = vunpack.c.l.b16 %v403
        %v2663 = vunpack.c.h.b16 %v403
        %v2664 = vunpack.c.l.b16 %v404
        %v2665 = vunpack.c.h.b16 %v404
        %v2666 = vunpack.c.l.b16 %v405
        %v2667 = vunpack.c.h.b16 %v405
        %v2668 = vunpack.c.l.b16 %v406
        %v2669 = vunpack.c.h.b16 %v406
        %v2670 = vunpack.c.l.b16 %v407
        %v2671 = vunpack.c.h.b16 %v407
        %v2672 = vunpack.c.l.b16 %v408
        %v2673 = vunpack.c.h.b16 %v408
        %v2674 = vunpack.c.l.b16 %v409
        %v2675 = vunpack.c.h.b16 %v409
        %v2676 = vunpack.c.l.b16 %v410
        %v2677 = vunpack.c.h.b16 %v410
        %v2678 = vunpack.c.l.b16 %v411
        %v2679 = vunpack.c.h.b16 %v411
        %v2680 = vunpack.c.l.b16 %v412
        %v2681 = vunpack.c.h.b16 %v412
        %v2682 = vunpack.c.l.b16 %v413
        %v2683 = vunpack.c.h.b16 %v413
        %v2684 = vunpack.c.l.b16 %v414
        %v2685 = vunpack.c.h.b16 %v414
        %v2686 = vunpack.c.l.b16 %v415
        %v2687 = vunpack.c.h.b16 %v415
        %v2688 = vunpack.c.l.b16 %v416
        %v2689 = vunpack.c.h.b16 %v416
        %v2690 = vunpack.c.l.b16 %v417
        %v2691 = vunpack.c.h.b16 %v417
        %v2692 = vunpack.c.l.b16 %v418
        %v2693 = vunpack.c.h.b16 %v418
        %v2694 = vunpack.c.l.b16 %v419
        %v2695 = vunpack.c.h.b16 %v419
        %v2696 = vunpack.c.l.b16 %v420
        %v2697 = vunpack.c.h.b16 %v420
        %v2698 = vunpack.c.l.b16 %v421
        %v2699 = vunpack.c.h.b16 %v421
        %v2700 = vunpack.c.l.b16 %v422
        %v2701 = vunpack.c.h.b16 %v422
        %v2702 = vunpack.c.l.b16 %v423
        %v2703 = vunpack.c.h.b16 %v423
        %v2704 = vunpack.c.l.b16 %v424
        %v2705 = vunpack.c.h.b16 %v424
        %v2706 = vunpack.c.l.b16 %v425
        %v2707 = vunpack.c.h.b16 %v425
        %v2708 = vunpack.c.l.b16 %v426
        %v2709 = vunpack.c.h.b16 %v426
        %v2710 = vunpack.c.l.b16 %v427
        %v2711 = vunpack.c.h.b16 %v427
        %v2712 = vunpack.c.l.b16 %v428
        %v2713 = vunpack.c.h.b16 %v428
        %v2714 = vunpack.c.l.b16 %v429
        %v2715 = vunpack.c.h.b16 %v429
        %v2716 = vunpack.c.l.b16 %v430
        %v2717 = vunpack.c.h.b16 %v430
        %v2718 = vunpack.c.l.b16 %v431
        %v2719 = vunpack.c.h.b16 %v431
        %v2720 = vunpack.c.l.b16 %v432
        %v2721 = vunpack.c.h.b16 %v432
        %v2722 = vunpack.c.l.b16 %v433
        %v2723 = vunpack.c.h.b16 %v433
        %v2724 = vunpack.c.l.b16 %v434
        %v2725 = vunpack.c.h.b16 %v434
        %v2726 = vunpack.c.l.b16 %v435
        %v2727 = vunpack.c.h.b16 %v435
        %v2728 = vunpack.c.l.b16 %v436
        %v2729 = vunpack.c.h.b16 %v436
        %v2730 = vunpack.c.l.b16 %v437
        %v2731 = vunpack.c.h.b16 %v437
        %v2732 = vunpack.c.l.b16 %v438
        %v2733 = vunpack.c.h.b16 %v438
        %v2734 = vunpack.c.l.b16 %v439
        %v2735 = vunpack.c.h.b16 %v439
        %v2736 = vunpack.c.l.b16 %v440
        %v2737 = vunpack.c.h.b16 %v440
        %v2738 = vunpack.c.l.b16 %v441
        %v2739 = vunpack.c.h.b16 %v441
        %v2740 = vunpack.c.l.b16 %v442
        %v2741 = vunpack.c.h.b16 %v442
        %v2742 = vunpack.c.l.b16 %v443
        %v2743 = vunpack.c.h.b16 %v443
        %v2744 = vunpack.c.l.b16 %v444
        %v2745 = vunpack.c.h.b16 %v444
        %v2746 = vunpack.c.l.b16 %v445
        %v2747 = vunpack.c.h.b16 %v445
        %v2748 = vunpack.c.l.b16 %v446
        %v2749 = vunpack.c.h.b16 %v446
        %v2750 = vunpack.c.l.b16 %v447
        %v2751 = vunpack.c.h.b16 %v447
        %v2752 = vunpack.c.l.b16 %v448
        %v2753 = vunpack.c.h.b16 %v448
        %v2754 = vunpack.c.l.b16 %v449
        %v2755 = vunpack.c.h.b16 %v449
        %v2756 = vunpack.c.l.b16 %v450
        %v2757 = vunpack.c.h.b16 %v450
        %v2758 = vunpack.c.l.b16 %v451
        %v2759 = vunpack.c.h.b16 %v451
        %v2760 = vunpack.c.l.b16 %v452
        %v2761 = vunpack.c.h.b16 %v452
        %v2762 = vunpack.c.l.b16 %v453
        %v2763 = vunpack.c.h.b16 %v453
        %v2764 = vunpack.c.l.b16 %v454
        %v2765 = vunpack.c.h.b16 %v454
        %v2766 = vunpack.c.l.b16 %v455
        %v2767 = vunpack.c.h.b16 %v455
        %v2768 = vunpack.c.l.b16 %v456
        %v2769 = vunpack.c.h.b16 %v456
        %v2770 = vunpack.c.l.b16 %v457
        %v2771 = vunpack.c.h.b16 %v457
        %v2772 = vunpack.c.l.b16 %v458
        %v2773 = vunpack.c.h.b16 %v458
        %v2774 = vunpack.c.l.b16 %v459
        %v2775 = vunpack.c.h.b16 %v459
        %v2776 = vunpack.c.l.b16 %v460
        %v2777 = vunpack.c.h.b16 %v460
        %v2778 = vunpack.c.l.b16 %v461
        %v2779 = vunpack.c.h.b16 %v461
        %v2780 = vunpack.c.l.b16 %v462
        %v2781 = vunpack.c.h.b16 %v462
        %v2782 = vunpack.c.l.b16 %v463
        %v2783 = vunpack.c.h.b16 %v463
        %v2784 = vunpack.c.l.b16 %v464
        %v2785 = vunpack.c.h.b16 %v464
        %v2786 = vunpack.c.l.b16 %v465
        %v2787 = vunpack.c.h.b16 %v465
        %v2788 = vunpack.c.l.b16 %v466
        %v2789 = vunpack.c.h.b16 %v466
        %v2790 = vunpack.c.l.b16 %v467
        %v2791 = vunpack.c.h.b16 %v467
        %v2792 = vunpack.c.l.b16 %v468
        %v2793 = vunpack.c.h.b16 %v468
        %v2794 = vunpack.c.l.b16 %v469
        %v2795 = vunpack.c.h.b16 %v469
        %v2796 = vunpack.c.l.b16 %v470
        %v2797 = vunpack.c.h.b16 %v470
        %v2798 = vunpack.c.l.b16 %v471
        %v2799 = vunpack.c.h.b16 %v471
        %v2800 = vunpack.c.l.b16 %v472
        %v2801 = vunpack.c.h.b16 %v472
        %v2802 = vunpack.c.l.b16 %v473
        %v2803 = vunpack.c.h.b16 %v473
        %v2804 = vunpack.c.l.b16 %v474
        %v2805 = vunpack.c.h.b16 %v474
        %v2806 = vunpack.c.l.b16 %v475
        %v2807 = vunpack.c.h.b16 %v475
        %v2808 = vunpack.c.l.b16 %v476
        %v2809 = vunpack.c.h.b16 %v476
        %v2810 = vunpack.c.l.b16 %v477
        %v2811 = vunpack.c.h.b16 %v477
        %v2812 = vunpack.c.l.b16 %v478
        %v2813 = vunpack.c.h.b16 %v478
        %v2814 = vunpack.c.l.b16 %v479
        %v2815 = vunpack.c.h.b16 %v479
        %v2816 = vunpack.c.l.b16 %v480
        %v2817 = vunpack.c.h.b16 %v480
        %v2818 = vunpack.c.l.b16 %v481
        %v2819 = vunpack.c.h.b16 %v481
        %v2820 = vunpack.c.l.b16 %v482
        %v2821 = vunpack.c.h.b16 %v482
        %v2822 = vunpack.c.l.b16 %v483
        %v2823 = vunpack.c.h.b16 %v483
        %v2824 = vunpack.c.l.b16 %v484
        %v2825 = vunpack.c.h.b16 %v484
        %v2826 = vunpack.c.l.b16 %v485
        %v2827 = vunpack.c.h.b16 %v485
        %v2828 = vunpack.c.l.b16 %v486
        %v2829 = vunpack.c.h.b16 %v486
        %v2830 = vunpack.c.l.b16 %v487
        %v2831 = vunpack.c.h.b16 %v487
        %v2832 = vunpack.c.l.b16 %v488
        %v2833 = vunpack.c.h.b16 %v488
        %v2834 = vunpack.c.l.b16 %v489
        %v2835 = vunpack.c.h.b16 %v489
        %v2836 = vunpack.c.l.b16 %v490
        %v2837 = vunpack.c.h.b16 %v490
        %v2838 = vunpack.c.l.b16 %v491
        %v2839 = vunpack.c.h.b16 %v491
        %v2840 = vunpack.c.l.b16 %v492
        %v2841 = vunpack.c.h.b16 %v492
        %v2842 = vunpack.c.l.b16 %v493
        %v2843 = vunpack.c.h.b16 %v493
        %v2844 = vunpack.c.l.b16 %v494
        %v2845 = vunpack.c.h.b16 %v494
        %v2846 = vunpack.c.l.b16 %v495
        %v2847 = vunpack.c.h.b16 %v495
        %v2848 = vunpack.c.l.b16 %v496
        %v2849 = vunpack.c.h.b16 %v496
        %v2850 = vunpack.c.l.b16 %v497
        %v2851 = vunpack.c.h.b16 %v497
        %v2852 = vunpack.c.l.b16 %v498
        %v2853 = vunpack.c.h.b16 %v498
        %v2854 = vunpack.c.l.b16 %v499
        %v2855 = vunpack.c.h.b16 %v499
        %v2856 = vunpack.c.l.b16 %v500
        %v2857 = vunpack.c.h.b16 %v500
        %v2858 = vunpack.c.l.b16 %v501
        %v2859 = vunpack.c.h.b16 %v501
        %v2860 = vunpack.c.l.b16 %v502
        %v2861 = vunpack.c.h.b16 %v502
        %v2862 = vunpack.c.l.b16 %v503
        %v2863 = vunpack.c.h.b16 %v503
        %v2864 = vunpack.c.l.b16 %v504
        %v2865 = vunpack.c.h.b16 %v504
        %v2866 = vunpack.c.l.b16 %v505
        %v2867 = vunpack.c.h.b16 %v505
        %v2868 = vunpack.c.l.b16 %v506
        %v2869 = vunpack.c.h.b16 %v506
        %v2870 = vunpack.c.l.b16 %v507
        %v2871 = vunpack.c.h.b16 %v507
        %v2872 = vunpack.c.l.b16 %v508
        %v2873 = vunpack.c.h.b16 %v508
        %v2874 = vunpack.c.l.b16 %v509
        %v2875 = vunpack.c.h.b16 %v509
        %v2876 = vunpack.c.l.b16 %v510
        %v2877 = vunpack.c.h.b16 %v510
        %v2878 = vunpack.c.l.b16 %v511
        %v2879 = vunpack.c.h.b16 %v511
        %v2880 = vunpack.c.l.b16 %v512
        %v2881 = vunpack.c.h.b16 %v512
        %v2882 = vunpack.c.l.b16 %v513
        %v2883 = vunpack.c.h.b16 %v513
        %v2884 = vunpack.c.l.b16 %v514
        %v2885 = vunpack.c.h.b16 %v514
        %v2886 = vunpack.c.l.b16 %v515
        %v2887 = vunpack.c.h.b16 %v515
        %v2888 = vunpack.c.l.b16 %v516
        %v2889 = vunpack.c.h.b16 %v516
        %v2890 = vunpack.c.l.b16 %v517
        %v2891 = vunpack.c.h.b16 %v517
        %v2892 = vunpack.c.l.b16 %v518
        %v2893 = vunpack.c.h.b16 %v518
        %v2894 = vunpack.c.l.b16 %v519
        %v2895 = vunpack.c.h.b16 %v519
        %v2896 = vunpack.c.l.b16 %v520
        %v2897 = vunpack.c.h.b16 %v520
        %v2898 = vunpack.c.l.b16 %v521
        %v2899 = vunpack.c.h.b16 %v521
        %v2900 = vunpack.c.l.b16 %v522
        %v2901 = vunpack.c.h.b16 %v522
        %v2902 = vunpack.c.l.b16 %v523
        %v2903 = vunpack.c.h.b16 %v523
        %v2904 = vunpack.c.l.b16 %v524
        %v2905 = vunpack.c.h.b16 %v524
        %v2906 = vunpack.c.l.b16 %v525
        %v2907 = vunpack.c.h.b16 %v525
        %v2908 = vunpack.c.l.b16 %v526
        %v2909 = vunpack.c.h.b16 %v526
        %v2910 = vunpack.c.l.b16 %v527
        %v2911 = vunpack.c.h.b16 %v527
        %v2912 = vunpack.c.l.b16 %v528
        %v2913 = vunpack.c.h.b16 %v528
        %v2914 = vunpack.c.l.b16 %v529
        %v2915 = vunpack.c.h.b16 %v529
        %v2916 = vunpack.c.l.b16 %v530
        %v2917 = vunpack.c.h.b16 %v530
        %v2918 = vunpack.c.l.b16 %v531
        %v2919 = vunpack.c.h.b16 %v531
        %v2920 = vunpack.c.l.b16 %v532
        %v2921 = vunpack.c.h.b16 %v532
        %v2922 = vunpack.c.l.b16 %v533
        %v2923 = vunpack.c.h.b16 %v533
        %v2924 = vunpack.c.l.b16 %v534
        %v2925 = vunpack.c.h.b16 %v534
        %v2926 = vunpack.c.l.b16 %v535
        %v2927 = vunpack.c.h.b16 %v535
        %v2928 = vunpack.c.l.b16 %v536
        %v2929 = vunpack.c.h.b16 %v536
        %v2930 = vunpack.c.l.b16 %v537
        %v2931 = vunpack.c.h.b16 %v537
        %v2932 = vunpack.c.l.b16 %v538
        %v2933 = vunpack.c.h.b16 %v538
        %v2934 = vunpack.c.l.b16 %v539
        %v2935 = vunpack.c.h.b16 %v539
        %v2936 = vunpack.c.l.b16 %v540
        %v2937 = vunpack.c.h.b16 %v540
        %v2938 = vunpack.c.l.b16 %v541
        %v2939 = vunpack.c.h.b16 %v541
        %v2940 = vunpack.c.l.b16 %v542
        %v2941 = vunpack.c.h.b16 %v542
        %v2942 = vunpack.c.l.b16 %v543
        %v2943 = vunpack.c.h.b16 %v543
        %v2944 = vunpack.c.l.b16 %v544
        %v2945 = vunpack.c.h.b16 %v544
        %v2946 = vunpack.c.l.b16 %v545
        %v2947 = vunpack.c.h.b16 %v545
        %v2948 = vunpack.c.l.b16 %v546
        %v2949 = vunpack.c.h.b16 %v546
        %v2950 = vunpack.c.l.b16 %v547
        %v2951 = vunpack.c.h.b16 %v547
        %v2952 = vunpack.c.l.b16 %v548
        %v2953 = vunpack.c.h.b16 %v548
        %v2954 = vunpack.c.l.b16 %v549
        %v2955 = vunpack.c.h.b16 %v549
        %v2956 = vunpack.c.l.b16 %v550
        %v2957 = vunpack.c.h.b16 %v550
        %v2958 = vunpack.c.l.b16 %v551
        %v2959 = vunpack.c.h.b16 %v551
        %v2960 = vunpack.c.l.b16 %v552
        %v2961 = vunpack.c.h.b16 %v552
        %v2962 = vunpack.c.l.b16 %v553
        %v2963 = vunpack.c.h.b16 %v553
        %v2964 = vunpack.c.l.b16 %v554
        %v2965 = vunpack.c.h.b16 %v554
        %v2966 = vunpack.c.l.b16 %v555
        %v2967 = vunpack.c.h.b16 %v555
        %v2968 = vunpack.c.l.b16 %v556
        %v2969 = vunpack.c.h.b16 %v556
        %v2970 = vunpack.c.l.b16 %v557
        %v2971 = vunpack.c.h.b16 %v557
        %v2972 = vunpack.c.l.b16 %v558
        %v2973 = vunpack.c.h.b16 %v558
        %v2974 = vunpack.c.l.b16 %v559
        %v2975 = vunpack.c.h.b16 %v559
        %v2976 = vunpack.c.l.b16 %v560
        %v2977 = vunpack.c.h.b16 %v560
        %v2978 = vunpack.c.l.b16 %v561
        %v2979 = vunpack.c.h.b16 %v561
        %v2980 = vunpack.c.l.b16 %v562
        %v2981 = vunpack.c.h.b16 %v562
        %v2982 = vunpack.c.l.b16 %v563
        %v2983 = vunpack.c.h.b16 %v563
        %v2984 = vunpack.c.l.b16 %v564
        %v2985 = vunpack.c.h.b16 %v564
        %v2986 = vunpack.c.l.b16 %v565
        %v2987 = vunpack.c.h.b16 %v565
        %v2988 = vunpack.c.l.b16 %v566
        %v2989 = vunpack.c.h.b16 %v566
        %v2990 = vunpack.c.l.b16 %v567
        %v2991 = vunpack.c.h.b16 %v567
        %v2992 = vunpack.c.l.b16 %v568
        %v2993 = vunpack.c.h.b16 %v568
        %v2994 = vunpack.c.l.b16 %v569
        %v2995 = vunpack.c.h.b16 %v569
        %v2996 = vunpack.c.l.b16 %v570
        %v2997 = vunpack.c.h.b16 %v570
        %v2998 = vunpack.c.l.b16 %v571
        %v2999 = vunpack.c.h.b16 %v571
        %v3000 = vunpack.c.l.b16 %v572
        %v3001 = vunpack.c.h.b16 %v572
        %v3002 = vunpack.c.l.b16 %v573
        %v3003 = vunpack.c.h.b16 %v573
        %v3004 = vunpack.c.l.b16 %v574
        %v3005 = vunpack.c.h.b16 %v574
        %v3006 = vunpack.c.l.b16 %v575
        %v3007 = vunpack.c.h.b16 %v575
        %v3008 = vunpack.c.l.b16 %v576
        %v3009 = vunpack.c.h.b16 %v576
        %v3010 = vunpack.c.l.b16 %v577
        %v3011 = vunpack.c.h.b16 %v577
        %v3012 = vunpack.c.l.b16 %v578
        %v3013 = vunpack.c.h.b16 %v578
        %v3014 = vunpack.c.l.b16 %v579
        %v3015 = vunpack.c.h.b16 %v579
        %v3016 = vunpack.c.l.b16 %v580
        %v3017 = vunpack.c.h.b16 %v580
        %v3018 = vunpack.c.l.b16 %v581
        %v3019 = vunpack.c.h.b16 %v581
        %v3020 = vunpack.c.l.b16 %v582
        %v3021 = vunpack.c.h.b16 %v582
        %v3022 = vunpack.c.l.b16 %v583
        %v3023 = vunpack.c.h.b16 %v583
        %v3024 = vunpack.c.l.b16 %v584
        %v3025 = vunpack.c.h.b16 %v584
        %v3026 = vunpack.c.l.b16 %v585
        %v3027 = vunpack.c.h.b16 %v585
        %v3028 = vunpack.c.l.b16 %v586
        %v3029 = vunpack.c.h.b16 %v586
        %v3030 = vunpack.c.l.b16 %v587
        %v3031 = vunpack.c.h.b16 %v587
        %v3032 = vunpack.c.l.b16 %v588
        %v3033 = vunpack.c.h.b16 %v588
        %v3034 = vunpack.c.l.b16 %v589
        %v3035 = vunpack.c.h.b16 %v589
        %v3036 = vunpack.c.l.b16 %v590
        %v3037 = vunpack.c.h.b16 %v590
        %v3038 = vunpack.c.l.b16 %v591
        %v3039 = vunpack.c.h.b16 %v591
        %v3040 = vunpack.c.l.b16 %v592
        %v3041 = vunpack.c.h.b16 %v592
        %v3042 = vunpack.c.l.b16 %v593
        %v3043 = vunpack.c.h.b16 %v593
        %v3044 = vunpack.c.l.b16 %v594
        %v3045 = vunpack.c.h.b16 %v594
        %v3046 = vunpack.c.l.b16 %v595
        %v3047 = vunpack.c.h.b16 %v595
        %v3048 = vunpack.c.l.b16 %v596
        %v3049 = vunpack.c.h.b16 %v596
        %v3050 = vunpack.c.l.b16 %v597
        %v3051 = vunpack.c.h.b16 %v597
        %v3052 = vunpack.c.l.b16 %v598
        %v3053 = vunpack.c.h.b16 %v598
        %v3054 = vunpack.c.l.b16 %v599
        %v3055 = vunpack.c.h.b16 %v599
        %v3056 = vunpack.c.l.b16 %v600
        %v3057 = vunpack.c.h.b16 %v600
        %v3058 = vunpack.c.l.b16 %v601
        %v3059 = vunpack.c.h.b16 %v601
        %v3060 = vunpack.c.l.b16 %v602
        %v3061 = vunpack.c.h.b16 %v602
        %v3062 = vunpack.c.l.b16 %v603
        %v3063 = vunpack.c.h.b16 %v603
        %v3064 = vunpack.c.l.b16 %v604
        %v3065 = vunpack.c.h.b16 %v604
        %v3066 = vunpack.c.l.b16 %v605
        %v3067 = vunpack.c.h.b16 %v605
        %v3068 = vunpack.c.l.b16 %v606
        %v3069 = vunpack.c.h.b16 %v606
        %v3070 = vunpack.c.l.b16 %v607
        %v3071 = vunpack.c.h.b16 %v607
        %v3072 = vunpack.c.l.b16 %v608
        %v3073 = vunpack.c.h.b16 %v608
        %v3074 = vunpack.c.l.b16 %v609
        %v3075 = vunpack.c.h.b16 %v609
        %v3076 = vunpack.c.l.b16 %v610
        %v3077 = vunpack.c.h.b16 %v610
        %v3078 = vunpack.c.l.b16 %v611
        %v3079 = vunpack.c.h.b16 %v611
        %v3080 = vunpack.c.l.b16 %v612
        %v3081 = vunpack.c.h.b16 %v612
        %v3082 = vunpack.c.l.b16 %v613
        %v3083 = vunpack.c.h.b16 %v613
        %v3084 = vunpack.c.l.b16 %v614
        %v3085 = vunpack.c.h.b16 %v614
        %v3086 = vunpack.c.l.b16 %v615
        %v3087 = vunpack.c.h.b16 %v615
        %v3088 = vunpack.c.l.b16 %v616
        %v3089 = vunpack.c.h.b16 %v616
        %v3090 = vunpack.c.l.b16 %v617
        %v3091 = vunpack.c.h.b16 %v617
        %v3092 = vunpack.c.l.b16 %v618
        %v3093 = vunpack.c.h.b16 %v618
        %v3094 = vunpack.c.l.b16 %v619
        %v3095 = vunpack.c.h.b16 %v619
        %v3096 = vunpack.c.l.b16 %v620
        %v3097 = vunpack.c.h.b16 %v620
        %v3098 = vunpack.c.l.b16 %v621
        %v3099 = vunpack.c.h.b16 %v621
        %v3100 = vunpack.c.l.b16 %v622
        %v3101 = vunpack.c.h.b16 %v622
        %v3102 = vunpack.c.l.b16 %v623
        %v3103 = vunpack.c.h.b16 %v623
        %v3104 = vunpack.c.l.b16 %v624
        %v3105 = vunpack.c.h.b16 %v624
        %v3106 = vunpack.c.l.b16 %v625
        %v3107 = vunpack.c.h.b16 %v625
        %v3108 = vunpack.c.l.b16 %v626
        %v3109 = vunpack.c.h.b16 %v626
        %v3110 = vunpack.c.l.b16 %v627
        %v3111 = vunpack.c.h.b16 %v627
        %v3112 = vunpack.c.l.b16 %v628
        %v3113 = vunpack.c.h.b16 %v628
        %v3114 = vunpack.c.l.b16 %v629
        %v3115 = vunpack.c.h.b16 %v629
        %v3116 = vunpack.c.l.b16 %v630
        %v3117 = vunpack.c.h.b16 %v630
        %v3118 = vunpack.c.l.b16 %v631
        %v3119 = vunpack.c.h.b16 %v631
        %v3120 = vunpack.c.l.b16 %v632
        %v3121 = vunpack.c.h.b16 %v632
        %v3122 = vunpack.c.l.b16 %v633
        %v3123 = vunpack.c.h.b16 %v633
        %v3124 = vunpack.c.l.b16 %v634
        %v3125 = vunpack.c.h.b16 %v634
        %v3126 = vunpack.c.l.b16 %v635
        %v3127 = vunpack.c.h.b16 %v635
        %v3128 = vunpack.c.l.b16 %v636
        %v3129 = vunpack.c.h.b16 %v636
        %v3130 = vunpack.c.l.b16 %v637
        %v3131 = vunpack.c.h.b16 %v637
        %v3132 = vunpack.c.l.b16 %v638
        %v3133 = vunpack.c.h.b16 %v638
        %v3134 = vunpack.c.l.b16 %v639
        %v3135 = vunpack.c.h.b16 %v639
        %v3136 = vunpack.c.l.b16 %v640
        %v3137 = vunpack.c.h.b16 %v640
        %v3138 = vunpack.c.l.b16 %v641
        %v3139 = vunpack.c.h.b16 %v641
        %v3140 = vunpack.c.l.b16 %v642
        %v3141 = vunpack.c.h.b16 %v642
        %v3142 = vunpack.c.l.b16 %v643
        %v3143 = vunpack.c.h.b16 %v643
        %v3144 = vunpack.c.l.b16 %v644
        %v3145 = vunpack.c.h.b16 %v644
        %v3146 = vunpack.c.l.b16 %v645
        %v3147 = vunpack.c.h.b16 %v645
        %v3148 = vunpack.c.l.b16 %v646
        %v3149 = vunpack.c.h.b16 %v646
        %v3150 = vunpack.c.l.b16 %v647
        %v3151 = vunpack.c.h.b16 %v647
        %v3152 = vunpack.c.l.b16 %v648
        %v3153 = vunpack.c.h.b16 %v648
        %v3154 = vunpack.c.l.b16 %v649
        %v3155 = vunpack.c.h.b16 %v649
        %v3156 = vunpack.c.l.b16 %v650
        %v3157 = vunpack.c.h.b16 %v650
        %v3158 = vunpack.c.l.b16 %v651
        %v3159 = vunpack.c.h.b16 %v651
        %v3160 = vunpack.c.l.b16 %v652
        %v3161 = vunpack.c.h.b16 %v652
        %v3162 = vunpack.c.l.b16 %v653
        %v3163 = vunpack.c.h.b16 %v653
        %v3164 = vunpack.c.l.b16 %v654
        %v3165 = vunpack.c.h.b16 %v654
        %v3166 = vunpack.c.l.b16 %v655
        %v3167 = vunpack.c.h.b16 %v655
        %v3168 = vunpack.c.l.b16 %v656
        %v3169 = vunpack.c.h.b16 %v656
        %v3170 = vunpack.c.l.b16 %v657
        %v3171 = vunpack.c.h.b16 %v657
        %v3172 = vunpack.c.l.b16 %v658
        %v3173 = vunpack.c.h.b16 %v658
        %v3174 = vunpack.c.l.b16 %v659
        %v3175 = vunpack.c.h.b16 %v659
        %v3176 = vunpack.c.l.b16 %v660
        %v3177 = vunpack.c.h.b16 %v660
        %v3178 = vunpack.c.l.b16 %v661
        %v3179 = vunpack.c.h.b16 %v661
        %v3180 = vunpack.c.l.b16 %v662
        %v3181 = vunpack.c.h.b16 %v662
        %v3182 = vunpack.c.l.b16 %v663
        %v3183 = vunpack.c.h.b16 %v663
        %v3184 = vunpack.c.l.b16 %v664
        %v3185 = vunpack.c.h.b16 %v664
        %v3186 = vunpack.c.l.b16 %v665
        %v3187 = vunpack.c.h.b16 %v665
        %v3188 = vunpack.c.l.b16 %v666
        %v3189 = vunpack.c.h.b16 %v666
        %v3190 = vunpack.c.l.b16 %v667
        %v3191 = vunpack.c.h.b16 %v667
        %v3192 = vunpack.c.l.b16 %v668
        %v3193 = vunpack.c.h.b16 %v668
        %v3194 = vunpack.c.l.b16 %v669
        %v3195 = vunpack.c.h.b16 %v669
        %v3196 = vunpack.c.l.b16 %v670
        %v3197 = vunpack.c.h.b16 %v670
        %v3198 = vunpack.c.l.b16 %v671
        %v3199 = vunpack.c.h.b16 %v671
        %v3200 = vunpack.c.l.b16 %v672
        %v3201 = vunpack.c.h.b16 %v672
        %v3202 = vunpack.c.l.b16 %v673
        %v3203 = vunpack.c.h.b16 %v673
        %v3204 = vunpack.c.l.b16 %v674
        %v3205 = vunpack.c.h.b16 %v674
        %v3206 = vunpack.c.l.b16 %v675
        %v3207 = vunpack.c.h.b16 %v675
        %v3208 = vunpack.c.l.b16 %v676
        %v3209 = vunpack.c.h.b16 %v676
        %v3210 = vunpack.c.l.b16 %v677
        %v3211 = vunpack.c.h.b16 %v677
        %v3212 = vunpack.c.l.b16 %v678
        %v3213 = vunpack.c.h.b16 %v678
        %v3214 = vunpack.c.l.b16 %v679
        %v3215 = vunpack.c.h.b16 %v679
        %v3216 = vunpack.c.l.b16 %v680
        %v3217 = vunpack.c.h.b16 %v680
        %v3218 = vunpack.c.l.b16 %v681
        %v3219 = vunpack.c.h.b16 %v681
        %v3220 = vunpack.c.l.b16 %v682
        %v3221 = vunpack.c.h.b16 %v682
        %v3222 = vunpack.c.l.b16 %v683
        %v3223 = vunpack.c.h.b16 %v683
        %v3224 = vunpack.c.l.b16 %v684
        %v3225 = vunpack.c.h.b16 %v684
        %v3226 = vunpack.c.l.b16 %v685
        %v3227 = vunpack.c.h.b16 %v685
        %v3228 = vunpack.c.l.b16 %v686
        %v3229 = vunpack.c.h.b16 %v686
        %v3230 = vunpack.c.l.b16 %v687
        %v3231 = vunpack.c.h.b16 %v687
        %v3232 = vunpack.c.l.b16 %v688
        %v3233 = vunpack.c.h.b16 %v688
        %v3234 = vunpack.c.l.b16 %v689
        %v3235 = vunpack.c.h.b16 %v689
        %v3236 = vunpack.c.l.b16 %v690
        %v3237 = vunpack.c.h.b16 %v690
        %v3238 = vunpack.c.l.b16 %v691
        %v3239 = vunpack.c.h.b16 %v691
        %v3240 = vunpack.c.l.b16 %v692
        %v3241 = vunpack.c.h.b16 %v692
        %v3242 = vunpack.c.l.b16 %v693
        %v3243 = vunpack.c.h.b16 %v693
        %v3244 = vunpack.c.l.b16 %v694
        %v3245 = vunpack.c.h.b16 %v694
        %v3246 = vunpack.c.l.b16 %v695
        %v3247 = vunpack.c.h.b16 %v695
        %v3248 = vunpack.c.l.b16 %v696
        %v3249 = vunpack.c.h.b16 %v696
        %v3250 = vunpack.c.l.b16 %v697
        %v3251 = vunpack.c.h.b16 %v697
        %v3252 = vunpack.c.l.b16 %v698
        %v3253 = vunpack.c.h.b16 %v698
        %v3254 = vunpack.c.l.b16 %v699
        %v3255 = vunpack.c.h.b16 %v699
        %v3256 = vunpack.c.l.b16 %v700
        %v3257 = vunpack.c.h.b16 %v700
        %v3258 = vunpack.c.l.b16 %v701
        %v3259 = vunpack.c.h.b16 %v701
        %v3260 = vunpack.c.l.b16 %v702
        %v3261 = vunpack.c.h.b16 %v702
        %v3262 = vunpack.c.l.b16 %v703
        %v3263 = vunpack.c.h.b16 %v703
        %v3264 = vunpack.c.l.b16 %v704
        %v3265 = vunpack.c.h.b16 %v704
        %v3266 = vunpack.c.l.b16 %v705
        %v3267 = vunpack.c.h.b16 %v705
        %v3268 = vunpack.c.l.b16 %v706
        %v3269 = vunpack.c.h.b16 %v706
        %v3270 = vunpack.c.l.b16 %v707
        %v3271 = vunpack.c.h.b16 %v707
        %v3272 = vunpack.c.l.b16 %v708
        %v3273 = vunpack.c.h.b16 %v708
        %v3274 = vunpack.c.l.b16 %v709
        %v3275 = vunpack.c.h.b16 %v709
        %v3276 = vunpack.c.l.b16 %v710
        %v3277 = vunpack.c.h.b16 %v710
        %v3278 = vunpack.c.l.b16 %v711
        %v3279 = vunpack.c.h.b16 %v711
        %v3280 = vunpack.c.l.b16 %v712
        %v3281 = vunpack.c.h.b16 %v712
        %v3282 = vunpack.c.l.b16 %v713
        %v3283 = vunpack.c.h.b16 %v713
        %v3284 = vunpack.c.l.b16 %v714
        %v3285 = vunpack.c.h.b16 %v714
        %v3286 = vunpack.c.l.b16 %v715
        %v3287 = vunpack.c.h.b16 %v715
        %v3288 = vunpack.c.l.b16 %v716
        %v3289 = vunpack.c.h.b16 %v716
        %v3290 = vunpack.c.l.b16 %v717
        %v3291 = vunpack.c.h.b16 %v717
        %v3292 = vunpack.c.l.b16 %v718
        %v3293 = vunpack.c.h.b16 %v718
        %v3294 = vunpack.c.l.b16 %v719
        %v3295 = vunpack.c.h.b16 %v719
        %v3296 = vunpack.c.l.b16 %v720
        %v3297 = vunpack.c.h.b16 %v720
        %v3298 = vunpack.c.l.b16 %v721
        %v3299 = vunpack.c.h.b16 %v721
        %v3300 = vunpack.c.l.b16 %v722
        %v3301 = vunpack.c.h.b16 %v722
        %v3302 = vunpack.c.l.b16 %v723
        %v3303 = vunpack.c.h.b16 %v723
        %v3304 = vunpack.c.l.b16 %v724
        %v3305 = vunpack.c.h.b16 %v724
        %v3306 = vunpack.c.l.b16 %v725
        %v3307 = vunpack.c.h.b16 %v725
        %v3308 = vunpack.c.l.b16 %v726
        %v3309 = vunpack.c.h.b16 %v726
        %v3310 = vunpack.c.l.b16 %v727
        %v3311 = vunpack.c.h.b16 %v727
        %v3312 = vunpack.c.l.b16 %v728
        %v3313 = vunpack.c.h.b16 %v728
        %v3314 = vunpack.c.l.b16 %v729
        %v3315 = vunpack.c.h.b16 %v729
        %v3316 = vunpack.c.l.b16 %v730
        %v3317 = vunpack.c.h.b16 %v730
        %v3318 = vunpack.c.l.b16 %v731
        %v3319 = vunpack.c.h.b16 %v731
        %v3320 = vunpack.c.l.b16 %v732
        %v3321 = vunpack.c.h.b16 %v732
        %v3322 = vunpack.c.l.b16 %v733
        %v3323 = vunpack.c.h.b16 %v733
        %v3324 = vunpack.c.l.b16 %v734
        %v3325 = vunpack.c.h.b16 %v734
        %v3326 = vunpack.c.l.b16 %v735
        %v3327 = vunpack.c.h.b16 %v735
        %v3328 = vunpack.c.l.b16 %v736
        %v3329 = vunpack.c.h.b16 %v736
        %v3330 = vunpack.c.l.b16 %v737
        %v3331 = vunpack.c.h.b16 %v737
        %v3332 = vunpack.c.l.b16 %v738
        %v3333 = vunpack.c.h.b16 %v738
        %v3334 = vunpack.c.l.b16 %v739
        %v3335 = vunpack.c.h.b16 %v739
        %v3336 = vunpack.c.l.b16 %v740
        %v3337 = vunpack.c.h.b16 %v740
        %v3338 = vunpack.c.l.b16 %v741
        %v3339 = vunpack.c.h.b16 %v741
        %v3340 = vunpack.c.l.b16 %v742
        %v3341 = vunpack.c.h.b16 %v742
        %v3342 = vunpack.c.l.b16 %v743
        %v3343 = vunpack.c.h.b16 %v743
        %v3344 = vunpack.c.l.b16 %v744
        %v3345 = vunpack.c.h.b16 %v744
        %v3346 = vunpack.c.l.b16 %v745
        %v3347 = vunpack.c.h.b16 %v745
        %v3348 = vunpack.c.l.b16 %v746
        %v3349 = vunpack.c.h.b16 %v746
        %v3350 = vunpack.c.l.b16 %v747
        %v3351 = vunpack.c.h.b16 %v747
        %v3352 = vunpack.c.l.b16 %v748
        %v3353 = vunpack.c.h.b16 %v748
        %v3354 = vunpack.c.l.b16 %v749
        %v3355 = vunpack.c.h.b16 %v749
        %v3356 = vunpack.c.l.b16 %v750
        %v3357 = vunpack.c.h.b16 %v750
        %v3358 = vunpack.c.l.b16 %v751
        %v3359 = vunpack.c.h.b16 %v751
        %v3360 = vunpack.c.l.b16 %v752
        %v3361 = vunpack.c.h.b16 %v752
        %v3362 = vunpack.c.l.b16 %v753
        %v3363 = vunpack.c.h.b16 %v753
        %v3364 = vunpack.c.l.b16 %v754
        %v3365 = vunpack.c.h.b16 %v754
        %v3366 = vunpack.c.l.b16 %v755
        %v3367 = vunpack.c.h.b16 %v755
        %v3368 = vunpack.c.l.b16 %v756
        %v3369 = vunpack.c.h.b16 %v756
        %v3370 = vunpack.c.l.b16 %v757
        %v3371 = vunpack.c.h.b16 %v757
        %v3372 = vunpack.c.l.b16 %v758
        %v3373 = vunpack.c.h.b16 %v758
        %v3374 = vunpack.c.l.b16 %v759
        %v3375 = vunpack.c.h.b16 %v759
        %v3376 = vunpack.c.l.b16 %v760
        %v3377 = vunpack.c.h.b16 %v760
        %v3378 = vunpack.c.l.b16 %v761
        %v3379 = vunpack.c.h.b16 %v761
        %v3380 = vunpack.c.l.b16 %v762
        %v3381 = vunpack.c.h.b16 %v762
        %v3382 = vunpack.c.l.b16 %v763
        %v3383 = vunpack.c.h.b16 %v763
        %v3384 = vunpack.c.l.b16 %v764
        %v3385 = vunpack.c.h.b16 %v764
        %v3386 = vunpack.c.l.b16 %v765
        %v3387 = vunpack.c.h.b16 %v765
        %v3388 = vunpack.c.l.b16 %v766
        %v3389 = vunpack.c.h.b16 %v766
        %v3390 = vunpack.c.l.b16 %v767
        %v3391 = vunpack.c.h.b16 %v767
        %v3392 = vunpack.c.l.b16 %v768
        %v3393 = vunpack.c.h.b16 %v768
        %v3394 = vunpack.c.l.b16 %v769
        %v3395 = vunpack.c.h.b16 %v769
        %v3396 = vunpack.c.l.b16 %v770
        %v3397 = vunpack.c.h.b16 %v770
        %v3398 = vunpack.c.l.b16 %v771
        %v3399 = vunpack.c.h.b16 %v771
        %v3400 = vunpack.c.l.b16 %v772
        %v3401 = vunpack.c.h.b16 %v772
        %v3402 = vunpack.c.l.b16 %v773
        %v3403 = vunpack.c.h.b16 %v773
        %v3404 = vunpack.c.l.b16 %v774
        %v3405 = vunpack.c.h.b16 %v774
        %v3406 = vunpack.c.l.b16 %v775
        %v3407 = vunpack.c.h.b16 %v775
        %v3408 = vunpack.c.l.b16 %v776
        %v3409 = vunpack.c.h.b16 %v776
        %v3410 = vunpack.c.l.b16 %v777
        %v3411 = vunpack.c.h.b16 %v777
        %v3412 = vunpack.c.l.b16 %v778
        %v3413 = vunpack.c.h.b16 %v778
        %v3414 = vunpack.c.l.b16 %v779
        %v3415 = vunpack.c.h.b16 %v779
        %v3416 = vunpack.c.l.b16 %v780
        %v3417 = vunpack.c.h.b16 %v780
        %v3418 = vunpack.c.l.b16 %v781
        %v3419 = vunpack.c.h.b16 %v781
        %v3420 = vunpack.c.l.b16 %v782
        %v3421 = vunpack.c.h.b16 %v782
        %v3422 = vunpack.c.l.b16 %v783
        %v3423 = vunpack.c.h.b16 %v783
        %v3424 = vunpack.c.l.b16 %v784
        %v3425 = vunpack.c.h.b16 %v784
        %v3426 = vunpack.c.l.b16 %v785
        %v3427 = vunpack.c.h.b16 %v785
        %v3428 = vunpack.c.l.b16 %v786
        %v3429 = vunpack.c.h.b16 %v786
        %v3430 = vunpack.c.l.b16 %v787
        %v3431 = vunpack.c.h.b16 %v787
        %v3432 = vunpack.c.l.b16 %v788
        %v3433 = vunpack.c.h.b16 %v788
        %v3434 = vunpack.c.l.b16 %v789
        %v3435 = vunpack.c.h.b16 %v789
        %v3436 = vunpack.c.l.b16 %v790
        %v3437 = vunpack.c.h.b16 %v790
        %v3438 = vunpack.c.l.b16 %v791
        %v3439 = vunpack.c.h.b16 %v791
        %v3440 = vunpack.c.l.b16 %v792
        %v3441 = vunpack.c.h.b16 %v792
        %v3442 = vunpack.c.l.b16 %v793
        %v3443 = vunpack.c.h.b16 %v793
        %v3444 = vunpack.c.l.b16 %v794
        %v3445 = vunpack.c.h.b16 %v794
        %v3446 = vunpack.c.l.b16 %v795
        %v3447 = vunpack.c.h.b16 %v795
        %v3448 = vunpack.c.l.b16 %v796
        %v3449 = vunpack.c.h.b16 %v796
        %v3450 = vunpack.c.l.b16 %v797
        %v3451 = vunpack.c.h.b16 %v797
        %v3452 = vunpack.c.l.b16 %v798
        %v3453 = vunpack.c.h.b16 %v798
        %v3454 = vunpack.c.l.b16 %v799
        %v3455 = vunpack.c.h.b16 %v799
        %v3456 = vunpack.c.l.b16 %v800
        %v3457 = vunpack.c.h.b16 %v800
        %v3458 = vunpack.c.l.b16 %v801
        %v3459 = vunpack.c.h.b16 %v801
        %v3460 = vunpack.c.l.b16 %v802
        %v3461 = vunpack.c.h.b16 %v802
        %v3462 = vunpack.c.l.b16 %v803
        %v3463 = vunpack.c.h.b16 %v803
        %v3464 = vunpack.c.l.b16 %v804
        %v3465 = vunpack.c.h.b16 %v804
        %v3466 = vunpack.c.l.b16 %v805
        %v3467 = vunpack.c.h.b16 %v805
        %v3468 = vunpack.c.l.b16 %v806
        %v3469 = vunpack.c.h.b16 %v806
        %v3470 = vunpack.c.l.b16 %v807
        %v3471 = vunpack.c.h.b16 %v807
        %v3472 = vunpack.c.l.b16 %v808
        %v3473 = vunpack.c.h.b16 %v808
        %v3474 = vunpack.c.l.b16 %v809
        %v3475 = vunpack.c.h.b16 %v809
        %v3476 = vunpack.c.l.b16 %v810
        %v3477 = vunpack.c.h.b16 %v810
        %v3478 = vunpack.c.l.b16 %v811
        %v3479 = vunpack.c.h.b16 %v811
        %v3480 = vunpack.c.l.b16 %v812
        %v3481 = vunpack.c.h.b16 %v812
        %v3482 = vunpack.c.l.b16 %v813
        %v3483 = vunpack.c.h.b16 %v813
        %v3484 = vunpack.c.l.b16 %v814
        %v3485 = vunpack.c.h.b16 %v814
        %v3486 = vunpack.c.l.b16 %v815
        %v3487 = vunpack.c.h.b16 %v815
        %v3488 = vunpack.c.l.b16 %v816
        %v3489 = vunpack.c.h.b16 %v816
        %v3490 = vunpack.c.l.b16 %v817
        %v3491 = vunpack.c.h.b16 %v817
        %v3492 = vunpack.c.l.b16 %v818
        %v3493 = vunpack.c.h.b16 %v818
        %v3494 = vunpack.c.l.b16 %v819
        %v3495 = vunpack.c.h.b16 %v819
        %v3496 = vunpack.c.l.b16 %v820
        %v3497 = vunpack.c.h.b16 %v820
        %v3498 = vunpack.c.l.b16 %v821
        %v3499 = vunpack.c.h.b16 %v821
        %v3500 = vunpack.c.l.b16 %v822
        %v3501 = vunpack.c.h.b16 %v822
        %v3502 = vunpack.c.l.b16 %v823
        %v3503 = vunpack.c.h.b16 %v823
        %v3504 = vunpack.c.l.b16 %v824
        %v3505 = vunpack.c.h.b16 %v824
        %v3506 = vunpack.c.l.b16 %v825
        %v3507 = vunpack.c.h.b16 %v825
        %v3508 = vunpack.c.l.b16 %v826
        %v3509 = vunpack.c.h.b16 %v826
        %v3510 = vunpack.c.l.b16 %v827
        %v3511 = vunpack.c.h.b16 %v827
        %v3512 = vunpack.c.l.b16 %v828
        %v3513 = vunpack.c.h.b16 %v828
        %v3514 = vunpack.c.l.b16 %v829
        %v3515 = vunpack.c.h.b16 %v829
        %v3516 = vunpack.c.l.b16 %v830
        %v3517 = vunpack.c.h.b16 %v830
        %v3518 = vunpack.c.l.b16 %v831
        %v3519 = vunpack.c.h.b16 %v831
        %v3520 = vpack.c.b16 %v3008, %v2496
        %v3521 = vpack.c.b16 %v3009, %v2497
        %v3522 = vpack.c.b16 %v3010, %v2498
        %v3523 = vpack.c.b16 %v3011, %v2499
        %v3524 = vpack.c.b16 %v3012, %v2500
        %v3525 = vpack.c.b16 %v3013, %v2501
        %v3526 = vpack.c.b16 %v3014, %v2502
        %v3527 = vpack.c.b16 %v3015, %v2503
        %v3528 = vpack.c.b16 %v3016, %v2504
        %v3529 = vpack.c.b16 %v3017, %v2505
        %v3530 = vpack.c.b16 %v3018, %v2506
        %v3531 = vpack.c.b16 %v3019, %v2507
        %v3532 = vpack.c.b16 %v3020, %v2508
        %v3533 = vpack.c.b16 %v3021, %v2509
        %v3534 = vpack.c.b16 %v3022, %v2510
        %v3535 = vpack.c.b16 %v3023, %v2511
        %v3536 = vpack.c.b16 %v3024, %v2512
        %v3537 = vpack.c.b16 %v3025, %v2513
        %v3538 = vpack.c.b16 %v3026, %v2514
        %v3539 = vpack.c.b16 %v3027, %v2515
        %v3540 = vpack.c.b16 %v3028, %v2516
        %v3541 = vpack.c.b16 %v3029, %v2517
        %v3542 = vpack.c.b16 %v3030, %v2518
        %v3543 = vpack.c.b16 %v3031, %v2519
        %v3544 = vpack.c.b16 %v3032, %v2520
        %v3545 = vpack.c.b16 %v3033, %v2521
        %v3546 = vpack.c.b16 %v3034, %v2522
        %v3547 = vpack.c.b16 %v3035, %v2523
        %v3548 = vpack.c.b16 %v3036, %v2524
        %v3549 = vpack.c.b16 %v3037, %v2525
        %v3550 = vpack.c.b16 %v3038, %v2526
        %v3551 = vpack.c.b16 %v3039, %v2527
        %v3552 = vpack.c.b16 %v3040, %v2528
        %v3553 = vpack.c.b16 %v3041, %v2529
        %v3554 = vpack.c.b16 %v3042, %v2530
        %v3555 = vpack.c.b16 %v3043, %v2531
        %v3556 = vpack.c.b16 %v3044, %v2532
        %v3557 = vpack.c.b16 %v3045, %v2533
        %v3558 = vpack.c.b16 %v3046, %v2534
        %v3559 = vpack.c.b16 %v3047, %v2535
        %v3560 = vpack.c.b16 %v3048, %v2536
        %v3561 = vpack.c.b16 %v3049, %v2537
        %v3562 = vpack.c.b16 %v3050, %v2538
        %v3563 = vpack.c.b16 %v3051, %v2539
        %v3564 = vpack.c.b16 %v3052, %v2540
        %v3565 = vpack.c.b16 %v3053, %v2541
        %v3566 = vpack.c.b16 %v3054, %v2542
        %v3567 = vpack.c.b16 %v3055, %v2543
        %v3568 = vpack.c.b16 %v3056, %v2544
        %v3569 = vpack.c.b16 %v3057, %v2545
        %v3570 = vpack.c.b16 %v3058, %v2546
        %v3571 = vpack.c.b16 %v3059, %v2547
        %v3572 = vpack.c.b16 %v3060, %v2548
        %v3573 = vpack.c.b16 %v3061, %v2549
        %v3574 = vpack.c.b16 %v3062, %v2550
        %v3575 = vpack.c.b16 %v3063, %v2551
        %v3576 = vpack.c.b16 %v3064, %v2552
        %v3577 = vpack.c.b16 %v3065, %v2553
        %v3578 = vpack.c.b16 %v3066, %v2554
        %v3579 = vpack.c.b16 %v3067, %v2555
        %v3580 = vpack.c.b16 %v3068, %v2556
        %v3581 = vpack.c.b16 %v3069, %v2557
        %v3582 = vpack.c.b16 %v3070, %v2558
        %v3583 = vpack.c.b16 %v3071, %v2559
        %v3584 = vpack.c.b16 %v3072, %v2560
        %v3585 = vpack.c.b16 %v3073, %v2561
        %v3586 = vpack.c.b16 %v3074, %v2562
        %v3587 = vpack.c.b16 %v3075, %v2563
        %v3588 = vpack.c.b16 %v3076, %v2564
        %v3589 = vpack.c.b16 %v3077, %v2565
        %v3590 = vpack.c.b16 %v3078, %v2566
        %v3591 = vpack.c.b16 %v3079, %v2567
        %v3592 = vpack.c.b16 %v3080, %v2568
        %v3593 = vpack.c.b16 %v3081, %v2569
        %v3594 = vpack.c.b16 %v3082, %v2570
        %v3595 = vpack.c.b16 %v3083, %v2571
        %v3596 = vpack.c.b16 %v3084, %v2572
        %v3597 = vpack.c.b16 %v3085, %v2573
        %v3598 = vpack.c.b16 %v3086, %v2574
        %v3599 = vpack.c.b16 %v3087, %v2575
        %v3600 = vpack.c.b16 %v3088, %v2576
        %v3601 = vpack.c.b16 %v3089, %v2577
        %v3602 = vpack.c.b16 %v3090, %v2578
        %v3603 = vpack.c.b16 %v3091, %v2579
        %v3604 = vpack.c.b16 %v3092, %v2580
        %v3605 = vpack.c.b16 %v3093, %v2581
        %v3606 = vpack.c.b16 %v3094, %v2582
        %v3607 = vpack.c.b16 %v3095, %v2583
        %v3608 = vpack.c.b16 %v3096, %v2584
        %v3609 = vpack.c.b16 %v3097, %v2585
        %v3610 = vpack.c.b16 %v3098, %v2586
        %v3611 = vpack.c.b16 %v3099, %v2587
        %v3612 = vpack.c.b16 %v3100, %v2588
        %v3613 = vpack.c.b16 %v3101, %v2589
        %v3614 = vpack.c.b16 %v3102, %v2590
        %v3615 = vpack.c.b16 %v3103, %v2591
        %v3616 = vpack.c.b16 %v3104, %v2592
        %v3617 = vpack.c.b16 %v3105, %v2593
        %v3618 = vpack.c.b16 %v3106, %v2594
        %v3619 = vpack.c.b16 %v3107, %v2595
        %v3620 = vpack.c.b16 %v3108, %v2596
        %v3621 = vpack.c.b16 %v3109, %v2597
        %v3622 = vpack.c.b16 %v3110, %v2598
        %v3623 = vpack.c.b16 %v3111, %v2599
        %v3624 = vpack.c.b16 %v3112, %v2600
        %v3625 = vpack.c.b16 %v3113, %v2601
        %v3626 = vpack.c.b16 %v3114, %v2602
        %v3627 = vpack.c.b16 %v3115, %v2603
        %v3628 = vpack.c.b16 %v3116, %v2604
        %v3629 = vpack.c.b16 %v3117, %v2605
        %v3630 = vpack.c.b16 %v3118, %v2606
        %v3631 = vpack.c.b16 %v3119, %v2607
        %v3632 = vpack.c.b16 %v3120, %v2608
        %v3633 = vpack.c.b16 %v3121, %v2609
        %v3634 = vpack.c.b16 %v3122, %v2610
        %v3635 = vpack.c.b16 %v3123, %v2611
        %v3636 = vpack.c.b16 %v3124, %v2612
        %v3637 = vpack.c.b16 %v3125, %v2613
        %v3638 = vpack.c.b16 %v3126, %v2614
        %v3639 = vpack.c.b16 %v3127, %v2615
        %v3640 = vpack.c.b16 %v3128, %v2616
        %v3641 = vpack.c.b16 %v3129, %v2617
        %v3642 = vpack.c.b16 %v3130, %v2618
        %v3643 = vpack.c.b16 %v3131, %v2619
        %v3644 = vpack.c.b16 %v3132, %v2620
        %v3645 = vpack.c.b16 %v3133, %v2621
        %v3646 = vpack.c.b16 %v3134, %v2622
        %v3647 = vpack.c.b16 %v3135, %v2623
        %v3648 = vpack.c.b16 %v3136, %v2624
        %v3649 = vpack.c.b16 %v3137, %v2625
        %v3650 = vpack.c.b16 %v3138, %v2626
        %v3651 = vpack.c.b16 %v3139, %v2627
        %v3652 = vpack.c.b16 %v3140, %v2628
        %v3653 = vpack.c.b16 %v3141, %v2629
        %v3654 = vpack.c.b16 %v3142, %v2630
        %v3655 = vpack.c.b16 %v3143, %v2631
        %v3656 = vpack.c.b16 %v3144, %v2632
        %v3657 = vpack.c.b16 %v3145, %v2633
        %v3658 = vpack.c.b16 %v3146, %v2634
        %v3659 = vpack.c.b16 %v3147, %v2635
        %v3660 = vpack.c.b16 %v3148, %v2636
        %v3661 = vpack.c.b16 %v3149, %v2637
        %v3662 = vpack.c.b16 %v3150, %v2638
        %v3663 = vpack.c.b16 %v3151, %v2639
        %v3664 = vpack.c.b16 %v3152, %v2640
        %v3665 = vpack.c.b16 %v3153, %v2641
        %v3666 = vpack.c.b16 %v3154, %v2642
        %v3667 = vpack.c.b16 %v3155, %v2643
        %v3668 = vpack.c.b16 %v3156, %v2644
        %v3669 = vpack.c.b16 %v3157, %v2645
        %v3670 = vpack.c.b16 %v3158, %v2646
        %v3671 = vpack.c.b16 %v3159, %v2647
        %v3672 = vpack.c.b16 %v3160, %v2648
        %v3673 = vpack.c.b16 %v3161, %v2649
        %v3674 = vpack.c.b16 %v3162, %v2650
        %v3675 = vpack.c.b16 %v3163, %v2651
        %v3676 = vpack.c.b16 %v3164, %v2652
        %v3677 = vpack.c.b16 %v3165, %v2653
        %v3678 = vpack.c.b16 %v3166, %v2654
        %v3679 = vpack.c.b16 %v3167, %v2655
        %v3680 = vpack.c.b16 %v3168, %v2656
        %v3681 = vpack.c.b16 %v3169, %v2657
        %v3682 = vpack.c.b16 %v3170, %v2658
        %v3683 = vpack.c.b16 %v3171, %v2659
        %v3684 = vpack.c.b16 %v3172, %v2660
        %v3685 = vpack.c.b16 %v3173, %v2661
        %v3686 = vpack.c.b16 %v3174, %v2662
        %v3687 = vpack.c.b16 %v3175, %v2663
        %v3688 = vpack.c.b16 %v3176, %v2664
        %v3689 = vpack.c.b16 %v3177, %v2665
        %v3690 = vpack.c.b16 %v3178, %v2666
        %v3691 = vpack.c.b16 %v3179, %v2667
        %v3692 = vpack.c.b16 %v3180, %v2668
        %v3693 = vpack.c.b16 %v3181, %v2669
        %v3694 = vpack.c.b16 %v3182, %v2670
        %v3695 = vpack.c.b16 %v3183, %v2671
        %v3696 = vpack.c.b16 %v3184, %v2672
        %v3697 = vpack.c.b16 %v3185, %v2673
        %v3698 = vpack.c.b16 %v3186, %v2674
        %v3699 = vpack.c.b16 %v3187, %v2675
        %v3700 = vpack.c.b16 %v3188, %v2676
        %v3701 = vpack.c.b16 %v3189, %v2677
        %v3702 = vpack.c.b16 %v3190, %v2678
        %v3703 = vpack.c.b16 %v3191, %v2679
        %v3704 = vpack.c.b16 %v3192, %v2680
        %v3705 = vpack.c.b16 %v3193, %v2681
        %v3706 = vpack.c.b16 %v3194, %v2682
        %v3707 = vpack.c.b16 %v3195, %v2683
        %v3708 = vpack.c.b16 %v3196, %v2684
        %v3709 = vpack.c.b16 %v3197, %v2685
        %v3710 = vpack.c.b16 %v3198, %v2686
        %v3711 = vpack.c.b16 %v3199, %v2687
        %v3712 = vpack.c.b16 %v3200, %v2688
        %v3713 = vpack.c.b16 %v3201, %v2689
        %v3714 = vpack.c.b16 %v3202, %v2690
        %v3715 = vpack.c.b16 %v3203, %v2691
        %v3716 = vpack.c.b16 %v3204, %v2692
        %v3717 = vpack.c.b16 %v3205, %v2693
        %v3718 = vpack.c.b16 %v3206, %v2694
        %v3719 = vpack.c.b16 %v3207, %v2695
        %v3720 = vpack.c.b16 %v3208, %v2696
        %v3721 = vpack.c.b16 %v3209, %v2697
        %v3722 = vpack.c.b16 %v3210, %v2698
        %v3723 = vpack.c.b16 %v3211, %v2699
        %v3724 = vpack.c.b16 %v3212, %v2700
        %v3725 = vpack.c.b16 %v3213, %v2701
        %v3726 = vpack.c.b16 %v3214, %v2702
        %v3727 = vpack.c.b16 %v3215, %v2703
        %v3728 = vpack.c.b16 %v3216, %v2704
        %v3729 = vpack.c.b16 %v3217, %v2705
        %v3730 = vpack.c.b16 %v3218, %v2706
        %v3731 = vpack.c.b16 %v3219, %v2707
        %v3732 = vpack.c.b16 %v3220, %v2708
        %v3733 = vpack.c.b16 %v3221, %v2709
        %v3734 = vpack.c.b16 %v3222, %v2710
        %v3735 = vpack.c.b16 %v3223, %v2711
        %v3736 = vpack.c.b16 %v3224, %v2712
        %v3737 = vpack.c.b16 %v3225, %v2713
        %v3738 = vpack.c.b16 %v3226, %v2714
        %v3739 = vpack.c.b16 %v3227, %v2715
        %v3740 = vpack.c.b16 %v3228, %v2716
        %v3741 = vpack.c.b16 %v3229, %v2717
        %v3742 = vpack.c.b16 %v3230, %v2718
        %v3743 = vpack.c.b16 %v3231, %v2719
        %v3744 = vpack.c.b16 %v3232, %v2720
        %v3745 = vpack.c.b16 %v3233, %v2721
        %v3746 = vpack.c.b16 %v3234, %v2722
        %v3747 = vpack.c.b16 %v3235, %v2723
        %v3748 = vpack.c.b16 %v3236, %v2724
        %v3749 = vpack.c.b16 %v3237, %v2725
        %v3750 = vpack.c.b16 %v3238, %v2726
        %v3751 = vpack.c.b16 %v3239, %v2727
        %v3752 = vpack.c.b16 %v3240, %v2728
        %v3753 = vpack.c.b16 %v3241, %v2729
        %v3754 = vpack.c.b16 %v3242, %v2730
        %v3755 = vpack.c.b16 %v3243, %v2731
        %v3756 = vpack.c.b16 %v3244, %v2732
        %v3757 = vpack.c.b16 %v3245, %v2733
        %v3758 = vpack.c.b16 %v3246, %v2734
        %v3759 = vpack.c.b16 %v3247, %v2735
        %v3760 = vpack.c.b16 %v3248, %v2736
        %v3761 = vpack.c.b16 %v3249, %v2737
        %v3762 = vpack.c.b16 %v3250, %v2738
        %v3763 = vpack.c.b16 %v3251, %v2739
        %v3764 = vpack.c.b16 %v3252, %v2740
        %v3765 = vpack.c.b16 %v3253, %v2741
        %v3766 = vpack.c.b16 %v3254, %v2742
        %v3767 = vpack.c.b16 %v3255, %v2743
        %v3768 = vpack.c.b16 %v3256, %v2744
        %v3769 = vpack.c.b16 %v3257, %v2745
        %v3770 = vpack.c.b16 %v3258, %v2746
        %v3771 = vpack.c.b16 %v3259, %v2747
        %v3772 = vpack.c.b16 %v3260, %v2748
        %v3773 = vpack.c.b16 %v3261, %v2749
        %v3774 = vpack.c.b16 %v3262, %v2750
        %v3775 = vpack.c.b16 %v3263, %v2751
        %v3776 = vpack.c.b16 %v3264, %v2752
        %v3777 = vpack.c.b16 %v3265, %v2753
        %v3778 = vpack.c.b16 %v3266, %v2754
        %v3779 = vpack.c.b16 %v3267, %v2755
        %v3780 = vpack.c.b16 %v3268, %v2756
        %v3781 = vpack.c.b16 %v3269, %v2757
        %v3782 = vpack.c.b16 %v3270, %v2758
        %v3783 = vpack.c.b16 %v3271, %v2759
        %v3784 = vpack.c.b16 %v3272, %v2760
        %v3785 = vpack.c.b16 %v3273, %v2761
        %v3786 = vpack.c.b16 %v3274, %v2762
        %v3787 = vpack.c.b16 %v3275, %v2763
        %v3788 = vpack.c.b16 %v3276, %v2764
        %v3789 = vpack.c.b16 %v3277, %v2765
        %v3790 = vpack.c.b16 %v3278, %v2766
        %v3791 = vpack.c.b16 %v3279, %v2767
        %v3792 = vpack.c.b16 %v3280, %v2768
        %v3793 = vpack.c.b16 %v3281, %v2769
        %v3794 = vpack.c.b16 %v3282, %v2770
        %v3795 = vpack.c.b16 %v3283, %v2771
        %v3796 = vpack.c.b16 %v3284, %v2772
        %v3797 = vpack.c.b16 %v3285, %v2773
        %v3798 = vpack.c.b16 %v3286, %v2774
        %v3799 = vpack.c.b16 %v3287, %v2775
        %v3800 = vpack.c.b16 %v3288, %v2776
        %v3801 = vpack.c.b16 %v3289, %v2777
        %v3802 = vpack.c.b16 %v3290, %v2778
        %v3803 = vpack.c.b16 %v3291, %v2779
        %v3804 = vpack.c.b16 %v3292, %v2780
        %v3805 = vpack.c.b16 %v3293, %v2781
        %v3806 = vpack.c.b16 %v3294, %v2782
        %v3807 = vpack.c.b16 %v3295, %v2783
        %v3808 = vpack.c.b16 %v3296, %v2784
        %v3809 = vpack.c.b16 %v3297, %v2785
        %v3810 = vpack.c.b16 %v3298, %v2786
        %v3811 = vpack.c.b16 %v3299, %v2787
        %v3812 = vpack.c.b16 %v3300, %v2788
        %v3813 = vpack.c.b16 %v3301, %v2789
        %v3814 = vpack.c.b16 %v3302, %v2790
        %v3815 = vpack.c.b16 %v3303, %v2791
        %v3816 = vpack.c.b16 %v3304, %v2792
        %v3817 = vpack.c.b16 %v3305, %v2793
        %v3818 = vpack.c.b16 %v3306, %v2794
        %v3819 = vpack.c.b16 %v3307, %v2795
        %v3820 = vpack.c.b16 %v3308, %v2796
        %v3821 = vpack.c.b16 %v3309, %v2797
        %v3822 = vpack.c.b16 %v3310, %v2798
        %v3823 = vpack.c.b16 %v3311, %v2799
        %v3824 = vpack.c.b16 %v3312, %v2800
        %v3825 = vpack.c.b16 %v3313, %v2801
        %v3826 = vpack.c.b16 %v3314, %v2802
        %v3827 = vpack.c.b16 %v3315, %v2803
        %v3828 = vpack.c.b16 %v3316, %v2804
        %v3829 = vpack.c.b16 %v3317, %v2805
        %v3830 = vpack.c.b16 %v3318, %v2806
        %v3831 = vpack.c.b16 %v3319, %v2807
        %v3832 = vpack.c.b16 %v3320, %v2808
        %v3833 = vpack.c.b16 %v3321, %v2809
        %v3834 = vpack.c.b16 %v3322, %v2810
        %v3835 = vpack.c.b16 %v3323, %v2811
        %v3836 = vpack.c.b16 %v3324, %v2812
        %v3837 = vpack.c.b16 %v3325, %v2813
        %v3838 = vpack.c.b16 %v3326, %v2814
        %v3839 = vpack.c.b16 %v3327, %v2815
        %v3840 = vpack.c.b16 %v3328, %v2816
        %v3841 = vpack.c.b16 %v3329, %v2817
        %v3842 = vpack.c.b16 %v3330, %v2818
        %v3843 = vpack.c.b16 %v3331, %v2819
        %v3844 = vpack.c.b16 %v3332, %v2820
        %v3845 = vpack.c.b16 %v3333, %v2821
        %v3846 = vpack.c.b16 %v3334, %v2822
        %v3847 = vpack.c.b16 %v3335, %v2823
        %v3848 = vpack.c.b16 %v3336, %v2824
        %v3849 = vpack.c.b16 %v3337, %v2825
        %v3850 = vpack.c.b16 %v3338, %v2826
        %v3851 = vpack.c.b16 %v3339, %v2827
        %v3852 = vpack.c.b16 %v3340, %v2828
        %v3853 = vpack.c.b16 %v3341, %v2829
        %v3854 = vpack.c.b16 %v3342, %v2830
        %v3855 = vpack.c.b16 %v3343, %v2831
        %v3856 = vpack.c.b16 %v3344, %v2832
        %v3857 = vpack.c.b16 %v3345, %v2833
        %v3858 = vpack.c.b16 %v3346, %v2834
        %v3859 = vpack.c.b16 %v3347, %v2835
        %v3860 = vpack.c.b16 %v3348, %v2836
        %v3861 = vpack.c.b16 %v3349, %v2837
        %v3862 = vpack.c.b16 %v3350, %v2838
        %v3863 = vpack.c.b16 %v3351, %v2839
        %v3864 = vpack.c.b16 %v3352, %v2840
        %v3865 = vpack.c.b16 %v3353, %v2841
        %v3866 = vpack.c.b16 %v3354, %v2842
        %v3867 = vpack.c.b16 %v3355, %v2843
        %v3868 = vpack.c.b16 %v3356, %v2844
        %v3869 = vpack.c.b16 %v3357, %v2845
        %v3870 = vpack.c.b16 %v3358, %v2846
        %v3871 = vpack.c.b16 %v3359, %v2847
        %v3872 = vpack.c.b16 %v3360, %v2848
        %v3873 = vpack.c.b16 %v3361, %v2849
        %v3874 = vpack.c.b16 %v3362, %v2850
        %v3875 = vpack.c.b16 %v3363, %v2851
        %v3876 = vpack.c.b16 %v3364, %v2852
        %v3877 = vpack.c.b16 %v3365, %v2853
        %v3878 = vpack.c.b16 %v3366, %v2854
        %v3879 = vpack.c.b16 %v3367, %v2855
        %v3880 = vpack.c.b16 %v3368, %v2856
        %v3881 = vpack.c.b16 %v3369, %v2857
        %v3882 = vpack.c.b16 %v3370, %v2858
        %v3883 = vpack.c.b16 %v3371, %v2859
        %v3884 = vpack.c.b16 %v3372, %v2860
        %v3885 = vpack.c.b16 %v3373, %v2861
        %v3886 = vpack.c.b16 %v3374, %v2862
        %v3887 = vpack.c.b16 %v3375, %v2863
        %v3888 = vpack.c.b16 %v3376, %v2864
        %v3889 = vpack.c.b16 %v3377, %v2865
        %v3890 = vpack.c.b16 %v3378, %v2866
        %v3891 = vpack.c.b16 %v3379, %v2867
        %v3892 = vpack.c.b16 %v3380, %v2868
        %v3893 = vpack.c.b16 %v3381, %v2869
        %v3894 = vpack.c.b16 %v3382, %v2870
        %v3895 = vpack.c.b16 %v3383, %v2871
        %v3896 = vpack.c.b16 %v3384, %v2872
        %v3897 = vpack.c.b16 %v3385, %v2873
        %v3898 = vpack.c.b16 %v3386, %v2874
        %v3899 = vpack.c.b16 %v3387, %v2875
        %v3900 = vpack.c.b16 %v3388, %v2876
        %v3901 = vpack.c.b16 %v3389, %v2877
        %v3902 = vpack.c.b16 %v3390, %v2878
        %v3903 = vpack.c.b16 %v3391, %v2879
        %v3904 = vpack.c.b16 %v3392, %v2880
        %v3905 = vpack.c.b16 %v3393, %v2881
        %v3906 = vpack.c.b16 %v3394, %v2882
        %v3907 = vpack.c.b16 %v3395, %v2883
        %v3908 = vpack.c.b16 %v3396, %v2884
        %v3909 = vpack.c.b16 %v3397, %v2885
        %v3910 = vpack.c.b16 %v3398, %v2886
        %v3911 = vpack.c.b16 %v3399, %v2887
        %v3912 = vpack.c.b16 %v3400, %v2888
        %v3913 = vpack.c.b16 %v3401, %v2889
        %v3914 = vpack.c.b16 %v3402, %v2890
        %v3915 = vpack.c.b16 %v3403, %v2891
        %v3916 = vpack.c.b16 %v3404, %v2892
        %v3917 = vpack.c.b16 %v3405, %v2893
        %v3918 = vpack.c.b16 %v3406, %v2894
        %v3919 = vpack.c.b16 %v3407, %v2895
        %v3920 = vpack.c.b16 %v3408, %v2896
        %v3921 = vpack.c.b16 %v3409, %v2897
        %v3922 = vpack.c.b16 %v3410, %v2898
        %v3923 = vpack.c.b16 %v3411, %v2899
        %v3924 = vpack.c.b16 %v3412, %v2900
        %v3925 = vpack.c.b16 %v3413, %v2901
        %v3926 = vpack.c.b16 %v3414, %v2902
        %v3927 = vpack.c.b16 %v3415, %v2903
        %v3928 = vpack.c.b16 %v3416, %v2904
        %v3929 = vpack.c.b16 %v3417, %v2905
        %v3930 = vpack.c.b16 %v3418, %v2906
        %v3931 = vpack.c.b16 %v3419, %v2907
        %v3932 = vpack.c.b16 %v3420, %v2908
        %v3933 = vpack.c.b16 %v3421, %v2909
        %v3934 = vpack.c.b16 %v3422, %v2910
        %v3935 = vpack.c.b16 %v3423, %v2911
        %v3936 = vpack.c.b16 %v3424, %v2912
        %v3937 = vpack.c.b16 %v3425, %v2913
        %v3938 = vpack.c.b16 %v3426, %v2914
        %v3939 = vpack.c.b16 %v3427, %v2915
        %v3940 = vpack.c.b16 %v3428, %v2916
        %v3941 = vpack.c.b16 %v3429, %v2917
        %v3942 = vpack.c.b16 %v3430, %v2918
        %v3943 = vpack.c.b16 %v3431, %v2919
        %v3944 = vpack.c.b16 %v3432, %v2920
        %v3945 = vpack.c.b16 %v3433, %v2921
        %v3946 = vpack.c.b16 %v3434, %v2922
        %v3947 = vpack.c.b16 %v3435, %v2923
        %v3948 = vpack.c.b16 %v3436, %v2924
        %v3949 = vpack.c.b16 %v3437, %v2925
        %v3950 = vpack.c.b16 %v3438, %v2926
        %v3951 = vpack.c.b16 %v3439, %v2927
        %v3952 = vpack.c.b16 %v3440, %v2928
        %v3953 = vpack.c.b16 %v3441, %v2929
        %v3954 = vpack.c.b16 %v3442, %v2930
        %v3955 = vpack.c.b16 %v3443, %v2931
        %v3956 = vpack.c.b16 %v3444, %v2932
        %v3957 = vpack.c.b16 %v3445, %v2933
        %v3958 = vpack.c.b16 %v3446, %v2934
        %v3959 = vpack.c.b16 %v3447, %v2935
        %v3960 = vpack.c.b16 %v3448, %v2936
        %v3961 = vpack.c.b16 %v3449, %v2937
        %v3962 = vpack.c.b16 %v3450, %v2938
        %v3963 = vpack.c.b16 %v3451, %v2939
        %v3964 = vpack.c.b16 %v3452, %v2940
        %v3965 = vpack.c.b16 %v3453, %v2941
        %v3966 = vpack.c.b16 %v3454, %v2942
        %v3967 = vpack.c.b16 %v3455, %v2943
        %v3968 = vpack.c.b16 %v3456, %v2944
        %v3969 = vpack.c.b16 %v3457, %v2945
        %v3970 = vpack.c.b16 %v3458, %v2946
        %v3971 = vpack.c.b16 %v3459, %v2947
        %v3972 = vpack.c.b16 %v3460, %v2948
        %v3973 = vpack.c.b16 %v3461, %v2949
        %v3974 = vpack.c.b16 %v3462, %v2950
        %v3975 = vpack.c.b16 %v3463, %v2951
        %v3976 = vpack.c.b16 %v3464, %v2952
        %v3977 = vpack.c.b16 %v3465, %v2953
        %v3978 = vpack.c.b16 %v3466, %v2954
        %v3979 = vpack.c.b16 %v3467, %v2955
        %v3980 = vpack.c.b16 %v3468, %v2956
        %v3981 = vpack.c.b16 %v3469, %v2957
        %v3982 = vpack.c.b16 %v3470, %v2958
        %v3983 = vpack.c.b16 %v3471, %v2959
        %v3984 = vpack.c.b16 %v3472, %v2960
        %v3985 = vpack.c.b16 %v3473, %v2961
        %v3986 = vpack.c.b16 %v3474, %v2962
        %v3987 = vpack.c.b16 %v3475, %v2963
        %v3988 = vpack.c.b16 %v3476, %v2964
        %v3989 = vpack.c.b16 %v3477, %v2965
        %v3990 = vpack.c.b16 %v3478, %v2966
        %v3991 = vpack.c.b16 %v3479, %v2967
        %v3992 = vpack.c.b16 %v3480, %v2968
        %v3993 = vpack.c.b16 %v3481, %v2969
        %v3994 = vpack.c.b16 %v3482, %v2970
        %v3995 = vpack.c.b16 %v3483, %v2971
        %v3996 = vpack.c.b16 %v3484, %v2972
        %v3997 = vpack.c.b16 %v3485, %v2973
        %v3998 = vpack.c.b16 %v3486, %v2974
        %v3999 = vpack.c.b16 %v3487, %v2975
        %v4000 = vpack.c.b16 %v3488, %v2976
        %v4001 = vpack.c.b16 %v3489, %v2977
        %v4002 = vpack.c.b16 %v3490, %v2978
        %v4003 = vpack.c.b16 %v3491, %v2979
        %v4004 = vpack.c.b16 %v3492, %v2980
        %v4005 = vpack.c.b16 %v3493, %v2981
        %v4006 = vpack.c.b16 %v3494, %v2982
        %v4007 = vpack.c.b16 %v3495, %v2983
        %v4008 = vpack.c.b16 %v3496, %v2984
        %v4009 = vpack.c.b16 %v3497, %v2985
        %v4010 = vpack.c.b16 %v3498, %v2986
        %v4011 = vpack.c.b16 %v3499, %v2987
        %v4012 = vpack.c.b16 %v3500, %v2988
        %v4013 = vpack.c.b16 %v3501, %v2989
        %v4014 = vpack.c.b16 %v3502, %v2990
        %v4015 = vpack.c.b16 %v3503, %v2991
        %v4016 = vpack.c.b16 %v3504, %v2992
        %v4017 = vpack.c.b16 %v3505, %v2993
        %v4018 = vpack.c.b16 %v3506, %v2994
        %v4019 = vpack.c.b16 %v3507, %v2995
        %v4020 = vpack.c.b16 %v3508, %v2996
        %v4021 = vpack.c.b16 %v3509, %v2997
        %v4022 = vpack.c.b16 %v3510, %v2998
        %v4023 = vpack.c.b16 %v3511, %v2999
        %v4024 = vpack.c.b16 %v3512, %v3000
        %v4025 = vpack.c.b16 %v3513, %v3001
        %v4026 = vpack.c.b16 %v3514, %v3002
        %v4027 = vpack.c.b16 %v3515, %v3003
        %v4028 = vpack.c.b16 %v3516, %v3004
        %v4029 = vpack.c.b16 %v3517, %v3005
        %v4030 = vpack.c.b16 %v3518, %v3006
        %v4031 = vpack.c.b16 %v3519, %v3007
        %4544 = vmatpush.bf16.xpose.msra.mxu0 0
        %4545 = vmatpush.bf16.xpose.msra.mxu0 0
        %4546 = vmatpush.bf16.xpose.msra.mxu0 0
        %4547 = vmatpush.bf16.xpose.msra.mxu0 0
        %4548 = vmatpush.bf16.xpose.msra.mxu0 0
        %4549 = vmatpush.bf16.xpose.msra.mxu0 0
        %4550 = vmatpush.bf16.xpose.msra.mxu0 0
        %4551 = vmatpush.bf16.xpose.msra.mxu0 %v3520
        %4552 = vmatmul.bf16.gmra.mxu0 %v834
        %v4553 = vpop.f32.mrf.mxu0
        %v4554 = vadd.f32 0.0, %v4553
        %v4555 = vpop.f32.mrf.mxu0
        %4556 = vdwg.mxu0
        %4557 = vmatpush.bf16.xpose.msra.mxu0 0
        %4558 = vmatpush.bf16.xpose.msra.mxu0 0
        %4559 = vmatpush.bf16.xpose.msra.mxu0 0
        %4560 = vmatpush.bf16.xpose.msra.mxu0 0
        %4561 = vmatpush.bf16.xpose.msra.mxu0 0
        %4562 = vmatpush.bf16.xpose.msra.mxu0 0
        %4563 = vmatpush.bf16.xpose.msra.mxu0 0
        %4564 = vmatpush.bf16.xpose.msra.mxu0 %v3521
        %4565 = vmatmul.bf16.gmra.mxu0 %v835
        %v4566 = vpop.f32.mrf.mxu0
        %v4567 = vadd.f32 %v4554, %v4566
        %v4568 = vpop.f32.mrf.mxu0
        %4569 = vdwg.mxu0
        %4570 = vmatpush.bf16.xpose.msra.mxu0 0
        %4571 = vmatpush.bf16.xpose.msra.mxu0 0
        %4572 = vmatpush.bf16.xpose.msra.mxu0 0
        %4573 = vmatpush.bf16.xpose.msra.mxu0 0
        %4574 = vmatpush.bf16.xpose.msra.mxu0 0
        %4575 = vmatpush.bf16.xpose.msra.mxu0 0
        %4576 = vmatpush.bf16.xpose.msra.mxu0 0
        %4577 = vmatpush.bf16.xpose.msra.mxu0 %v3522
        %4578 = vmatmul.bf16.gmra.mxu0 %v836
        %v4579 = vpop.f32.mrf.mxu0
        %v4580 = vadd.f32 %v4567, %v4579
        %v4581 = vpop.f32.mrf.mxu0
        %4582 = vdwg.mxu0
        %4583 = vmatpush.bf16.xpose.msra.mxu0 0
        %4584 = vmatpush.bf16.xpose.msra.mxu0 0
        %4585 = vmatpush.bf16.xpose.msra.mxu0 0
        %4586 = vmatpush.bf16.xpose.msra.mxu0 0
        %4587 = vmatpush.bf16.xpose.msra.mxu0 0
        %4588 = vmatpush.bf16.xpose.msra.mxu0 0
        %4589 = vmatpush.bf16.xpose.msra.mxu0 0
        %4590 = vmatpush.bf16.xpose.msra.mxu0 %v3523
        %4591 = vmatmul.bf16.gmra.mxu0 %v837
        %v4592 = vpop.f32.mrf.mxu0
        %v4593 = vadd.f32 %v4580, %v4592
        %v4594 = vpop.f32.mrf.mxu0
        %4595 = vdwg.mxu0
        %4596 = vmatpush.bf16.xpose.msra.mxu0 0
        %4597 = vmatpush.bf16.xpose.msra.mxu0 0
        %4598 = vmatpush.bf16.xpose.msra.mxu0 0
        %4599 = vmatpush.bf16.xpose.msra.mxu0 0
        %4600 = vmatpush.bf16.xpose.msra.mxu0 0
        %4601 = vmatpush.bf16.xpose.msra.mxu0 0
        %4602 = vmatpush.bf16.xpose.msra.mxu0 0
        %4603 = vmatpush.bf16.xpose.msra.mxu0 %v3524
        %4604 = vmatmul.bf16.gmra.mxu0 %v838
        %v4605 = vpop.f32.mrf.mxu0
        %v4606 = vadd.f32 %v4593, %v4605
        %v4607 = vpop.f32.mrf.mxu0
        %4608 = vdwg.mxu0
        %4609 = vmatpush.bf16.xpose.msra.mxu0 0
        %4610 = vmatpush.bf16.xpose.msra.mxu0 0
        %4611 = vmatpush.bf16.xpose.msra.mxu0 0
        %4612 = vmatpush.bf16.xpose.msra.mxu0 0
        %4613 = vmatpush.bf16.xpose.msra.mxu0 0
        %4614 = vmatpush.bf16.xpose.msra.mxu0 0
        %4615 = vmatpush.bf16.xpose.msra.mxu0 0
        %4616 = vmatpush.bf16.xpose.msra.mxu0 %v3525
        %4617 = vmatmul.bf16.gmra.mxu0 %v839
        %v4618 = vpop.f32.mrf.mxu0
        %v4619 = vadd.f32 %v4606, %v4618
        %v4620 = vpop.f32.mrf.mxu0
        %4621 = vdwg.mxu0
        %4622 = vmatpush.bf16.xpose.msra.mxu0 0
        %4623 = vmatpush.bf16.xpose.msra.mxu0 0
        %4624 = vmatpush.bf16.xpose.msra.mxu0 0
        %4625 = vmatpush.bf16.xpose.msra.mxu0 0
        %4626 = vmatpush.bf16.xpose.msra.mxu0 0
        %4627 = vmatpush.bf16.xpose.msra.mxu0 0
        %4628 = vmatpush.bf16.xpose.msra.mxu0 0
        %4629 = vmatpush.bf16.xpose.msra.mxu0 %v3526
        %4630 = vmatmul.bf16.gmra.mxu0 %v840
        %v4631 = vpop.f32.mrf.mxu0
        %v4632 = vadd.f32 %v4619, %v4631
        %v4633 = vpop.f32.mrf.mxu0
        %4634 = vdwg.mxu0
        %4635 = vmatpush.bf16.xpose.msra.mxu0 0
        %4636 = vmatpush.bf16.xpose.msra.mxu0 0
        %4637 = vmatpush.bf16.xpose.msra.mxu0 0
        %4638 = vmatpush.bf16.xpose.msra.mxu0 0
        %4639 = vmatpush.bf16.xpose.msra.mxu0 0
        %4640 = vmatpush.bf16.xpose.msra.mxu0 0
        %4641 = vmatpush.bf16.xpose.msra.mxu0 0
        %4642 = vmatpush.bf16.xpose.msra.mxu0 %v3527
        %4643 = vmatmul.bf16.gmra.mxu0 %v841
        %v4644 = vpop.f32.mrf.mxu0
        %v4645 = vadd.f32 %v4632, %v4644
        %v4646 = vpop.f32.mrf.mxu0
        %4647 = vdwg.mxu0
        %4648 = vmatpush.bf16.xpose.msra.mxu0 0
        %4649 = vmatpush.bf16.xpose.msra.mxu0 0
        %4650 = vmatpush.bf16.xpose.msra.mxu0 0
        %4651 = vmatpush.bf16.xpose.msra.mxu0 0
        %4652 = vmatpush.bf16.xpose.msra.mxu0 0
        %4653 = vmatpush.bf16.xpose.msra.mxu0 0
        %4654 = vmatpush.bf16.xpose.msra.mxu0 0
        %4655 = vmatpush.bf16.xpose.msra.mxu0 %v3528
        %4656 = vmatmul.bf16.gmra.mxu0 %v844
        %v4657 = vpop.f32.mrf.mxu0
        %v4658 = vadd.f32 %v4645, %v4657
        %v4659 = vpop.f32.mrf.mxu0
        %4660 = vdwg.mxu0
        %4661 = vmatpush.bf16.xpose.msra.mxu0 0
        %4662 = vmatpush.bf16.xpose.msra.mxu0 0
        %4663 = vmatpush.bf16.xpose.msra.mxu0 0
        %4664 = vmatpush.bf16.xpose.msra.mxu0 0
        %4665 = vmatpush.bf16.xpose.msra.mxu0 0
        %4666 = vmatpush.bf16.xpose.msra.mxu0 0
        %4667 = vmatpush.bf16.xpose.msra.mxu0 0
        %4668 = vmatpush.bf16.xpose.msra.mxu0 %v3529
        %4669 = vmatmul.bf16.gmra.mxu0 %v845
        %v4670 = vpop.f32.mrf.mxu0
        %v4671 = vadd.f32 %v4658, %v4670
        %v4672 = vpop.f32.mrf.mxu0
        %4673 = vdwg.mxu0
        %4674 = vmatpush.bf16.xpose.msra.mxu0 0
        %4675 = vmatpush.bf16.xpose.msra.mxu0 0
        %4676 = vmatpush.bf16.xpose.msra.mxu0 0
        %4677 = vmatpush.bf16.xpose.msra.mxu0 0
        %4678 = vmatpush.bf16.xpose.msra.mxu0 0
        %4679 = vmatpush.bf16.xpose.msra.mxu0 0
        %4680 = vmatpush.bf16.xpose.msra.mxu0 0
        %4681 = vmatpush.bf16.xpose.msra.mxu0 %v3530
        %4682 = vmatmul.bf16.gmra.mxu0 %v846
        %v4683 = vpop.f32.mrf.mxu0
        %v4684 = vadd.f32 %v4671, %v4683
        %v4685 = vpop.f32.mrf.mxu0
        %4686 = vdwg.mxu0
        %4687 = vmatpush.bf16.xpose.msra.mxu0 0
        %4688 = vmatpush.bf16.xpose.msra.mxu0 0
        %4689 = vmatpush.bf16.xpose.msra.mxu0 0
        %4690 = vmatpush.bf16.xpose.msra.mxu0 0
        %4691 = vmatpush.bf16.xpose.msra.mxu0 0
        %4692 = vmatpush.bf16.xpose.msra.mxu0 0
        %4693 = vmatpush.bf16.xpose.msra.mxu0 0
        %4694 = vmatpush.bf16.xpose.msra.mxu0 %v3531
        %4695 = vmatmul.bf16.gmra.mxu0 %v847
        %v4696 = vpop.f32.mrf.mxu0
        %v4697 = vadd.f32 %v4684, %v4696
        %v4698 = vpop.f32.mrf.mxu0
        %4699 = vdwg.mxu0
        %4700 = vmatpush.bf16.xpose.msra.mxu0 0
        %4701 = vmatpush.bf16.xpose.msra.mxu0 0
        %4702 = vmatpush.bf16.xpose.msra.mxu0 0
        %4703 = vmatpush.bf16.xpose.msra.mxu0 0
        %4704 = vmatpush.bf16.xpose.msra.mxu0 0
        %4705 = vmatpush.bf16.xpose.msra.mxu0 0
        %4706 = vmatpush.bf16.xpose.msra.mxu0 0
        %4707 = vmatpush.bf16.xpose.msra.mxu0 %v3532
        %4708 = vmatmul.bf16.gmra.mxu0 %v848
        %v4709 = vpop.f32.mrf.mxu0
        %v4710 = vadd.f32 %v4697, %v4709
        %v4711 = vpop.f32.mrf.mxu0
        %4712 = vdwg.mxu0
        %4713 = vmatpush.bf16.xpose.msra.mxu0 0
        %4714 = vmatpush.bf16.xpose.msra.mxu0 0
        %4715 = vmatpush.bf16.xpose.msra.mxu0 0
        %4716 = vmatpush.bf16.xpose.msra.mxu0 0
        %4717 = vmatpush.bf16.xpose.msra.mxu0 0
        %4718 = vmatpush.bf16.xpose.msra.mxu0 0
        %4719 = vmatpush.bf16.xpose.msra.mxu0 0
        %4720 = vmatpush.bf16.xpose.msra.mxu0 %v3533
        %4721 = vmatmul.bf16.gmra.mxu0 %v849
        %v4722 = vpop.f32.mrf.mxu0
        %v4723 = vadd.f32 %v4710, %v4722
        %v4724 = vpop.f32.mrf.mxu0
        %4725 = vdwg.mxu0
        %4726 = vmatpush.bf16.xpose.msra.mxu0 0
        %4727 = vmatpush.bf16.xpose.msra.mxu0 0
        %4728 = vmatpush.bf16.xpose.msra.mxu0 0
        %4729 = vmatpush.bf16.xpose.msra.mxu0 0
        %4730 = vmatpush.bf16.xpose.msra.mxu0 0
        %4731 = vmatpush.bf16.xpose.msra.mxu0 0
        %4732 = vmatpush.bf16.xpose.msra.mxu0 0
        %4733 = vmatpush.bf16.xpose.msra.mxu0 %v3534
        %4734 = vmatmul.bf16.gmra.mxu0 %v850
        %v4735 = vpop.f32.mrf.mxu0
        %v4736 = vadd.f32 %v4723, %v4735
        %v4737 = vpop.f32.mrf.mxu0
        %4738 = vdwg.mxu0
        %4739 = vmatpush.bf16.xpose.msra.mxu0 0
        %4740 = vmatpush.bf16.xpose.msra.mxu0 0
        %4741 = vmatpush.bf16.xpose.msra.mxu0 0
        %4742 = vmatpush.bf16.xpose.msra.mxu0 0
        %4743 = vmatpush.bf16.xpose.msra.mxu0 0
        %4744 = vmatpush.bf16.xpose.msra.mxu0 0
        %4745 = vmatpush.bf16.xpose.msra.mxu0 0
        %4746 = vmatpush.bf16.xpose.msra.mxu0 %v3535
        %4747 = vmatmul.bf16.gmra.mxu0 %v851
        %v4748 = vpop.f32.mrf.mxu0
        %v4749 = vadd.f32 %v4736, %v4748
        %v4750 = vpop.f32.mrf.mxu0
        %4751 = vdwg.mxu0
        %4752 = vmatpush.bf16.xpose.msra.mxu0 0
        %4753 = vmatpush.bf16.xpose.msra.mxu0 0
        %4754 = vmatpush.bf16.xpose.msra.mxu0 0
        %4755 = vmatpush.bf16.xpose.msra.mxu0 0
        %4756 = vmatpush.bf16.xpose.msra.mxu0 0
        %4757 = vmatpush.bf16.xpose.msra.mxu0 0
        %4758 = vmatpush.bf16.xpose.msra.mxu0 0
        %4759 = vmatpush.bf16.xpose.msra.mxu0 %v3536
        %4760 = vmatmul.bf16.gmra.mxu0 %v854
        %v4761 = vpop.f32.mrf.mxu0
        %v4762 = vadd.f32 %v4749, %v4761
        %v4763 = vpop.f32.mrf.mxu0
        %4764 = vdwg.mxu0
        %4765 = vmatpush.bf16.xpose.msra.mxu0 0
        %4766 = vmatpush.bf16.xpose.msra.mxu0 0
        %4767 = vmatpush.bf16.xpose.msra.mxu0 0
        %4768 = vmatpush.bf16.xpose.msra.mxu0 0
        %4769 = vmatpush.bf16.xpose.msra.mxu0 0
        %4770 = vmatpush.bf16.xpose.msra.mxu0 0
        %4771 = vmatpush.bf16.xpose.msra.mxu0 0
        %4772 = vmatpush.bf16.xpose.msra.mxu0 %v3537
        %4773 = vmatmul.bf16.gmra.mxu0 %v855
        %v4774 = vpop.f32.mrf.mxu0
        %v4775 = vadd.f32 %v4762, %v4774
        %v4776 = vpop.f32.mrf.mxu0
        %4777 = vdwg.mxu0
        %4778 = vmatpush.bf16.xpose.msra.mxu0 0
        %4779 = vmatpush.bf16.xpose.msra.mxu0 0
        %4780 = vmatpush.bf16.xpose.msra.mxu0 0
        %4781 = vmatpush.bf16.xpose.msra.mxu0 0
        %4782 = vmatpush.bf16.xpose.msra.mxu0 0
        %4783 = vmatpush.bf16.xpose.msra.mxu0 0
        %4784 = vmatpush.bf16.xpose.msra.mxu0 0
        %4785 = vmatpush.bf16.xpose.msra.mxu0 %v3538
        %4786 = vmatmul.bf16.gmra.mxu0 %v856
        %v4787 = vpop.f32.mrf.mxu0
        %v4788 = vadd.f32 %v4775, %v4787
        %v4789 = vpop.f32.mrf.mxu0
        %4790 = vdwg.mxu0
        %4791 = vmatpush.bf16.xpose.msra.mxu0 0
        %4792 = vmatpush.bf16.xpose.msra.mxu0 0
        %4793 = vmatpush.bf16.xpose.msra.mxu0 0
        %4794 = vmatpush.bf16.xpose.msra.mxu0 0
        %4795 = vmatpush.bf16.xpose.msra.mxu0 0
        %4796 = vmatpush.bf16.xpose.msra.mxu0 0
        %4797 = vmatpush.bf16.xpose.msra.mxu0 0
        %4798 = vmatpush.bf16.xpose.msra.mxu0 %v3539
        %4799 = vmatmul.bf16.gmra.mxu0 %v857
        %v4800 = vpop.f32.mrf.mxu0
        %v4801 = vadd.f32 %v4788, %v4800
        %v4802 = vpop.f32.mrf.mxu0
        %4803 = vdwg.mxu0
        %4804 = vmatpush.bf16.xpose.msra.mxu0 0
        %4805 = vmatpush.bf16.xpose.msra.mxu0 0
        %4806 = vmatpush.bf16.xpose.msra.mxu0 0
        %4807 = vmatpush.bf16.xpose.msra.mxu0 0
        %4808 = vmatpush.bf16.xpose.msra.mxu0 0
        %4809 = vmatpush.bf16.xpose.msra.mxu0 0
        %4810 = vmatpush.bf16.xpose.msra.mxu0 0
        %4811 = vmatpush.bf16.xpose.msra.mxu0 %v3540
        %4812 = vmatmul.bf16.gmra.mxu0 %v858
        %v4813 = vpop.f32.mrf.mxu0
        %v4814 = vadd.f32 %v4801, %v4813
        %v4815 = vpop.f32.mrf.mxu0
        %4816 = vdwg.mxu0
        %4817 = vmatpush.bf16.xpose.msra.mxu0 0
        %4818 = vmatpush.bf16.xpose.msra.mxu0 0
        %4819 = vmatpush.bf16.xpose.msra.mxu0 0
        %4820 = vmatpush.bf16.xpose.msra.mxu0 0
        %4821 = vmatpush.bf16.xpose.msra.mxu0 0
        %4822 = vmatpush.bf16.xpose.msra.mxu0 0
        %4823 = vmatpush.bf16.xpose.msra.mxu0 0
        %4824 = vmatpush.bf16.xpose.msra.mxu0 %v3541
        %4825 = vmatmul.bf16.gmra.mxu0 %v859
        %v4826 = vpop.f32.mrf.mxu0
        %v4827 = vadd.f32 %v4814, %v4826
        %v4828 = vpop.f32.mrf.mxu0
        %4829 = vdwg.mxu0
        %4830 = vmatpush.bf16.xpose.msra.mxu0 0
        %4831 = vmatpush.bf16.xpose.msra.mxu0 0
        %4832 = vmatpush.bf16.xpose.msra.mxu0 0
        %4833 = vmatpush.bf16.xpose.msra.mxu0 0
        %4834 = vmatpush.bf16.xpose.msra.mxu0 0
        %4835 = vmatpush.bf16.xpose.msra.mxu0 0
        %4836 = vmatpush.bf16.xpose.msra.mxu0 0
        %4837 = vmatpush.bf16.xpose.msra.mxu0 %v3542
        %4838 = vmatmul.bf16.gmra.mxu0 %v860
        %v4839 = vpop.f32.mrf.mxu0
        %v4840 = vadd.f32 %v4827, %v4839
        %v4841 = vpop.f32.mrf.mxu0
        %4842 = vdwg.mxu0
        %4843 = vmatpush.bf16.xpose.msra.mxu0 0
        %4844 = vmatpush.bf16.xpose.msra.mxu0 0
        %4845 = vmatpush.bf16.xpose.msra.mxu0 0
        %4846 = vmatpush.bf16.xpose.msra.mxu0 0
        %4847 = vmatpush.bf16.xpose.msra.mxu0 0
        %4848 = vmatpush.bf16.xpose.msra.mxu0 0
        %4849 = vmatpush.bf16.xpose.msra.mxu0 0
        %4850 = vmatpush.bf16.xpose.msra.mxu0 %v3543
        %4851 = vmatmul.bf16.gmra.mxu0 %v861
        %v4852 = vpop.f32.mrf.mxu0
        %v4853 = vadd.f32 %v4840, %v4852
        %v4854 = vpop.f32.mrf.mxu0
        %4855 = vdwg.mxu0
        %4856 = vmatpush.bf16.xpose.msra.mxu0 0
        %4857 = vmatpush.bf16.xpose.msra.mxu0 0
        %4858 = vmatpush.bf16.xpose.msra.mxu0 0
        %4859 = vmatpush.bf16.xpose.msra.mxu0 0
        %4860 = vmatpush.bf16.xpose.msra.mxu0 0
        %4861 = vmatpush.bf16.xpose.msra.mxu0 0
        %4862 = vmatpush.bf16.xpose.msra.mxu0 0
        %4863 = vmatpush.bf16.xpose.msra.mxu0 %v3544
        %4864 = vmatmul.bf16.gmra.mxu0 %v864
        %v4865 = vpop.f32.mrf.mxu0
        %v4866 = vadd.f32 %v4853, %v4865
        %v4867 = vpop.f32.mrf.mxu0
        %4868 = vdwg.mxu0
        %4869 = vmatpush.bf16.xpose.msra.mxu0 0
        %4870 = vmatpush.bf16.xpose.msra.mxu0 0
        %4871 = vmatpush.bf16.xpose.msra.mxu0 0
        %4872 = vmatpush.bf16.xpose.msra.mxu0 0
        %4873 = vmatpush.bf16.xpose.msra.mxu0 0
        %4874 = vmatpush.bf16.xpose.msra.mxu0 0
        %4875 = vmatpush.bf16.xpose.msra.mxu0 0
        %4876 = vmatpush.bf16.xpose.msra.mxu0 %v3545
        %4877 = vmatmul.bf16.gmra.mxu0 %v865
        %v4878 = vpop.f32.mrf.mxu0
        %v4879 = vadd.f32 %v4866, %v4878
        %v4880 = vpop.f32.mrf.mxu0
        %4881 = vdwg.mxu0
        %4882 = vmatpush.bf16.xpose.msra.mxu0 0
        %4883 = vmatpush.bf16.xpose.msra.mxu0 0
        %4884 = vmatpush.bf16.xpose.msra.mxu0 0
        %4885 = vmatpush.bf16.xpose.msra.mxu0 0
        %4886 = vmatpush.bf16.xpose.msra.mxu0 0
        %4887 = vmatpush.bf16.xpose.msra.mxu0 0
        %4888 = vmatpush.bf16.xpose.msra.mxu0 0
        %4889 = vmatpush.bf16.xpose.msra.mxu0 %v3546
        %4890 = vmatmul.bf16.gmra.mxu0 %v866
        %v4891 = vpop.f32.mrf.mxu0
        %v4892 = vadd.f32 %v4879, %v4891
        %v4893 = vpop.f32.mrf.mxu0
        %4894 = vdwg.mxu0
        %4895 = vmatpush.bf16.xpose.msra.mxu0 0
        %4896 = vmatpush.bf16.xpose.msra.mxu0 0
        %4897 = vmatpush.bf16.xpose.msra.mxu0 0
        %4898 = vmatpush.bf16.xpose.msra.mxu0 0
        %4899 = vmatpush.bf16.xpose.msra.mxu0 0
        %4900 = vmatpush.bf16.xpose.msra.mxu0 0
        %4901 = vmatpush.bf16.xpose.msra.mxu0 0
        %4902 = vmatpush.bf16.xpose.msra.mxu0 %v3547
        %4903 = vmatmul.bf16.gmra.mxu0 %v867
        %v4904 = vpop.f32.mrf.mxu0
        %v4905 = vadd.f32 %v4892, %v4904
        %v4906 = vpop.f32.mrf.mxu0
        %4907 = vdwg.mxu0
        %4908 = vmatpush.bf16.xpose.msra.mxu0 0
        %4909 = vmatpush.bf16.xpose.msra.mxu0 0
        %4910 = vmatpush.bf16.xpose.msra.mxu0 0
        %4911 = vmatpush.bf16.xpose.msra.mxu0 0
        %4912 = vmatpush.bf16.xpose.msra.mxu0 0
        %4913 = vmatpush.bf16.xpose.msra.mxu0 0
        %4914 = vmatpush.bf16.xpose.msra.mxu0 0
        %4915 = vmatpush.bf16.xpose.msra.mxu0 %v3548
        %4916 = vmatmul.bf16.gmra.mxu0 %v868
        %v4917 = vpop.f32.mrf.mxu0
        %v4918 = vadd.f32 %v4905, %v4917
        %v4919 = vpop.f32.mrf.mxu0
        %4920 = vdwg.mxu0
        %4921 = vmatpush.bf16.xpose.msra.mxu0 0
        %4922 = vmatpush.bf16.xpose.msra.mxu0 0
        %4923 = vmatpush.bf16.xpose.msra.mxu0 0
        %4924 = vmatpush.bf16.xpose.msra.mxu0 0
        %4925 = vmatpush.bf16.xpose.msra.mxu0 0
        %4926 = vmatpush.bf16.xpose.msra.mxu0 0
        %4927 = vmatpush.bf16.xpose.msra.mxu0 0
        %4928 = vmatpush.bf16.xpose.msra.mxu0 %v3549
        %4929 = vmatmul.bf16.gmra.mxu0 %v869
        %v4930 = vpop.f32.mrf.mxu0
        %v4931 = vadd.f32 %v4918, %v4930
        %v4932 = vpop.f32.mrf.mxu0
        %4933 = vdwg.mxu0
        %4934 = vmatpush.bf16.xpose.msra.mxu0 0
        %4935 = vmatpush.bf16.xpose.msra.mxu0 0
        %4936 = vmatpush.bf16.xpose.msra.mxu0 0
        %4937 = vmatpush.bf16.xpose.msra.mxu0 0
        %4938 = vmatpush.bf16.xpose.msra.mxu0 0
        %4939 = vmatpush.bf16.xpose.msra.mxu0 0
        %4940 = vmatpush.bf16.xpose.msra.mxu0 0
        %4941 = vmatpush.bf16.xpose.msra.mxu0 %v3550
        %4942 = vmatmul.bf16.gmra.mxu0 %v870
        %v4943 = vpop.f32.mrf.mxu0
        %v4944 = vadd.f32 %v4931, %v4943
        %v4945 = vpop.f32.mrf.mxu0
        %4946 = vdwg.mxu0
        %4947 = vmatpush.bf16.xpose.msra.mxu0 0
        %4948 = vmatpush.bf16.xpose.msra.mxu0 0
        %4949 = vmatpush.bf16.xpose.msra.mxu0 0
        %4950 = vmatpush.bf16.xpose.msra.mxu0 0
        %4951 = vmatpush.bf16.xpose.msra.mxu0 0
        %4952 = vmatpush.bf16.xpose.msra.mxu0 0
        %4953 = vmatpush.bf16.xpose.msra.mxu0 0
        %4954 = vmatpush.bf16.xpose.msra.mxu0 %v3551
        %4955 = vmatmul.bf16.gmra.mxu0 %v871
        %v4956 = vpop.f32.mrf.mxu0
        %v4957 = vadd.f32 %v4944, %v4956
        %v4958 = vpop.f32.mrf.mxu0
        %4959 = vdwg.mxu0
        %4960 = vmatpush.bf16.xpose.msra.mxu0 0
        %4961 = vmatpush.bf16.xpose.msra.mxu0 0
        %4962 = vmatpush.bf16.xpose.msra.mxu0 0
        %4963 = vmatpush.bf16.xpose.msra.mxu0 0
        %4964 = vmatpush.bf16.xpose.msra.mxu0 0
        %4965 = vmatpush.bf16.xpose.msra.mxu0 0
        %4966 = vmatpush.bf16.xpose.msra.mxu0 0
        %4967 = vmatpush.bf16.xpose.msra.mxu0 %v3552
        %4968 = vmatmul.bf16.gmra.mxu0 %v874
        %v4969 = vpop.f32.mrf.mxu0
        %v4970 = vadd.f32 %v4957, %v4969
        %v4971 = vpop.f32.mrf.mxu0
        %4972 = vdwg.mxu0
        %4973 = vmatpush.bf16.xpose.msra.mxu0 0
        %4974 = vmatpush.bf16.xpose.msra.mxu0 0
        %4975 = vmatpush.bf16.xpose.msra.mxu0 0
        %4976 = vmatpush.bf16.xpose.msra.mxu0 0
        %4977 = vmatpush.bf16.xpose.msra.mxu0 0
        %4978 = vmatpush.bf16.xpose.msra.mxu0 0
        %4979 = vmatpush.bf16.xpose.msra.mxu0 0
        %4980 = vmatpush.bf16.xpose.msra.mxu0 %v3553
        %4981 = vmatmul.bf16.gmra.mxu0 %v875
        %v4982 = vpop.f32.mrf.mxu0
        %v4983 = vadd.f32 %v4970, %v4982
        %v4984 = vpop.f32.mrf.mxu0
        %4985 = vdwg.mxu0
        %4986 = vmatpush.bf16.xpose.msra.mxu0 0
        %4987 = vmatpush.bf16.xpose.msra.mxu0 0
        %4988 = vmatpush.bf16.xpose.msra.mxu0 0
        %4989 = vmatpush.bf16.xpose.msra.mxu0 0
        %4990 = vmatpush.bf16.xpose.msra.mxu0 0
        %4991 = vmatpush.bf16.xpose.msra.mxu0 0
        %4992 = vmatpush.bf16.xpose.msra.mxu0 0
        %4993 = vmatpush.bf16.xpose.msra.mxu0 %v3554
        %4994 = vmatmul.bf16.gmra.mxu0 %v876
        %v4995 = vpop.f32.mrf.mxu0
        %v4996 = vadd.f32 %v4983, %v4995
        %v4997 = vpop.f32.mrf.mxu0
        %4998 = vdwg.mxu0
        %4999 = vmatpush.bf16.xpose.msra.mxu0 0
        %5000 = vmatpush.bf16.xpose.msra.mxu0 0
        %5001 = vmatpush.bf16.xpose.msra.mxu0 0
        %5002 = vmatpush.bf16.xpose.msra.mxu0 0
        %5003 = vmatpush.bf16.xpose.msra.mxu0 0
        %5004 = vmatpush.bf16.xpose.msra.mxu0 0
        %5005 = vmatpush.bf16.xpose.msra.mxu0 0
        %5006 = vmatpush.bf16.xpose.msra.mxu0 %v3555
        %5007 = vmatmul.bf16.gmra.mxu0 %v877
        %v5008 = vpop.f32.mrf.mxu0
        %v5009 = vadd.f32 %v4996, %v5008
        %v5010 = vpop.f32.mrf.mxu0
        %5011 = vdwg.mxu0
        %5012 = vmatpush.bf16.xpose.msra.mxu0 0
        %5013 = vmatpush.bf16.xpose.msra.mxu0 0
        %5014 = vmatpush.bf16.xpose.msra.mxu0 0
        %5015 = vmatpush.bf16.xpose.msra.mxu0 0
        %5016 = vmatpush.bf16.xpose.msra.mxu0 0
        %5017 = vmatpush.bf16.xpose.msra.mxu0 0
        %5018 = vmatpush.bf16.xpose.msra.mxu0 0
        %5019 = vmatpush.bf16.xpose.msra.mxu0 %v3556
        %5020 = vmatmul.bf16.gmra.mxu0 %v878
        %v5021 = vpop.f32.mrf.mxu0
        %v5022 = vadd.f32 %v5009, %v5021
        %v5023 = vpop.f32.mrf.mxu0
        %5024 = vdwg.mxu0
        %5025 = vmatpush.bf16.xpose.msra.mxu0 0
        %5026 = vmatpush.bf16.xpose.msra.mxu0 0
        %5027 = vmatpush.bf16.xpose.msra.mxu0 0
        %5028 = vmatpush.bf16.xpose.msra.mxu0 0
        %5029 = vmatpush.bf16.xpose.msra.mxu0 0
        %5030 = vmatpush.bf16.xpose.msra.mxu0 0
        %5031 = vmatpush.bf16.xpose.msra.mxu0 0
        %5032 = vmatpush.bf16.xpose.msra.mxu0 %v3557
        %5033 = vmatmul.bf16.gmra.mxu0 %v879
        %v5034 = vpop.f32.mrf.mxu0
        %v5035 = vadd.f32 %v5022, %v5034
        %v5036 = vpop.f32.mrf.mxu0
        %5037 = vdwg.mxu0
        %5038 = vmatpush.bf16.xpose.msra.mxu0 0
        %5039 = vmatpush.bf16.xpose.msra.mxu0 0
        %5040 = vmatpush.bf16.xpose.msra.mxu0 0
        %5041 = vmatpush.bf16.xpose.msra.mxu0 0
        %5042 = vmatpush.bf16.xpose.msra.mxu0 0
        %5043 = vmatpush.bf16.xpose.msra.mxu0 0
        %5044 = vmatpush.bf16.xpose.msra.mxu0 0
        %5045 = vmatpush.bf16.xpose.msra.mxu0 %v3558
        %5046 = vmatmul.bf16.gmra.mxu0 %v880
        %v5047 = vpop.f32.mrf.mxu0
        %v5048 = vadd.f32 %v5035, %v5047
        %v5049 = vpop.f32.mrf.mxu0
        %5050 = vdwg.mxu0
        %5051 = vmatpush.bf16.xpose.msra.mxu0 0
        %5052 = vmatpush.bf16.xpose.msra.mxu0 0
        %5053 = vmatpush.bf16.xpose.msra.mxu0 0
        %5054 = vmatpush.bf16.xpose.msra.mxu0 0
        %5055 = vmatpush.bf16.xpose.msra.mxu0 0
        %5056 = vmatpush.bf16.xpose.msra.mxu0 0
        %5057 = vmatpush.bf16.xpose.msra.mxu0 0
        %5058 = vmatpush.bf16.xpose.msra.mxu0 %v3559
        %5059 = vmatmul.bf16.gmra.mxu0 %v881
        %v5060 = vpop.f32.mrf.mxu0
        %v5061 = vadd.f32 %v5048, %v5060
        %v5062 = vpop.f32.mrf.mxu0
        %5063 = vdwg.mxu0
        %5064 = vmatpush.bf16.xpose.msra.mxu0 0
        %5065 = vmatpush.bf16.xpose.msra.mxu0 0
        %5066 = vmatpush.bf16.xpose.msra.mxu0 0
        %5067 = vmatpush.bf16.xpose.msra.mxu0 0
        %5068 = vmatpush.bf16.xpose.msra.mxu0 0
        %5069 = vmatpush.bf16.xpose.msra.mxu0 0
        %5070 = vmatpush.bf16.xpose.msra.mxu0 0
        %5071 = vmatpush.bf16.xpose.msra.mxu0 %v3560
        %5072 = vmatmul.bf16.gmra.mxu0 %v884
        %v5073 = vpop.f32.mrf.mxu0
        %v5074 = vadd.f32 %v5061, %v5073
        %v5075 = vpop.f32.mrf.mxu0
        %5076 = vdwg.mxu0
        %5077 = vmatpush.bf16.xpose.msra.mxu0 0
        %5078 = vmatpush.bf16.xpose.msra.mxu0 0
        %5079 = vmatpush.bf16.xpose.msra.mxu0 0
        %5080 = vmatpush.bf16.xpose.msra.mxu0 0
        %5081 = vmatpush.bf16.xpose.msra.mxu0 0
        %5082 = vmatpush.bf16.xpose.msra.mxu0 0
        %5083 = vmatpush.bf16.xpose.msra.mxu0 0
        %5084 = vmatpush.bf16.xpose.msra.mxu0 %v3561
        %5085 = vmatmul.bf16.gmra.mxu0 %v885
        %v5086 = vpop.f32.mrf.mxu0
        %v5087 = vadd.f32 %v5074, %v5086
        %v5088 = vpop.f32.mrf.mxu0
        %5089 = vdwg.mxu0
        %5090 = vmatpush.bf16.xpose.msra.mxu0 0
        %5091 = vmatpush.bf16.xpose.msra.mxu0 0
        %5092 = vmatpush.bf16.xpose.msra.mxu0 0
        %5093 = vmatpush.bf16.xpose.msra.mxu0 0
        %5094 = vmatpush.bf16.xpose.msra.mxu0 0
        %5095 = vmatpush.bf16.xpose.msra.mxu0 0
        %5096 = vmatpush.bf16.xpose.msra.mxu0 0
        %5097 = vmatpush.bf16.xpose.msra.mxu0 %v3562
        %5098 = vmatmul.bf16.gmra.mxu0 %v886
        %v5099 = vpop.f32.mrf.mxu0
        %v5100 = vadd.f32 %v5087, %v5099
        %v5101 = vpop.f32.mrf.mxu0
        %5102 = vdwg.mxu0
        %5103 = vmatpush.bf16.xpose.msra.mxu0 0
        %5104 = vmatpush.bf16.xpose.msra.mxu0 0
        %5105 = vmatpush.bf16.xpose.msra.mxu0 0
        %5106 = vmatpush.bf16.xpose.msra.mxu0 0
        %5107 = vmatpush.bf16.xpose.msra.mxu0 0
        %5108 = vmatpush.bf16.xpose.msra.mxu0 0
        %5109 = vmatpush.bf16.xpose.msra.mxu0 0
        %5110 = vmatpush.bf16.xpose.msra.mxu0 %v3563
        %5111 = vmatmul.bf16.gmra.mxu0 %v887
        %v5112 = vpop.f32.mrf.mxu0
        %v5113 = vadd.f32 %v5100, %v5112
        %v5114 = vpop.f32.mrf.mxu0
        %5115 = vdwg.mxu0
        %5116 = vmatpush.bf16.xpose.msra.mxu0 0
        %5117 = vmatpush.bf16.xpose.msra.mxu0 0
        %5118 = vmatpush.bf16.xpose.msra.mxu0 0
        %5119 = vmatpush.bf16.xpose.msra.mxu0 0
        %5120 = vmatpush.bf16.xpose.msra.mxu0 0
        %5121 = vmatpush.bf16.xpose.msra.mxu0 0
        %5122 = vmatpush.bf16.xpose.msra.mxu0 0
        %5123 = vmatpush.bf16.xpose.msra.mxu0 %v3564
        %5124 = vmatmul.bf16.gmra.mxu0 %v888
        %v5125 = vpop.f32.mrf.mxu0
        %v5126 = vadd.f32 %v5113, %v5125
        %v5127 = vpop.f32.mrf.mxu0
        %5128 = vdwg.mxu0
        %5129 = vmatpush.bf16.xpose.msra.mxu0 0
        %5130 = vmatpush.bf16.xpose.msra.mxu0 0
        %5131 = vmatpush.bf16.xpose.msra.mxu0 0
        %5132 = vmatpush.bf16.xpose.msra.mxu0 0
        %5133 = vmatpush.bf16.xpose.msra.mxu0 0
        %5134 = vmatpush.bf16.xpose.msra.mxu0 0
        %5135 = vmatpush.bf16.xpose.msra.mxu0 0
        %5136 = vmatpush.bf16.xpose.msra.mxu0 %v3565
        %5137 = vmatmul.bf16.gmra.mxu0 %v889
        %v5138 = vpop.f32.mrf.mxu0
        %v5139 = vadd.f32 %v5126, %v5138
        %v5140 = vpop.f32.mrf.mxu0
        %5141 = vdwg.mxu0
        %5142 = vmatpush.bf16.xpose.msra.mxu0 0
        %5143 = vmatpush.bf16.xpose.msra.mxu0 0
        %5144 = vmatpush.bf16.xpose.msra.mxu0 0
        %5145 = vmatpush.bf16.xpose.msra.mxu0 0
        %5146 = vmatpush.bf16.xpose.msra.mxu0 0
        %5147 = vmatpush.bf16.xpose.msra.mxu0 0
        %5148 = vmatpush.bf16.xpose.msra.mxu0 0
        %5149 = vmatpush.bf16.xpose.msra.mxu0 %v3566
        %5150 = vmatmul.bf16.gmra.mxu0 %v890
        %v5151 = vpop.f32.mrf.mxu0
        %v5152 = vadd.f32 %v5139, %v5151
        %v5153 = vpop.f32.mrf.mxu0
        %5154 = vdwg.mxu0
        %5155 = vmatpush.bf16.xpose.msra.mxu0 0
        %5156 = vmatpush.bf16.xpose.msra.mxu0 0
        %5157 = vmatpush.bf16.xpose.msra.mxu0 0
        %5158 = vmatpush.bf16.xpose.msra.mxu0 0
        %5159 = vmatpush.bf16.xpose.msra.mxu0 0
        %5160 = vmatpush.bf16.xpose.msra.mxu0 0
        %5161 = vmatpush.bf16.xpose.msra.mxu0 0
        %5162 = vmatpush.bf16.xpose.msra.mxu0 %v3567
        %5163 = vmatmul.bf16.gmra.mxu0 %v891
        %v5164 = vpop.f32.mrf.mxu0
        %v5165 = vadd.f32 %v5152, %v5164
        %v5166 = vpop.f32.mrf.mxu0
        %5167 = vdwg.mxu0
        %5168 = vmatpush.bf16.xpose.msra.mxu0 0
        %5169 = vmatpush.bf16.xpose.msra.mxu0 0
        %5170 = vmatpush.bf16.xpose.msra.mxu0 0
        %5171 = vmatpush.bf16.xpose.msra.mxu0 0
        %5172 = vmatpush.bf16.xpose.msra.mxu0 0
        %5173 = vmatpush.bf16.xpose.msra.mxu0 0
        %5174 = vmatpush.bf16.xpose.msra.mxu0 0
        %5175 = vmatpush.bf16.xpose.msra.mxu0 %v3568
        %5176 = vmatmul.bf16.gmra.mxu0 %v894
        %v5177 = vpop.f32.mrf.mxu0
        %v5178 = vadd.f32 %v5165, %v5177
        %v5179 = vpop.f32.mrf.mxu0
        %5180 = vdwg.mxu0
        %5181 = vmatpush.bf16.xpose.msra.mxu0 0
        %5182 = vmatpush.bf16.xpose.msra.mxu0 0
        %5183 = vmatpush.bf16.xpose.msra.mxu0 0
        %5184 = vmatpush.bf16.xpose.msra.mxu0 0
        %5185 = vmatpush.bf16.xpose.msra.mxu0 0
        %5186 = vmatpush.bf16.xpose.msra.mxu0 0
        %5187 = vmatpush.bf16.xpose.msra.mxu0 0
        %5188 = vmatpush.bf16.xpose.msra.mxu0 %v3569
        %5189 = vmatmul.bf16.gmra.mxu0 %v895
        %v5190 = vpop.f32.mrf.mxu0
        %v5191 = vadd.f32 %v5178, %v5190
        %v5192 = vpop.f32.mrf.mxu0
        %5193 = vdwg.mxu0
        %5194 = vmatpush.bf16.xpose.msra.mxu0 0
        %5195 = vmatpush.bf16.xpose.msra.mxu0 0
        %5196 = vmatpush.bf16.xpose.msra.mxu0 0
        %5197 = vmatpush.bf16.xpose.msra.mxu0 0
        %5198 = vmatpush.bf16.xpose.msra.mxu0 0
        %5199 = vmatpush.bf16.xpose.msra.mxu0 0
        %5200 = vmatpush.bf16.xpose.msra.mxu0 0
        %5201 = vmatpush.bf16.xpose.msra.mxu0 %v3570
        %5202 = vmatmul.bf16.gmra.mxu0 %v896
        %v5203 = vpop.f32.mrf.mxu0
        %v5204 = vadd.f32 %v5191, %v5203
        %v5205 = vpop.f32.mrf.mxu0
        %5206 = vdwg.mxu0
        %5207 = vmatpush.bf16.xpose.msra.mxu0 0
        %5208 = vmatpush.bf16.xpose.msra.mxu0 0
        %5209 = vmatpush.bf16.xpose.msra.mxu0 0
        %5210 = vmatpush.bf16.xpose.msra.mxu0 0
        %5211 = vmatpush.bf16.xpose.msra.mxu0 0
        %5212 = vmatpush.bf16.xpose.msra.mxu0 0
        %5213 = vmatpush.bf16.xpose.msra.mxu0 0
        %5214 = vmatpush.bf16.xpose.msra.mxu0 %v3571
        %5215 = vmatmul.bf16.gmra.mxu0 %v897
        %v5216 = vpop.f32.mrf.mxu0
        %v5217 = vadd.f32 %v5204, %v5216
        %v5218 = vpop.f32.mrf.mxu0
        %5219 = vdwg.mxu0
        %5220 = vmatpush.bf16.xpose.msra.mxu0 0
        %5221 = vmatpush.bf16.xpose.msra.mxu0 0
        %5222 = vmatpush.bf16.xpose.msra.mxu0 0
        %5223 = vmatpush.bf16.xpose.msra.mxu0 0
        %5224 = vmatpush.bf16.xpose.msra.mxu0 0
        %5225 = vmatpush.bf16.xpose.msra.mxu0 0
        %5226 = vmatpush.bf16.xpose.msra.mxu0 0
        %5227 = vmatpush.bf16.xpose.msra.mxu0 %v3572
        %5228 = vmatmul.bf16.gmra.mxu0 %v898
        %v5229 = vpop.f32.mrf.mxu0
        %v5230 = vadd.f32 %v5217, %v5229
        %v5231 = vpop.f32.mrf.mxu0
        %5232 = vdwg.mxu0
        %5233 = vmatpush.bf16.xpose.msra.mxu0 0
        %5234 = vmatpush.bf16.xpose.msra.mxu0 0
        %5235 = vmatpush.bf16.xpose.msra.mxu0 0
        %5236 = vmatpush.bf16.xpose.msra.mxu0 0
        %5237 = vmatpush.bf16.xpose.msra.mxu0 0
        %5238 = vmatpush.bf16.xpose.msra.mxu0 0
        %5239 = vmatpush.bf16.xpose.msra.mxu0 0
        %5240 = vmatpush.bf16.xpose.msra.mxu0 %v3573
        %5241 = vmatmul.bf16.gmra.mxu0 %v899
        %v5242 = vpop.f32.mrf.mxu0
        %v5243 = vadd.f32 %v5230, %v5242
        %v5244 = vpop.f32.mrf.mxu0
        %5245 = vdwg.mxu0
        %5246 = vmatpush.bf16.xpose.msra.mxu0 0
        %5247 = vmatpush.bf16.xpose.msra.mxu0 0
        %5248 = vmatpush.bf16.xpose.msra.mxu0 0
        %5249 = vmatpush.bf16.xpose.msra.mxu0 0
        %5250 = vmatpush.bf16.xpose.msra.mxu0 0
        %5251 = vmatpush.bf16.xpose.msra.mxu0 0
        %5252 = vmatpush.bf16.xpose.msra.mxu0 0
        %5253 = vmatpush.bf16.xpose.msra.mxu0 %v3574
        %5254 = vmatmul.bf16.gmra.mxu0 %v900
        %v5255 = vpop.f32.mrf.mxu0
        %v5256 = vadd.f32 %v5243, %v5255
        %v5257 = vpop.f32.mrf.mxu0
        %5258 = vdwg.mxu0
        %5259 = vmatpush.bf16.xpose.msra.mxu0 0
        %5260 = vmatpush.bf16.xpose.msra.mxu0 0
        %5261 = vmatpush.bf16.xpose.msra.mxu0 0
        %5262 = vmatpush.bf16.xpose.msra.mxu0 0
        %5263 = vmatpush.bf16.xpose.msra.mxu0 0
        %5264 = vmatpush.bf16.xpose.msra.mxu0 0
        %5265 = vmatpush.bf16.xpose.msra.mxu0 0
        %5266 = vmatpush.bf16.xpose.msra.mxu0 %v3575
        %5267 = vmatmul.bf16.gmra.mxu0 %v901
        %v5268 = vpop.f32.mrf.mxu0
        %v5269 = vadd.f32 %v5256, %v5268
        %v5270 = vpop.f32.mrf.mxu0
        %5271 = vdwg.mxu0
        %5272 = vmatpush.bf16.xpose.msra.mxu0 0
        %5273 = vmatpush.bf16.xpose.msra.mxu0 0
        %5274 = vmatpush.bf16.xpose.msra.mxu0 0
        %5275 = vmatpush.bf16.xpose.msra.mxu0 0
        %5276 = vmatpush.bf16.xpose.msra.mxu0 0
        %5277 = vmatpush.bf16.xpose.msra.mxu0 0
        %5278 = vmatpush.bf16.xpose.msra.mxu0 0
        %5279 = vmatpush.bf16.xpose.msra.mxu0 %v3576
        %5280 = vmatmul.bf16.gmra.mxu0 %v904
        %v5281 = vpop.f32.mrf.mxu0
        %v5282 = vadd.f32 %v5269, %v5281
        %v5283 = vpop.f32.mrf.mxu0
        %5284 = vdwg.mxu0
        %5285 = vmatpush.bf16.xpose.msra.mxu0 0
        %5286 = vmatpush.bf16.xpose.msra.mxu0 0
        %5287 = vmatpush.bf16.xpose.msra.mxu0 0
        %5288 = vmatpush.bf16.xpose.msra.mxu0 0
        %5289 = vmatpush.bf16.xpose.msra.mxu0 0
        %5290 = vmatpush.bf16.xpose.msra.mxu0 0
        %5291 = vmatpush.bf16.xpose.msra.mxu0 0
        %5292 = vmatpush.bf16.xpose.msra.mxu0 %v3577
        %5293 = vmatmul.bf16.gmra.mxu0 %v905
        %v5294 = vpop.f32.mrf.mxu0
        %v5295 = vadd.f32 %v5282, %v5294
        %v5296 = vpop.f32.mrf.mxu0
        %5297 = vdwg.mxu0
        %5298 = vmatpush.bf16.xpose.msra.mxu0 0
        %5299 = vmatpush.bf16.xpose.msra.mxu0 0
        %5300 = vmatpush.bf16.xpose.msra.mxu0 0
        %5301 = vmatpush.bf16.xpose.msra.mxu0 0
        %5302 = vmatpush.bf16.xpose.msra.mxu0 0
        %5303 = vmatpush.bf16.xpose.msra.mxu0 0
        %5304 = vmatpush.bf16.xpose.msra.mxu0 0
        %5305 = vmatpush.bf16.xpose.msra.mxu0 %v3578
        %5306 = vmatmul.bf16.gmra.mxu0 %v906
        %v5307 = vpop.f32.mrf.mxu0
        %v5308 = vadd.f32 %v5295, %v5307
        %v5309 = vpop.f32.mrf.mxu0
        %5310 = vdwg.mxu0
        %5311 = vmatpush.bf16.xpose.msra.mxu0 0
        %5312 = vmatpush.bf16.xpose.msra.mxu0 0
        %5313 = vmatpush.bf16.xpose.msra.mxu0 0
        %5314 = vmatpush.bf16.xpose.msra.mxu0 0
        %5315 = vmatpush.bf16.xpose.msra.mxu0 0
        %5316 = vmatpush.bf16.xpose.msra.mxu0 0
        %5317 = vmatpush.bf16.xpose.msra.mxu0 0
        %5318 = vmatpush.bf16.xpose.msra.mxu0 %v3579
        %5319 = vmatmul.bf16.gmra.mxu0 %v907
        %v5320 = vpop.f32.mrf.mxu0
        %v5321 = vadd.f32 %v5308, %v5320
        %v5322 = vpop.f32.mrf.mxu0
        %5323 = vdwg.mxu0
        %5324 = vmatpush.bf16.xpose.msra.mxu0 0
        %5325 = vmatpush.bf16.xpose.msra.mxu0 0
        %5326 = vmatpush.bf16.xpose.msra.mxu0 0
        %5327 = vmatpush.bf16.xpose.msra.mxu0 0
        %5328 = vmatpush.bf16.xpose.msra.mxu0 0
        %5329 = vmatpush.bf16.xpose.msra.mxu0 0
        %5330 = vmatpush.bf16.xpose.msra.mxu0 0
        %5331 = vmatpush.bf16.xpose.msra.mxu0 %v3580
        %5332 = vmatmul.bf16.gmra.mxu0 %v908
        %v5333 = vpop.f32.mrf.mxu0
        %v5334 = vadd.f32 %v5321, %v5333
        %v5335 = vpop.f32.mrf.mxu0
        %5336 = vdwg.mxu0
        %5337 = vmatpush.bf16.xpose.msra.mxu0 0
        %5338 = vmatpush.bf16.xpose.msra.mxu0 0
        %5339 = vmatpush.bf16.xpose.msra.mxu0 0
        %5340 = vmatpush.bf16.xpose.msra.mxu0 0
        %5341 = vmatpush.bf16.xpose.msra.mxu0 0
        %5342 = vmatpush.bf16.xpose.msra.mxu0 0
        %5343 = vmatpush.bf16.xpose.msra.mxu0 0
        %5344 = vmatpush.bf16.xpose.msra.mxu0 %v3581
        %5345 = vmatmul.bf16.gmra.mxu0 %v909
        %v5346 = vpop.f32.mrf.mxu0
        %v5347 = vadd.f32 %v5334, %v5346
        %v5348 = vpop.f32.mrf.mxu0
        %5349 = vdwg.mxu0
        %5350 = vmatpush.bf16.xpose.msra.mxu0 0
        %5351 = vmatpush.bf16.xpose.msra.mxu0 0
        %5352 = vmatpush.bf16.xpose.msra.mxu0 0
        %5353 = vmatpush.bf16.xpose.msra.mxu0 0
        %5354 = vmatpush.bf16.xpose.msra.mxu0 0
        %5355 = vmatpush.bf16.xpose.msra.mxu0 0
        %5356 = vmatpush.bf16.xpose.msra.mxu0 0
        %5357 = vmatpush.bf16.xpose.msra.mxu0 %v3582
        %5358 = vmatmul.bf16.gmra.mxu0 %v910
        %v5359 = vpop.f32.mrf.mxu0
        %v5360 = vadd.f32 %v5347, %v5359
        %v5361 = vpop.f32.mrf.mxu0
        %5362 = vdwg.mxu0
        %5363 = vmatpush.bf16.xpose.msra.mxu0 0
        %5364 = vmatpush.bf16.xpose.msra.mxu0 0
        %5365 = vmatpush.bf16.xpose.msra.mxu0 0
        %5366 = vmatpush.bf16.xpose.msra.mxu0 0
        %5367 = vmatpush.bf16.xpose.msra.mxu0 0
        %5368 = vmatpush.bf16.xpose.msra.mxu0 0
        %5369 = vmatpush.bf16.xpose.msra.mxu0 0
        %5370 = vmatpush.bf16.xpose.msra.mxu0 %v3583
        %5371 = vmatmul.bf16.gmra.mxu0 %v911
        %v5372 = vpop.f32.mrf.mxu0
        %v5373 = vadd.f32 %v5360, %v5372
        %v5374 = vpop.f32.mrf.mxu0
        %5375 = vdwg.mxu0
        %5376 = vmatpush.bf16.xpose.msra.mxu0 0
        %5377 = vmatpush.bf16.xpose.msra.mxu0 0
        %5378 = vmatpush.bf16.xpose.msra.mxu0 0
        %5379 = vmatpush.bf16.xpose.msra.mxu0 0
        %5380 = vmatpush.bf16.xpose.msra.mxu0 0
        %5381 = vmatpush.bf16.xpose.msra.mxu0 0
        %5382 = vmatpush.bf16.xpose.msra.mxu0 0
        %5383 = vmatpush.bf16.xpose.msra.mxu0 %v3584
        %5384 = vmatmul.bf16.gmra.mxu0 %v914
        %v5385 = vpop.f32.mrf.mxu0
        %v5386 = vadd.f32 %v5373, %v5385
        %v5387 = vpop.f32.mrf.mxu0
        %5388 = vdwg.mxu0
        %5389 = vmatpush.bf16.xpose.msra.mxu0 0
        %5390 = vmatpush.bf16.xpose.msra.mxu0 0
        %5391 = vmatpush.bf16.xpose.msra.mxu0 0
        %5392 = vmatpush.bf16.xpose.msra.mxu0 0
        %5393 = vmatpush.bf16.xpose.msra.mxu0 0
        %5394 = vmatpush.bf16.xpose.msra.mxu0 0
        %5395 = vmatpush.bf16.xpose.msra.mxu0 0
        %5396 = vmatpush.bf16.xpose.msra.mxu0 %v3585
        %5397 = vmatmul.bf16.gmra.mxu0 %v915
        %v5398 = vpop.f32.mrf.mxu0
        %v5399 = vadd.f32 %v5386, %v5398
        %v5400 = vpop.f32.mrf.mxu0
        %5401 = vdwg.mxu0
        %5402 = vmatpush.bf16.xpose.msra.mxu0 0
        %5403 = vmatpush.bf16.xpose.msra.mxu0 0
        %5404 = vmatpush.bf16.xpose.msra.mxu0 0
        %5405 = vmatpush.bf16.xpose.msra.mxu0 0
        %5406 = vmatpush.bf16.xpose.msra.mxu0 0
        %5407 = vmatpush.bf16.xpose.msra.mxu0 0
        %5408 = vmatpush.bf16.xpose.msra.mxu0 0
        %5409 = vmatpush.bf16.xpose.msra.mxu0 %v3586
        %5410 = vmatmul.bf16.gmra.mxu0 %v916
        %v5411 = vpop.f32.mrf.mxu0
        %v5412 = vadd.f32 %v5399, %v5411
        %v5413 = vpop.f32.mrf.mxu0
        %5414 = vdwg.mxu0
        %5415 = vmatpush.bf16.xpose.msra.mxu0 0
        %5416 = vmatpush.bf16.xpose.msra.mxu0 0
        %5417 = vmatpush.bf16.xpose.msra.mxu0 0
        %5418 = vmatpush.bf16.xpose.msra.mxu0 0
        %5419 = vmatpush.bf16.xpose.msra.mxu0 0
        %5420 = vmatpush.bf16.xpose.msra.mxu0 0
        %5421 = vmatpush.bf16.xpose.msra.mxu0 0
        %5422 = vmatpush.bf16.xpose.msra.mxu0 %v3587
        %5423 = vmatmul.bf16.gmra.mxu0 %v917
        %v5424 = vpop.f32.mrf.mxu0
        %v5425 = vadd.f32 %v5412, %v5424
        %v5426 = vpop.f32.mrf.mxu0
        %5427 = vdwg.mxu0
        %5428 = vmatpush.bf16.xpose.msra.mxu0 0
        %5429 = vmatpush.bf16.xpose.msra.mxu0 0
        %5430 = vmatpush.bf16.xpose.msra.mxu0 0
        %5431 = vmatpush.bf16.xpose.msra.mxu0 0
        %5432 = vmatpush.bf16.xpose.msra.mxu0 0
        %5433 = vmatpush.bf16.xpose.msra.mxu0 0
        %5434 = vmatpush.bf16.xpose.msra.mxu0 0
        %5435 = vmatpush.bf16.xpose.msra.mxu0 %v3588
        %5436 = vmatmul.bf16.gmra.mxu0 %v918
        %v5437 = vpop.f32.mrf.mxu0
        %v5438 = vadd.f32 %v5425, %v5437
        %v5439 = vpop.f32.mrf.mxu0
        %5440 = vdwg.mxu0
        %5441 = vmatpush.bf16.xpose.msra.mxu0 0
        %5442 = vmatpush.bf16.xpose.msra.mxu0 0
        %5443 = vmatpush.bf16.xpose.msra.mxu0 0
        %5444 = vmatpush.bf16.xpose.msra.mxu0 0
        %5445 = vmatpush.bf16.xpose.msra.mxu0 0
        %5446 = vmatpush.bf16.xpose.msra.mxu0 0
        %5447 = vmatpush.bf16.xpose.msra.mxu0 0
        %5448 = vmatpush.bf16.xpose.msra.mxu0 %v3589
        %5449 = vmatmul.bf16.gmra.mxu0 %v919
        %v5450 = vpop.f32.mrf.mxu0
        %v5451 = vadd.f32 %v5438, %v5450
        %v5452 = vpop.f32.mrf.mxu0
        %5453 = vdwg.mxu0
        %5454 = vmatpush.bf16.xpose.msra.mxu0 0
        %5455 = vmatpush.bf16.xpose.msra.mxu0 0
        %5456 = vmatpush.bf16.xpose.msra.mxu0 0
        %5457 = vmatpush.bf16.xpose.msra.mxu0 0
        %5458 = vmatpush.bf16.xpose.msra.mxu0 0
        %5459 = vmatpush.bf16.xpose.msra.mxu0 0
        %5460 = vmatpush.bf16.xpose.msra.mxu0 0
        %5461 = vmatpush.bf16.xpose.msra.mxu0 %v3590
        %5462 = vmatmul.bf16.gmra.mxu0 %v920
        %v5463 = vpop.f32.mrf.mxu0
        %v5464 = vadd.f32 %v5451, %v5463
        %v5465 = vpop.f32.mrf.mxu0
        %5466 = vdwg.mxu0
        %5467 = vmatpush.bf16.xpose.msra.mxu0 0
        %5468 = vmatpush.bf16.xpose.msra.mxu0 0
        %5469 = vmatpush.bf16.xpose.msra.mxu0 0
        %5470 = vmatpush.bf16.xpose.msra.mxu0 0
        %5471 = vmatpush.bf16.xpose.msra.mxu0 0
        %5472 = vmatpush.bf16.xpose.msra.mxu0 0
        %5473 = vmatpush.bf16.xpose.msra.mxu0 0
        %5474 = vmatpush.bf16.xpose.msra.mxu0 %v3591
        %5475 = vmatmul.bf16.gmra.mxu0 %v921
        %v5476 = vpop.f32.mrf.mxu0
        %v5477 = vadd.f32 %v5464, %v5476
        %v5478 = vpop.f32.mrf.mxu0
        %5479 = vdwg.mxu0
        %5480 = vmatpush.bf16.xpose.msra.mxu0 0
        %5481 = vmatpush.bf16.xpose.msra.mxu0 0
        %5482 = vmatpush.bf16.xpose.msra.mxu0 0
        %5483 = vmatpush.bf16.xpose.msra.mxu0 0
        %5484 = vmatpush.bf16.xpose.msra.mxu0 0
        %5485 = vmatpush.bf16.xpose.msra.mxu0 0
        %5486 = vmatpush.bf16.xpose.msra.mxu0 0
        %5487 = vmatpush.bf16.xpose.msra.mxu0 %v3592
        %5488 = vmatmul.bf16.gmra.mxu0 %v924
        %v5489 = vpop.f32.mrf.mxu0
        %v5490 = vadd.f32 %v5477, %v5489
        %v5491 = vpop.f32.mrf.mxu0
        %5492 = vdwg.mxu0
        %5493 = vmatpush.bf16.xpose.msra.mxu0 0
        %5494 = vmatpush.bf16.xpose.msra.mxu0 0
        %5495 = vmatpush.bf16.xpose.msra.mxu0 0
        %5496 = vmatpush.bf16.xpose.msra.mxu0 0
        %5497 = vmatpush.bf16.xpose.msra.mxu0 0
        %5498 = vmatpush.bf16.xpose.msra.mxu0 0
        %5499 = vmatpush.bf16.xpose.msra.mxu0 0
        %5500 = vmatpush.bf16.xpose.msra.mxu0 %v3593
        %5501 = vmatmul.bf16.gmra.mxu0 %v925
        %v5502 = vpop.f32.mrf.mxu0
        %v5503 = vadd.f32 %v5490, %v5502
        %v5504 = vpop.f32.mrf.mxu0
        %5505 = vdwg.mxu0
        %5506 = vmatpush.bf16.xpose.msra.mxu0 0
        %5507 = vmatpush.bf16.xpose.msra.mxu0 0
        %5508 = vmatpush.bf16.xpose.msra.mxu0 0
        %5509 = vmatpush.bf16.xpose.msra.mxu0 0
        %5510 = vmatpush.bf16.xpose.msra.mxu0 0
        %5511 = vmatpush.bf16.xpose.msra.mxu0 0
        %5512 = vmatpush.bf16.xpose.msra.mxu0 0
        %5513 = vmatpush.bf16.xpose.msra.mxu0 %v3594
        %5514 = vmatmul.bf16.gmra.mxu0 %v926
        %v5515 = vpop.f32.mrf.mxu0
        %v5516 = vadd.f32 %v5503, %v5515
        %v5517 = vpop.f32.mrf.mxu0
        %5518 = vdwg.mxu0
        %5519 = vmatpush.bf16.xpose.msra.mxu0 0
        %5520 = vmatpush.bf16.xpose.msra.mxu0 0
        %5521 = vmatpush.bf16.xpose.msra.mxu0 0
        %5522 = vmatpush.bf16.xpose.msra.mxu0 0
        %5523 = vmatpush.bf16.xpose.msra.mxu0 0
        %5524 = vmatpush.bf16.xpose.msra.mxu0 0
        %5525 = vmatpush.bf16.xpose.msra.mxu0 0
        %5526 = vmatpush.bf16.xpose.msra.mxu0 %v3595
        %5527 = vmatmul.bf16.gmra.mxu0 %v927
        %v5528 = vpop.f32.mrf.mxu0
        %v5529 = vadd.f32 %v5516, %v5528
        %v5530 = vpop.f32.mrf.mxu0
        %5531 = vdwg.mxu0
        %5532 = vmatpush.bf16.xpose.msra.mxu0 0
        %5533 = vmatpush.bf16.xpose.msra.mxu0 0
        %5534 = vmatpush.bf16.xpose.msra.mxu0 0
        %5535 = vmatpush.bf16.xpose.msra.mxu0 0
        %5536 = vmatpush.bf16.xpose.msra.mxu0 0
        %5537 = vmatpush.bf16.xpose.msra.mxu0 0
        %5538 = vmatpush.bf16.xpose.msra.mxu0 0
        %5539 = vmatpush.bf16.xpose.msra.mxu0 %v3596
        %5540 = vmatmul.bf16.gmra.mxu0 %v928
        %v5541 = vpop.f32.mrf.mxu0
        %v5542 = vadd.f32 %v5529, %v5541
        %v5543 = vpop.f32.mrf.mxu0
        %5544 = vdwg.mxu0
        %5545 = vmatpush.bf16.xpose.msra.mxu0 0
        %5546 = vmatpush.bf16.xpose.msra.mxu0 0
        %5547 = vmatpush.bf16.xpose.msra.mxu0 0
        %5548 = vmatpush.bf16.xpose.msra.mxu0 0
        %5549 = vmatpush.bf16.xpose.msra.mxu0 0
        %5550 = vmatpush.bf16.xpose.msra.mxu0 0
        %5551 = vmatpush.bf16.xpose.msra.mxu0 0
        %5552 = vmatpush.bf16.xpose.msra.mxu0 %v3597
        %5553 = vmatmul.bf16.gmra.mxu0 %v929
        %v5554 = vpop.f32.mrf.mxu0
        %v5555 = vadd.f32 %v5542, %v5554
        %v5556 = vpop.f32.mrf.mxu0
        %5557 = vdwg.mxu0
        %5558 = vmatpush.bf16.xpose.msra.mxu0 0
        %5559 = vmatpush.bf16.xpose.msra.mxu0 0
        %5560 = vmatpush.bf16.xpose.msra.mxu0 0
        %5561 = vmatpush.bf16.xpose.msra.mxu0 0
        %5562 = vmatpush.bf16.xpose.msra.mxu0 0
        %5563 = vmatpush.bf16.xpose.msra.mxu0 0
        %5564 = vmatpush.bf16.xpose.msra.mxu0 0
        %5565 = vmatpush.bf16.xpose.msra.mxu0 %v3598
        %5566 = vmatmul.bf16.gmra.mxu0 %v930
        %v5567 = vpop.f32.mrf.mxu0
        %v5568 = vadd.f32 %v5555, %v5567
        %v5569 = vpop.f32.mrf.mxu0
        %5570 = vdwg.mxu0
        %5571 = vmatpush.bf16.xpose.msra.mxu0 0
        %5572 = vmatpush.bf16.xpose.msra.mxu0 0
        %5573 = vmatpush.bf16.xpose.msra.mxu0 0
        %5574 = vmatpush.bf16.xpose.msra.mxu0 0
        %5575 = vmatpush.bf16.xpose.msra.mxu0 0
        %5576 = vmatpush.bf16.xpose.msra.mxu0 0
        %5577 = vmatpush.bf16.xpose.msra.mxu0 0
        %5578 = vmatpush.bf16.xpose.msra.mxu0 %v3599
        %5579 = vmatmul.bf16.gmra.mxu0 %v931
        %v5580 = vpop.f32.mrf.mxu0
        %v5581 = vadd.f32 %v5568, %v5580
        %v5582 = vpop.f32.mrf.mxu0
        %5583 = vdwg.mxu0
        %5584 = vmatpush.bf16.xpose.msra.mxu0 0
        %5585 = vmatpush.bf16.xpose.msra.mxu0 0
        %5586 = vmatpush.bf16.xpose.msra.mxu0 0
        %5587 = vmatpush.bf16.xpose.msra.mxu0 0
        %5588 = vmatpush.bf16.xpose.msra.mxu0 0
        %5589 = vmatpush.bf16.xpose.msra.mxu0 0
        %5590 = vmatpush.bf16.xpose.msra.mxu0 0
        %5591 = vmatpush.bf16.xpose.msra.mxu0 %v3600
        %5592 = vmatmul.bf16.gmra.mxu0 %v934
        %v5593 = vpop.f32.mrf.mxu0
        %v5594 = vadd.f32 %v5581, %v5593
        %v5595 = vpop.f32.mrf.mxu0
        %5596 = vdwg.mxu0
        %5597 = vmatpush.bf16.xpose.msra.mxu0 0
        %5598 = vmatpush.bf16.xpose.msra.mxu0 0
        %5599 = vmatpush.bf16.xpose.msra.mxu0 0
        %5600 = vmatpush.bf16.xpose.msra.mxu0 0
        %5601 = vmatpush.bf16.xpose.msra.mxu0 0
        %5602 = vmatpush.bf16.xpose.msra.mxu0 0
        %5603 = vmatpush.bf16.xpose.msra.mxu0 0
        %5604 = vmatpush.bf16.xpose.msra.mxu0 %v3601
        %5605 = vmatmul.bf16.gmra.mxu0 %v935
        %v5606 = vpop.f32.mrf.mxu0
        %v5607 = vadd.f32 %v5594, %v5606
        %v5608 = vpop.f32.mrf.mxu0
        %5609 = vdwg.mxu0
        %5610 = vmatpush.bf16.xpose.msra.mxu0 0
        %5611 = vmatpush.bf16.xpose.msra.mxu0 0
        %5612 = vmatpush.bf16.xpose.msra.mxu0 0
        %5613 = vmatpush.bf16.xpose.msra.mxu0 0
        %5614 = vmatpush.bf16.xpose.msra.mxu0 0
        %5615 = vmatpush.bf16.xpose.msra.mxu0 0
        %5616 = vmatpush.bf16.xpose.msra.mxu0 0
        %5617 = vmatpush.bf16.xpose.msra.mxu0 %v3602
        %5618 = vmatmul.bf16.gmra.mxu0 %v936
        %v5619 = vpop.f32.mrf.mxu0
        %v5620 = vadd.f32 %v5607, %v5619
        %v5621 = vpop.f32.mrf.mxu0
        %5622 = vdwg.mxu0
        %5623 = vmatpush.bf16.xpose.msra.mxu0 0
        %5624 = vmatpush.bf16.xpose.msra.mxu0 0
        %5625 = vmatpush.bf16.xpose.msra.mxu0 0
        %5626 = vmatpush.bf16.xpose.msra.mxu0 0
        %5627 = vmatpush.bf16.xpose.msra.mxu0 0
        %5628 = vmatpush.bf16.xpose.msra.mxu0 0
        %5629 = vmatpush.bf16.xpose.msra.mxu0 0
        %5630 = vmatpush.bf16.xpose.msra.mxu0 %v3603
        %5631 = vmatmul.bf16.gmra.mxu0 %v937
        %v5632 = vpop.f32.mrf.mxu0
        %v5633 = vadd.f32 %v5620, %v5632
        %v5634 = vpop.f32.mrf.mxu0
        %5635 = vdwg.mxu0
        %5636 = vmatpush.bf16.xpose.msra.mxu0 0
        %5637 = vmatpush.bf16.xpose.msra.mxu0 0
        %5638 = vmatpush.bf16.xpose.msra.mxu0 0
        %5639 = vmatpush.bf16.xpose.msra.mxu0 0
        %5640 = vmatpush.bf16.xpose.msra.mxu0 0
        %5641 = vmatpush.bf16.xpose.msra.mxu0 0
        %5642 = vmatpush.bf16.xpose.msra.mxu0 0
        %5643 = vmatpush.bf16.xpose.msra.mxu0 %v3604
        %5644 = vmatmul.bf16.gmra.mxu0 %v938
        %v5645 = vpop.f32.mrf.mxu0
        %v5646 = vadd.f32 %v5633, %v5645
        %v5647 = vpop.f32.mrf.mxu0
        %5648 = vdwg.mxu0
        %5649 = vmatpush.bf16.xpose.msra.mxu0 0
        %5650 = vmatpush.bf16.xpose.msra.mxu0 0
        %5651 = vmatpush.bf16.xpose.msra.mxu0 0
        %5652 = vmatpush.bf16.xpose.msra.mxu0 0
        %5653 = vmatpush.bf16.xpose.msra.mxu0 0
        %5654 = vmatpush.bf16.xpose.msra.mxu0 0
        %5655 = vmatpush.bf16.xpose.msra.mxu0 0
        %5656 = vmatpush.bf16.xpose.msra.mxu0 %v3605
        %5657 = vmatmul.bf16.gmra.mxu0 %v939
        %v5658 = vpop.f32.mrf.mxu0
        %v5659 = vadd.f32 %v5646, %v5658
        %v5660 = vpop.f32.mrf.mxu0
        %5661 = vdwg.mxu0
        %5662 = vmatpush.bf16.xpose.msra.mxu0 0
        %5663 = vmatpush.bf16.xpose.msra.mxu0 0
        %5664 = vmatpush.bf16.xpose.msra.mxu0 0
        %5665 = vmatpush.bf16.xpose.msra.mxu0 0
        %5666 = vmatpush.bf16.xpose.msra.mxu0 0
        %5667 = vmatpush.bf16.xpose.msra.mxu0 0
        %5668 = vmatpush.bf16.xpose.msra.mxu0 0
        %5669 = vmatpush.bf16.xpose.msra.mxu0 %v3606
        %5670 = vmatmul.bf16.gmra.mxu0 %v940
        %v5671 = vpop.f32.mrf.mxu0
        %v5672 = vadd.f32 %v5659, %v5671
        %v5673 = vpop.f32.mrf.mxu0
        %5674 = vdwg.mxu0
        %5675 = vmatpush.bf16.xpose.msra.mxu0 0
        %5676 = vmatpush.bf16.xpose.msra.mxu0 0
        %5677 = vmatpush.bf16.xpose.msra.mxu0 0
        %5678 = vmatpush.bf16.xpose.msra.mxu0 0
        %5679 = vmatpush.bf16.xpose.msra.mxu0 0
        %5680 = vmatpush.bf16.xpose.msra.mxu0 0
        %5681 = vmatpush.bf16.xpose.msra.mxu0 0
        %5682 = vmatpush.bf16.xpose.msra.mxu0 %v3607
        %5683 = vmatmul.bf16.gmra.mxu0 %v941
        %v5684 = vpop.f32.mrf.mxu0
        %v5685 = vadd.f32 %v5672, %v5684
        %v5686 = vpop.f32.mrf.mxu0
        %5687 = vdwg.mxu0
        %5688 = vmatpush.bf16.xpose.msra.mxu0 0
        %5689 = vmatpush.bf16.xpose.msra.mxu0 0
        %5690 = vmatpush.bf16.xpose.msra.mxu0 0
        %5691 = vmatpush.bf16.xpose.msra.mxu0 0
        %5692 = vmatpush.bf16.xpose.msra.mxu0 0
        %5693 = vmatpush.bf16.xpose.msra.mxu0 0
        %5694 = vmatpush.bf16.xpose.msra.mxu0 0
        %5695 = vmatpush.bf16.xpose.msra.mxu0 %v3608
        %5696 = vmatmul.bf16.gmra.mxu0 %v944
        %v5697 = vpop.f32.mrf.mxu0
        %v5698 = vadd.f32 %v5685, %v5697
        %v5699 = vpop.f32.mrf.mxu0
        %5700 = vdwg.mxu0
        %5701 = vmatpush.bf16.xpose.msra.mxu0 0
        %5702 = vmatpush.bf16.xpose.msra.mxu0 0
        %5703 = vmatpush.bf16.xpose.msra.mxu0 0
        %5704 = vmatpush.bf16.xpose.msra.mxu0 0
        %5705 = vmatpush.bf16.xpose.msra.mxu0 0
        %5706 = vmatpush.bf16.xpose.msra.mxu0 0
        %5707 = vmatpush.bf16.xpose.msra.mxu0 0
        %5708 = vmatpush.bf16.xpose.msra.mxu0 %v3609
        %5709 = vmatmul.bf16.gmra.mxu0 %v945
        %v5710 = vpop.f32.mrf.mxu0
        %v5711 = vadd.f32 %v5698, %v5710
        %v5712 = vpop.f32.mrf.mxu0
        %5713 = vdwg.mxu0
        %5714 = vmatpush.bf16.xpose.msra.mxu0 0
        %5715 = vmatpush.bf16.xpose.msra.mxu0 0
        %5716 = vmatpush.bf16.xpose.msra.mxu0 0
        %5717 = vmatpush.bf16.xpose.msra.mxu0 0
        %5718 = vmatpush.bf16.xpose.msra.mxu0 0
        %5719 = vmatpush.bf16.xpose.msra.mxu0 0
        %5720 = vmatpush.bf16.xpose.msra.mxu0 0
        %5721 = vmatpush.bf16.xpose.msra.mxu0 %v3610
        %5722 = vmatmul.bf16.gmra.mxu0 %v946
        %v5723 = vpop.f32.mrf.mxu0
        %v5724 = vadd.f32 %v5711, %v5723
        %v5725 = vpop.f32.mrf.mxu0
        %5726 = vdwg.mxu0
        %5727 = vmatpush.bf16.xpose.msra.mxu0 0
        %5728 = vmatpush.bf16.xpose.msra.mxu0 0
        %5729 = vmatpush.bf16.xpose.msra.mxu0 0
        %5730 = vmatpush.bf16.xpose.msra.mxu0 0
        %5731 = vmatpush.bf16.xpose.msra.mxu0 0
        %5732 = vmatpush.bf16.xpose.msra.mxu0 0
        %5733 = vmatpush.bf16.xpose.msra.mxu0 0
        %5734 = vmatpush.bf16.xpose.msra.mxu0 %v3611
        %5735 = vmatmul.bf16.gmra.mxu0 %v947
        %v5736 = vpop.f32.mrf.mxu0
        %v5737 = vadd.f32 %v5724, %v5736
        %v5738 = vpop.f32.mrf.mxu0
        %5739 = vdwg.mxu0
        %5740 = vmatpush.bf16.xpose.msra.mxu0 0
        %5741 = vmatpush.bf16.xpose.msra.mxu0 0
        %5742 = vmatpush.bf16.xpose.msra.mxu0 0
        %5743 = vmatpush.bf16.xpose.msra.mxu0 0
        %5744 = vmatpush.bf16.xpose.msra.mxu0 0
        %5745 = vmatpush.bf16.xpose.msra.mxu0 0
        %5746 = vmatpush.bf16.xpose.msra.mxu0 0
        %5747 = vmatpush.bf16.xpose.msra.mxu0 %v3612
        %5748 = vmatmul.bf16.gmra.mxu0 %v948
        %v5749 = vpop.f32.mrf.mxu0
        %v5750 = vadd.f32 %v5737, %v5749
        %v5751 = vpop.f32.mrf.mxu0
        %5752 = vdwg.mxu0
        %5753 = vmatpush.bf16.xpose.msra.mxu0 0
        %5754 = vmatpush.bf16.xpose.msra.mxu0 0
        %5755 = vmatpush.bf16.xpose.msra.mxu0 0
        %5756 = vmatpush.bf16.xpose.msra.mxu0 0
        %5757 = vmatpush.bf16.xpose.msra.mxu0 0
        %5758 = vmatpush.bf16.xpose.msra.mxu0 0
        %5759 = vmatpush.bf16.xpose.msra.mxu0 0
        %5760 = vmatpush.bf16.xpose.msra.mxu0 %v3613
        %5761 = vmatmul.bf16.gmra.mxu0 %v949
        %v5762 = vpop.f32.mrf.mxu0
        %v5763 = vadd.f32 %v5750, %v5762
        %v5764 = vpop.f32.mrf.mxu0
        %5765 = vdwg.mxu0
        %5766 = vmatpush.bf16.xpose.msra.mxu0 0
        %5767 = vmatpush.bf16.xpose.msra.mxu0 0
        %5768 = vmatpush.bf16.xpose.msra.mxu0 0
        %5769 = vmatpush.bf16.xpose.msra.mxu0 0
        %5770 = vmatpush.bf16.xpose.msra.mxu0 0
        %5771 = vmatpush.bf16.xpose.msra.mxu0 0
        %5772 = vmatpush.bf16.xpose.msra.mxu0 0
        %5773 = vmatpush.bf16.xpose.msra.mxu0 %v3614
        %5774 = vmatmul.bf16.gmra.mxu0 %v950
        %v5775 = vpop.f32.mrf.mxu0
        %v5776 = vadd.f32 %v5763, %v5775
        %v5777 = vpop.f32.mrf.mxu0
        %5778 = vdwg.mxu0
        %5779 = vmatpush.bf16.xpose.msra.mxu0 0
        %5780 = vmatpush.bf16.xpose.msra.mxu0 0
        %5781 = vmatpush.bf16.xpose.msra.mxu0 0
        %5782 = vmatpush.bf16.xpose.msra.mxu0 0
        %5783 = vmatpush.bf16.xpose.msra.mxu0 0
        %5784 = vmatpush.bf16.xpose.msra.mxu0 0
        %5785 = vmatpush.bf16.xpose.msra.mxu0 0
        %5786 = vmatpush.bf16.xpose.msra.mxu0 %v3615
        %5787 = vmatmul.bf16.gmra.mxu0 %v951
        %v5788 = vpop.f32.mrf.mxu0
        %v5789 = vadd.f32 %v5776, %v5788
        %v5790 = vpop.f32.mrf.mxu0
        %5791 = vdwg.mxu0
        %5792 = vmatpush.bf16.xpose.msra.mxu0 0
        %5793 = vmatpush.bf16.xpose.msra.mxu0 0
        %5794 = vmatpush.bf16.xpose.msra.mxu0 0
        %5795 = vmatpush.bf16.xpose.msra.mxu0 0
        %5796 = vmatpush.bf16.xpose.msra.mxu0 0
        %5797 = vmatpush.bf16.xpose.msra.mxu0 0
        %5798 = vmatpush.bf16.xpose.msra.mxu0 0
        %5799 = vmatpush.bf16.xpose.msra.mxu0 %v3616
        %5800 = vmatmul.bf16.gmra.mxu0 %v954
        %v5801 = vpop.f32.mrf.mxu0
        %v5802 = vadd.f32 %v5789, %v5801
        %v5803 = vpop.f32.mrf.mxu0
        %5804 = vdwg.mxu0
        %5805 = vmatpush.bf16.xpose.msra.mxu0 0
        %5806 = vmatpush.bf16.xpose.msra.mxu0 0
        %5807 = vmatpush.bf16.xpose.msra.mxu0 0
        %5808 = vmatpush.bf16.xpose.msra.mxu0 0
        %5809 = vmatpush.bf16.xpose.msra.mxu0 0
        %5810 = vmatpush.bf16.xpose.msra.mxu0 0
        %5811 = vmatpush.bf16.xpose.msra.mxu0 0
        %5812 = vmatpush.bf16.xpose.msra.mxu0 %v3617
        %5813 = vmatmul.bf16.gmra.mxu0 %v955
        %v5814 = vpop.f32.mrf.mxu0
        %v5815 = vadd.f32 %v5802, %v5814
        %v5816 = vpop.f32.mrf.mxu0
        %5817 = vdwg.mxu0
        %5818 = vmatpush.bf16.xpose.msra.mxu0 0
        %5819 = vmatpush.bf16.xpose.msra.mxu0 0
        %5820 = vmatpush.bf16.xpose.msra.mxu0 0
        %5821 = vmatpush.bf16.xpose.msra.mxu0 0
        %5822 = vmatpush.bf16.xpose.msra.mxu0 0
        %5823 = vmatpush.bf16.xpose.msra.mxu0 0
        %5824 = vmatpush.bf16.xpose.msra.mxu0 0
        %5825 = vmatpush.bf16.xpose.msra.mxu0 %v3618
        %5826 = vmatmul.bf16.gmra.mxu0 %v956
        %v5827 = vpop.f32.mrf.mxu0
        %v5828 = vadd.f32 %v5815, %v5827
        %v5829 = vpop.f32.mrf.mxu0
        %5830 = vdwg.mxu0
        %5831 = vmatpush.bf16.xpose.msra.mxu0 0
        %5832 = vmatpush.bf16.xpose.msra.mxu0 0
        %5833 = vmatpush.bf16.xpose.msra.mxu0 0
        %5834 = vmatpush.bf16.xpose.msra.mxu0 0
        %5835 = vmatpush.bf16.xpose.msra.mxu0 0
        %5836 = vmatpush.bf16.xpose.msra.mxu0 0
        %5837 = vmatpush.bf16.xpose.msra.mxu0 0
        %5838 = vmatpush.bf16.xpose.msra.mxu0 %v3619
        %5839 = vmatmul.bf16.gmra.mxu0 %v957
        %v5840 = vpop.f32.mrf.mxu0
        %v5841 = vadd.f32 %v5828, %v5840
        %v5842 = vpop.f32.mrf.mxu0
        %5843 = vdwg.mxu0
        %5844 = vmatpush.bf16.xpose.msra.mxu0 0
        %5845 = vmatpush.bf16.xpose.msra.mxu0 0
        %5846 = vmatpush.bf16.xpose.msra.mxu0 0
        %5847 = vmatpush.bf16.xpose.msra.mxu0 0
        %5848 = vmatpush.bf16.xpose.msra.mxu0 0
        %5849 = vmatpush.bf16.xpose.msra.mxu0 0
        %5850 = vmatpush.bf16.xpose.msra.mxu0 0
        %5851 = vmatpush.bf16.xpose.msra.mxu0 %v3620
        %5852 = vmatmul.bf16.gmra.mxu0 %v958
        %v5853 = vpop.f32.mrf.mxu0
        %v5854 = vadd.f32 %v5841, %v5853
        %v5855 = vpop.f32.mrf.mxu0
        %5856 = vdwg.mxu0
        %5857 = vmatpush.bf16.xpose.msra.mxu0 0
        %5858 = vmatpush.bf16.xpose.msra.mxu0 0
        %5859 = vmatpush.bf16.xpose.msra.mxu0 0
        %5860 = vmatpush.bf16.xpose.msra.mxu0 0
        %5861 = vmatpush.bf16.xpose.msra.mxu0 0
        %5862 = vmatpush.bf16.xpose.msra.mxu0 0
        %5863 = vmatpush.bf16.xpose.msra.mxu0 0
        %5864 = vmatpush.bf16.xpose.msra.mxu0 %v3621
        %5865 = vmatmul.bf16.gmra.mxu0 %v959
        %v5866 = vpop.f32.mrf.mxu0
        %v5867 = vadd.f32 %v5854, %v5866
        %v5868 = vpop.f32.mrf.mxu0
        %5869 = vdwg.mxu0
        %5870 = vmatpush.bf16.xpose.msra.mxu0 0
        %5871 = vmatpush.bf16.xpose.msra.mxu0 0
        %5872 = vmatpush.bf16.xpose.msra.mxu0 0
        %5873 = vmatpush.bf16.xpose.msra.mxu0 0
        %5874 = vmatpush.bf16.xpose.msra.mxu0 0
        %5875 = vmatpush.bf16.xpose.msra.mxu0 0
        %5876 = vmatpush.bf16.xpose.msra.mxu0 0
        %5877 = vmatpush.bf16.xpose.msra.mxu0 %v3622
        %5878 = vmatmul.bf16.gmra.mxu0 %v960
        %v5879 = vpop.f32.mrf.mxu0
        %v5880 = vadd.f32 %v5867, %v5879
        %v5881 = vpop.f32.mrf.mxu0
        %5882 = vdwg.mxu0
        %5883 = vmatpush.bf16.xpose.msra.mxu0 0
        %5884 = vmatpush.bf16.xpose.msra.mxu0 0
        %5885 = vmatpush.bf16.xpose.msra.mxu0 0
        %5886 = vmatpush.bf16.xpose.msra.mxu0 0
        %5887 = vmatpush.bf16.xpose.msra.mxu0 0
        %5888 = vmatpush.bf16.xpose.msra.mxu0 0
        %5889 = vmatpush.bf16.xpose.msra.mxu0 0
        %5890 = vmatpush.bf16.xpose.msra.mxu0 %v3623
        %5891 = vmatmul.bf16.gmra.mxu0 %v961
        %v5892 = vpop.f32.mrf.mxu0
        %v5893 = vadd.f32 %v5880, %v5892
        %v5894 = vpop.f32.mrf.mxu0
        %5895 = vdwg.mxu0
        %5896 = vmatpush.bf16.xpose.msra.mxu0 0
        %5897 = vmatpush.bf16.xpose.msra.mxu0 0
        %5898 = vmatpush.bf16.xpose.msra.mxu0 0
        %5899 = vmatpush.bf16.xpose.msra.mxu0 0
        %5900 = vmatpush.bf16.xpose.msra.mxu0 0
        %5901 = vmatpush.bf16.xpose.msra.mxu0 0
        %5902 = vmatpush.bf16.xpose.msra.mxu0 0
        %5903 = vmatpush.bf16.xpose.msra.mxu0 %v3624
        %5904 = vmatmul.bf16.gmra.mxu0 %v964
        %v5905 = vpop.f32.mrf.mxu0
        %v5906 = vadd.f32 %v5893, %v5905
        %v5907 = vpop.f32.mrf.mxu0
        %5908 = vdwg.mxu0
        %5909 = vmatpush.bf16.xpose.msra.mxu0 0
        %5910 = vmatpush.bf16.xpose.msra.mxu0 0
        %5911 = vmatpush.bf16.xpose.msra.mxu0 0
        %5912 = vmatpush.bf16.xpose.msra.mxu0 0
        %5913 = vmatpush.bf16.xpose.msra.mxu0 0
        %5914 = vmatpush.bf16.xpose.msra.mxu0 0
        %5915 = vmatpush.bf16.xpose.msra.mxu0 0
        %5916 = vmatpush.bf16.xpose.msra.mxu0 %v3625
        %5917 = vmatmul.bf16.gmra.mxu0 %v965
        %v5918 = vpop.f32.mrf.mxu0
        %v5919 = vadd.f32 %v5906, %v5918
        %v5920 = vpop.f32.mrf.mxu0
        %5921 = vdwg.mxu0
        %5922 = vmatpush.bf16.xpose.msra.mxu0 0
        %5923 = vmatpush.bf16.xpose.msra.mxu0 0
        %5924 = vmatpush.bf16.xpose.msra.mxu0 0
        %5925 = vmatpush.bf16.xpose.msra.mxu0 0
        %5926 = vmatpush.bf16.xpose.msra.mxu0 0
        %5927 = vmatpush.bf16.xpose.msra.mxu0 0
        %5928 = vmatpush.bf16.xpose.msra.mxu0 0
        %5929 = vmatpush.bf16.xpose.msra.mxu0 %v3626
        %5930 = vmatmul.bf16.gmra.mxu0 %v966
        %v5931 = vpop.f32.mrf.mxu0
        %v5932 = vadd.f32 %v5919, %v5931
        %v5933 = vpop.f32.mrf.mxu0
        %5934 = vdwg.mxu0
        %5935 = vmatpush.bf16.xpose.msra.mxu0 0
        %5936 = vmatpush.bf16.xpose.msra.mxu0 0
        %5937 = vmatpush.bf16.xpose.msra.mxu0 0
        %5938 = vmatpush.bf16.xpose.msra.mxu0 0
        %5939 = vmatpush.bf16.xpose.msra.mxu0 0
        %5940 = vmatpush.bf16.xpose.msra.mxu0 0
        %5941 = vmatpush.bf16.xpose.msra.mxu0 0
        %5942 = vmatpush.bf16.xpose.msra.mxu0 %v3627
        %5943 = vmatmul.bf16.gmra.mxu0 %v967
        %v5944 = vpop.f32.mrf.mxu0
        %v5945 = vadd.f32 %v5932, %v5944
        %v5946 = vpop.f32.mrf.mxu0
        %5947 = vdwg.mxu0
        %5948 = vmatpush.bf16.xpose.msra.mxu0 0
        %5949 = vmatpush.bf16.xpose.msra.mxu0 0
        %5950 = vmatpush.bf16.xpose.msra.mxu0 0
        %5951 = vmatpush.bf16.xpose.msra.mxu0 0
        %5952 = vmatpush.bf16.xpose.msra.mxu0 0
        %5953 = vmatpush.bf16.xpose.msra.mxu0 0
        %5954 = vmatpush.bf16.xpose.msra.mxu0 0
        %5955 = vmatpush.bf16.xpose.msra.mxu0 %v3628
        %5956 = vmatmul.bf16.gmra.mxu0 %v968
        %v5957 = vpop.f32.mrf.mxu0
        %v5958 = vadd.f32 %v5945, %v5957
        %v5959 = vpop.f32.mrf.mxu0
        %5960 = vdwg.mxu0
        %5961 = vmatpush.bf16.xpose.msra.mxu0 0
        %5962 = vmatpush.bf16.xpose.msra.mxu0 0
        %5963 = vmatpush.bf16.xpose.msra.mxu0 0
        %5964 = vmatpush.bf16.xpose.msra.mxu0 0
        %5965 = vmatpush.bf16.xpose.msra.mxu0 0
        %5966 = vmatpush.bf16.xpose.msra.mxu0 0
        %5967 = vmatpush.bf16.xpose.msra.mxu0 0
        %5968 = vmatpush.bf16.xpose.msra.mxu0 %v3629
        %5969 = vmatmul.bf16.gmra.mxu0 %v969
        %v5970 = vpop.f32.mrf.mxu0
        %v5971 = vadd.f32 %v5958, %v5970
        %v5972 = vpop.f32.mrf.mxu0
        %5973 = vdwg.mxu0
        %5974 = vmatpush.bf16.xpose.msra.mxu0 0
        %5975 = vmatpush.bf16.xpose.msra.mxu0 0
        %5976 = vmatpush.bf16.xpose.msra.mxu0 0
        %5977 = vmatpush.bf16.xpose.msra.mxu0 0
        %5978 = vmatpush.bf16.xpose.msra.mxu0 0
        %5979 = vmatpush.bf16.xpose.msra.mxu0 0
        %5980 = vmatpush.bf16.xpose.msra.mxu0 0
        %5981 = vmatpush.bf16.xpose.msra.mxu0 %v3630
        %5982 = vmatmul.bf16.gmra.mxu0 %v970
        %v5983 = vpop.f32.mrf.mxu0
        %v5984 = vadd.f32 %v5971, %v5983
        %v5985 = vpop.f32.mrf.mxu0
        %5986 = vdwg.mxu0
        %5987 = vmatpush.bf16.xpose.msra.mxu0 0
        %5988 = vmatpush.bf16.xpose.msra.mxu0 0
        %5989 = vmatpush.bf16.xpose.msra.mxu0 0
        %5990 = vmatpush.bf16.xpose.msra.mxu0 0
        %5991 = vmatpush.bf16.xpose.msra.mxu0 0
        %5992 = vmatpush.bf16.xpose.msra.mxu0 0
        %5993 = vmatpush.bf16.xpose.msra.mxu0 0
        %5994 = vmatpush.bf16.xpose.msra.mxu0 %v3631
        %5995 = vmatmul.bf16.gmra.mxu0 %v971
        %v5996 = vpop.f32.mrf.mxu0
        %v5997 = vadd.f32 %v5984, %v5996
        %v5998 = vpop.f32.mrf.mxu0
        %5999 = vdwg.mxu0
        %6000 = vmatpush.bf16.xpose.msra.mxu0 0
        %6001 = vmatpush.bf16.xpose.msra.mxu0 0
        %6002 = vmatpush.bf16.xpose.msra.mxu0 0
        %6003 = vmatpush.bf16.xpose.msra.mxu0 0
        %6004 = vmatpush.bf16.xpose.msra.mxu0 0
        %6005 = vmatpush.bf16.xpose.msra.mxu0 0
        %6006 = vmatpush.bf16.xpose.msra.mxu0 0
        %6007 = vmatpush.bf16.xpose.msra.mxu0 %v3632
        %6008 = vmatmul.bf16.gmra.mxu0 %v974
        %v6009 = vpop.f32.mrf.mxu0
        %v6010 = vadd.f32 %v5997, %v6009
        %v6011 = vpop.f32.mrf.mxu0
        %6012 = vdwg.mxu0
        %6013 = vmatpush.bf16.xpose.msra.mxu0 0
        %6014 = vmatpush.bf16.xpose.msra.mxu0 0
        %6015 = vmatpush.bf16.xpose.msra.mxu0 0
        %6016 = vmatpush.bf16.xpose.msra.mxu0 0
        %6017 = vmatpush.bf16.xpose.msra.mxu0 0
        %6018 = vmatpush.bf16.xpose.msra.mxu0 0
        %6019 = vmatpush.bf16.xpose.msra.mxu0 0
        %6020 = vmatpush.bf16.xpose.msra.mxu0 %v3633
        %6021 = vmatmul.bf16.gmra.mxu0 %v975
        %v6022 = vpop.f32.mrf.mxu0
        %v6023 = vadd.f32 %v6010, %v6022
        %v6024 = vpop.f32.mrf.mxu0
        %6025 = vdwg.mxu0
        %6026 = vmatpush.bf16.xpose.msra.mxu0 0
        %6027 = vmatpush.bf16.xpose.msra.mxu0 0
        %6028 = vmatpush.bf16.xpose.msra.mxu0 0
        %6029 = vmatpush.bf16.xpose.msra.mxu0 0
        %6030 = vmatpush.bf16.xpose.msra.mxu0 0
        %6031 = vmatpush.bf16.xpose.msra.mxu0 0
        %6032 = vmatpush.bf16.xpose.msra.mxu0 0
        %6033 = vmatpush.bf16.xpose.msra.mxu0 %v3634
        %6034 = vmatmul.bf16.gmra.mxu0 %v976
        %v6035 = vpop.f32.mrf.mxu0
        %v6036 = vadd.f32 %v6023, %v6035
        %v6037 = vpop.f32.mrf.mxu0
        %6038 = vdwg.mxu0
        %6039 = vmatpush.bf16.xpose.msra.mxu0 0
        %6040 = vmatpush.bf16.xpose.msra.mxu0 0
        %6041 = vmatpush.bf16.xpose.msra.mxu0 0
        %6042 = vmatpush.bf16.xpose.msra.mxu0 0
        %6043 = vmatpush.bf16.xpose.msra.mxu0 0
        %6044 = vmatpush.bf16.xpose.msra.mxu0 0
        %6045 = vmatpush.bf16.xpose.msra.mxu0 0
        %6046 = vmatpush.bf16.xpose.msra.mxu0 %v3635
        %6047 = vmatmul.bf16.gmra.mxu0 %v977
        %v6048 = vpop.f32.mrf.mxu0
        %v6049 = vadd.f32 %v6036, %v6048
        %v6050 = vpop.f32.mrf.mxu0
        %6051 = vdwg.mxu0
        %6052 = vmatpush.bf16.xpose.msra.mxu0 0
        %6053 = vmatpush.bf16.xpose.msra.mxu0 0
        %6054 = vmatpush.bf16.xpose.msra.mxu0 0
        %6055 = vmatpush.bf16.xpose.msra.mxu0 0
        %6056 = vmatpush.bf16.xpose.msra.mxu0 0
        %6057 = vmatpush.bf16.xpose.msra.mxu0 0
        %6058 = vmatpush.bf16.xpose.msra.mxu0 0
        %6059 = vmatpush.bf16.xpose.msra.mxu0 %v3636
        %6060 = vmatmul.bf16.gmra.mxu0 %v978
        %v6061 = vpop.f32.mrf.mxu0
        %v6062 = vadd.f32 %v6049, %v6061
        %v6063 = vpop.f32.mrf.mxu0
        %6064 = vdwg.mxu0
        %6065 = vmatpush.bf16.xpose.msra.mxu0 0
        %6066 = vmatpush.bf16.xpose.msra.mxu0 0
        %6067 = vmatpush.bf16.xpose.msra.mxu0 0
        %6068 = vmatpush.bf16.xpose.msra.mxu0 0
        %6069 = vmatpush.bf16.xpose.msra.mxu0 0
        %6070 = vmatpush.bf16.xpose.msra.mxu0 0
        %6071 = vmatpush.bf16.xpose.msra.mxu0 0
        %6072 = vmatpush.bf16.xpose.msra.mxu0 %v3637
        %6073 = vmatmul.bf16.gmra.mxu0 %v979
        %v6074 = vpop.f32.mrf.mxu0
        %v6075 = vadd.f32 %v6062, %v6074
        %v6076 = vpop.f32.mrf.mxu0
        %6077 = vdwg.mxu0
        %6078 = vmatpush.bf16.xpose.msra.mxu0 0
        %6079 = vmatpush.bf16.xpose.msra.mxu0 0
        %6080 = vmatpush.bf16.xpose.msra.mxu0 0
        %6081 = vmatpush.bf16.xpose.msra.mxu0 0
        %6082 = vmatpush.bf16.xpose.msra.mxu0 0
        %6083 = vmatpush.bf16.xpose.msra.mxu0 0
        %6084 = vmatpush.bf16.xpose.msra.mxu0 0
        %6085 = vmatpush.bf16.xpose.msra.mxu0 %v3638
        %6086 = vmatmul.bf16.gmra.mxu0 %v980
        %v6087 = vpop.f32.mrf.mxu0
        %v6088 = vadd.f32 %v6075, %v6087
        %v6089 = vpop.f32.mrf.mxu0
        %6090 = vdwg.mxu0
        %6091 = vmatpush.bf16.xpose.msra.mxu0 0
        %6092 = vmatpush.bf16.xpose.msra.mxu0 0
        %6093 = vmatpush.bf16.xpose.msra.mxu0 0
        %6094 = vmatpush.bf16.xpose.msra.mxu0 0
        %6095 = vmatpush.bf16.xpose.msra.mxu0 0
        %6096 = vmatpush.bf16.xpose.msra.mxu0 0
        %6097 = vmatpush.bf16.xpose.msra.mxu0 0
        %6098 = vmatpush.bf16.xpose.msra.mxu0 %v3639
        %6099 = vmatmul.bf16.gmra.mxu0 %v981
        %v6100 = vpop.f32.mrf.mxu0
        %v6101 = vadd.f32 %v6088, %v6100
        %v6102 = vpop.f32.mrf.mxu0
        %6103 = vdwg.mxu0
        %6104 = vmatpush.bf16.xpose.msra.mxu0 0
        %6105 = vmatpush.bf16.xpose.msra.mxu0 0
        %6106 = vmatpush.bf16.xpose.msra.mxu0 0
        %6107 = vmatpush.bf16.xpose.msra.mxu0 0
        %6108 = vmatpush.bf16.xpose.msra.mxu0 0
        %6109 = vmatpush.bf16.xpose.msra.mxu0 0
        %6110 = vmatpush.bf16.xpose.msra.mxu0 0
        %6111 = vmatpush.bf16.xpose.msra.mxu0 %v3640
        %6112 = vmatmul.bf16.gmra.mxu0 %v984
        %v6113 = vpop.f32.mrf.mxu0
        %v6114 = vadd.f32 %v6101, %v6113
        %v6115 = vpop.f32.mrf.mxu0
        %6116 = vdwg.mxu0
        %6117 = vmatpush.bf16.xpose.msra.mxu0 0
        %6118 = vmatpush.bf16.xpose.msra.mxu0 0
        %6119 = vmatpush.bf16.xpose.msra.mxu0 0
        %6120 = vmatpush.bf16.xpose.msra.mxu0 0
        %6121 = vmatpush.bf16.xpose.msra.mxu0 0
        %6122 = vmatpush.bf16.xpose.msra.mxu0 0
        %6123 = vmatpush.bf16.xpose.msra.mxu0 0
        %6124 = vmatpush.bf16.xpose.msra.mxu0 %v3641
        %6125 = vmatmul.bf16.gmra.mxu0 %v985
        %v6126 = vpop.f32.mrf.mxu0
        %v6127 = vadd.f32 %v6114, %v6126
        %v6128 = vpop.f32.mrf.mxu0
        %6129 = vdwg.mxu0
        %6130 = vmatpush.bf16.xpose.msra.mxu0 0
        %6131 = vmatpush.bf16.xpose.msra.mxu0 0
        %6132 = vmatpush.bf16.xpose.msra.mxu0 0
        %6133 = vmatpush.bf16.xpose.msra.mxu0 0
        %6134 = vmatpush.bf16.xpose.msra.mxu0 0
        %6135 = vmatpush.bf16.xpose.msra.mxu0 0
        %6136 = vmatpush.bf16.xpose.msra.mxu0 0
        %6137 = vmatpush.bf16.xpose.msra.mxu0 %v3642
        %6138 = vmatmul.bf16.gmra.mxu0 %v986
        %v6139 = vpop.f32.mrf.mxu0
        %v6140 = vadd.f32 %v6127, %v6139
        %v6141 = vpop.f32.mrf.mxu0
        %6142 = vdwg.mxu0
        %6143 = vmatpush.bf16.xpose.msra.mxu0 0
        %6144 = vmatpush.bf16.xpose.msra.mxu0 0
        %6145 = vmatpush.bf16.xpose.msra.mxu0 0
        %6146 = vmatpush.bf16.xpose.msra.mxu0 0
        %6147 = vmatpush.bf16.xpose.msra.mxu0 0
        %6148 = vmatpush.bf16.xpose.msra.mxu0 0
        %6149 = vmatpush.bf16.xpose.msra.mxu0 0
        %6150 = vmatpush.bf16.xpose.msra.mxu0 %v3643
        %6151 = vmatmul.bf16.gmra.mxu0 %v987
        %v6152 = vpop.f32.mrf.mxu0
        %v6153 = vadd.f32 %v6140, %v6152
        %v6154 = vpop.f32.mrf.mxu0
        %6155 = vdwg.mxu0
        %6156 = vmatpush.bf16.xpose.msra.mxu0 0
        %6157 = vmatpush.bf16.xpose.msra.mxu0 0
        %6158 = vmatpush.bf16.xpose.msra.mxu0 0
        %6159 = vmatpush.bf16.xpose.msra.mxu0 0
        %6160 = vmatpush.bf16.xpose.msra.mxu0 0
        %6161 = vmatpush.bf16.xpose.msra.mxu0 0
        %6162 = vmatpush.bf16.xpose.msra.mxu0 0
        %6163 = vmatpush.bf16.xpose.msra.mxu0 %v3644
        %6164 = vmatmul.bf16.gmra.mxu0 %v988
        %v6165 = vpop.f32.mrf.mxu0
        %v6166 = vadd.f32 %v6153, %v6165
        %v6167 = vpop.f32.mrf.mxu0
        %6168 = vdwg.mxu0
        %6169 = vmatpush.bf16.xpose.msra.mxu0 0
        %6170 = vmatpush.bf16.xpose.msra.mxu0 0
        %6171 = vmatpush.bf16.xpose.msra.mxu0 0
        %6172 = vmatpush.bf16.xpose.msra.mxu0 0
        %6173 = vmatpush.bf16.xpose.msra.mxu0 0
        %6174 = vmatpush.bf16.xpose.msra.mxu0 0
        %6175 = vmatpush.bf16.xpose.msra.mxu0 0
        %6176 = vmatpush.bf16.xpose.msra.mxu0 %v3645
        %6177 = vmatmul.bf16.gmra.mxu0 %v989
        %v6178 = vpop.f32.mrf.mxu0
        %v6179 = vadd.f32 %v6166, %v6178
        %v6180 = vpop.f32.mrf.mxu0
        %6181 = vdwg.mxu0
        %6182 = vmatpush.bf16.xpose.msra.mxu0 0
        %6183 = vmatpush.bf16.xpose.msra.mxu0 0
        %6184 = vmatpush.bf16.xpose.msra.mxu0 0
        %6185 = vmatpush.bf16.xpose.msra.mxu0 0
        %6186 = vmatpush.bf16.xpose.msra.mxu0 0
        %6187 = vmatpush.bf16.xpose.msra.mxu0 0
        %6188 = vmatpush.bf16.xpose.msra.mxu0 0
        %6189 = vmatpush.bf16.xpose.msra.mxu0 %v3646
        %6190 = vmatmul.bf16.gmra.mxu0 %v990
        %v6191 = vpop.f32.mrf.mxu0
        %v6192 = vadd.f32 %v6179, %v6191
        %v6193 = vpop.f32.mrf.mxu0
        %6194 = vdwg.mxu0
        %6195 = vmatpush.bf16.xpose.msra.mxu0 0
        %6196 = vmatpush.bf16.xpose.msra.mxu0 0
        %6197 = vmatpush.bf16.xpose.msra.mxu0 0
        %6198 = vmatpush.bf16.xpose.msra.mxu0 0
        %6199 = vmatpush.bf16.xpose.msra.mxu0 0
        %6200 = vmatpush.bf16.xpose.msra.mxu0 0
        %6201 = vmatpush.bf16.xpose.msra.mxu0 0
        %6202 = vmatpush.bf16.xpose.msra.mxu0 %v3647
        %6203 = vmatmul.bf16.gmra.mxu0 %v991
        %v6204 = vpop.f32.mrf.mxu0
        %v6205 = vadd.f32 %v6192, %v6204
        %v6206 = vpop.f32.mrf.mxu0
        %6207 = vdwg.mxu0
        %6208 = vmatpush.bf16.xpose.msra.mxu0 0
        %6209 = vmatpush.bf16.xpose.msra.mxu0 0
        %6210 = vmatpush.bf16.xpose.msra.mxu0 0
        %6211 = vmatpush.bf16.xpose.msra.mxu0 0
        %6212 = vmatpush.bf16.xpose.msra.mxu0 0
        %6213 = vmatpush.bf16.xpose.msra.mxu0 0
        %6214 = vmatpush.bf16.xpose.msra.mxu0 0
        %6215 = vmatpush.bf16.xpose.msra.mxu0 %v3648
        %6216 = vmatmul.bf16.gmra.mxu0 %v994
        %v6217 = vpop.f32.mrf.mxu0
        %v6218 = vadd.f32 %v6205, %v6217
        %v6219 = vpop.f32.mrf.mxu0
        %6220 = vdwg.mxu0
        %6221 = vmatpush.bf16.xpose.msra.mxu0 0
        %6222 = vmatpush.bf16.xpose.msra.mxu0 0
        %6223 = vmatpush.bf16.xpose.msra.mxu0 0
        %6224 = vmatpush.bf16.xpose.msra.mxu0 0
        %6225 = vmatpush.bf16.xpose.msra.mxu0 0
        %6226 = vmatpush.bf16.xpose.msra.mxu0 0
        %6227 = vmatpush.bf16.xpose.msra.mxu0 0
        %6228 = vmatpush.bf16.xpose.msra.mxu0 %v3649
        %6229 = vmatmul.bf16.gmra.mxu0 %v995
        %v6230 = vpop.f32.mrf.mxu0
        %v6231 = vadd.f32 %v6218, %v6230
        %v6232 = vpop.f32.mrf.mxu0
        %6233 = vdwg.mxu0
        %6234 = vmatpush.bf16.xpose.msra.mxu0 0
        %6235 = vmatpush.bf16.xpose.msra.mxu0 0
        %6236 = vmatpush.bf16.xpose.msra.mxu0 0
        %6237 = vmatpush.bf16.xpose.msra.mxu0 0
        %6238 = vmatpush.bf16.xpose.msra.mxu0 0
        %6239 = vmatpush.bf16.xpose.msra.mxu0 0
        %6240 = vmatpush.bf16.xpose.msra.mxu0 0
        %6241 = vmatpush.bf16.xpose.msra.mxu0 %v3650
        %6242 = vmatmul.bf16.gmra.mxu0 %v996
        %v6243 = vpop.f32.mrf.mxu0
        %v6244 = vadd.f32 %v6231, %v6243
        %v6245 = vpop.f32.mrf.mxu0
        %6246 = vdwg.mxu0
        %6247 = vmatpush.bf16.xpose.msra.mxu0 0
        %6248 = vmatpush.bf16.xpose.msra.mxu0 0
        %6249 = vmatpush.bf16.xpose.msra.mxu0 0
        %6250 = vmatpush.bf16.xpose.msra.mxu0 0
        %6251 = vmatpush.bf16.xpose.msra.mxu0 0
        %6252 = vmatpush.bf16.xpose.msra.mxu0 0
        %6253 = vmatpush.bf16.xpose.msra.mxu0 0
        %6254 = vmatpush.bf16.xpose.msra.mxu0 %v3651
        %6255 = vmatmul.bf16.gmra.mxu0 %v997
        %v6256 = vpop.f32.mrf.mxu0
        %v6257 = vadd.f32 %v6244, %v6256
        %v6258 = vpop.f32.mrf.mxu0
        %6259 = vdwg.mxu0
        %6260 = vmatpush.bf16.xpose.msra.mxu0 0
        %6261 = vmatpush.bf16.xpose.msra.mxu0 0
        %6262 = vmatpush.bf16.xpose.msra.mxu0 0
        %6263 = vmatpush.bf16.xpose.msra.mxu0 0
        %6264 = vmatpush.bf16.xpose.msra.mxu0 0
        %6265 = vmatpush.bf16.xpose.msra.mxu0 0
        %6266 = vmatpush.bf16.xpose.msra.mxu0 0
        %6267 = vmatpush.bf16.xpose.msra.mxu0 %v3652
        %6268 = vmatmul.bf16.gmra.mxu0 %v998
        %v6269 = vpop.f32.mrf.mxu0
        %v6270 = vadd.f32 %v6257, %v6269
        %v6271 = vpop.f32.mrf.mxu0
        %6272 = vdwg.mxu0
        %6273 = vmatpush.bf16.xpose.msra.mxu0 0
        %6274 = vmatpush.bf16.xpose.msra.mxu0 0
        %6275 = vmatpush.bf16.xpose.msra.mxu0 0
        %6276 = vmatpush.bf16.xpose.msra.mxu0 0
        %6277 = vmatpush.bf16.xpose.msra.mxu0 0
        %6278 = vmatpush.bf16.xpose.msra.mxu0 0
        %6279 = vmatpush.bf16.xpose.msra.mxu0 0
        %6280 = vmatpush.bf16.xpose.msra.mxu0 %v3653
        %6281 = vmatmul.bf16.gmra.mxu0 %v999
        %v6282 = vpop.f32.mrf.mxu0
        %v6283 = vadd.f32 %v6270, %v6282
        %v6284 = vpop.f32.mrf.mxu0
        %6285 = vdwg.mxu0
        %6286 = vmatpush.bf16.xpose.msra.mxu0 0
        %6287 = vmatpush.bf16.xpose.msra.mxu0 0
        %6288 = vmatpush.bf16.xpose.msra.mxu0 0
        %6289 = vmatpush.bf16.xpose.msra.mxu0 0
        %6290 = vmatpush.bf16.xpose.msra.mxu0 0
        %6291 = vmatpush.bf16.xpose.msra.mxu0 0
        %6292 = vmatpush.bf16.xpose.msra.mxu0 0
        %6293 = vmatpush.bf16.xpose.msra.mxu0 %v3654
        %6294 = vmatmul.bf16.gmra.mxu0 %v1000
        %v6295 = vpop.f32.mrf.mxu0
        %v6296 = vadd.f32 %v6283, %v6295
        %v6297 = vpop.f32.mrf.mxu0
        %6298 = vdwg.mxu0
        %6299 = vmatpush.bf16.xpose.msra.mxu0 0
        %6300 = vmatpush.bf16.xpose.msra.mxu0 0
        %6301 = vmatpush.bf16.xpose.msra.mxu0 0
        %6302 = vmatpush.bf16.xpose.msra.mxu0 0
        %6303 = vmatpush.bf16.xpose.msra.mxu0 0
        %6304 = vmatpush.bf16.xpose.msra.mxu0 0
        %6305 = vmatpush.bf16.xpose.msra.mxu0 0
        %6306 = vmatpush.bf16.xpose.msra.mxu0 %v3655
        %6307 = vmatmul.bf16.gmra.mxu0 %v1001
        %v6308 = vpop.f32.mrf.mxu0
        %v6309 = vadd.f32 %v6296, %v6308
        %v6310 = vpop.f32.mrf.mxu0
        %6311 = vdwg.mxu0
        %6312 = vmatpush.bf16.xpose.msra.mxu0 0
        %6313 = vmatpush.bf16.xpose.msra.mxu0 0
        %6314 = vmatpush.bf16.xpose.msra.mxu0 0
        %6315 = vmatpush.bf16.xpose.msra.mxu0 0
        %6316 = vmatpush.bf16.xpose.msra.mxu0 0
        %6317 = vmatpush.bf16.xpose.msra.mxu0 0
        %6318 = vmatpush.bf16.xpose.msra.mxu0 0
        %6319 = vmatpush.bf16.xpose.msra.mxu0 %v3656
        %6320 = vmatmul.bf16.gmra.mxu0 %v1004
        %v6321 = vpop.f32.mrf.mxu0
        %v6322 = vadd.f32 %v6309, %v6321
        %v6323 = vpop.f32.mrf.mxu0
        %6324 = vdwg.mxu0
        %6325 = vmatpush.bf16.xpose.msra.mxu0 0
        %6326 = vmatpush.bf16.xpose.msra.mxu0 0
        %6327 = vmatpush.bf16.xpose.msra.mxu0 0
        %6328 = vmatpush.bf16.xpose.msra.mxu0 0
        %6329 = vmatpush.bf16.xpose.msra.mxu0 0
        %6330 = vmatpush.bf16.xpose.msra.mxu0 0
        %6331 = vmatpush.bf16.xpose.msra.mxu0 0
        %6332 = vmatpush.bf16.xpose.msra.mxu0 %v3657
        %6333 = vmatmul.bf16.gmra.mxu0 %v1005
        %v6334 = vpop.f32.mrf.mxu0
        %v6335 = vadd.f32 %v6322, %v6334
        %v6336 = vpop.f32.mrf.mxu0
        %6337 = vdwg.mxu0
        %6338 = vmatpush.bf16.xpose.msra.mxu0 0
        %6339 = vmatpush.bf16.xpose.msra.mxu0 0
        %6340 = vmatpush.bf16.xpose.msra.mxu0 0
        %6341 = vmatpush.bf16.xpose.msra.mxu0 0
        %6342 = vmatpush.bf16.xpose.msra.mxu0 0
        %6343 = vmatpush.bf16.xpose.msra.mxu0 0
        %6344 = vmatpush.bf16.xpose.msra.mxu0 0
        %6345 = vmatpush.bf16.xpose.msra.mxu0 %v3658
        %6346 = vmatmul.bf16.gmra.mxu0 %v1006
        %v6347 = vpop.f32.mrf.mxu0
        %v6348 = vadd.f32 %v6335, %v6347
        %v6349 = vpop.f32.mrf.mxu0
        %6350 = vdwg.mxu0
        %6351 = vmatpush.bf16.xpose.msra.mxu0 0
        %6352 = vmatpush.bf16.xpose.msra.mxu0 0
        %6353 = vmatpush.bf16.xpose.msra.mxu0 0
        %6354 = vmatpush.bf16.xpose.msra.mxu0 0
        %6355 = vmatpush.bf16.xpose.msra.mxu0 0
        %6356 = vmatpush.bf16.xpose.msra.mxu0 0
        %6357 = vmatpush.bf16.xpose.msra.mxu0 0
        %6358 = vmatpush.bf16.xpose.msra.mxu0 %v3659
        %6359 = vmatmul.bf16.gmra.mxu0 %v1007
        %v6360 = vpop.f32.mrf.mxu0
        %v6361 = vadd.f32 %v6348, %v6360
        %v6362 = vpop.f32.mrf.mxu0
        %6363 = vdwg.mxu0
        %6364 = vmatpush.bf16.xpose.msra.mxu0 0
        %6365 = vmatpush.bf16.xpose.msra.mxu0 0
        %6366 = vmatpush.bf16.xpose.msra.mxu0 0
        %6367 = vmatpush.bf16.xpose.msra.mxu0 0
        %6368 = vmatpush.bf16.xpose.msra.mxu0 0
        %6369 = vmatpush.bf16.xpose.msra.mxu0 0
        %6370 = vmatpush.bf16.xpose.msra.mxu0 0
        %6371 = vmatpush.bf16.xpose.msra.mxu0 %v3660
        %6372 = vmatmul.bf16.gmra.mxu0 %v1008
        %v6373 = vpop.f32.mrf.mxu0
        %v6374 = vadd.f32 %v6361, %v6373
        %v6375 = vpop.f32.mrf.mxu0
        %6376 = vdwg.mxu0
        %6377 = vmatpush.bf16.xpose.msra.mxu0 0
        %6378 = vmatpush.bf16.xpose.msra.mxu0 0
        %6379 = vmatpush.bf16.xpose.msra.mxu0 0
        %6380 = vmatpush.bf16.xpose.msra.mxu0 0
        %6381 = vmatpush.bf16.xpose.msra.mxu0 0
        %6382 = vmatpush.bf16.xpose.msra.mxu0 0
        %6383 = vmatpush.bf16.xpose.msra.mxu0 0
        %6384 = vmatpush.bf16.xpose.msra.mxu0 %v3661
        %6385 = vmatmul.bf16.gmra.mxu0 %v1009
        %v6386 = vpop.f32.mrf.mxu0
        %v6387 = vadd.f32 %v6374, %v6386
        %v6388 = vpop.f32.mrf.mxu0
        %6389 = vdwg.mxu0
        %6390 = vmatpush.bf16.xpose.msra.mxu0 0
        %6391 = vmatpush.bf16.xpose.msra.mxu0 0
        %6392 = vmatpush.bf16.xpose.msra.mxu0 0
        %6393 = vmatpush.bf16.xpose.msra.mxu0 0
        %6394 = vmatpush.bf16.xpose.msra.mxu0 0
        %6395 = vmatpush.bf16.xpose.msra.mxu0 0
        %6396 = vmatpush.bf16.xpose.msra.mxu0 0
        %6397 = vmatpush.bf16.xpose.msra.mxu0 %v3662
        %6398 = vmatmul.bf16.gmra.mxu0 %v1010
        %v6399 = vpop.f32.mrf.mxu0
        %v6400 = vadd.f32 %v6387, %v6399
        %v6401 = vpop.f32.mrf.mxu0
        %6402 = vdwg.mxu0
        %6403 = vmatpush.bf16.xpose.msra.mxu0 0
        %6404 = vmatpush.bf16.xpose.msra.mxu0 0
        %6405 = vmatpush.bf16.xpose.msra.mxu0 0
        %6406 = vmatpush.bf16.xpose.msra.mxu0 0
        %6407 = vmatpush.bf16.xpose.msra.mxu0 0
        %6408 = vmatpush.bf16.xpose.msra.mxu0 0
        %6409 = vmatpush.bf16.xpose.msra.mxu0 0
        %6410 = vmatpush.bf16.xpose.msra.mxu0 %v3663
        %6411 = vmatmul.bf16.gmra.mxu0 %v1011
        %v6412 = vpop.f32.mrf.mxu0
        %v6413 = vadd.f32 %v6400, %v6412
        %v6414 = vpop.f32.mrf.mxu0
        %6415 = vdwg.mxu0
        %6416 = vmatpush.bf16.xpose.msra.mxu0 0
        %6417 = vmatpush.bf16.xpose.msra.mxu0 0
        %6418 = vmatpush.bf16.xpose.msra.mxu0 0
        %6419 = vmatpush.bf16.xpose.msra.mxu0 0
        %6420 = vmatpush.bf16.xpose.msra.mxu0 0
        %6421 = vmatpush.bf16.xpose.msra.mxu0 0
        %6422 = vmatpush.bf16.xpose.msra.mxu0 0
        %6423 = vmatpush.bf16.xpose.msra.mxu0 %v3664
        %6424 = vmatmul.bf16.gmra.mxu0 %v1014
        %v6425 = vpop.f32.mrf.mxu0
        %v6426 = vadd.f32 %v6413, %v6425
        %v6427 = vpop.f32.mrf.mxu0
        %6428 = vdwg.mxu0
        %6429 = vmatpush.bf16.xpose.msra.mxu0 0
        %6430 = vmatpush.bf16.xpose.msra.mxu0 0
        %6431 = vmatpush.bf16.xpose.msra.mxu0 0
        %6432 = vmatpush.bf16.xpose.msra.mxu0 0
        %6433 = vmatpush.bf16.xpose.msra.mxu0 0
        %6434 = vmatpush.bf16.xpose.msra.mxu0 0
        %6435 = vmatpush.bf16.xpose.msra.mxu0 0
        %6436 = vmatpush.bf16.xpose.msra.mxu0 %v3665
        %6437 = vmatmul.bf16.gmra.mxu0 %v1015
        %v6438 = vpop.f32.mrf.mxu0
        %v6439 = vadd.f32 %v6426, %v6438
        %v6440 = vpop.f32.mrf.mxu0
        %6441 = vdwg.mxu0
        %6442 = vmatpush.bf16.xpose.msra.mxu0 0
        %6443 = vmatpush.bf16.xpose.msra.mxu0 0
        %6444 = vmatpush.bf16.xpose.msra.mxu0 0
        %6445 = vmatpush.bf16.xpose.msra.mxu0 0
        %6446 = vmatpush.bf16.xpose.msra.mxu0 0
        %6447 = vmatpush.bf16.xpose.msra.mxu0 0
        %6448 = vmatpush.bf16.xpose.msra.mxu0 0
        %6449 = vmatpush.bf16.xpose.msra.mxu0 %v3666
        %6450 = vmatmul.bf16.gmra.mxu0 %v1016
        %v6451 = vpop.f32.mrf.mxu0
        %v6452 = vadd.f32 %v6439, %v6451
        %v6453 = vpop.f32.mrf.mxu0
        %6454 = vdwg.mxu0
        %6455 = vmatpush.bf16.xpose.msra.mxu0 0
        %6456 = vmatpush.bf16.xpose.msra.mxu0 0
        %6457 = vmatpush.bf16.xpose.msra.mxu0 0
        %6458 = vmatpush.bf16.xpose.msra.mxu0 0
        %6459 = vmatpush.bf16.xpose.msra.mxu0 0
        %6460 = vmatpush.bf16.xpose.msra.mxu0 0
        %6461 = vmatpush.bf16.xpose.msra.mxu0 0
        %6462 = vmatpush.bf16.xpose.msra.mxu0 %v3667
        %6463 = vmatmul.bf16.gmra.mxu0 %v1017
        %v6464 = vpop.f32.mrf.mxu0
        %v6465 = vadd.f32 %v6452, %v6464
        %v6466 = vpop.f32.mrf.mxu0
        %6467 = vdwg.mxu0
        %6468 = vmatpush.bf16.xpose.msra.mxu0 0
        %6469 = vmatpush.bf16.xpose.msra.mxu0 0
        %6470 = vmatpush.bf16.xpose.msra.mxu0 0
        %6471 = vmatpush.bf16.xpose.msra.mxu0 0
        %6472 = vmatpush.bf16.xpose.msra.mxu0 0
        %6473 = vmatpush.bf16.xpose.msra.mxu0 0
        %6474 = vmatpush.bf16.xpose.msra.mxu0 0
        %6475 = vmatpush.bf16.xpose.msra.mxu0 %v3668
        %6476 = vmatmul.bf16.gmra.mxu0 %v1018
        %v6477 = vpop.f32.mrf.mxu0
        %v6478 = vadd.f32 %v6465, %v6477
        %v6479 = vpop.f32.mrf.mxu0
        %6480 = vdwg.mxu0
        %6481 = vmatpush.bf16.xpose.msra.mxu0 0
        %6482 = vmatpush.bf16.xpose.msra.mxu0 0
        %6483 = vmatpush.bf16.xpose.msra.mxu0 0
        %6484 = vmatpush.bf16.xpose.msra.mxu0 0
        %6485 = vmatpush.bf16.xpose.msra.mxu0 0
        %6486 = vmatpush.bf16.xpose.msra.mxu0 0
        %6487 = vmatpush.bf16.xpose.msra.mxu0 0
        %6488 = vmatpush.bf16.xpose.msra.mxu0 %v3669
        %6489 = vmatmul.bf16.gmra.mxu0 %v1019
        %v6490 = vpop.f32.mrf.mxu0
        %v6491 = vadd.f32 %v6478, %v6490
        %v6492 = vpop.f32.mrf.mxu0
        %6493 = vdwg.mxu0
        %6494 = vmatpush.bf16.xpose.msra.mxu0 0
        %6495 = vmatpush.bf16.xpose.msra.mxu0 0
        %6496 = vmatpush.bf16.xpose.msra.mxu0 0
        %6497 = vmatpush.bf16.xpose.msra.mxu0 0
        %6498 = vmatpush.bf16.xpose.msra.mxu0 0
        %6499 = vmatpush.bf16.xpose.msra.mxu0 0
        %6500 = vmatpush.bf16.xpose.msra.mxu0 0
        %6501 = vmatpush.bf16.xpose.msra.mxu0 %v3670
        %6502 = vmatmul.bf16.gmra.mxu0 %v1020
        %v6503 = vpop.f32.mrf.mxu0
        %v6504 = vadd.f32 %v6491, %v6503
        %v6505 = vpop.f32.mrf.mxu0
        %6506 = vdwg.mxu0
        %6507 = vmatpush.bf16.xpose.msra.mxu0 0
        %6508 = vmatpush.bf16.xpose.msra.mxu0 0
        %6509 = vmatpush.bf16.xpose.msra.mxu0 0
        %6510 = vmatpush.bf16.xpose.msra.mxu0 0
        %6511 = vmatpush.bf16.xpose.msra.mxu0 0
        %6512 = vmatpush.bf16.xpose.msra.mxu0 0
        %6513 = vmatpush.bf16.xpose.msra.mxu0 0
        %6514 = vmatpush.bf16.xpose.msra.mxu0 %v3671
        %6515 = vmatmul.bf16.gmra.mxu0 %v1021
        %v6516 = vpop.f32.mrf.mxu0
        %v6517 = vadd.f32 %v6504, %v6516
        %v6518 = vpop.f32.mrf.mxu0
        %6519 = vdwg.mxu0
        %6520 = vmatpush.bf16.xpose.msra.mxu0 0
        %6521 = vmatpush.bf16.xpose.msra.mxu0 0
        %6522 = vmatpush.bf16.xpose.msra.mxu0 0
        %6523 = vmatpush.bf16.xpose.msra.mxu0 0
        %6524 = vmatpush.bf16.xpose.msra.mxu0 0
        %6525 = vmatpush.bf16.xpose.msra.mxu0 0
        %6526 = vmatpush.bf16.xpose.msra.mxu0 0
        %6527 = vmatpush.bf16.xpose.msra.mxu0 %v3672
        %6528 = vmatmul.bf16.gmra.mxu0 %v1024
        %v6529 = vpop.f32.mrf.mxu0
        %v6530 = vadd.f32 %v6517, %v6529
        %v6531 = vpop.f32.mrf.mxu0
        %6532 = vdwg.mxu0
        %6533 = vmatpush.bf16.xpose.msra.mxu0 0
        %6534 = vmatpush.bf16.xpose.msra.mxu0 0
        %6535 = vmatpush.bf16.xpose.msra.mxu0 0
        %6536 = vmatpush.bf16.xpose.msra.mxu0 0
        %6537 = vmatpush.bf16.xpose.msra.mxu0 0
        %6538 = vmatpush.bf16.xpose.msra.mxu0 0
        %6539 = vmatpush.bf16.xpose.msra.mxu0 0
        %6540 = vmatpush.bf16.xpose.msra.mxu0 %v3673
        %6541 = vmatmul.bf16.gmra.mxu0 %v1025
        %v6542 = vpop.f32.mrf.mxu0
        %v6543 = vadd.f32 %v6530, %v6542
        %v6544 = vpop.f32.mrf.mxu0
        %6545 = vdwg.mxu0
        %6546 = vmatpush.bf16.xpose.msra.mxu0 0
        %6547 = vmatpush.bf16.xpose.msra.mxu0 0
        %6548 = vmatpush.bf16.xpose.msra.mxu0 0
        %6549 = vmatpush.bf16.xpose.msra.mxu0 0
        %6550 = vmatpush.bf16.xpose.msra.mxu0 0
        %6551 = vmatpush.bf16.xpose.msra.mxu0 0
        %6552 = vmatpush.bf16.xpose.msra.mxu0 0
        %6553 = vmatpush.bf16.xpose.msra.mxu0 %v3674
        %6554 = vmatmul.bf16.gmra.mxu0 %v1026
        %v6555 = vpop.f32.mrf.mxu0
        %v6556 = vadd.f32 %v6543, %v6555
        %v6557 = vpop.f32.mrf.mxu0
        %6558 = vdwg.mxu0
        %6559 = vmatpush.bf16.xpose.msra.mxu0 0
        %6560 = vmatpush.bf16.xpose.msra.mxu0 0
        %6561 = vmatpush.bf16.xpose.msra.mxu0 0
        %6562 = vmatpush.bf16.xpose.msra.mxu0 0
        %6563 = vmatpush.bf16.xpose.msra.mxu0 0
        %6564 = vmatpush.bf16.xpose.msra.mxu0 0
        %6565 = vmatpush.bf16.xpose.msra.mxu0 0
        %6566 = vmatpush.bf16.xpose.msra.mxu0 %v3675
        %6567 = vmatmul.bf16.gmra.mxu0 %v1027
        %v6568 = vpop.f32.mrf.mxu0
        %v6569 = vadd.f32 %v6556, %v6568
        %v6570 = vpop.f32.mrf.mxu0
        %6571 = vdwg.mxu0
        %6572 = vmatpush.bf16.xpose.msra.mxu0 0
        %6573 = vmatpush.bf16.xpose.msra.mxu0 0
        %6574 = vmatpush.bf16.xpose.msra.mxu0 0
        %6575 = vmatpush.bf16.xpose.msra.mxu0 0
        %6576 = vmatpush.bf16.xpose.msra.mxu0 0
        %6577 = vmatpush.bf16.xpose.msra.mxu0 0
        %6578 = vmatpush.bf16.xpose.msra.mxu0 0
        %6579 = vmatpush.bf16.xpose.msra.mxu0 %v3676
        %6580 = vmatmul.bf16.gmra.mxu0 %v1028
        %v6581 = vpop.f32.mrf.mxu0
        %v6582 = vadd.f32 %v6569, %v6581
        %v6583 = vpop.f32.mrf.mxu0
        %6584 = vdwg.mxu0
        %6585 = vmatpush.bf16.xpose.msra.mxu0 0
        %6586 = vmatpush.bf16.xpose.msra.mxu0 0
        %6587 = vmatpush.bf16.xpose.msra.mxu0 0
        %6588 = vmatpush.bf16.xpose.msra.mxu0 0
        %6589 = vmatpush.bf16.xpose.msra.mxu0 0
        %6590 = vmatpush.bf16.xpose.msra.mxu0 0
        %6591 = vmatpush.bf16.xpose.msra.mxu0 0
        %6592 = vmatpush.bf16.xpose.msra.mxu0 %v3677
        %6593 = vmatmul.bf16.gmra.mxu0 %v1029
        %v6594 = vpop.f32.mrf.mxu0
        %v6595 = vadd.f32 %v6582, %v6594
        %v6596 = vpop.f32.mrf.mxu0
        %6597 = vdwg.mxu0
        %6598 = vmatpush.bf16.xpose.msra.mxu0 0
        %6599 = vmatpush.bf16.xpose.msra.mxu0 0
        %6600 = vmatpush.bf16.xpose.msra.mxu0 0
        %6601 = vmatpush.bf16.xpose.msra.mxu0 0
        %6602 = vmatpush.bf16.xpose.msra.mxu0 0
        %6603 = vmatpush.bf16.xpose.msra.mxu0 0
        %6604 = vmatpush.bf16.xpose.msra.mxu0 0
        %6605 = vmatpush.bf16.xpose.msra.mxu0 %v3678
        %6606 = vmatmul.bf16.gmra.mxu0 %v1030
        %v6607 = vpop.f32.mrf.mxu0
        %v6608 = vadd.f32 %v6595, %v6607
        %v6609 = vpop.f32.mrf.mxu0
        %6610 = vdwg.mxu0
        %6611 = vmatpush.bf16.xpose.msra.mxu0 0
        %6612 = vmatpush.bf16.xpose.msra.mxu0 0
        %6613 = vmatpush.bf16.xpose.msra.mxu0 0
        %6614 = vmatpush.bf16.xpose.msra.mxu0 0
        %6615 = vmatpush.bf16.xpose.msra.mxu0 0
        %6616 = vmatpush.bf16.xpose.msra.mxu0 0
        %6617 = vmatpush.bf16.xpose.msra.mxu0 0
        %6618 = vmatpush.bf16.xpose.msra.mxu0 %v3679
        %6619 = vmatmul.bf16.gmra.mxu0 %v1031
        %v6620 = vpop.f32.mrf.mxu0
        %v6621 = vadd.f32 %v6608, %v6620
        %v6622 = vpop.f32.mrf.mxu0
        %6623 = vdwg.mxu0
        %6624 = vmatpush.bf16.xpose.msra.mxu0 0
        %6625 = vmatpush.bf16.xpose.msra.mxu0 0
        %6626 = vmatpush.bf16.xpose.msra.mxu0 0
        %6627 = vmatpush.bf16.xpose.msra.mxu0 0
        %6628 = vmatpush.bf16.xpose.msra.mxu0 0
        %6629 = vmatpush.bf16.xpose.msra.mxu0 0
        %6630 = vmatpush.bf16.xpose.msra.mxu0 0
        %6631 = vmatpush.bf16.xpose.msra.mxu0 %v3680
        %6632 = vmatmul.bf16.gmra.mxu0 %v1034
        %v6633 = vpop.f32.mrf.mxu0
        %v6634 = vadd.f32 %v6621, %v6633
        %v6635 = vpop.f32.mrf.mxu0
        %6636 = vdwg.mxu0
        %6637 = vmatpush.bf16.xpose.msra.mxu0 0
        %6638 = vmatpush.bf16.xpose.msra.mxu0 0
        %6639 = vmatpush.bf16.xpose.msra.mxu0 0
        %6640 = vmatpush.bf16.xpose.msra.mxu0 0
        %6641 = vmatpush.bf16.xpose.msra.mxu0 0
        %6642 = vmatpush.bf16.xpose.msra.mxu0 0
        %6643 = vmatpush.bf16.xpose.msra.mxu0 0
        %6644 = vmatpush.bf16.xpose.msra.mxu0 %v3681
        %6645 = vmatmul.bf16.gmra.mxu0 %v1035
        %v6646 = vpop.f32.mrf.mxu0
        %v6647 = vadd.f32 %v6634, %v6646
        %v6648 = vpop.f32.mrf.mxu0
        %6649 = vdwg.mxu0
        %6650 = vmatpush.bf16.xpose.msra.mxu0 0
        %6651 = vmatpush.bf16.xpose.msra.mxu0 0
        %6652 = vmatpush.bf16.xpose.msra.mxu0 0
        %6653 = vmatpush.bf16.xpose.msra.mxu0 0
        %6654 = vmatpush.bf16.xpose.msra.mxu0 0
        %6655 = vmatpush.bf16.xpose.msra.mxu0 0
        %6656 = vmatpush.bf16.xpose.msra.mxu0 0
        %6657 = vmatpush.bf16.xpose.msra.mxu0 %v3682
        %6658 = vmatmul.bf16.gmra.mxu0 %v1036
        %v6659 = vpop.f32.mrf.mxu0
        %v6660 = vadd.f32 %v6647, %v6659
        %v6661 = vpop.f32.mrf.mxu0
        %6662 = vdwg.mxu0
        %6663 = vmatpush.bf16.xpose.msra.mxu0 0
        %6664 = vmatpush.bf16.xpose.msra.mxu0 0
        %6665 = vmatpush.bf16.xpose.msra.mxu0 0
        %6666 = vmatpush.bf16.xpose.msra.mxu0 0
        %6667 = vmatpush.bf16.xpose.msra.mxu0 0
        %6668 = vmatpush.bf16.xpose.msra.mxu0 0
        %6669 = vmatpush.bf16.xpose.msra.mxu0 0
        %6670 = vmatpush.bf16.xpose.msra.mxu0 %v3683
        %6671 = vmatmul.bf16.gmra.mxu0 %v1037
        %v6672 = vpop.f32.mrf.mxu0
        %v6673 = vadd.f32 %v6660, %v6672
        %v6674 = vpop.f32.mrf.mxu0
        %6675 = vdwg.mxu0
        %6676 = vmatpush.bf16.xpose.msra.mxu0 0
        %6677 = vmatpush.bf16.xpose.msra.mxu0 0
        %6678 = vmatpush.bf16.xpose.msra.mxu0 0
        %6679 = vmatpush.bf16.xpose.msra.mxu0 0
        %6680 = vmatpush.bf16.xpose.msra.mxu0 0
        %6681 = vmatpush.bf16.xpose.msra.mxu0 0
        %6682 = vmatpush.bf16.xpose.msra.mxu0 0
        %6683 = vmatpush.bf16.xpose.msra.mxu0 %v3684
        %6684 = vmatmul.bf16.gmra.mxu0 %v1038
        %v6685 = vpop.f32.mrf.mxu0
        %v6686 = vadd.f32 %v6673, %v6685
        %v6687 = vpop.f32.mrf.mxu0
        %6688 = vdwg.mxu0
        %6689 = vmatpush.bf16.xpose.msra.mxu0 0
        %6690 = vmatpush.bf16.xpose.msra.mxu0 0
        %6691 = vmatpush.bf16.xpose.msra.mxu0 0
        %6692 = vmatpush.bf16.xpose.msra.mxu0 0
        %6693 = vmatpush.bf16.xpose.msra.mxu0 0
        %6694 = vmatpush.bf16.xpose.msra.mxu0 0
        %6695 = vmatpush.bf16.xpose.msra.mxu0 0
        %6696 = vmatpush.bf16.xpose.msra.mxu0 %v3685
        %6697 = vmatmul.bf16.gmra.mxu0 %v1039
        %v6698 = vpop.f32.mrf.mxu0
        %v6699 = vadd.f32 %v6686, %v6698
        %v6700 = vpop.f32.mrf.mxu0
        %6701 = vdwg.mxu0
        %6702 = vmatpush.bf16.xpose.msra.mxu0 0
        %6703 = vmatpush.bf16.xpose.msra.mxu0 0
        %6704 = vmatpush.bf16.xpose.msra.mxu0 0
        %6705 = vmatpush.bf16.xpose.msra.mxu0 0
        %6706 = vmatpush.bf16.xpose.msra.mxu0 0
        %6707 = vmatpush.bf16.xpose.msra.mxu0 0
        %6708 = vmatpush.bf16.xpose.msra.mxu0 0
        %6709 = vmatpush.bf16.xpose.msra.mxu0 %v3686
        %6710 = vmatmul.bf16.gmra.mxu0 %v1040
        %v6711 = vpop.f32.mrf.mxu0
        %v6712 = vadd.f32 %v6699, %v6711
        %v6713 = vpop.f32.mrf.mxu0
        %6714 = vdwg.mxu0
        %6715 = vmatpush.bf16.xpose.msra.mxu0 0
        %6716 = vmatpush.bf16.xpose.msra.mxu0 0
        %6717 = vmatpush.bf16.xpose.msra.mxu0 0
        %6718 = vmatpush.bf16.xpose.msra.mxu0 0
        %6719 = vmatpush.bf16.xpose.msra.mxu0 0
        %6720 = vmatpush.bf16.xpose.msra.mxu0 0
        %6721 = vmatpush.bf16.xpose.msra.mxu0 0
        %6722 = vmatpush.bf16.xpose.msra.mxu0 %v3687
        %6723 = vmatmul.bf16.gmra.mxu0 %v1041
        %v6724 = vpop.f32.mrf.mxu0
        %v6725 = vadd.f32 %v6712, %v6724
        %v6726 = vpop.f32.mrf.mxu0
        %6727 = vdwg.mxu0
        %6728 = vmatpush.bf16.xpose.msra.mxu0 0
        %6729 = vmatpush.bf16.xpose.msra.mxu0 0
        %6730 = vmatpush.bf16.xpose.msra.mxu0 0
        %6731 = vmatpush.bf16.xpose.msra.mxu0 0
        %6732 = vmatpush.bf16.xpose.msra.mxu0 0
        %6733 = vmatpush.bf16.xpose.msra.mxu0 0
        %6734 = vmatpush.bf16.xpose.msra.mxu0 0
        %6735 = vmatpush.bf16.xpose.msra.mxu0 %v3688
        %6736 = vmatmul.bf16.gmra.mxu0 %v1044
        %v6737 = vpop.f32.mrf.mxu0
        %v6738 = vadd.f32 %v6725, %v6737
        %v6739 = vpop.f32.mrf.mxu0
        %6740 = vdwg.mxu0
        %6741 = vmatpush.bf16.xpose.msra.mxu0 0
        %6742 = vmatpush.bf16.xpose.msra.mxu0 0
        %6743 = vmatpush.bf16.xpose.msra.mxu0 0
        %6744 = vmatpush.bf16.xpose.msra.mxu0 0
        %6745 = vmatpush.bf16.xpose.msra.mxu0 0
        %6746 = vmatpush.bf16.xpose.msra.mxu0 0
        %6747 = vmatpush.bf16.xpose.msra.mxu0 0
        %6748 = vmatpush.bf16.xpose.msra.mxu0 %v3689
        %6749 = vmatmul.bf16.gmra.mxu0 %v1045
        %v6750 = vpop.f32.mrf.mxu0
        %v6751 = vadd.f32 %v6738, %v6750
        %v6752 = vpop.f32.mrf.mxu0
        %6753 = vdwg.mxu0
        %6754 = vmatpush.bf16.xpose.msra.mxu0 0
        %6755 = vmatpush.bf16.xpose.msra.mxu0 0
        %6756 = vmatpush.bf16.xpose.msra.mxu0 0
        %6757 = vmatpush.bf16.xpose.msra.mxu0 0
        %6758 = vmatpush.bf16.xpose.msra.mxu0 0
        %6759 = vmatpush.bf16.xpose.msra.mxu0 0
        %6760 = vmatpush.bf16.xpose.msra.mxu0 0
        %6761 = vmatpush.bf16.xpose.msra.mxu0 %v3690
        %6762 = vmatmul.bf16.gmra.mxu0 %v1046
        %v6763 = vpop.f32.mrf.mxu0
        %v6764 = vadd.f32 %v6751, %v6763
        %v6765 = vpop.f32.mrf.mxu0
        %6766 = vdwg.mxu0
        %6767 = vmatpush.bf16.xpose.msra.mxu0 0
        %6768 = vmatpush.bf16.xpose.msra.mxu0 0
        %6769 = vmatpush.bf16.xpose.msra.mxu0 0
        %6770 = vmatpush.bf16.xpose.msra.mxu0 0
        %6771 = vmatpush.bf16.xpose.msra.mxu0 0
        %6772 = vmatpush.bf16.xpose.msra.mxu0 0
        %6773 = vmatpush.bf16.xpose.msra.mxu0 0
        %6774 = vmatpush.bf16.xpose.msra.mxu0 %v3691
        %6775 = vmatmul.bf16.gmra.mxu0 %v1047
        %v6776 = vpop.f32.mrf.mxu0
        %v6777 = vadd.f32 %v6764, %v6776
        %v6778 = vpop.f32.mrf.mxu0
        %6779 = vdwg.mxu0
        %6780 = vmatpush.bf16.xpose.msra.mxu0 0
        %6781 = vmatpush.bf16.xpose.msra.mxu0 0
        %6782 = vmatpush.bf16.xpose.msra.mxu0 0
        %6783 = vmatpush.bf16.xpose.msra.mxu0 0
        %6784 = vmatpush.bf16.xpose.msra.mxu0 0
        %6785 = vmatpush.bf16.xpose.msra.mxu0 0
        %6786 = vmatpush.bf16.xpose.msra.mxu0 0
        %6787 = vmatpush.bf16.xpose.msra.mxu0 %v3692
        %6788 = vmatmul.bf16.gmra.mxu0 %v1048
        %v6789 = vpop.f32.mrf.mxu0
        %v6790 = vadd.f32 %v6777, %v6789
        %v6791 = vpop.f32.mrf.mxu0
        %6792 = vdwg.mxu0
        %6793 = vmatpush.bf16.xpose.msra.mxu0 0
        %6794 = vmatpush.bf16.xpose.msra.mxu0 0
        %6795 = vmatpush.bf16.xpose.msra.mxu0 0
        %6796 = vmatpush.bf16.xpose.msra.mxu0 0
        %6797 = vmatpush.bf16.xpose.msra.mxu0 0
        %6798 = vmatpush.bf16.xpose.msra.mxu0 0
        %6799 = vmatpush.bf16.xpose.msra.mxu0 0
        %6800 = vmatpush.bf16.xpose.msra.mxu0 %v3693
        %6801 = vmatmul.bf16.gmra.mxu0 %v1049
        %v6802 = vpop.f32.mrf.mxu0
        %v6803 = vadd.f32 %v6790, %v6802
        %v6804 = vpop.f32.mrf.mxu0
        %6805 = vdwg.mxu0
        %6806 = vmatpush.bf16.xpose.msra.mxu0 0
        %6807 = vmatpush.bf16.xpose.msra.mxu0 0
        %6808 = vmatpush.bf16.xpose.msra.mxu0 0
        %6809 = vmatpush.bf16.xpose.msra.mxu0 0
        %6810 = vmatpush.bf16.xpose.msra.mxu0 0
        %6811 = vmatpush.bf16.xpose.msra.mxu0 0
        %6812 = vmatpush.bf16.xpose.msra.mxu0 0
        %6813 = vmatpush.bf16.xpose.msra.mxu0 %v3694
        %6814 = vmatmul.bf16.gmra.mxu0 %v1050
        %v6815 = vpop.f32.mrf.mxu0
        %v6816 = vadd.f32 %v6803, %v6815
        %v6817 = vpop.f32.mrf.mxu0
        %6818 = vdwg.mxu0
        %6819 = vmatpush.bf16.xpose.msra.mxu0 0
        %6820 = vmatpush.bf16.xpose.msra.mxu0 0
        %6821 = vmatpush.bf16.xpose.msra.mxu0 0
        %6822 = vmatpush.bf16.xpose.msra.mxu0 0
        %6823 = vmatpush.bf16.xpose.msra.mxu0 0
        %6824 = vmatpush.bf16.xpose.msra.mxu0 0
        %6825 = vmatpush.bf16.xpose.msra.mxu0 0
        %6826 = vmatpush.bf16.xpose.msra.mxu0 %v3695
        %6827 = vmatmul.bf16.gmra.mxu0 %v1051
        %v6828 = vpop.f32.mrf.mxu0
        %v6829 = vadd.f32 %v6816, %v6828
        %v6830 = vpop.f32.mrf.mxu0
        %6831 = vdwg.mxu0
        %6832 = vmatpush.bf16.xpose.msra.mxu0 0
        %6833 = vmatpush.bf16.xpose.msra.mxu0 0
        %6834 = vmatpush.bf16.xpose.msra.mxu0 0
        %6835 = vmatpush.bf16.xpose.msra.mxu0 0
        %6836 = vmatpush.bf16.xpose.msra.mxu0 0
        %6837 = vmatpush.bf16.xpose.msra.mxu0 0
        %6838 = vmatpush.bf16.xpose.msra.mxu0 0
        %6839 = vmatpush.bf16.xpose.msra.mxu0 %v3696
        %6840 = vmatmul.bf16.gmra.mxu0 %v1054
        %v6841 = vpop.f32.mrf.mxu0
        %v6842 = vadd.f32 %v6829, %v6841
        %v6843 = vpop.f32.mrf.mxu0
        %6844 = vdwg.mxu0
        %6845 = vmatpush.bf16.xpose.msra.mxu0 0
        %6846 = vmatpush.bf16.xpose.msra.mxu0 0
        %6847 = vmatpush.bf16.xpose.msra.mxu0 0
        %6848 = vmatpush.bf16.xpose.msra.mxu0 0
        %6849 = vmatpush.bf16.xpose.msra.mxu0 0
        %6850 = vmatpush.bf16.xpose.msra.mxu0 0
        %6851 = vmatpush.bf16.xpose.msra.mxu0 0
        %6852 = vmatpush.bf16.xpose.msra.mxu0 %v3697
        %6853 = vmatmul.bf16.gmra.mxu0 %v1055
        %v6854 = vpop.f32.mrf.mxu0
        %v6855 = vadd.f32 %v6842, %v6854
        %v6856 = vpop.f32.mrf.mxu0
        %6857 = vdwg.mxu0
        %6858 = vmatpush.bf16.xpose.msra.mxu0 0
        %6859 = vmatpush.bf16.xpose.msra.mxu0 0
        %6860 = vmatpush.bf16.xpose.msra.mxu0 0
        %6861 = vmatpush.bf16.xpose.msra.mxu0 0
        %6862 = vmatpush.bf16.xpose.msra.mxu0 0
        %6863 = vmatpush.bf16.xpose.msra.mxu0 0
        %6864 = vmatpush.bf16.xpose.msra.mxu0 0
        %6865 = vmatpush.bf16.xpose.msra.mxu0 %v3698
        %6866 = vmatmul.bf16.gmra.mxu0 %v1056
        %v6867 = vpop.f32.mrf.mxu0
        %v6868 = vadd.f32 %v6855, %v6867
        %v6869 = vpop.f32.mrf.mxu0
        %6870 = vdwg.mxu0
        %6871 = vmatpush.bf16.xpose.msra.mxu0 0
        %6872 = vmatpush.bf16.xpose.msra.mxu0 0
        %6873 = vmatpush.bf16.xpose.msra.mxu0 0
        %6874 = vmatpush.bf16.xpose.msra.mxu0 0
        %6875 = vmatpush.bf16.xpose.msra.mxu0 0
        %6876 = vmatpush.bf16.xpose.msra.mxu0 0
        %6877 = vmatpush.bf16.xpose.msra.mxu0 0
        %6878 = vmatpush.bf16.xpose.msra.mxu0 %v3699
        %6879 = vmatmul.bf16.gmra.mxu0 %v1057
        %v6880 = vpop.f32.mrf.mxu0
        %v6881 = vadd.f32 %v6868, %v6880
        %v6882 = vpop.f32.mrf.mxu0
        %6883 = vdwg.mxu0
        %6884 = vmatpush.bf16.xpose.msra.mxu0 0
        %6885 = vmatpush.bf16.xpose.msra.mxu0 0
        %6886 = vmatpush.bf16.xpose.msra.mxu0 0
        %6887 = vmatpush.bf16.xpose.msra.mxu0 0
        %6888 = vmatpush.bf16.xpose.msra.mxu0 0
        %6889 = vmatpush.bf16.xpose.msra.mxu0 0
        %6890 = vmatpush.bf16.xpose.msra.mxu0 0
        %6891 = vmatpush.bf16.xpose.msra.mxu0 %v3700
        %6892 = vmatmul.bf16.gmra.mxu0 %v1058
        %v6893 = vpop.f32.mrf.mxu0
        %v6894 = vadd.f32 %v6881, %v6893
        %v6895 = vpop.f32.mrf.mxu0
        %6896 = vdwg.mxu0
        %6897 = vmatpush.bf16.xpose.msra.mxu0 0
        %6898 = vmatpush.bf16.xpose.msra.mxu0 0
        %6899 = vmatpush.bf16.xpose.msra.mxu0 0
        %6900 = vmatpush.bf16.xpose.msra.mxu0 0
        %6901 = vmatpush.bf16.xpose.msra.mxu0 0
        %6902 = vmatpush.bf16.xpose.msra.mxu0 0
        %6903 = vmatpush.bf16.xpose.msra.mxu0 0
        %6904 = vmatpush.bf16.xpose.msra.mxu0 %v3701
        %6905 = vmatmul.bf16.gmra.mxu0 %v1059
        %v6906 = vpop.f32.mrf.mxu0
        %v6907 = vadd.f32 %v6894, %v6906
        %v6908 = vpop.f32.mrf.mxu0
        %6909 = vdwg.mxu0
        %6910 = vmatpush.bf16.xpose.msra.mxu0 0
        %6911 = vmatpush.bf16.xpose.msra.mxu0 0
        %6912 = vmatpush.bf16.xpose.msra.mxu0 0
        %6913 = vmatpush.bf16.xpose.msra.mxu0 0
        %6914 = vmatpush.bf16.xpose.msra.mxu0 0
        %6915 = vmatpush.bf16.xpose.msra.mxu0 0
        %6916 = vmatpush.bf16.xpose.msra.mxu0 0
        %6917 = vmatpush.bf16.xpose.msra.mxu0 %v3702
        %6918 = vmatmul.bf16.gmra.mxu0 %v1060
        %v6919 = vpop.f32.mrf.mxu0
        %v6920 = vadd.f32 %v6907, %v6919
        %v6921 = vpop.f32.mrf.mxu0
        %6922 = vdwg.mxu0
        %6923 = vmatpush.bf16.xpose.msra.mxu0 0
        %6924 = vmatpush.bf16.xpose.msra.mxu0 0
        %6925 = vmatpush.bf16.xpose.msra.mxu0 0
        %6926 = vmatpush.bf16.xpose.msra.mxu0 0
        %6927 = vmatpush.bf16.xpose.msra.mxu0 0
        %6928 = vmatpush.bf16.xpose.msra.mxu0 0
        %6929 = vmatpush.bf16.xpose.msra.mxu0 0
        %6930 = vmatpush.bf16.xpose.msra.mxu0 %v3703
        %6931 = vmatmul.bf16.gmra.mxu0 %v1061
        %v6932 = vpop.f32.mrf.mxu0
        %v6933 = vadd.f32 %v6920, %v6932
        %v6934 = vpop.f32.mrf.mxu0
        %6935 = vdwg.mxu0
        %6936 = vmatpush.bf16.xpose.msra.mxu0 0
        %6937 = vmatpush.bf16.xpose.msra.mxu0 0
        %6938 = vmatpush.bf16.xpose.msra.mxu0 0
        %6939 = vmatpush.bf16.xpose.msra.mxu0 0
        %6940 = vmatpush.bf16.xpose.msra.mxu0 0
        %6941 = vmatpush.bf16.xpose.msra.mxu0 0
        %6942 = vmatpush.bf16.xpose.msra.mxu0 0
        %6943 = vmatpush.bf16.xpose.msra.mxu0 %v3704
        %6944 = vmatmul.bf16.gmra.mxu0 %v1064
        %v6945 = vpop.f32.mrf.mxu0
        %v6946 = vadd.f32 %v6933, %v6945
        %v6947 = vpop.f32.mrf.mxu0
        %6948 = vdwg.mxu0
        %6949 = vmatpush.bf16.xpose.msra.mxu0 0
        %6950 = vmatpush.bf16.xpose.msra.mxu0 0
        %6951 = vmatpush.bf16.xpose.msra.mxu0 0
        %6952 = vmatpush.bf16.xpose.msra.mxu0 0
        %6953 = vmatpush.bf16.xpose.msra.mxu0 0
        %6954 = vmatpush.bf16.xpose.msra.mxu0 0
        %6955 = vmatpush.bf16.xpose.msra.mxu0 0
        %6956 = vmatpush.bf16.xpose.msra.mxu0 %v3705
        %6957 = vmatmul.bf16.gmra.mxu0 %v1065
        %v6958 = vpop.f32.mrf.mxu0
        %v6959 = vadd.f32 %v6946, %v6958
        %v6960 = vpop.f32.mrf.mxu0
        %6961 = vdwg.mxu0
        %6962 = vmatpush.bf16.xpose.msra.mxu0 0
        %6963 = vmatpush.bf16.xpose.msra.mxu0 0
        %6964 = vmatpush.bf16.xpose.msra.mxu0 0
        %6965 = vmatpush.bf16.xpose.msra.mxu0 0
        %6966 = vmatpush.bf16.xpose.msra.mxu0 0
        %6967 = vmatpush.bf16.xpose.msra.mxu0 0
        %6968 = vmatpush.bf16.xpose.msra.mxu0 0
        %6969 = vmatpush.bf16.xpose.msra.mxu0 %v3706
        %6970 = vmatmul.bf16.gmra.mxu0 %v1066
        %v6971 = vpop.f32.mrf.mxu0
        %v6972 = vadd.f32 %v6959, %v6971
        %v6973 = vpop.f32.mrf.mxu0
        %6974 = vdwg.mxu0
        %6975 = vmatpush.bf16.xpose.msra.mxu0 0
        %6976 = vmatpush.bf16.xpose.msra.mxu0 0
        %6977 = vmatpush.bf16.xpose.msra.mxu0 0
        %6978 = vmatpush.bf16.xpose.msra.mxu0 0
        %6979 = vmatpush.bf16.xpose.msra.mxu0 0
        %6980 = vmatpush.bf16.xpose.msra.mxu0 0
        %6981 = vmatpush.bf16.xpose.msra.mxu0 0
        %6982 = vmatpush.bf16.xpose.msra.mxu0 %v3707
        %6983 = vmatmul.bf16.gmra.mxu0 %v1067
        %v6984 = vpop.f32.mrf.mxu0
        %v6985 = vadd.f32 %v6972, %v6984
        %v6986 = vpop.f32.mrf.mxu0
        %6987 = vdwg.mxu0
        %6988 = vmatpush.bf16.xpose.msra.mxu0 0
        %6989 = vmatpush.bf16.xpose.msra.mxu0 0
        %6990 = vmatpush.bf16.xpose.msra.mxu0 0
        %6991 = vmatpush.bf16.xpose.msra.mxu0 0
        %6992 = vmatpush.bf16.xpose.msra.mxu0 0
        %6993 = vmatpush.bf16.xpose.msra.mxu0 0
        %6994 = vmatpush.bf16.xpose.msra.mxu0 0
        %6995 = vmatpush.bf16.xpose.msra.mxu0 %v3708
        %6996 = vmatmul.bf16.gmra.mxu0 %v1068
        %v6997 = vpop.f32.mrf.mxu0
        %v6998 = vadd.f32 %v6985, %v6997
        %v6999 = vpop.f32.mrf.mxu0
        %7000 = vdwg.mxu0
        %7001 = vmatpush.bf16.xpose.msra.mxu0 0
        %7002 = vmatpush.bf16.xpose.msra.mxu0 0
        %7003 = vmatpush.bf16.xpose.msra.mxu0 0
        %7004 = vmatpush.bf16.xpose.msra.mxu0 0
        %7005 = vmatpush.bf16.xpose.msra.mxu0 0
        %7006 = vmatpush.bf16.xpose.msra.mxu0 0
        %7007 = vmatpush.bf16.xpose.msra.mxu0 0
        %7008 = vmatpush.bf16.xpose.msra.mxu0 %v3709
        %7009 = vmatmul.bf16.gmra.mxu0 %v1069
        %v7010 = vpop.f32.mrf.mxu0
        %v7011 = vadd.f32 %v6998, %v7010
        %v7012 = vpop.f32.mrf.mxu0
        %7013 = vdwg.mxu0
        %7014 = vmatpush.bf16.xpose.msra.mxu0 0
        %7015 = vmatpush.bf16.xpose.msra.mxu0 0
        %7016 = vmatpush.bf16.xpose.msra.mxu0 0
        %7017 = vmatpush.bf16.xpose.msra.mxu0 0
        %7018 = vmatpush.bf16.xpose.msra.mxu0 0
        %7019 = vmatpush.bf16.xpose.msra.mxu0 0
        %7020 = vmatpush.bf16.xpose.msra.mxu0 0
        %7021 = vmatpush.bf16.xpose.msra.mxu0 %v3710
        %7022 = vmatmul.bf16.gmra.mxu0 %v1070
        %v7023 = vpop.f32.mrf.mxu0
        %v7024 = vadd.f32 %v7011, %v7023
        %v7025 = vpop.f32.mrf.mxu0
        %7026 = vdwg.mxu0
        %7027 = vmatpush.bf16.xpose.msra.mxu0 0
        %7028 = vmatpush.bf16.xpose.msra.mxu0 0
        %7029 = vmatpush.bf16.xpose.msra.mxu0 0
        %7030 = vmatpush.bf16.xpose.msra.mxu0 0
        %7031 = vmatpush.bf16.xpose.msra.mxu0 0
        %7032 = vmatpush.bf16.xpose.msra.mxu0 0
        %7033 = vmatpush.bf16.xpose.msra.mxu0 0
        %7034 = vmatpush.bf16.xpose.msra.mxu0 %v3711
        %7035 = vmatmul.bf16.gmra.mxu0 %v1071
        %v7036 = vpop.f32.mrf.mxu0
        %v7037 = vadd.f32 %v7024, %v7036
        %v7038 = vpop.f32.mrf.mxu0
        %7039 = vdwg.mxu0
        %7040 = vmatpush.bf16.xpose.msra.mxu0 0
        %7041 = vmatpush.bf16.xpose.msra.mxu0 0
        %7042 = vmatpush.bf16.xpose.msra.mxu0 0
        %7043 = vmatpush.bf16.xpose.msra.mxu0 0
        %7044 = vmatpush.bf16.xpose.msra.mxu0 0
        %7045 = vmatpush.bf16.xpose.msra.mxu0 0
        %7046 = vmatpush.bf16.xpose.msra.mxu0 0
        %7047 = vmatpush.bf16.xpose.msra.mxu0 %v3712
        %7048 = vmatmul.bf16.gmra.mxu0 %v1074
        %v7049 = vpop.f32.mrf.mxu0
        %v7050 = vadd.f32 %v7037, %v7049
        %v7051 = vpop.f32.mrf.mxu0
        %7052 = vdwg.mxu0
        %7053 = vmatpush.bf16.xpose.msra.mxu0 0
        %7054 = vmatpush.bf16.xpose.msra.mxu0 0
        %7055 = vmatpush.bf16.xpose.msra.mxu0 0
        %7056 = vmatpush.bf16.xpose.msra.mxu0 0
        %7057 = vmatpush.bf16.xpose.msra.mxu0 0
        %7058 = vmatpush.bf16.xpose.msra.mxu0 0
        %7059 = vmatpush.bf16.xpose.msra.mxu0 0
        %7060 = vmatpush.bf16.xpose.msra.mxu0 %v3713
        %7061 = vmatmul.bf16.gmra.mxu0 %v1075
        %v7062 = vpop.f32.mrf.mxu0
        %v7063 = vadd.f32 %v7050, %v7062
        %v7064 = vpop.f32.mrf.mxu0
        %7065 = vdwg.mxu0
        %7066 = vmatpush.bf16.xpose.msra.mxu0 0
        %7067 = vmatpush.bf16.xpose.msra.mxu0 0
        %7068 = vmatpush.bf16.xpose.msra.mxu0 0
        %7069 = vmatpush.bf16.xpose.msra.mxu0 0
        %7070 = vmatpush.bf16.xpose.msra.mxu0 0
        %7071 = vmatpush.bf16.xpose.msra.mxu0 0
        %7072 = vmatpush.bf16.xpose.msra.mxu0 0
        %7073 = vmatpush.bf16.xpose.msra.mxu0 %v3714
        %7074 = vmatmul.bf16.gmra.mxu0 %v1076
        %v7075 = vpop.f32.mrf.mxu0
        %v7076 = vadd.f32 %v7063, %v7075
        %v7077 = vpop.f32.mrf.mxu0
        %7078 = vdwg.mxu0
        %7079 = vmatpush.bf16.xpose.msra.mxu0 0
        %7080 = vmatpush.bf16.xpose.msra.mxu0 0
        %7081 = vmatpush.bf16.xpose.msra.mxu0 0
        %7082 = vmatpush.bf16.xpose.msra.mxu0 0
        %7083 = vmatpush.bf16.xpose.msra.mxu0 0
        %7084 = vmatpush.bf16.xpose.msra.mxu0 0
        %7085 = vmatpush.bf16.xpose.msra.mxu0 0
        %7086 = vmatpush.bf16.xpose.msra.mxu0 %v3715
        %7087 = vmatmul.bf16.gmra.mxu0 %v1077
        %v7088 = vpop.f32.mrf.mxu0
        %v7089 = vadd.f32 %v7076, %v7088
        %v7090 = vpop.f32.mrf.mxu0
        %7091 = vdwg.mxu0
        %7092 = vmatpush.bf16.xpose.msra.mxu0 0
        %7093 = vmatpush.bf16.xpose.msra.mxu0 0
        %7094 = vmatpush.bf16.xpose.msra.mxu0 0
        %7095 = vmatpush.bf16.xpose.msra.mxu0 0
        %7096 = vmatpush.bf16.xpose.msra.mxu0 0
        %7097 = vmatpush.bf16.xpose.msra.mxu0 0
        %7098 = vmatpush.bf16.xpose.msra.mxu0 0
        %7099 = vmatpush.bf16.xpose.msra.mxu0 %v3716
        %7100 = vmatmul.bf16.gmra.mxu0 %v1078
        %v7101 = vpop.f32.mrf.mxu0
        %v7102 = vadd.f32 %v7089, %v7101
        %v7103 = vpop.f32.mrf.mxu0
        %7104 = vdwg.mxu0
        %7105 = vmatpush.bf16.xpose.msra.mxu0 0
        %7106 = vmatpush.bf16.xpose.msra.mxu0 0
        %7107 = vmatpush.bf16.xpose.msra.mxu0 0
        %7108 = vmatpush.bf16.xpose.msra.mxu0 0
        %7109 = vmatpush.bf16.xpose.msra.mxu0 0
        %7110 = vmatpush.bf16.xpose.msra.mxu0 0
        %7111 = vmatpush.bf16.xpose.msra.mxu0 0
        %7112 = vmatpush.bf16.xpose.msra.mxu0 %v3717
        %7113 = vmatmul.bf16.gmra.mxu0 %v1079
        %v7114 = vpop.f32.mrf.mxu0
        %v7115 = vadd.f32 %v7102, %v7114
        %v7116 = vpop.f32.mrf.mxu0
        %7117 = vdwg.mxu0
        %7118 = vmatpush.bf16.xpose.msra.mxu0 0
        %7119 = vmatpush.bf16.xpose.msra.mxu0 0
        %7120 = vmatpush.bf16.xpose.msra.mxu0 0
        %7121 = vmatpush.bf16.xpose.msra.mxu0 0
        %7122 = vmatpush.bf16.xpose.msra.mxu0 0
        %7123 = vmatpush.bf16.xpose.msra.mxu0 0
        %7124 = vmatpush.bf16.xpose.msra.mxu0 0
        %7125 = vmatpush.bf16.xpose.msra.mxu0 %v3718
        %7126 = vmatmul.bf16.gmra.mxu0 %v1080
        %v7127 = vpop.f32.mrf.mxu0
        %v7128 = vadd.f32 %v7115, %v7127
        %v7129 = vpop.f32.mrf.mxu0
        %7130 = vdwg.mxu0
        %7131 = vmatpush.bf16.xpose.msra.mxu0 0
        %7132 = vmatpush.bf16.xpose.msra.mxu0 0
        %7133 = vmatpush.bf16.xpose.msra.mxu0 0
        %7134 = vmatpush.bf16.xpose.msra.mxu0 0
        %7135 = vmatpush.bf16.xpose.msra.mxu0 0
        %7136 = vmatpush.bf16.xpose.msra.mxu0 0
        %7137 = vmatpush.bf16.xpose.msra.mxu0 0
        %7138 = vmatpush.bf16.xpose.msra.mxu0 %v3719
        %7139 = vmatmul.bf16.gmra.mxu0 %v1081
        %v7140 = vpop.f32.mrf.mxu0
        %v7141 = vadd.f32 %v7128, %v7140
        %v7142 = vpop.f32.mrf.mxu0
        %7143 = vdwg.mxu0
        %7144 = vmatpush.bf16.xpose.msra.mxu0 0
        %7145 = vmatpush.bf16.xpose.msra.mxu0 0
        %7146 = vmatpush.bf16.xpose.msra.mxu0 0
        %7147 = vmatpush.bf16.xpose.msra.mxu0 0
        %7148 = vmatpush.bf16.xpose.msra.mxu0 0
        %7149 = vmatpush.bf16.xpose.msra.mxu0 0
        %7150 = vmatpush.bf16.xpose.msra.mxu0 0
        %7151 = vmatpush.bf16.xpose.msra.mxu0 %v3720
        %7152 = vmatmul.bf16.gmra.mxu0 %v1084
        %v7153 = vpop.f32.mrf.mxu0
        %v7154 = vadd.f32 %v7141, %v7153
        %v7155 = vpop.f32.mrf.mxu0
        %7156 = vdwg.mxu0
        %7157 = vmatpush.bf16.xpose.msra.mxu0 0
        %7158 = vmatpush.bf16.xpose.msra.mxu0 0
        %7159 = vmatpush.bf16.xpose.msra.mxu0 0
        %7160 = vmatpush.bf16.xpose.msra.mxu0 0
        %7161 = vmatpush.bf16.xpose.msra.mxu0 0
        %7162 = vmatpush.bf16.xpose.msra.mxu0 0
        %7163 = vmatpush.bf16.xpose.msra.mxu0 0
        %7164 = vmatpush.bf16.xpose.msra.mxu0 %v3721
        %7165 = vmatmul.bf16.gmra.mxu0 %v1085
        %v7166 = vpop.f32.mrf.mxu0
        %v7167 = vadd.f32 %v7154, %v7166
        %v7168 = vpop.f32.mrf.mxu0
        %7169 = vdwg.mxu0
        %7170 = vmatpush.bf16.xpose.msra.mxu0 0
        %7171 = vmatpush.bf16.xpose.msra.mxu0 0
        %7172 = vmatpush.bf16.xpose.msra.mxu0 0
        %7173 = vmatpush.bf16.xpose.msra.mxu0 0
        %7174 = vmatpush.bf16.xpose.msra.mxu0 0
        %7175 = vmatpush.bf16.xpose.msra.mxu0 0
        %7176 = vmatpush.bf16.xpose.msra.mxu0 0
        %7177 = vmatpush.bf16.xpose.msra.mxu0 %v3722
        %7178 = vmatmul.bf16.gmra.mxu0 %v1086
        %v7179 = vpop.f32.mrf.mxu0
        %v7180 = vadd.f32 %v7167, %v7179
        %v7181 = vpop.f32.mrf.mxu0
        %7182 = vdwg.mxu0
        %7183 = vmatpush.bf16.xpose.msra.mxu0 0
        %7184 = vmatpush.bf16.xpose.msra.mxu0 0
        %7185 = vmatpush.bf16.xpose.msra.mxu0 0
        %7186 = vmatpush.bf16.xpose.msra.mxu0 0
        %7187 = vmatpush.bf16.xpose.msra.mxu0 0
        %7188 = vmatpush.bf16.xpose.msra.mxu0 0
        %7189 = vmatpush.bf16.xpose.msra.mxu0 0
        %7190 = vmatpush.bf16.xpose.msra.mxu0 %v3723
        %7191 = vmatmul.bf16.gmra.mxu0 %v1087
        %v7192 = vpop.f32.mrf.mxu0
        %v7193 = vadd.f32 %v7180, %v7192
        %v7194 = vpop.f32.mrf.mxu0
        %7195 = vdwg.mxu0
        %7196 = vmatpush.bf16.xpose.msra.mxu0 0
        %7197 = vmatpush.bf16.xpose.msra.mxu0 0
        %7198 = vmatpush.bf16.xpose.msra.mxu0 0
        %7199 = vmatpush.bf16.xpose.msra.mxu0 0
        %7200 = vmatpush.bf16.xpose.msra.mxu0 0
        %7201 = vmatpush.bf16.xpose.msra.mxu0 0
        %7202 = vmatpush.bf16.xpose.msra.mxu0 0
        %7203 = vmatpush.bf16.xpose.msra.mxu0 %v3724
        %7204 = vmatmul.bf16.gmra.mxu0 %v1088
        %v7205 = vpop.f32.mrf.mxu0
        %v7206 = vadd.f32 %v7193, %v7205
        %v7207 = vpop.f32.mrf.mxu0
        %7208 = vdwg.mxu0
        %7209 = vmatpush.bf16.xpose.msra.mxu0 0
        %7210 = vmatpush.bf16.xpose.msra.mxu0 0
        %7211 = vmatpush.bf16.xpose.msra.mxu0 0
        %7212 = vmatpush.bf16.xpose.msra.mxu0 0
        %7213 = vmatpush.bf16.xpose.msra.mxu0 0
        %7214 = vmatpush.bf16.xpose.msra.mxu0 0
        %7215 = vmatpush.bf16.xpose.msra.mxu0 0
        %7216 = vmatpush.bf16.xpose.msra.mxu0 %v3725
        %7217 = vmatmul.bf16.gmra.mxu0 %v1089
        %v7218 = vpop.f32.mrf.mxu0
        %v7219 = vadd.f32 %v7206, %v7218
        %v7220 = vpop.f32.mrf.mxu0
        %7221 = vdwg.mxu0
        %7222 = vmatpush.bf16.xpose.msra.mxu0 0
        %7223 = vmatpush.bf16.xpose.msra.mxu0 0
        %7224 = vmatpush.bf16.xpose.msra.mxu0 0
        %7225 = vmatpush.bf16.xpose.msra.mxu0 0
        %7226 = vmatpush.bf16.xpose.msra.mxu0 0
        %7227 = vmatpush.bf16.xpose.msra.mxu0 0
        %7228 = vmatpush.bf16.xpose.msra.mxu0 0
        %7229 = vmatpush.bf16.xpose.msra.mxu0 %v3726
        %7230 = vmatmul.bf16.gmra.mxu0 %v1090
        %v7231 = vpop.f32.mrf.mxu0
        %v7232 = vadd.f32 %v7219, %v7231
        %v7233 = vpop.f32.mrf.mxu0
        %7234 = vdwg.mxu0
        %7235 = vmatpush.bf16.xpose.msra.mxu0 0
        %7236 = vmatpush.bf16.xpose.msra.mxu0 0
        %7237 = vmatpush.bf16.xpose.msra.mxu0 0
        %7238 = vmatpush.bf16.xpose.msra.mxu0 0
        %7239 = vmatpush.bf16.xpose.msra.mxu0 0
        %7240 = vmatpush.bf16.xpose.msra.mxu0 0
        %7241 = vmatpush.bf16.xpose.msra.mxu0 0
        %7242 = vmatpush.bf16.xpose.msra.mxu0 %v3727
        %7243 = vmatmul.bf16.gmra.mxu0 %v1091
        %v7244 = vpop.f32.mrf.mxu0
        %v7245 = vadd.f32 %v7232, %v7244
        %v7246 = vpop.f32.mrf.mxu0
        %7247 = vdwg.mxu0
        %7248 = vmatpush.bf16.xpose.msra.mxu0 0
        %7249 = vmatpush.bf16.xpose.msra.mxu0 0
        %7250 = vmatpush.bf16.xpose.msra.mxu0 0
        %7251 = vmatpush.bf16.xpose.msra.mxu0 0
        %7252 = vmatpush.bf16.xpose.msra.mxu0 0
        %7253 = vmatpush.bf16.xpose.msra.mxu0 0
        %7254 = vmatpush.bf16.xpose.msra.mxu0 0
        %7255 = vmatpush.bf16.xpose.msra.mxu0 %v3728
        %7256 = vmatmul.bf16.gmra.mxu0 %v1094
        %v7257 = vpop.f32.mrf.mxu0
        %v7258 = vadd.f32 %v7245, %v7257
        %v7259 = vpop.f32.mrf.mxu0
        %7260 = vdwg.mxu0
        %7261 = vmatpush.bf16.xpose.msra.mxu0 0
        %7262 = vmatpush.bf16.xpose.msra.mxu0 0
        %7263 = vmatpush.bf16.xpose.msra.mxu0 0
        %7264 = vmatpush.bf16.xpose.msra.mxu0 0
        %7265 = vmatpush.bf16.xpose.msra.mxu0 0
        %7266 = vmatpush.bf16.xpose.msra.mxu0 0
        %7267 = vmatpush.bf16.xpose.msra.mxu0 0
        %7268 = vmatpush.bf16.xpose.msra.mxu0 %v3729
        %7269 = vmatmul.bf16.gmra.mxu0 %v1095
        %v7270 = vpop.f32.mrf.mxu0
        %v7271 = vadd.f32 %v7258, %v7270
        %v7272 = vpop.f32.mrf.mxu0
        %7273 = vdwg.mxu0
        %7274 = vmatpush.bf16.xpose.msra.mxu0 0
        %7275 = vmatpush.bf16.xpose.msra.mxu0 0
        %7276 = vmatpush.bf16.xpose.msra.mxu0 0
        %7277 = vmatpush.bf16.xpose.msra.mxu0 0
        %7278 = vmatpush.bf16.xpose.msra.mxu0 0
        %7279 = vmatpush.bf16.xpose.msra.mxu0 0
        %7280 = vmatpush.bf16.xpose.msra.mxu0 0
        %7281 = vmatpush.bf16.xpose.msra.mxu0 %v3730
        %7282 = vmatmul.bf16.gmra.mxu0 %v1096
        %v7283 = vpop.f32.mrf.mxu0
        %v7284 = vadd.f32 %v7271, %v7283
        %v7285 = vpop.f32.mrf.mxu0
        %7286 = vdwg.mxu0
        %7287 = vmatpush.bf16.xpose.msra.mxu0 0
        %7288 = vmatpush.bf16.xpose.msra.mxu0 0
        %7289 = vmatpush.bf16.xpose.msra.mxu0 0
        %7290 = vmatpush.bf16.xpose.msra.mxu0 0
        %7291 = vmatpush.bf16.xpose.msra.mxu0 0
        %7292 = vmatpush.bf16.xpose.msra.mxu0 0
        %7293 = vmatpush.bf16.xpose.msra.mxu0 0
        %7294 = vmatpush.bf16.xpose.msra.mxu0 %v3731
        %7295 = vmatmul.bf16.gmra.mxu0 %v1097
        %v7296 = vpop.f32.mrf.mxu0
        %v7297 = vadd.f32 %v7284, %v7296
        %v7298 = vpop.f32.mrf.mxu0
        %7299 = vdwg.mxu0
        %7300 = vmatpush.bf16.xpose.msra.mxu0 0
        %7301 = vmatpush.bf16.xpose.msra.mxu0 0
        %7302 = vmatpush.bf16.xpose.msra.mxu0 0
        %7303 = vmatpush.bf16.xpose.msra.mxu0 0
        %7304 = vmatpush.bf16.xpose.msra.mxu0 0
        %7305 = vmatpush.bf16.xpose.msra.mxu0 0
        %7306 = vmatpush.bf16.xpose.msra.mxu0 0
        %7307 = vmatpush.bf16.xpose.msra.mxu0 %v3732
        %7308 = vmatmul.bf16.gmra.mxu0 %v1098
        %v7309 = vpop.f32.mrf.mxu0
        %v7310 = vadd.f32 %v7297, %v7309
        %v7311 = vpop.f32.mrf.mxu0
        %7312 = vdwg.mxu0
        %7313 = vmatpush.bf16.xpose.msra.mxu0 0
        %7314 = vmatpush.bf16.xpose.msra.mxu0 0
        %7315 = vmatpush.bf16.xpose.msra.mxu0 0
        %7316 = vmatpush.bf16.xpose.msra.mxu0 0
        %7317 = vmatpush.bf16.xpose.msra.mxu0 0
        %7318 = vmatpush.bf16.xpose.msra.mxu0 0
        %7319 = vmatpush.bf16.xpose.msra.mxu0 0
        %7320 = vmatpush.bf16.xpose.msra.mxu0 %v3733
        %7321 = vmatmul.bf16.gmra.mxu0 %v1099
        %v7322 = vpop.f32.mrf.mxu0
        %v7323 = vadd.f32 %v7310, %v7322
        %v7324 = vpop.f32.mrf.mxu0
        %7325 = vdwg.mxu0
        %7326 = vmatpush.bf16.xpose.msra.mxu0 0
        %7327 = vmatpush.bf16.xpose.msra.mxu0 0
        %7328 = vmatpush.bf16.xpose.msra.mxu0 0
        %7329 = vmatpush.bf16.xpose.msra.mxu0 0
        %7330 = vmatpush.bf16.xpose.msra.mxu0 0
        %7331 = vmatpush.bf16.xpose.msra.mxu0 0
        %7332 = vmatpush.bf16.xpose.msra.mxu0 0
        %7333 = vmatpush.bf16.xpose.msra.mxu0 %v3734
        %7334 = vmatmul.bf16.gmra.mxu0 %v1100
        %v7335 = vpop.f32.mrf.mxu0
        %v7336 = vadd.f32 %v7323, %v7335
        %v7337 = vpop.f32.mrf.mxu0
        %7338 = vdwg.mxu0
        %7339 = vmatpush.bf16.xpose.msra.mxu0 0
        %7340 = vmatpush.bf16.xpose.msra.mxu0 0
        %7341 = vmatpush.bf16.xpose.msra.mxu0 0
        %7342 = vmatpush.bf16.xpose.msra.mxu0 0
        %7343 = vmatpush.bf16.xpose.msra.mxu0 0
        %7344 = vmatpush.bf16.xpose.msra.mxu0 0
        %7345 = vmatpush.bf16.xpose.msra.mxu0 0
        %7346 = vmatpush.bf16.xpose.msra.mxu0 %v3735
        %7347 = vmatmul.bf16.gmra.mxu0 %v1101
        %v7348 = vpop.f32.mrf.mxu0
        %v7349 = vadd.f32 %v7336, %v7348
        %v7350 = vpop.f32.mrf.mxu0
        %7351 = vdwg.mxu0
        %7352 = vmatpush.bf16.xpose.msra.mxu0 0
        %7353 = vmatpush.bf16.xpose.msra.mxu0 0
        %7354 = vmatpush.bf16.xpose.msra.mxu0 0
        %7355 = vmatpush.bf16.xpose.msra.mxu0 0
        %7356 = vmatpush.bf16.xpose.msra.mxu0 0
        %7357 = vmatpush.bf16.xpose.msra.mxu0 0
        %7358 = vmatpush.bf16.xpose.msra.mxu0 0
        %7359 = vmatpush.bf16.xpose.msra.mxu0 %v3736
        %7360 = vmatmul.bf16.gmra.mxu0 %v1104
        %v7361 = vpop.f32.mrf.mxu0
        %v7362 = vadd.f32 %v7349, %v7361
        %v7363 = vpop.f32.mrf.mxu0
        %7364 = vdwg.mxu0
        %7365 = vmatpush.bf16.xpose.msra.mxu0 0
        %7366 = vmatpush.bf16.xpose.msra.mxu0 0
        %7367 = vmatpush.bf16.xpose.msra.mxu0 0
        %7368 = vmatpush.bf16.xpose.msra.mxu0 0
        %7369 = vmatpush.bf16.xpose.msra.mxu0 0
        %7370 = vmatpush.bf16.xpose.msra.mxu0 0
        %7371 = vmatpush.bf16.xpose.msra.mxu0 0
        %7372 = vmatpush.bf16.xpose.msra.mxu0 %v3737
        %7373 = vmatmul.bf16.gmra.mxu0 %v1105
        %v7374 = vpop.f32.mrf.mxu0
        %v7375 = vadd.f32 %v7362, %v7374
        %v7376 = vpop.f32.mrf.mxu0
        %7377 = vdwg.mxu0
        %7378 = vmatpush.bf16.xpose.msra.mxu0 0
        %7379 = vmatpush.bf16.xpose.msra.mxu0 0
        %7380 = vmatpush.bf16.xpose.msra.mxu0 0
        %7381 = vmatpush.bf16.xpose.msra.mxu0 0
        %7382 = vmatpush.bf16.xpose.msra.mxu0 0
        %7383 = vmatpush.bf16.xpose.msra.mxu0 0
        %7384 = vmatpush.bf16.xpose.msra.mxu0 0
        %7385 = vmatpush.bf16.xpose.msra.mxu0 %v3738
        %7386 = vmatmul.bf16.gmra.mxu0 %v1106
        %v7387 = vpop.f32.mrf.mxu0
        %v7388 = vadd.f32 %v7375, %v7387
        %v7389 = vpop.f32.mrf.mxu0
        %7390 = vdwg.mxu0
        %7391 = vmatpush.bf16.xpose.msra.mxu0 0
        %7392 = vmatpush.bf16.xpose.msra.mxu0 0
        %7393 = vmatpush.bf16.xpose.msra.mxu0 0
        %7394 = vmatpush.bf16.xpose.msra.mxu0 0
        %7395 = vmatpush.bf16.xpose.msra.mxu0 0
        %7396 = vmatpush.bf16.xpose.msra.mxu0 0
        %7397 = vmatpush.bf16.xpose.msra.mxu0 0
        %7398 = vmatpush.bf16.xpose.msra.mxu0 %v3739
        %7399 = vmatmul.bf16.gmra.mxu0 %v1107
        %v7400 = vpop.f32.mrf.mxu0
        %v7401 = vadd.f32 %v7388, %v7400
        %v7402 = vpop.f32.mrf.mxu0
        %7403 = vdwg.mxu0
        %7404 = vmatpush.bf16.xpose.msra.mxu0 0
        %7405 = vmatpush.bf16.xpose.msra.mxu0 0
        %7406 = vmatpush.bf16.xpose.msra.mxu0 0
        %7407 = vmatpush.bf16.xpose.msra.mxu0 0
        %7408 = vmatpush.bf16.xpose.msra.mxu0 0
        %7409 = vmatpush.bf16.xpose.msra.mxu0 0
        %7410 = vmatpush.bf16.xpose.msra.mxu0 0
        %7411 = vmatpush.bf16.xpose.msra.mxu0 %v3740
        %7412 = vmatmul.bf16.gmra.mxu0 %v1108
        %v7413 = vpop.f32.mrf.mxu0
        %v7414 = vadd.f32 %v7401, %v7413
        %v7415 = vpop.f32.mrf.mxu0
        %7416 = vdwg.mxu0
        %7417 = vmatpush.bf16.xpose.msra.mxu0 0
        %7418 = vmatpush.bf16.xpose.msra.mxu0 0
        %7419 = vmatpush.bf16.xpose.msra.mxu0 0
        %7420 = vmatpush.bf16.xpose.msra.mxu0 0
        %7421 = vmatpush.bf16.xpose.msra.mxu0 0
        %7422 = vmatpush.bf16.xpose.msra.mxu0 0
        %7423 = vmatpush.bf16.xpose.msra.mxu0 0
        %7424 = vmatpush.bf16.xpose.msra.mxu0 %v3741
        %7425 = vmatmul.bf16.gmra.mxu0 %v1109
        %v7426 = vpop.f32.mrf.mxu0
        %v7427 = vadd.f32 %v7414, %v7426
        %v7428 = vpop.f32.mrf.mxu0
        %7429 = vdwg.mxu0
        %7430 = vmatpush.bf16.xpose.msra.mxu0 0
        %7431 = vmatpush.bf16.xpose.msra.mxu0 0
        %7432 = vmatpush.bf16.xpose.msra.mxu0 0
        %7433 = vmatpush.bf16.xpose.msra.mxu0 0
        %7434 = vmatpush.bf16.xpose.msra.mxu0 0
        %7435 = vmatpush.bf16.xpose.msra.mxu0 0
        %7436 = vmatpush.bf16.xpose.msra.mxu0 0
        %7437 = vmatpush.bf16.xpose.msra.mxu0 %v3742
        %7438 = vmatmul.bf16.gmra.mxu0 %v1110
        %v7439 = vpop.f32.mrf.mxu0
        %v7440 = vadd.f32 %v7427, %v7439
        %v7441 = vpop.f32.mrf.mxu0
        %7442 = vdwg.mxu0
        %7443 = vmatpush.bf16.xpose.msra.mxu0 0
        %7444 = vmatpush.bf16.xpose.msra.mxu0 0
        %7445 = vmatpush.bf16.xpose.msra.mxu0 0
        %7446 = vmatpush.bf16.xpose.msra.mxu0 0
        %7447 = vmatpush.bf16.xpose.msra.mxu0 0
        %7448 = vmatpush.bf16.xpose.msra.mxu0 0
        %7449 = vmatpush.bf16.xpose.msra.mxu0 0
        %7450 = vmatpush.bf16.xpose.msra.mxu0 %v3743
        %7451 = vmatmul.bf16.gmra.mxu0 %v1111
        %v7452 = vpop.f32.mrf.mxu0
        %v7453 = vadd.f32 %v7440, %v7452
        %v7454 = vpop.f32.mrf.mxu0
        %7455 = vdwg.mxu0
        %7456 = vmatpush.bf16.xpose.msra.mxu0 0
        %7457 = vmatpush.bf16.xpose.msra.mxu0 0
        %7458 = vmatpush.bf16.xpose.msra.mxu0 0
        %7459 = vmatpush.bf16.xpose.msra.mxu0 0
        %7460 = vmatpush.bf16.xpose.msra.mxu0 0
        %7461 = vmatpush.bf16.xpose.msra.mxu0 0
        %7462 = vmatpush.bf16.xpose.msra.mxu0 0
        %7463 = vmatpush.bf16.xpose.msra.mxu0 %v3744
        %7464 = vmatmul.bf16.gmra.mxu0 %v1114
        %v7465 = vpop.f32.mrf.mxu0
        %v7466 = vadd.f32 %v7453, %v7465
        %v7467 = vpop.f32.mrf.mxu0
        %7468 = vdwg.mxu0
        %7469 = vmatpush.bf16.xpose.msra.mxu0 0
        %7470 = vmatpush.bf16.xpose.msra.mxu0 0
        %7471 = vmatpush.bf16.xpose.msra.mxu0 0
        %7472 = vmatpush.bf16.xpose.msra.mxu0 0
        %7473 = vmatpush.bf16.xpose.msra.mxu0 0
        %7474 = vmatpush.bf16.xpose.msra.mxu0 0
        %7475 = vmatpush.bf16.xpose.msra.mxu0 0
        %7476 = vmatpush.bf16.xpose.msra.mxu0 %v3745
        %7477 = vmatmul.bf16.gmra.mxu0 %v1115
        %v7478 = vpop.f32.mrf.mxu0
        %v7479 = vadd.f32 %v7466, %v7478
        %v7480 = vpop.f32.mrf.mxu0
        %7481 = vdwg.mxu0
        %7482 = vmatpush.bf16.xpose.msra.mxu0 0
        %7483 = vmatpush.bf16.xpose.msra.mxu0 0
        %7484 = vmatpush.bf16.xpose.msra.mxu0 0
        %7485 = vmatpush.bf16.xpose.msra.mxu0 0
        %7486 = vmatpush.bf16.xpose.msra.mxu0 0
        %7487 = vmatpush.bf16.xpose.msra.mxu0 0
        %7488 = vmatpush.bf16.xpose.msra.mxu0 0
        %7489 = vmatpush.bf16.xpose.msra.mxu0 %v3746
        %7490 = vmatmul.bf16.gmra.mxu0 %v1116
        %v7491 = vpop.f32.mrf.mxu0
        %v7492 = vadd.f32 %v7479, %v7491
        %v7493 = vpop.f32.mrf.mxu0
        %7494 = vdwg.mxu0
        %7495 = vmatpush.bf16.xpose.msra.mxu0 0
        %7496 = vmatpush.bf16.xpose.msra.mxu0 0
        %7497 = vmatpush.bf16.xpose.msra.mxu0 0
        %7498 = vmatpush.bf16.xpose.msra.mxu0 0
        %7499 = vmatpush.bf16.xpose.msra.mxu0 0
        %7500 = vmatpush.bf16.xpose.msra.mxu0 0
        %7501 = vmatpush.bf16.xpose.msra.mxu0 0
        %7502 = vmatpush.bf16.xpose.msra.mxu0 %v3747
        %7503 = vmatmul.bf16.gmra.mxu0 %v1117
        %v7504 = vpop.f32.mrf.mxu0
        %v7505 = vadd.f32 %v7492, %v7504
        %v7506 = vpop.f32.mrf.mxu0
        %7507 = vdwg.mxu0
        %7508 = vmatpush.bf16.xpose.msra.mxu0 0
        %7509 = vmatpush.bf16.xpose.msra.mxu0 0
        %7510 = vmatpush.bf16.xpose.msra.mxu0 0
        %7511 = vmatpush.bf16.xpose.msra.mxu0 0
        %7512 = vmatpush.bf16.xpose.msra.mxu0 0
        %7513 = vmatpush.bf16.xpose.msra.mxu0 0
        %7514 = vmatpush.bf16.xpose.msra.mxu0 0
        %7515 = vmatpush.bf16.xpose.msra.mxu0 %v3748
        %7516 = vmatmul.bf16.gmra.mxu0 %v1118
        %v7517 = vpop.f32.mrf.mxu0
        %v7518 = vadd.f32 %v7505, %v7517
        %v7519 = vpop.f32.mrf.mxu0
        %7520 = vdwg.mxu0
        %7521 = vmatpush.bf16.xpose.msra.mxu0 0
        %7522 = vmatpush.bf16.xpose.msra.mxu0 0
        %7523 = vmatpush.bf16.xpose.msra.mxu0 0
        %7524 = vmatpush.bf16.xpose.msra.mxu0 0
        %7525 = vmatpush.bf16.xpose.msra.mxu0 0
        %7526 = vmatpush.bf16.xpose.msra.mxu0 0
        %7527 = vmatpush.bf16.xpose.msra.mxu0 0
        %7528 = vmatpush.bf16.xpose.msra.mxu0 %v3749
        %7529 = vmatmul.bf16.gmra.mxu0 %v1119
        %v7530 = vpop.f32.mrf.mxu0
        %v7531 = vadd.f32 %v7518, %v7530
        %v7532 = vpop.f32.mrf.mxu0
        %7533 = vdwg.mxu0
        %7534 = vmatpush.bf16.xpose.msra.mxu0 0
        %7535 = vmatpush.bf16.xpose.msra.mxu0 0
        %7536 = vmatpush.bf16.xpose.msra.mxu0 0
        %7537 = vmatpush.bf16.xpose.msra.mxu0 0
        %7538 = vmatpush.bf16.xpose.msra.mxu0 0
        %7539 = vmatpush.bf16.xpose.msra.mxu0 0
        %7540 = vmatpush.bf16.xpose.msra.mxu0 0
        %7541 = vmatpush.bf16.xpose.msra.mxu0 %v3750
        %7542 = vmatmul.bf16.gmra.mxu0 %v1120
        %v7543 = vpop.f32.mrf.mxu0
        %v7544 = vadd.f32 %v7531, %v7543
        %v7545 = vpop.f32.mrf.mxu0
        %7546 = vdwg.mxu0
        %7547 = vmatpush.bf16.xpose.msra.mxu0 0
        %7548 = vmatpush.bf16.xpose.msra.mxu0 0
        %7549 = vmatpush.bf16.xpose.msra.mxu0 0
        %7550 = vmatpush.bf16.xpose.msra.mxu0 0
        %7551 = vmatpush.bf16.xpose.msra.mxu0 0
        %7552 = vmatpush.bf16.xpose.msra.mxu0 0
        %7553 = vmatpush.bf16.xpose.msra.mxu0 0
        %7554 = vmatpush.bf16.xpose.msra.mxu0 %v3751
        %7555 = vmatmul.bf16.gmra.mxu0 %v1121
        %v7556 = vpop.f32.mrf.mxu0
        %v7557 = vadd.f32 %v7544, %v7556
        %v7558 = vpop.f32.mrf.mxu0
        %7559 = vdwg.mxu0
        %7560 = vmatpush.bf16.xpose.msra.mxu0 0
        %7561 = vmatpush.bf16.xpose.msra.mxu0 0
        %7562 = vmatpush.bf16.xpose.msra.mxu0 0
        %7563 = vmatpush.bf16.xpose.msra.mxu0 0
        %7564 = vmatpush.bf16.xpose.msra.mxu0 0
        %7565 = vmatpush.bf16.xpose.msra.mxu0 0
        %7566 = vmatpush.bf16.xpose.msra.mxu0 0
        %7567 = vmatpush.bf16.xpose.msra.mxu0 %v3752
        %7568 = vmatmul.bf16.gmra.mxu0 %v1124
        %v7569 = vpop.f32.mrf.mxu0
        %v7570 = vadd.f32 %v7557, %v7569
        %v7571 = vpop.f32.mrf.mxu0
        %7572 = vdwg.mxu0
        %7573 = vmatpush.bf16.xpose.msra.mxu0 0
        %7574 = vmatpush.bf16.xpose.msra.mxu0 0
        %7575 = vmatpush.bf16.xpose.msra.mxu0 0
        %7576 = vmatpush.bf16.xpose.msra.mxu0 0
        %7577 = vmatpush.bf16.xpose.msra.mxu0 0
        %7578 = vmatpush.bf16.xpose.msra.mxu0 0
        %7579 = vmatpush.bf16.xpose.msra.mxu0 0
        %7580 = vmatpush.bf16.xpose.msra.mxu0 %v3753
        %7581 = vmatmul.bf16.gmra.mxu0 %v1125
        %v7582 = vpop.f32.mrf.mxu0
        %v7583 = vadd.f32 %v7570, %v7582
        %v7584 = vpop.f32.mrf.mxu0
        %7585 = vdwg.mxu0
        %7586 = vmatpush.bf16.xpose.msra.mxu0 0
        %7587 = vmatpush.bf16.xpose.msra.mxu0 0
        %7588 = vmatpush.bf16.xpose.msra.mxu0 0
        %7589 = vmatpush.bf16.xpose.msra.mxu0 0
        %7590 = vmatpush.bf16.xpose.msra.mxu0 0
        %7591 = vmatpush.bf16.xpose.msra.mxu0 0
        %7592 = vmatpush.bf16.xpose.msra.mxu0 0
        %7593 = vmatpush.bf16.xpose.msra.mxu0 %v3754
        %7594 = vmatmul.bf16.gmra.mxu0 %v1126
        %v7595 = vpop.f32.mrf.mxu0
        %v7596 = vadd.f32 %v7583, %v7595
        %v7597 = vpop.f32.mrf.mxu0
        %7598 = vdwg.mxu0
        %7599 = vmatpush.bf16.xpose.msra.mxu0 0
        %7600 = vmatpush.bf16.xpose.msra.mxu0 0
        %7601 = vmatpush.bf16.xpose.msra.mxu0 0
        %7602 = vmatpush.bf16.xpose.msra.mxu0 0
        %7603 = vmatpush.bf16.xpose.msra.mxu0 0
        %7604 = vmatpush.bf16.xpose.msra.mxu0 0
        %7605 = vmatpush.bf16.xpose.msra.mxu0 0
        %7606 = vmatpush.bf16.xpose.msra.mxu0 %v3755
        %7607 = vmatmul.bf16.gmra.mxu0 %v1127
        %v7608 = vpop.f32.mrf.mxu0
        %v7609 = vadd.f32 %v7596, %v7608
        %v7610 = vpop.f32.mrf.mxu0
        %7611 = vdwg.mxu0
        %7612 = vmatpush.bf16.xpose.msra.mxu0 0
        %7613 = vmatpush.bf16.xpose.msra.mxu0 0
        %7614 = vmatpush.bf16.xpose.msra.mxu0 0
        %7615 = vmatpush.bf16.xpose.msra.mxu0 0
        %7616 = vmatpush.bf16.xpose.msra.mxu0 0
        %7617 = vmatpush.bf16.xpose.msra.mxu0 0
        %7618 = vmatpush.bf16.xpose.msra.mxu0 0
        %7619 = vmatpush.bf16.xpose.msra.mxu0 %v3756
        %7620 = vmatmul.bf16.gmra.mxu0 %v1128
        %v7621 = vpop.f32.mrf.mxu0
        %v7622 = vadd.f32 %v7609, %v7621
        %v7623 = vpop.f32.mrf.mxu0
        %7624 = vdwg.mxu0
        %7625 = vmatpush.bf16.xpose.msra.mxu0 0
        %7626 = vmatpush.bf16.xpose.msra.mxu0 0
        %7627 = vmatpush.bf16.xpose.msra.mxu0 0
        %7628 = vmatpush.bf16.xpose.msra.mxu0 0
        %7629 = vmatpush.bf16.xpose.msra.mxu0 0
        %7630 = vmatpush.bf16.xpose.msra.mxu0 0
        %7631 = vmatpush.bf16.xpose.msra.mxu0 0
        %7632 = vmatpush.bf16.xpose.msra.mxu0 %v3757
        %7633 = vmatmul.bf16.gmra.mxu0 %v1129
        %v7634 = vpop.f32.mrf.mxu0
        %v7635 = vadd.f32 %v7622, %v7634
        %v7636 = vpop.f32.mrf.mxu0
        %7637 = vdwg.mxu0
        %7638 = vmatpush.bf16.xpose.msra.mxu0 0
        %7639 = vmatpush.bf16.xpose.msra.mxu0 0
        %7640 = vmatpush.bf16.xpose.msra.mxu0 0
        %7641 = vmatpush.bf16.xpose.msra.mxu0 0
        %7642 = vmatpush.bf16.xpose.msra.mxu0 0
        %7643 = vmatpush.bf16.xpose.msra.mxu0 0
        %7644 = vmatpush.bf16.xpose.msra.mxu0 0
        %7645 = vmatpush.bf16.xpose.msra.mxu0 %v3758
        %7646 = vmatmul.bf16.gmra.mxu0 %v1130
        %v7647 = vpop.f32.mrf.mxu0
        %v7648 = vadd.f32 %v7635, %v7647
        %v7649 = vpop.f32.mrf.mxu0
        %7650 = vdwg.mxu0
        %7651 = vmatpush.bf16.xpose.msra.mxu0 0
        %7652 = vmatpush.bf16.xpose.msra.mxu0 0
        %7653 = vmatpush.bf16.xpose.msra.mxu0 0
        %7654 = vmatpush.bf16.xpose.msra.mxu0 0
        %7655 = vmatpush.bf16.xpose.msra.mxu0 0
        %7656 = vmatpush.bf16.xpose.msra.mxu0 0
        %7657 = vmatpush.bf16.xpose.msra.mxu0 0
        %7658 = vmatpush.bf16.xpose.msra.mxu0 %v3759
        %7659 = vmatmul.bf16.gmra.mxu0 %v1131
        %v7660 = vpop.f32.mrf.mxu0
        %v7661 = vadd.f32 %v7648, %v7660
        %v7662 = vpop.f32.mrf.mxu0
        %7663 = vdwg.mxu0
        %7664 = vmatpush.bf16.xpose.msra.mxu0 0
        %7665 = vmatpush.bf16.xpose.msra.mxu0 0
        %7666 = vmatpush.bf16.xpose.msra.mxu0 0
        %7667 = vmatpush.bf16.xpose.msra.mxu0 0
        %7668 = vmatpush.bf16.xpose.msra.mxu0 0
        %7669 = vmatpush.bf16.xpose.msra.mxu0 0
        %7670 = vmatpush.bf16.xpose.msra.mxu0 0
        %7671 = vmatpush.bf16.xpose.msra.mxu0 %v3760
        %7672 = vmatmul.bf16.gmra.mxu0 %v1134
        %v7673 = vpop.f32.mrf.mxu0
        %v7674 = vadd.f32 %v7661, %v7673
        %v7675 = vpop.f32.mrf.mxu0
        %7676 = vdwg.mxu0
        %7677 = vmatpush.bf16.xpose.msra.mxu0 0
        %7678 = vmatpush.bf16.xpose.msra.mxu0 0
        %7679 = vmatpush.bf16.xpose.msra.mxu0 0
        %7680 = vmatpush.bf16.xpose.msra.mxu0 0
        %7681 = vmatpush.bf16.xpose.msra.mxu0 0
        %7682 = vmatpush.bf16.xpose.msra.mxu0 0
        %7683 = vmatpush.bf16.xpose.msra.mxu0 0
        %7684 = vmatpush.bf16.xpose.msra.mxu0 %v3761
        %7685 = vmatmul.bf16.gmra.mxu0 %v1135
        %v7686 = vpop.f32.mrf.mxu0
        %v7687 = vadd.f32 %v7674, %v7686
        %v7688 = vpop.f32.mrf.mxu0
        %7689 = vdwg.mxu0
        %7690 = vmatpush.bf16.xpose.msra.mxu0 0
        %7691 = vmatpush.bf16.xpose.msra.mxu0 0
        %7692 = vmatpush.bf16.xpose.msra.mxu0 0
        %7693 = vmatpush.bf16.xpose.msra.mxu0 0
        %7694 = vmatpush.bf16.xpose.msra.mxu0 0
        %7695 = vmatpush.bf16.xpose.msra.mxu0 0
        %7696 = vmatpush.bf16.xpose.msra.mxu0 0
        %7697 = vmatpush.bf16.xpose.msra.mxu0 %v3762
        %7698 = vmatmul.bf16.gmra.mxu0 %v1136
        %v7699 = vpop.f32.mrf.mxu0
        %v7700 = vadd.f32 %v7687, %v7699
        %v7701 = vpop.f32.mrf.mxu0
        %7702 = vdwg.mxu0
        %7703 = vmatpush.bf16.xpose.msra.mxu0 0
        %7704 = vmatpush.bf16.xpose.msra.mxu0 0
        %7705 = vmatpush.bf16.xpose.msra.mxu0 0
        %7706 = vmatpush.bf16.xpose.msra.mxu0 0
        %7707 = vmatpush.bf16.xpose.msra.mxu0 0
        %7708 = vmatpush.bf16.xpose.msra.mxu0 0
        %7709 = vmatpush.bf16.xpose.msra.mxu0 0
        %7710 = vmatpush.bf16.xpose.msra.mxu0 %v3763
        %7711 = vmatmul.bf16.gmra.mxu0 %v1137
        %v7712 = vpop.f32.mrf.mxu0
        %v7713 = vadd.f32 %v7700, %v7712
        %v7714 = vpop.f32.mrf.mxu0
        %7715 = vdwg.mxu0
        %7716 = vmatpush.bf16.xpose.msra.mxu0 0
        %7717 = vmatpush.bf16.xpose.msra.mxu0 0
        %7718 = vmatpush.bf16.xpose.msra.mxu0 0
        %7719 = vmatpush.bf16.xpose.msra.mxu0 0
        %7720 = vmatpush.bf16.xpose.msra.mxu0 0
        %7721 = vmatpush.bf16.xpose.msra.mxu0 0
        %7722 = vmatpush.bf16.xpose.msra.mxu0 0
        %7723 = vmatpush.bf16.xpose.msra.mxu0 %v3764
        %7724 = vmatmul.bf16.gmra.mxu0 %v1138
        %v7725 = vpop.f32.mrf.mxu0
        %v7726 = vadd.f32 %v7713, %v7725
        %v7727 = vpop.f32.mrf.mxu0
        %7728 = vdwg.mxu0
        %7729 = vmatpush.bf16.xpose.msra.mxu0 0
        %7730 = vmatpush.bf16.xpose.msra.mxu0 0
        %7731 = vmatpush.bf16.xpose.msra.mxu0 0
        %7732 = vmatpush.bf16.xpose.msra.mxu0 0
        %7733 = vmatpush.bf16.xpose.msra.mxu0 0
        %7734 = vmatpush.bf16.xpose.msra.mxu0 0
        %7735 = vmatpush.bf16.xpose.msra.mxu0 0
        %7736 = vmatpush.bf16.xpose.msra.mxu0 %v3765
        %7737 = vmatmul.bf16.gmra.mxu0 %v1139
        %v7738 = vpop.f32.mrf.mxu0
        %v7739 = vadd.f32 %v7726, %v7738
        %v7740 = vpop.f32.mrf.mxu0
        %7741 = vdwg.mxu0
        %7742 = vmatpush.bf16.xpose.msra.mxu0 0
        %7743 = vmatpush.bf16.xpose.msra.mxu0 0
        %7744 = vmatpush.bf16.xpose.msra.mxu0 0
        %7745 = vmatpush.bf16.xpose.msra.mxu0 0
        %7746 = vmatpush.bf16.xpose.msra.mxu0 0
        %7747 = vmatpush.bf16.xpose.msra.mxu0 0
        %7748 = vmatpush.bf16.xpose.msra.mxu0 0
        %7749 = vmatpush.bf16.xpose.msra.mxu0 %v3766
        %7750 = vmatmul.bf16.gmra.mxu0 %v1140
        %v7751 = vpop.f32.mrf.mxu0
        %v7752 = vadd.f32 %v7739, %v7751
        %v7753 = vpop.f32.mrf.mxu0
        %7754 = vdwg.mxu0
        %7755 = vmatpush.bf16.xpose.msra.mxu0 0
        %7756 = vmatpush.bf16.xpose.msra.mxu0 0
        %7757 = vmatpush.bf16.xpose.msra.mxu0 0
        %7758 = vmatpush.bf16.xpose.msra.mxu0 0
        %7759 = vmatpush.bf16.xpose.msra.mxu0 0
        %7760 = vmatpush.bf16.xpose.msra.mxu0 0
        %7761 = vmatpush.bf16.xpose.msra.mxu0 0
        %7762 = vmatpush.bf16.xpose.msra.mxu0 %v3767
        %7763 = vmatmul.bf16.gmra.mxu0 %v1141
        %v7764 = vpop.f32.mrf.mxu0
        %v7765 = vadd.f32 %v7752, %v7764
        %v7766 = vpop.f32.mrf.mxu0
        %7767 = vdwg.mxu0
        %7768 = vmatpush.bf16.xpose.msra.mxu0 0
        %7769 = vmatpush.bf16.xpose.msra.mxu0 0
        %7770 = vmatpush.bf16.xpose.msra.mxu0 0
        %7771 = vmatpush.bf16.xpose.msra.mxu0 0
        %7772 = vmatpush.bf16.xpose.msra.mxu0 0
        %7773 = vmatpush.bf16.xpose.msra.mxu0 0
        %7774 = vmatpush.bf16.xpose.msra.mxu0 0
        %7775 = vmatpush.bf16.xpose.msra.mxu0 %v3768
        %7776 = vmatmul.bf16.gmra.mxu0 %v1144
        %v7777 = vpop.f32.mrf.mxu0
        %v7778 = vadd.f32 %v7765, %v7777
        %v7779 = vpop.f32.mrf.mxu0
        %7780 = vdwg.mxu0
        %7781 = vmatpush.bf16.xpose.msra.mxu0 0
        %7782 = vmatpush.bf16.xpose.msra.mxu0 0
        %7783 = vmatpush.bf16.xpose.msra.mxu0 0
        %7784 = vmatpush.bf16.xpose.msra.mxu0 0
        %7785 = vmatpush.bf16.xpose.msra.mxu0 0
        %7786 = vmatpush.bf16.xpose.msra.mxu0 0
        %7787 = vmatpush.bf16.xpose.msra.mxu0 0
        %7788 = vmatpush.bf16.xpose.msra.mxu0 %v3769
        %7789 = vmatmul.bf16.gmra.mxu0 %v1145
        %v7790 = vpop.f32.mrf.mxu0
        %v7791 = vadd.f32 %v7778, %v7790
        %v7792 = vpop.f32.mrf.mxu0
        %7793 = vdwg.mxu0
        %7794 = vmatpush.bf16.xpose.msra.mxu0 0
        %7795 = vmatpush.bf16.xpose.msra.mxu0 0
        %7796 = vmatpush.bf16.xpose.msra.mxu0 0
        %7797 = vmatpush.bf16.xpose.msra.mxu0 0
        %7798 = vmatpush.bf16.xpose.msra.mxu0 0
        %7799 = vmatpush.bf16.xpose.msra.mxu0 0
        %7800 = vmatpush.bf16.xpose.msra.mxu0 0
        %7801 = vmatpush.bf16.xpose.msra.mxu0 %v3770
        %7802 = vmatmul.bf16.gmra.mxu0 %v1146
        %v7803 = vpop.f32.mrf.mxu0
        %v7804 = vadd.f32 %v7791, %v7803
        %v7805 = vpop.f32.mrf.mxu0
        %7806 = vdwg.mxu0
        %7807 = vmatpush.bf16.xpose.msra.mxu0 0
        %7808 = vmatpush.bf16.xpose.msra.mxu0 0
        %7809 = vmatpush.bf16.xpose.msra.mxu0 0
        %7810 = vmatpush.bf16.xpose.msra.mxu0 0
        %7811 = vmatpush.bf16.xpose.msra.mxu0 0
        %7812 = vmatpush.bf16.xpose.msra.mxu0 0
        %7813 = vmatpush.bf16.xpose.msra.mxu0 0
        %7814 = vmatpush.bf16.xpose.msra.mxu0 %v3771
        %7815 = vmatmul.bf16.gmra.mxu0 %v1147
        %v7816 = vpop.f32.mrf.mxu0
        %v7817 = vadd.f32 %v7804, %v7816
        %v7818 = vpop.f32.mrf.mxu0
        %7819 = vdwg.mxu0
        %7820 = vmatpush.bf16.xpose.msra.mxu0 0
        %7821 = vmatpush.bf16.xpose.msra.mxu0 0
        %7822 = vmatpush.bf16.xpose.msra.mxu0 0
        %7823 = vmatpush.bf16.xpose.msra.mxu0 0
        %7824 = vmatpush.bf16.xpose.msra.mxu0 0
        %7825 = vmatpush.bf16.xpose.msra.mxu0 0
        %7826 = vmatpush.bf16.xpose.msra.mxu0 0
        %7827 = vmatpush.bf16.xpose.msra.mxu0 %v3772
        %7828 = vmatmul.bf16.gmra.mxu0 %v1148
        %v7829 = vpop.f32.mrf.mxu0
        %v7830 = vadd.f32 %v7817, %v7829
        %v7831 = vpop.f32.mrf.mxu0
        %7832 = vdwg.mxu0
        %7833 = vmatpush.bf16.xpose.msra.mxu0 0
        %7834 = vmatpush.bf16.xpose.msra.mxu0 0
        %7835 = vmatpush.bf16.xpose.msra.mxu0 0
        %7836 = vmatpush.bf16.xpose.msra.mxu0 0
        %7837 = vmatpush.bf16.xpose.msra.mxu0 0
        %7838 = vmatpush.bf16.xpose.msra.mxu0 0
        %7839 = vmatpush.bf16.xpose.msra.mxu0 0
        %7840 = vmatpush.bf16.xpose.msra.mxu0 %v3773
        %7841 = vmatmul.bf16.gmra.mxu0 %v1149
        %v7842 = vpop.f32.mrf.mxu0
        %v7843 = vadd.f32 %v7830, %v7842
        %v7844 = vpop.f32.mrf.mxu0
        %7845 = vdwg.mxu0
        %7846 = vmatpush.bf16.xpose.msra.mxu0 0
        %7847 = vmatpush.bf16.xpose.msra.mxu0 0
        %7848 = vmatpush.bf16.xpose.msra.mxu0 0
        %7849 = vmatpush.bf16.xpose.msra.mxu0 0
        %7850 = vmatpush.bf16.xpose.msra.mxu0 0
        %7851 = vmatpush.bf16.xpose.msra.mxu0 0
        %7852 = vmatpush.bf16.xpose.msra.mxu0 0
        %7853 = vmatpush.bf16.xpose.msra.mxu0 %v3774
        %7854 = vmatmul.bf16.gmra.mxu0 %v1150
        %v7855 = vpop.f32.mrf.mxu0
        %v7856 = vadd.f32 %v7843, %v7855
        %v7857 = vpop.f32.mrf.mxu0
        %7858 = vdwg.mxu0
        %7859 = vmatpush.bf16.xpose.msra.mxu0 0
        %7860 = vmatpush.bf16.xpose.msra.mxu0 0
        %7861 = vmatpush.bf16.xpose.msra.mxu0 0
        %7862 = vmatpush.bf16.xpose.msra.mxu0 0
        %7863 = vmatpush.bf16.xpose.msra.mxu0 0
        %7864 = vmatpush.bf16.xpose.msra.mxu0 0
        %7865 = vmatpush.bf16.xpose.msra.mxu0 0
        %7866 = vmatpush.bf16.xpose.msra.mxu0 %v3775
        %7867 = vmatmul.bf16.gmra.mxu0 %v1151
        %v7868 = vpop.f32.mrf.mxu0
        %v7869 = vadd.f32 %v7856, %v7868
        %v7870 = vpop.f32.mrf.mxu0
        %7871 = vdwg.mxu0
        %7872 = vmatpush.bf16.xpose.msra.mxu0 0
        %7873 = vmatpush.bf16.xpose.msra.mxu0 0
        %7874 = vmatpush.bf16.xpose.msra.mxu0 0
        %7875 = vmatpush.bf16.xpose.msra.mxu0 0
        %7876 = vmatpush.bf16.xpose.msra.mxu0 0
        %7877 = vmatpush.bf16.xpose.msra.mxu0 0
        %7878 = vmatpush.bf16.xpose.msra.mxu0 0
        %7879 = vmatpush.bf16.xpose.msra.mxu0 %v3776
        %7880 = vmatmul.bf16.gmra.mxu0 %v1154
        %v7881 = vpop.f32.mrf.mxu0
        %v7882 = vadd.f32 %v7869, %v7881
        %v7883 = vpop.f32.mrf.mxu0
        %7884 = vdwg.mxu0
        %7885 = vmatpush.bf16.xpose.msra.mxu0 0
        %7886 = vmatpush.bf16.xpose.msra.mxu0 0
        %7887 = vmatpush.bf16.xpose.msra.mxu0 0
        %7888 = vmatpush.bf16.xpose.msra.mxu0 0
        %7889 = vmatpush.bf16.xpose.msra.mxu0 0
        %7890 = vmatpush.bf16.xpose.msra.mxu0 0
        %7891 = vmatpush.bf16.xpose.msra.mxu0 0
        %7892 = vmatpush.bf16.xpose.msra.mxu0 %v3777
        %7893 = vmatmul.bf16.gmra.mxu0 %v1155
        %v7894 = vpop.f32.mrf.mxu0
        %v7895 = vadd.f32 %v7882, %v7894
        %v7896 = vpop.f32.mrf.mxu0
        %7897 = vdwg.mxu0
        %7898 = vmatpush.bf16.xpose.msra.mxu0 0
        %7899 = vmatpush.bf16.xpose.msra.mxu0 0
        %7900 = vmatpush.bf16.xpose.msra.mxu0 0
        %7901 = vmatpush.bf16.xpose.msra.mxu0 0
        %7902 = vmatpush.bf16.xpose.msra.mxu0 0
        %7903 = vmatpush.bf16.xpose.msra.mxu0 0
        %7904 = vmatpush.bf16.xpose.msra.mxu0 0
        %7905 = vmatpush.bf16.xpose.msra.mxu0 %v3778
        %7906 = vmatmul.bf16.gmra.mxu0 %v1156
        %v7907 = vpop.f32.mrf.mxu0
        %v7908 = vadd.f32 %v7895, %v7907
        %v7909 = vpop.f32.mrf.mxu0
        %7910 = vdwg.mxu0
        %7911 = vmatpush.bf16.xpose.msra.mxu0 0
        %7912 = vmatpush.bf16.xpose.msra.mxu0 0
        %7913 = vmatpush.bf16.xpose.msra.mxu0 0
        %7914 = vmatpush.bf16.xpose.msra.mxu0 0
        %7915 = vmatpush.bf16.xpose.msra.mxu0 0
        %7916 = vmatpush.bf16.xpose.msra.mxu0 0
        %7917 = vmatpush.bf16.xpose.msra.mxu0 0
        %7918 = vmatpush.bf16.xpose.msra.mxu0 %v3779
        %7919 = vmatmul.bf16.gmra.mxu0 %v1157
        %v7920 = vpop.f32.mrf.mxu0
        %v7921 = vadd.f32 %v7908, %v7920
        %v7922 = vpop.f32.mrf.mxu0
        %7923 = vdwg.mxu0
        %7924 = vmatpush.bf16.xpose.msra.mxu0 0
        %7925 = vmatpush.bf16.xpose.msra.mxu0 0
        %7926 = vmatpush.bf16.xpose.msra.mxu0 0
        %7927 = vmatpush.bf16.xpose.msra.mxu0 0
        %7928 = vmatpush.bf16.xpose.msra.mxu0 0
        %7929 = vmatpush.bf16.xpose.msra.mxu0 0
        %7930 = vmatpush.bf16.xpose.msra.mxu0 0
        %7931 = vmatpush.bf16.xpose.msra.mxu0 %v3780
        %7932 = vmatmul.bf16.gmra.mxu0 %v1158
        %v7933 = vpop.f32.mrf.mxu0
        %v7934 = vadd.f32 %v7921, %v7933
        %v7935 = vpop.f32.mrf.mxu0
        %7936 = vdwg.mxu0
        %7937 = vmatpush.bf16.xpose.msra.mxu0 0
        %7938 = vmatpush.bf16.xpose.msra.mxu0 0
        %7939 = vmatpush.bf16.xpose.msra.mxu0 0
        %7940 = vmatpush.bf16.xpose.msra.mxu0 0
        %7941 = vmatpush.bf16.xpose.msra.mxu0 0
        %7942 = vmatpush.bf16.xpose.msra.mxu0 0
        %7943 = vmatpush.bf16.xpose.msra.mxu0 0
        %7944 = vmatpush.bf16.xpose.msra.mxu0 %v3781
        %7945 = vmatmul.bf16.gmra.mxu0 %v1159
        %v7946 = vpop.f32.mrf.mxu0
        %v7947 = vadd.f32 %v7934, %v7946
        %v7948 = vpop.f32.mrf.mxu0
        %7949 = vdwg.mxu0
        %7950 = vmatpush.bf16.xpose.msra.mxu0 0
        %7951 = vmatpush.bf16.xpose.msra.mxu0 0
        %7952 = vmatpush.bf16.xpose.msra.mxu0 0
        %7953 = vmatpush.bf16.xpose.msra.mxu0 0
        %7954 = vmatpush.bf16.xpose.msra.mxu0 0
        %7955 = vmatpush.bf16.xpose.msra.mxu0 0
        %7956 = vmatpush.bf16.xpose.msra.mxu0 0
        %7957 = vmatpush.bf16.xpose.msra.mxu0 %v3782
        %7958 = vmatmul.bf16.gmra.mxu0 %v1160
        %v7959 = vpop.f32.mrf.mxu0
        %v7960 = vadd.f32 %v7947, %v7959
        %v7961 = vpop.f32.mrf.mxu0
        %7962 = vdwg.mxu0
        %7963 = vmatpush.bf16.xpose.msra.mxu0 0
        %7964 = vmatpush.bf16.xpose.msra.mxu0 0
        %7965 = vmatpush.bf16.xpose.msra.mxu0 0
        %7966 = vmatpush.bf16.xpose.msra.mxu0 0
        %7967 = vmatpush.bf16.xpose.msra.mxu0 0
        %7968 = vmatpush.bf16.xpose.msra.mxu0 0
        %7969 = vmatpush.bf16.xpose.msra.mxu0 0
        %7970 = vmatpush.bf16.xpose.msra.mxu0 %v3783
        %7971 = vmatmul.bf16.gmra.mxu0 %v1161
        %v7972 = vpop.f32.mrf.mxu0
        %v7973 = vadd.f32 %v7960, %v7972
        %v7974 = vpop.f32.mrf.mxu0
        %7975 = vdwg.mxu0
        %7976 = vmatpush.bf16.xpose.msra.mxu0 0
        %7977 = vmatpush.bf16.xpose.msra.mxu0 0
        %7978 = vmatpush.bf16.xpose.msra.mxu0 0
        %7979 = vmatpush.bf16.xpose.msra.mxu0 0
        %7980 = vmatpush.bf16.xpose.msra.mxu0 0
        %7981 = vmatpush.bf16.xpose.msra.mxu0 0
        %7982 = vmatpush.bf16.xpose.msra.mxu0 0
        %7983 = vmatpush.bf16.xpose.msra.mxu0 %v3784
        %7984 = vmatmul.bf16.gmra.mxu0 %v1164
        %v7985 = vpop.f32.mrf.mxu0
        %v7986 = vadd.f32 %v7973, %v7985
        %v7987 = vpop.f32.mrf.mxu0
        %7988 = vdwg.mxu0
        %7989 = vmatpush.bf16.xpose.msra.mxu0 0
        %7990 = vmatpush.bf16.xpose.msra.mxu0 0
        %7991 = vmatpush.bf16.xpose.msra.mxu0 0
        %7992 = vmatpush.bf16.xpose.msra.mxu0 0
        %7993 = vmatpush.bf16.xpose.msra.mxu0 0
        %7994 = vmatpush.bf16.xpose.msra.mxu0 0
        %7995 = vmatpush.bf16.xpose.msra.mxu0 0
        %7996 = vmatpush.bf16.xpose.msra.mxu0 %v3785
        %7997 = vmatmul.bf16.gmra.mxu0 %v1165
        %v7998 = vpop.f32.mrf.mxu0
        %v7999 = vadd.f32 %v7986, %v7998
        %v8000 = vpop.f32.mrf.mxu0
        %8001 = vdwg.mxu0
        %8002 = vmatpush.bf16.xpose.msra.mxu0 0
        %8003 = vmatpush.bf16.xpose.msra.mxu0 0
        %8004 = vmatpush.bf16.xpose.msra.mxu0 0
        %8005 = vmatpush.bf16.xpose.msra.mxu0 0
        %8006 = vmatpush.bf16.xpose.msra.mxu0 0
        %8007 = vmatpush.bf16.xpose.msra.mxu0 0
        %8008 = vmatpush.bf16.xpose.msra.mxu0 0
        %8009 = vmatpush.bf16.xpose.msra.mxu0 %v3786
        %8010 = vmatmul.bf16.gmra.mxu0 %v1166
        %v8011 = vpop.f32.mrf.mxu0
        %v8012 = vadd.f32 %v7999, %v8011
        %v8013 = vpop.f32.mrf.mxu0
        %8014 = vdwg.mxu0
        %8015 = vmatpush.bf16.xpose.msra.mxu0 0
        %8016 = vmatpush.bf16.xpose.msra.mxu0 0
        %8017 = vmatpush.bf16.xpose.msra.mxu0 0
        %8018 = vmatpush.bf16.xpose.msra.mxu0 0
        %8019 = vmatpush.bf16.xpose.msra.mxu0 0
        %8020 = vmatpush.bf16.xpose.msra.mxu0 0
        %8021 = vmatpush.bf16.xpose.msra.mxu0 0
        %8022 = vmatpush.bf16.xpose.msra.mxu0 %v3787
        %8023 = vmatmul.bf16.gmra.mxu0 %v1167
        %v8024 = vpop.f32.mrf.mxu0
        %v8025 = vadd.f32 %v8012, %v8024
        %v8026 = vpop.f32.mrf.mxu0
        %8027 = vdwg.mxu0
        %8028 = vmatpush.bf16.xpose.msra.mxu0 0
        %8029 = vmatpush.bf16.xpose.msra.mxu0 0
        %8030 = vmatpush.bf16.xpose.msra.mxu0 0
        %8031 = vmatpush.bf16.xpose.msra.mxu0 0
        %8032 = vmatpush.bf16.xpose.msra.mxu0 0
        %8033 = vmatpush.bf16.xpose.msra.mxu0 0
        %8034 = vmatpush.bf16.xpose.msra.mxu0 0
        %8035 = vmatpush.bf16.xpose.msra.mxu0 %v3788
        %8036 = vmatmul.bf16.gmra.mxu0 %v1168
        %v8037 = vpop.f32.mrf.mxu0
        %v8038 = vadd.f32 %v8025, %v8037
        %v8039 = vpop.f32.mrf.mxu0
        %8040 = vdwg.mxu0
        %8041 = vmatpush.bf16.xpose.msra.mxu0 0
        %8042 = vmatpush.bf16.xpose.msra.mxu0 0
        %8043 = vmatpush.bf16.xpose.msra.mxu0 0
        %8044 = vmatpush.bf16.xpose.msra.mxu0 0
        %8045 = vmatpush.bf16.xpose.msra.mxu0 0
        %8046 = vmatpush.bf16.xpose.msra.mxu0 0
        %8047 = vmatpush.bf16.xpose.msra.mxu0 0
        %8048 = vmatpush.bf16.xpose.msra.mxu0 %v3789
        %8049 = vmatmul.bf16.gmra.mxu0 %v1169
        %v8050 = vpop.f32.mrf.mxu0
        %v8051 = vadd.f32 %v8038, %v8050
        %v8052 = vpop.f32.mrf.mxu0
        %8053 = vdwg.mxu0
        %8054 = vmatpush.bf16.xpose.msra.mxu0 0
        %8055 = vmatpush.bf16.xpose.msra.mxu0 0
        %8056 = vmatpush.bf16.xpose.msra.mxu0 0
        %8057 = vmatpush.bf16.xpose.msra.mxu0 0
        %8058 = vmatpush.bf16.xpose.msra.mxu0 0
        %8059 = vmatpush.bf16.xpose.msra.mxu0 0
        %8060 = vmatpush.bf16.xpose.msra.mxu0 0
        %8061 = vmatpush.bf16.xpose.msra.mxu0 %v3790
        %8062 = vmatmul.bf16.gmra.mxu0 %v1170
        %v8063 = vpop.f32.mrf.mxu0
        %v8064 = vadd.f32 %v8051, %v8063
        %v8065 = vpop.f32.mrf.mxu0
        %8066 = vdwg.mxu0
        %8067 = vmatpush.bf16.xpose.msra.mxu0 0
        %8068 = vmatpush.bf16.xpose.msra.mxu0 0
        %8069 = vmatpush.bf16.xpose.msra.mxu0 0
        %8070 = vmatpush.bf16.xpose.msra.mxu0 0
        %8071 = vmatpush.bf16.xpose.msra.mxu0 0
        %8072 = vmatpush.bf16.xpose.msra.mxu0 0
        %8073 = vmatpush.bf16.xpose.msra.mxu0 0
        %8074 = vmatpush.bf16.xpose.msra.mxu0 %v3791
        %8075 = vmatmul.bf16.gmra.mxu0 %v1171
        %v8076 = vpop.f32.mrf.mxu0
        %v8077 = vadd.f32 %v8064, %v8076
        %v8078 = vpop.f32.mrf.mxu0
        %8079 = vdwg.mxu0
        %8080 = vmatpush.bf16.xpose.msra.mxu0 0
        %8081 = vmatpush.bf16.xpose.msra.mxu0 0
        %8082 = vmatpush.bf16.xpose.msra.mxu0 0
        %8083 = vmatpush.bf16.xpose.msra.mxu0 0
        %8084 = vmatpush.bf16.xpose.msra.mxu0 0
        %8085 = vmatpush.bf16.xpose.msra.mxu0 0
        %8086 = vmatpush.bf16.xpose.msra.mxu0 0
        %8087 = vmatpush.bf16.xpose.msra.mxu0 %v3792
        %8088 = vmatmul.bf16.gmra.mxu0 %v1174
        %v8089 = vpop.f32.mrf.mxu0
        %v8090 = vadd.f32 %v8077, %v8089
        %v8091 = vpop.f32.mrf.mxu0
        %8092 = vdwg.mxu0
        %8093 = vmatpush.bf16.xpose.msra.mxu0 0
        %8094 = vmatpush.bf16.xpose.msra.mxu0 0
        %8095 = vmatpush.bf16.xpose.msra.mxu0 0
        %8096 = vmatpush.bf16.xpose.msra.mxu0 0
        %8097 = vmatpush.bf16.xpose.msra.mxu0 0
        %8098 = vmatpush.bf16.xpose.msra.mxu0 0
        %8099 = vmatpush.bf16.xpose.msra.mxu0 0
        %8100 = vmatpush.bf16.xpose.msra.mxu0 %v3793
        %8101 = vmatmul.bf16.gmra.mxu0 %v1175
        %v8102 = vpop.f32.mrf.mxu0
        %v8103 = vadd.f32 %v8090, %v8102
        %v8104 = vpop.f32.mrf.mxu0
        %8105 = vdwg.mxu0
        %8106 = vmatpush.bf16.xpose.msra.mxu0 0
        %8107 = vmatpush.bf16.xpose.msra.mxu0 0
        %8108 = vmatpush.bf16.xpose.msra.mxu0 0
        %8109 = vmatpush.bf16.xpose.msra.mxu0 0
        %8110 = vmatpush.bf16.xpose.msra.mxu0 0
        %8111 = vmatpush.bf16.xpose.msra.mxu0 0
        %8112 = vmatpush.bf16.xpose.msra.mxu0 0
        %8113 = vmatpush.bf16.xpose.msra.mxu0 %v3794
        %8114 = vmatmul.bf16.gmra.mxu0 %v1176
        %v8115 = vpop.f32.mrf.mxu0
        %v8116 = vadd.f32 %v8103, %v8115
        %v8117 = vpop.f32.mrf.mxu0
        %8118 = vdwg.mxu0
        %8119 = vmatpush.bf16.xpose.msra.mxu0 0
        %8120 = vmatpush.bf16.xpose.msra.mxu0 0
        %8121 = vmatpush.bf16.xpose.msra.mxu0 0
        %8122 = vmatpush.bf16.xpose.msra.mxu0 0
        %8123 = vmatpush.bf16.xpose.msra.mxu0 0
        %8124 = vmatpush.bf16.xpose.msra.mxu0 0
        %8125 = vmatpush.bf16.xpose.msra.mxu0 0
        %8126 = vmatpush.bf16.xpose.msra.mxu0 %v3795
        %8127 = vmatmul.bf16.gmra.mxu0 %v1177
        %v8128 = vpop.f32.mrf.mxu0
        %v8129 = vadd.f32 %v8116, %v8128
        %v8130 = vpop.f32.mrf.mxu0
        %8131 = vdwg.mxu0
        %8132 = vmatpush.bf16.xpose.msra.mxu0 0
        %8133 = vmatpush.bf16.xpose.msra.mxu0 0
        %8134 = vmatpush.bf16.xpose.msra.mxu0 0
        %8135 = vmatpush.bf16.xpose.msra.mxu0 0
        %8136 = vmatpush.bf16.xpose.msra.mxu0 0
        %8137 = vmatpush.bf16.xpose.msra.mxu0 0
        %8138 = vmatpush.bf16.xpose.msra.mxu0 0
        %8139 = vmatpush.bf16.xpose.msra.mxu0 %v3796
        %8140 = vmatmul.bf16.gmra.mxu0 %v1178
        %v8141 = vpop.f32.mrf.mxu0
        %v8142 = vadd.f32 %v8129, %v8141
        %v8143 = vpop.f32.mrf.mxu0
        %8144 = vdwg.mxu0
        %8145 = vmatpush.bf16.xpose.msra.mxu0 0
        %8146 = vmatpush.bf16.xpose.msra.mxu0 0
        %8147 = vmatpush.bf16.xpose.msra.mxu0 0
        %8148 = vmatpush.bf16.xpose.msra.mxu0 0
        %8149 = vmatpush.bf16.xpose.msra.mxu0 0
        %8150 = vmatpush.bf16.xpose.msra.mxu0 0
        %8151 = vmatpush.bf16.xpose.msra.mxu0 0
        %8152 = vmatpush.bf16.xpose.msra.mxu0 %v3797
        %8153 = vmatmul.bf16.gmra.mxu0 %v1179
        %v8154 = vpop.f32.mrf.mxu0
        %v8155 = vadd.f32 %v8142, %v8154
        %v8156 = vpop.f32.mrf.mxu0
        %8157 = vdwg.mxu0
        %8158 = vmatpush.bf16.xpose.msra.mxu0 0
        %8159 = vmatpush.bf16.xpose.msra.mxu0 0
        %8160 = vmatpush.bf16.xpose.msra.mxu0 0
        %8161 = vmatpush.bf16.xpose.msra.mxu0 0
        %8162 = vmatpush.bf16.xpose.msra.mxu0 0
        %8163 = vmatpush.bf16.xpose.msra.mxu0 0
        %8164 = vmatpush.bf16.xpose.msra.mxu0 0
        %8165 = vmatpush.bf16.xpose.msra.mxu0 %v3798
        %8166 = vmatmul.bf16.gmra.mxu0 %v1180
        %v8167 = vpop.f32.mrf.mxu0
        %v8168 = vadd.f32 %v8155, %v8167
        %v8169 = vpop.f32.mrf.mxu0
        %8170 = vdwg.mxu0
        %8171 = vmatpush.bf16.xpose.msra.mxu0 0
        %8172 = vmatpush.bf16.xpose.msra.mxu0 0
        %8173 = vmatpush.bf16.xpose.msra.mxu0 0
        %8174 = vmatpush.bf16.xpose.msra.mxu0 0
        %8175 = vmatpush.bf16.xpose.msra.mxu0 0
        %8176 = vmatpush.bf16.xpose.msra.mxu0 0
        %8177 = vmatpush.bf16.xpose.msra.mxu0 0
        %8178 = vmatpush.bf16.xpose.msra.mxu0 %v3799
        %8179 = vmatmul.bf16.gmra.mxu0 %v1181
        %v8180 = vpop.f32.mrf.mxu0
        %v8181 = vadd.f32 %v8168, %v8180
        %v8182 = vpop.f32.mrf.mxu0
        %8183 = vdwg.mxu0
        %8184 = vmatpush.bf16.xpose.msra.mxu0 0
        %8185 = vmatpush.bf16.xpose.msra.mxu0 0
        %8186 = vmatpush.bf16.xpose.msra.mxu0 0
        %8187 = vmatpush.bf16.xpose.msra.mxu0 0
        %8188 = vmatpush.bf16.xpose.msra.mxu0 0
        %8189 = vmatpush.bf16.xpose.msra.mxu0 0
        %8190 = vmatpush.bf16.xpose.msra.mxu0 0
        %8191 = vmatpush.bf16.xpose.msra.mxu0 %v3800
        %8192 = vmatmul.bf16.gmra.mxu0 %v1184
        %v8193 = vpop.f32.mrf.mxu0
        %v8194 = vadd.f32 %v8181, %v8193
        %v8195 = vpop.f32.mrf.mxu0
        %8196 = vdwg.mxu0
        %8197 = vmatpush.bf16.xpose.msra.mxu0 0
        %8198 = vmatpush.bf16.xpose.msra.mxu0 0
        %8199 = vmatpush.bf16.xpose.msra.mxu0 0
        %8200 = vmatpush.bf16.xpose.msra.mxu0 0
        %8201 = vmatpush.bf16.xpose.msra.mxu0 0
        %8202 = vmatpush.bf16.xpose.msra.mxu0 0
        %8203 = vmatpush.bf16.xpose.msra.mxu0 0
        %8204 = vmatpush.bf16.xpose.msra.mxu0 %v3801
        %8205 = vmatmul.bf16.gmra.mxu0 %v1185
        %v8206 = vpop.f32.mrf.mxu0
        %v8207 = vadd.f32 %v8194, %v8206
        %v8208 = vpop.f32.mrf.mxu0
        %8209 = vdwg.mxu0
        %8210 = vmatpush.bf16.xpose.msra.mxu0 0
        %8211 = vmatpush.bf16.xpose.msra.mxu0 0
        %8212 = vmatpush.bf16.xpose.msra.mxu0 0
        %8213 = vmatpush.bf16.xpose.msra.mxu0 0
        %8214 = vmatpush.bf16.xpose.msra.mxu0 0
        %8215 = vmatpush.bf16.xpose.msra.mxu0 0
        %8216 = vmatpush.bf16.xpose.msra.mxu0 0
        %8217 = vmatpush.bf16.xpose.msra.mxu0 %v3802
        %8218 = vmatmul.bf16.gmra.mxu0 %v1186
        %v8219 = vpop.f32.mrf.mxu0
        %v8220 = vadd.f32 %v8207, %v8219
        %v8221 = vpop.f32.mrf.mxu0
        %8222 = vdwg.mxu0
        %8223 = vmatpush.bf16.xpose.msra.mxu0 0
        %8224 = vmatpush.bf16.xpose.msra.mxu0 0
        %8225 = vmatpush.bf16.xpose.msra.mxu0 0
        %8226 = vmatpush.bf16.xpose.msra.mxu0 0
        %8227 = vmatpush.bf16.xpose.msra.mxu0 0
        %8228 = vmatpush.bf16.xpose.msra.mxu0 0
        %8229 = vmatpush.bf16.xpose.msra.mxu0 0
        %8230 = vmatpush.bf16.xpose.msra.mxu0 %v3803
        %8231 = vmatmul.bf16.gmra.mxu0 %v1187
        %v8232 = vpop.f32.mrf.mxu0
        %v8233 = vadd.f32 %v8220, %v8232
        %v8234 = vpop.f32.mrf.mxu0
        %8235 = vdwg.mxu0
        %8236 = vmatpush.bf16.xpose.msra.mxu0 0
        %8237 = vmatpush.bf16.xpose.msra.mxu0 0
        %8238 = vmatpush.bf16.xpose.msra.mxu0 0
        %8239 = vmatpush.bf16.xpose.msra.mxu0 0
        %8240 = vmatpush.bf16.xpose.msra.mxu0 0
        %8241 = vmatpush.bf16.xpose.msra.mxu0 0
        %8242 = vmatpush.bf16.xpose.msra.mxu0 0
        %8243 = vmatpush.bf16.xpose.msra.mxu0 %v3804
        %8244 = vmatmul.bf16.gmra.mxu0 %v1188
        %v8245 = vpop.f32.mrf.mxu0
        %v8246 = vadd.f32 %v8233, %v8245
        %v8247 = vpop.f32.mrf.mxu0
        %8248 = vdwg.mxu0
        %8249 = vmatpush.bf16.xpose.msra.mxu0 0
        %8250 = vmatpush.bf16.xpose.msra.mxu0 0
        %8251 = vmatpush.bf16.xpose.msra.mxu0 0
        %8252 = vmatpush.bf16.xpose.msra.mxu0 0
        %8253 = vmatpush.bf16.xpose.msra.mxu0 0
        %8254 = vmatpush.bf16.xpose.msra.mxu0 0
        %8255 = vmatpush.bf16.xpose.msra.mxu0 0
        %8256 = vmatpush.bf16.xpose.msra.mxu0 %v3805
        %8257 = vmatmul.bf16.gmra.mxu0 %v1189
        %v8258 = vpop.f32.mrf.mxu0
        %v8259 = vadd.f32 %v8246, %v8258
        %v8260 = vpop.f32.mrf.mxu0
        %8261 = vdwg.mxu0
        %8262 = vmatpush.bf16.xpose.msra.mxu0 0
        %8263 = vmatpush.bf16.xpose.msra.mxu0 0
        %8264 = vmatpush.bf16.xpose.msra.mxu0 0
        %8265 = vmatpush.bf16.xpose.msra.mxu0 0
        %8266 = vmatpush.bf16.xpose.msra.mxu0 0
        %8267 = vmatpush.bf16.xpose.msra.mxu0 0
        %8268 = vmatpush.bf16.xpose.msra.mxu0 0
        %8269 = vmatpush.bf16.xpose.msra.mxu0 %v3806
        %8270 = vmatmul.bf16.gmra.mxu0 %v1190
        %v8271 = vpop.f32.mrf.mxu0
        %v8272 = vadd.f32 %v8259, %v8271
        %v8273 = vpop.f32.mrf.mxu0
        %8274 = vdwg.mxu0
        %8275 = vmatpush.bf16.xpose.msra.mxu0 0
        %8276 = vmatpush.bf16.xpose.msra.mxu0 0
        %8277 = vmatpush.bf16.xpose.msra.mxu0 0
        %8278 = vmatpush.bf16.xpose.msra.mxu0 0
        %8279 = vmatpush.bf16.xpose.msra.mxu0 0
        %8280 = vmatpush.bf16.xpose.msra.mxu0 0
        %8281 = vmatpush.bf16.xpose.msra.mxu0 0
        %8282 = vmatpush.bf16.xpose.msra.mxu0 %v3807
        %8283 = vmatmul.bf16.gmra.mxu0 %v1191
        %v8284 = vpop.f32.mrf.mxu0
        %v8285 = vadd.f32 %v8272, %v8284
        %v8286 = vpop.f32.mrf.mxu0
        %8287 = vdwg.mxu0
        %8288 = vmatpush.bf16.xpose.msra.mxu0 0
        %8289 = vmatpush.bf16.xpose.msra.mxu0 0
        %8290 = vmatpush.bf16.xpose.msra.mxu0 0
        %8291 = vmatpush.bf16.xpose.msra.mxu0 0
        %8292 = vmatpush.bf16.xpose.msra.mxu0 0
        %8293 = vmatpush.bf16.xpose.msra.mxu0 0
        %8294 = vmatpush.bf16.xpose.msra.mxu0 0
        %8295 = vmatpush.bf16.xpose.msra.mxu0 %v3808
        %8296 = vmatmul.bf16.gmra.mxu0 %v1194
        %v8297 = vpop.f32.mrf.mxu0
        %v8298 = vadd.f32 %v8285, %v8297
        %v8299 = vpop.f32.mrf.mxu0
        %8300 = vdwg.mxu0
        %8301 = vmatpush.bf16.xpose.msra.mxu0 0
        %8302 = vmatpush.bf16.xpose.msra.mxu0 0
        %8303 = vmatpush.bf16.xpose.msra.mxu0 0
        %8304 = vmatpush.bf16.xpose.msra.mxu0 0
        %8305 = vmatpush.bf16.xpose.msra.mxu0 0
        %8306 = vmatpush.bf16.xpose.msra.mxu0 0
        %8307 = vmatpush.bf16.xpose.msra.mxu0 0
        %8308 = vmatpush.bf16.xpose.msra.mxu0 %v3809
        %8309 = vmatmul.bf16.gmra.mxu0 %v1195
        %v8310 = vpop.f32.mrf.mxu0
        %v8311 = vadd.f32 %v8298, %v8310
        %v8312 = vpop.f32.mrf.mxu0
        %8313 = vdwg.mxu0
        %8314 = vmatpush.bf16.xpose.msra.mxu0 0
        %8315 = vmatpush.bf16.xpose.msra.mxu0 0
        %8316 = vmatpush.bf16.xpose.msra.mxu0 0
        %8317 = vmatpush.bf16.xpose.msra.mxu0 0
        %8318 = vmatpush.bf16.xpose.msra.mxu0 0
        %8319 = vmatpush.bf16.xpose.msra.mxu0 0
        %8320 = vmatpush.bf16.xpose.msra.mxu0 0
        %8321 = vmatpush.bf16.xpose.msra.mxu0 %v3810
        %8322 = vmatmul.bf16.gmra.mxu0 %v1196
        %v8323 = vpop.f32.mrf.mxu0
        %v8324 = vadd.f32 %v8311, %v8323
        %v8325 = vpop.f32.mrf.mxu0
        %8326 = vdwg.mxu0
        %8327 = vmatpush.bf16.xpose.msra.mxu0 0
        %8328 = vmatpush.bf16.xpose.msra.mxu0 0
        %8329 = vmatpush.bf16.xpose.msra.mxu0 0
        %8330 = vmatpush.bf16.xpose.msra.mxu0 0
        %8331 = vmatpush.bf16.xpose.msra.mxu0 0
        %8332 = vmatpush.bf16.xpose.msra.mxu0 0
        %8333 = vmatpush.bf16.xpose.msra.mxu0 0
        %8334 = vmatpush.bf16.xpose.msra.mxu0 %v3811
        %8335 = vmatmul.bf16.gmra.mxu0 %v1197
        %v8336 = vpop.f32.mrf.mxu0
        %v8337 = vadd.f32 %v8324, %v8336
        %v8338 = vpop.f32.mrf.mxu0
        %8339 = vdwg.mxu0
        %8340 = vmatpush.bf16.xpose.msra.mxu0 0
        %8341 = vmatpush.bf16.xpose.msra.mxu0 0
        %8342 = vmatpush.bf16.xpose.msra.mxu0 0
        %8343 = vmatpush.bf16.xpose.msra.mxu0 0
        %8344 = vmatpush.bf16.xpose.msra.mxu0 0
        %8345 = vmatpush.bf16.xpose.msra.mxu0 0
        %8346 = vmatpush.bf16.xpose.msra.mxu0 0
        %8347 = vmatpush.bf16.xpose.msra.mxu0 %v3812
        %8348 = vmatmul.bf16.gmra.mxu0 %v1198
        %v8349 = vpop.f32.mrf.mxu0
        %v8350 = vadd.f32 %v8337, %v8349
        %v8351 = vpop.f32.mrf.mxu0
        %8352 = vdwg.mxu0
        %8353 = vmatpush.bf16.xpose.msra.mxu0 0
        %8354 = vmatpush.bf16.xpose.msra.mxu0 0
        %8355 = vmatpush.bf16.xpose.msra.mxu0 0
        %8356 = vmatpush.bf16.xpose.msra.mxu0 0
        %8357 = vmatpush.bf16.xpose.msra.mxu0 0
        %8358 = vmatpush.bf16.xpose.msra.mxu0 0
        %8359 = vmatpush.bf16.xpose.msra.mxu0 0
        %8360 = vmatpush.bf16.xpose.msra.mxu0 %v3813
        %8361 = vmatmul.bf16.gmra.mxu0 %v1199
        %v8362 = vpop.f32.mrf.mxu0
        %v8363 = vadd.f32 %v8350, %v8362
        %v8364 = vpop.f32.mrf.mxu0
        %8365 = vdwg.mxu0
        %8366 = vmatpush.bf16.xpose.msra.mxu0 0
        %8367 = vmatpush.bf16.xpose.msra.mxu0 0
        %8368 = vmatpush.bf16.xpose.msra.mxu0 0
        %8369 = vmatpush.bf16.xpose.msra.mxu0 0
        %8370 = vmatpush.bf16.xpose.msra.mxu0 0
        %8371 = vmatpush.bf16.xpose.msra.mxu0 0
        %8372 = vmatpush.bf16.xpose.msra.mxu0 0
        %8373 = vmatpush.bf16.xpose.msra.mxu0 %v3814
        %8374 = vmatmul.bf16.gmra.mxu0 %v1200
        %v8375 = vpop.f32.mrf.mxu0
        %v8376 = vadd.f32 %v8363, %v8375
        %v8377 = vpop.f32.mrf.mxu0
        %8378 = vdwg.mxu0
        %8379 = vmatpush.bf16.xpose.msra.mxu0 0
        %8380 = vmatpush.bf16.xpose.msra.mxu0 0
        %8381 = vmatpush.bf16.xpose.msra.mxu0 0
        %8382 = vmatpush.bf16.xpose.msra.mxu0 0
        %8383 = vmatpush.bf16.xpose.msra.mxu0 0
        %8384 = vmatpush.bf16.xpose.msra.mxu0 0
        %8385 = vmatpush.bf16.xpose.msra.mxu0 0
        %8386 = vmatpush.bf16.xpose.msra.mxu0 %v3815
        %8387 = vmatmul.bf16.gmra.mxu0 %v1201
        %v8388 = vpop.f32.mrf.mxu0
        %v8389 = vadd.f32 %v8376, %v8388
        %v8390 = vpop.f32.mrf.mxu0
        %8391 = vdwg.mxu0
        %8392 = vmatpush.bf16.xpose.msra.mxu0 0
        %8393 = vmatpush.bf16.xpose.msra.mxu0 0
        %8394 = vmatpush.bf16.xpose.msra.mxu0 0
        %8395 = vmatpush.bf16.xpose.msra.mxu0 0
        %8396 = vmatpush.bf16.xpose.msra.mxu0 0
        %8397 = vmatpush.bf16.xpose.msra.mxu0 0
        %8398 = vmatpush.bf16.xpose.msra.mxu0 0
        %8399 = vmatpush.bf16.xpose.msra.mxu0 %v3816
        %8400 = vmatmul.bf16.gmra.mxu0 %v1204
        %v8401 = vpop.f32.mrf.mxu0
        %v8402 = vadd.f32 %v8389, %v8401
        %v8403 = vpop.f32.mrf.mxu0
        %8404 = vdwg.mxu0
        %8405 = vmatpush.bf16.xpose.msra.mxu0 0
        %8406 = vmatpush.bf16.xpose.msra.mxu0 0
        %8407 = vmatpush.bf16.xpose.msra.mxu0 0
        %8408 = vmatpush.bf16.xpose.msra.mxu0 0
        %8409 = vmatpush.bf16.xpose.msra.mxu0 0
        %8410 = vmatpush.bf16.xpose.msra.mxu0 0
        %8411 = vmatpush.bf16.xpose.msra.mxu0 0
        %8412 = vmatpush.bf16.xpose.msra.mxu0 %v3817
        %8413 = vmatmul.bf16.gmra.mxu0 %v1205
        %v8414 = vpop.f32.mrf.mxu0
        %v8415 = vadd.f32 %v8402, %v8414
        %v8416 = vpop.f32.mrf.mxu0
        %8417 = vdwg.mxu0
        %8418 = vmatpush.bf16.xpose.msra.mxu0 0
        %8419 = vmatpush.bf16.xpose.msra.mxu0 0
        %8420 = vmatpush.bf16.xpose.msra.mxu0 0
        %8421 = vmatpush.bf16.xpose.msra.mxu0 0
        %8422 = vmatpush.bf16.xpose.msra.mxu0 0
        %8423 = vmatpush.bf16.xpose.msra.mxu0 0
        %8424 = vmatpush.bf16.xpose.msra.mxu0 0
        %8425 = vmatpush.bf16.xpose.msra.mxu0 %v3818
        %8426 = vmatmul.bf16.gmra.mxu0 %v1206
        %v8427 = vpop.f32.mrf.mxu0
        %v8428 = vadd.f32 %v8415, %v8427
        %v8429 = vpop.f32.mrf.mxu0
        %8430 = vdwg.mxu0
        %8431 = vmatpush.bf16.xpose.msra.mxu0 0
        %8432 = vmatpush.bf16.xpose.msra.mxu0 0
        %8433 = vmatpush.bf16.xpose.msra.mxu0 0
        %8434 = vmatpush.bf16.xpose.msra.mxu0 0
        %8435 = vmatpush.bf16.xpose.msra.mxu0 0
        %8436 = vmatpush.bf16.xpose.msra.mxu0 0
        %8437 = vmatpush.bf16.xpose.msra.mxu0 0
        %8438 = vmatpush.bf16.xpose.msra.mxu0 %v3819
        %8439 = vmatmul.bf16.gmra.mxu0 %v1207
        %v8440 = vpop.f32.mrf.mxu0
        %v8441 = vadd.f32 %v8428, %v8440
        %v8442 = vpop.f32.mrf.mxu0
        %8443 = vdwg.mxu0
        %8444 = vmatpush.bf16.xpose.msra.mxu0 0
        %8445 = vmatpush.bf16.xpose.msra.mxu0 0
        %8446 = vmatpush.bf16.xpose.msra.mxu0 0
        %8447 = vmatpush.bf16.xpose.msra.mxu0 0
        %8448 = vmatpush.bf16.xpose.msra.mxu0 0
        %8449 = vmatpush.bf16.xpose.msra.mxu0 0
        %8450 = vmatpush.bf16.xpose.msra.mxu0 0
        %8451 = vmatpush.bf16.xpose.msra.mxu0 %v3820
        %8452 = vmatmul.bf16.gmra.mxu0 %v1208
        %v8453 = vpop.f32.mrf.mxu0
        %v8454 = vadd.f32 %v8441, %v8453
        %v8455 = vpop.f32.mrf.mxu0
        %8456 = vdwg.mxu0
        %8457 = vmatpush.bf16.xpose.msra.mxu0 0
        %8458 = vmatpush.bf16.xpose.msra.mxu0 0
        %8459 = vmatpush.bf16.xpose.msra.mxu0 0
        %8460 = vmatpush.bf16.xpose.msra.mxu0 0
        %8461 = vmatpush.bf16.xpose.msra.mxu0 0
        %8462 = vmatpush.bf16.xpose.msra.mxu0 0
        %8463 = vmatpush.bf16.xpose.msra.mxu0 0
        %8464 = vmatpush.bf16.xpose.msra.mxu0 %v3821
        %8465 = vmatmul.bf16.gmra.mxu0 %v1209
        %v8466 = vpop.f32.mrf.mxu0
        %v8467 = vadd.f32 %v8454, %v8466
        %v8468 = vpop.f32.mrf.mxu0
        %8469 = vdwg.mxu0
        %8470 = vmatpush.bf16.xpose.msra.mxu0 0
        %8471 = vmatpush.bf16.xpose.msra.mxu0 0
        %8472 = vmatpush.bf16.xpose.msra.mxu0 0
        %8473 = vmatpush.bf16.xpose.msra.mxu0 0
        %8474 = vmatpush.bf16.xpose.msra.mxu0 0
        %8475 = vmatpush.bf16.xpose.msra.mxu0 0
        %8476 = vmatpush.bf16.xpose.msra.mxu0 0
        %8477 = vmatpush.bf16.xpose.msra.mxu0 %v3822
        %8478 = vmatmul.bf16.gmra.mxu0 %v1210
        %v8479 = vpop.f32.mrf.mxu0
        %v8480 = vadd.f32 %v8467, %v8479
        %v8481 = vpop.f32.mrf.mxu0
        %8482 = vdwg.mxu0
        %8483 = vmatpush.bf16.xpose.msra.mxu0 0
        %8484 = vmatpush.bf16.xpose.msra.mxu0 0
        %8485 = vmatpush.bf16.xpose.msra.mxu0 0
        %8486 = vmatpush.bf16.xpose.msra.mxu0 0
        %8487 = vmatpush.bf16.xpose.msra.mxu0 0
        %8488 = vmatpush.bf16.xpose.msra.mxu0 0
        %8489 = vmatpush.bf16.xpose.msra.mxu0 0
        %8490 = vmatpush.bf16.xpose.msra.mxu0 %v3823
        %8491 = vmatmul.bf16.gmra.mxu0 %v1211
        %v8492 = vpop.f32.mrf.mxu0
        %v8493 = vadd.f32 %v8480, %v8492
        %v8494 = vpop.f32.mrf.mxu0
        %8495 = vdwg.mxu0
        %8496 = vmatpush.bf16.xpose.msra.mxu0 0
        %8497 = vmatpush.bf16.xpose.msra.mxu0 0
        %8498 = vmatpush.bf16.xpose.msra.mxu0 0
        %8499 = vmatpush.bf16.xpose.msra.mxu0 0
        %8500 = vmatpush.bf16.xpose.msra.mxu0 0
        %8501 = vmatpush.bf16.xpose.msra.mxu0 0
        %8502 = vmatpush.bf16.xpose.msra.mxu0 0
        %8503 = vmatpush.bf16.xpose.msra.mxu0 %v3824
        %8504 = vmatmul.bf16.gmra.mxu0 %v1214
        %v8505 = vpop.f32.mrf.mxu0
        %v8506 = vadd.f32 %v8493, %v8505
        %v8507 = vpop.f32.mrf.mxu0
        %8508 = vdwg.mxu0
        %8509 = vmatpush.bf16.xpose.msra.mxu0 0
        %8510 = vmatpush.bf16.xpose.msra.mxu0 0
        %8511 = vmatpush.bf16.xpose.msra.mxu0 0
        %8512 = vmatpush.bf16.xpose.msra.mxu0 0
        %8513 = vmatpush.bf16.xpose.msra.mxu0 0
        %8514 = vmatpush.bf16.xpose.msra.mxu0 0
        %8515 = vmatpush.bf16.xpose.msra.mxu0 0
        %8516 = vmatpush.bf16.xpose.msra.mxu0 %v3825
        %8517 = vmatmul.bf16.gmra.mxu0 %v1215
        %v8518 = vpop.f32.mrf.mxu0
        %v8519 = vadd.f32 %v8506, %v8518
        %v8520 = vpop.f32.mrf.mxu0
        %8521 = vdwg.mxu0
        %8522 = vmatpush.bf16.xpose.msra.mxu0 0
        %8523 = vmatpush.bf16.xpose.msra.mxu0 0
        %8524 = vmatpush.bf16.xpose.msra.mxu0 0
        %8525 = vmatpush.bf16.xpose.msra.mxu0 0
        %8526 = vmatpush.bf16.xpose.msra.mxu0 0
        %8527 = vmatpush.bf16.xpose.msra.mxu0 0
        %8528 = vmatpush.bf16.xpose.msra.mxu0 0
        %8529 = vmatpush.bf16.xpose.msra.mxu0 %v3826
        %8530 = vmatmul.bf16.gmra.mxu0 %v1216
        %v8531 = vpop.f32.mrf.mxu0
        %v8532 = vadd.f32 %v8519, %v8531
        %v8533 = vpop.f32.mrf.mxu0
        %8534 = vdwg.mxu0
        %8535 = vmatpush.bf16.xpose.msra.mxu0 0
        %8536 = vmatpush.bf16.xpose.msra.mxu0 0
        %8537 = vmatpush.bf16.xpose.msra.mxu0 0
        %8538 = vmatpush.bf16.xpose.msra.mxu0 0
        %8539 = vmatpush.bf16.xpose.msra.mxu0 0
        %8540 = vmatpush.bf16.xpose.msra.mxu0 0
        %8541 = vmatpush.bf16.xpose.msra.mxu0 0
        %8542 = vmatpush.bf16.xpose.msra.mxu0 %v3827
        %8543 = vmatmul.bf16.gmra.mxu0 %v1217
        %v8544 = vpop.f32.mrf.mxu0
        %v8545 = vadd.f32 %v8532, %v8544
        %v8546 = vpop.f32.mrf.mxu0
        %8547 = vdwg.mxu0
        %8548 = vmatpush.bf16.xpose.msra.mxu0 0
        %8549 = vmatpush.bf16.xpose.msra.mxu0 0
        %8550 = vmatpush.bf16.xpose.msra.mxu0 0
        %8551 = vmatpush.bf16.xpose.msra.mxu0 0
        %8552 = vmatpush.bf16.xpose.msra.mxu0 0
        %8553 = vmatpush.bf16.xpose.msra.mxu0 0
        %8554 = vmatpush.bf16.xpose.msra.mxu0 0
        %8555 = vmatpush.bf16.xpose.msra.mxu0 %v3828
        %8556 = vmatmul.bf16.gmra.mxu0 %v1218
        %v8557 = vpop.f32.mrf.mxu0
        %v8558 = vadd.f32 %v8545, %v8557
        %v8559 = vpop.f32.mrf.mxu0
        %8560 = vdwg.mxu0
        %8561 = vmatpush.bf16.xpose.msra.mxu0 0
        %8562 = vmatpush.bf16.xpose.msra.mxu0 0
        %8563 = vmatpush.bf16.xpose.msra.mxu0 0
        %8564 = vmatpush.bf16.xpose.msra.mxu0 0
        %8565 = vmatpush.bf16.xpose.msra.mxu0 0
        %8566 = vmatpush.bf16.xpose.msra.mxu0 0
        %8567 = vmatpush.bf16.xpose.msra.mxu0 0
        %8568 = vmatpush.bf16.xpose.msra.mxu0 %v3829
        %8569 = vmatmul.bf16.gmra.mxu0 %v1219
        %v8570 = vpop.f32.mrf.mxu0
        %v8571 = vadd.f32 %v8558, %v8570
        %v8572 = vpop.f32.mrf.mxu0
        %8573 = vdwg.mxu0
        %8574 = vmatpush.bf16.xpose.msra.mxu0 0
        %8575 = vmatpush.bf16.xpose.msra.mxu0 0
        %8576 = vmatpush.bf16.xpose.msra.mxu0 0
        %8577 = vmatpush.bf16.xpose.msra.mxu0 0
        %8578 = vmatpush.bf16.xpose.msra.mxu0 0
        %8579 = vmatpush.bf16.xpose.msra.mxu0 0
        %8580 = vmatpush.bf16.xpose.msra.mxu0 0
        %8581 = vmatpush.bf16.xpose.msra.mxu0 %v3830
        %8582 = vmatmul.bf16.gmra.mxu0 %v1220
        %v8583 = vpop.f32.mrf.mxu0
        %v8584 = vadd.f32 %v8571, %v8583
        %v8585 = vpop.f32.mrf.mxu0
        %8586 = vdwg.mxu0
        %8587 = vmatpush.bf16.xpose.msra.mxu0 0
        %8588 = vmatpush.bf16.xpose.msra.mxu0 0
        %8589 = vmatpush.bf16.xpose.msra.mxu0 0
        %8590 = vmatpush.bf16.xpose.msra.mxu0 0
        %8591 = vmatpush.bf16.xpose.msra.mxu0 0
        %8592 = vmatpush.bf16.xpose.msra.mxu0 0
        %8593 = vmatpush.bf16.xpose.msra.mxu0 0
        %8594 = vmatpush.bf16.xpose.msra.mxu0 %v3831
        %8595 = vmatmul.bf16.gmra.mxu0 %v1221
        %v8596 = vpop.f32.mrf.mxu0
        %v8597 = vadd.f32 %v8584, %v8596
        %v8598 = vpop.f32.mrf.mxu0
        %8599 = vdwg.mxu0
        %8600 = vmatpush.bf16.xpose.msra.mxu0 0
        %8601 = vmatpush.bf16.xpose.msra.mxu0 0
        %8602 = vmatpush.bf16.xpose.msra.mxu0 0
        %8603 = vmatpush.bf16.xpose.msra.mxu0 0
        %8604 = vmatpush.bf16.xpose.msra.mxu0 0
        %8605 = vmatpush.bf16.xpose.msra.mxu0 0
        %8606 = vmatpush.bf16.xpose.msra.mxu0 0
        %8607 = vmatpush.bf16.xpose.msra.mxu0 %v3832
        %8608 = vmatmul.bf16.gmra.mxu0 %v1224
        %v8609 = vpop.f32.mrf.mxu0
        %v8610 = vadd.f32 %v8597, %v8609
        %v8611 = vpop.f32.mrf.mxu0
        %8612 = vdwg.mxu0
        %8613 = vmatpush.bf16.xpose.msra.mxu0 0
        %8614 = vmatpush.bf16.xpose.msra.mxu0 0
        %8615 = vmatpush.bf16.xpose.msra.mxu0 0
        %8616 = vmatpush.bf16.xpose.msra.mxu0 0
        %8617 = vmatpush.bf16.xpose.msra.mxu0 0
        %8618 = vmatpush.bf16.xpose.msra.mxu0 0
        %8619 = vmatpush.bf16.xpose.msra.mxu0 0
        %8620 = vmatpush.bf16.xpose.msra.mxu0 %v3833
        %8621 = vmatmul.bf16.gmra.mxu0 %v1225
        %v8622 = vpop.f32.mrf.mxu0
        %v8623 = vadd.f32 %v8610, %v8622
        %v8624 = vpop.f32.mrf.mxu0
        %8625 = vdwg.mxu0
        %8626 = vmatpush.bf16.xpose.msra.mxu0 0
        %8627 = vmatpush.bf16.xpose.msra.mxu0 0
        %8628 = vmatpush.bf16.xpose.msra.mxu0 0
        %8629 = vmatpush.bf16.xpose.msra.mxu0 0
        %8630 = vmatpush.bf16.xpose.msra.mxu0 0
        %8631 = vmatpush.bf16.xpose.msra.mxu0 0
        %8632 = vmatpush.bf16.xpose.msra.mxu0 0
        %8633 = vmatpush.bf16.xpose.msra.mxu0 %v3834
        %8634 = vmatmul.bf16.gmra.mxu0 %v1226
        %v8635 = vpop.f32.mrf.mxu0
        %v8636 = vadd.f32 %v8623, %v8635
        %v8637 = vpop.f32.mrf.mxu0
        %8638 = vdwg.mxu0
        %8639 = vmatpush.bf16.xpose.msra.mxu0 0
        %8640 = vmatpush.bf16.xpose.msra.mxu0 0
        %8641 = vmatpush.bf16.xpose.msra.mxu0 0
        %8642 = vmatpush.bf16.xpose.msra.mxu0 0
        %8643 = vmatpush.bf16.xpose.msra.mxu0 0
        %8644 = vmatpush.bf16.xpose.msra.mxu0 0
        %8645 = vmatpush.bf16.xpose.msra.mxu0 0
        %8646 = vmatpush.bf16.xpose.msra.mxu0 %v3835
        %8647 = vmatmul.bf16.gmra.mxu0 %v1227
        %v8648 = vpop.f32.mrf.mxu0
        %v8649 = vadd.f32 %v8636, %v8648
        %v8650 = vpop.f32.mrf.mxu0
        %8651 = vdwg.mxu0
        %8652 = vmatpush.bf16.xpose.msra.mxu0 0
        %8653 = vmatpush.bf16.xpose.msra.mxu0 0
        %8654 = vmatpush.bf16.xpose.msra.mxu0 0
        %8655 = vmatpush.bf16.xpose.msra.mxu0 0
        %8656 = vmatpush.bf16.xpose.msra.mxu0 0
        %8657 = vmatpush.bf16.xpose.msra.mxu0 0
        %8658 = vmatpush.bf16.xpose.msra.mxu0 0
        %8659 = vmatpush.bf16.xpose.msra.mxu0 %v3836
        %8660 = vmatmul.bf16.gmra.mxu0 %v1228
        %v8661 = vpop.f32.mrf.mxu0
        %v8662 = vadd.f32 %v8649, %v8661
        %v8663 = vpop.f32.mrf.mxu0
        %8664 = vdwg.mxu0
        %8665 = vmatpush.bf16.xpose.msra.mxu0 0
        %8666 = vmatpush.bf16.xpose.msra.mxu0 0
        %8667 = vmatpush.bf16.xpose.msra.mxu0 0
        %8668 = vmatpush.bf16.xpose.msra.mxu0 0
        %8669 = vmatpush.bf16.xpose.msra.mxu0 0
        %8670 = vmatpush.bf16.xpose.msra.mxu0 0
        %8671 = vmatpush.bf16.xpose.msra.mxu0 0
        %8672 = vmatpush.bf16.xpose.msra.mxu0 %v3837
        %8673 = vmatmul.bf16.gmra.mxu0 %v1229
        %v8674 = vpop.f32.mrf.mxu0
        %v8675 = vadd.f32 %v8662, %v8674
        %v8676 = vpop.f32.mrf.mxu0
        %8677 = vdwg.mxu0
        %8678 = vmatpush.bf16.xpose.msra.mxu0 0
        %8679 = vmatpush.bf16.xpose.msra.mxu0 0
        %8680 = vmatpush.bf16.xpose.msra.mxu0 0
        %8681 = vmatpush.bf16.xpose.msra.mxu0 0
        %8682 = vmatpush.bf16.xpose.msra.mxu0 0
        %8683 = vmatpush.bf16.xpose.msra.mxu0 0
        %8684 = vmatpush.bf16.xpose.msra.mxu0 0
        %8685 = vmatpush.bf16.xpose.msra.mxu0 %v3838
        %8686 = vmatmul.bf16.gmra.mxu0 %v1230
        %v8687 = vpop.f32.mrf.mxu0
        %v8688 = vadd.f32 %v8675, %v8687
        %v8689 = vpop.f32.mrf.mxu0
        %8690 = vdwg.mxu0
        %8691 = vmatpush.bf16.xpose.msra.mxu0 0
        %8692 = vmatpush.bf16.xpose.msra.mxu0 0
        %8693 = vmatpush.bf16.xpose.msra.mxu0 0
        %8694 = vmatpush.bf16.xpose.msra.mxu0 0
        %8695 = vmatpush.bf16.xpose.msra.mxu0 0
        %8696 = vmatpush.bf16.xpose.msra.mxu0 0
        %8697 = vmatpush.bf16.xpose.msra.mxu0 0
        %8698 = vmatpush.bf16.xpose.msra.mxu0 %v3839
        %8699 = vmatmul.bf16.gmra.mxu0 %v1231
        %v8700 = vpop.f32.mrf.mxu0
        %v8701 = vadd.f32 %v8688, %v8700
        %v8702 = vpop.f32.mrf.mxu0
        %8703 = vdwg.mxu0
        %8704 = vmatpush.bf16.xpose.msra.mxu0 0
        %8705 = vmatpush.bf16.xpose.msra.mxu0 0
        %8706 = vmatpush.bf16.xpose.msra.mxu0 0
        %8707 = vmatpush.bf16.xpose.msra.mxu0 0
        %8708 = vmatpush.bf16.xpose.msra.mxu0 0
        %8709 = vmatpush.bf16.xpose.msra.mxu0 0
        %8710 = vmatpush.bf16.xpose.msra.mxu0 0
        %8711 = vmatpush.bf16.xpose.msra.mxu0 %v3840
        %8712 = vmatmul.bf16.gmra.mxu0 %v1234
        %v8713 = vpop.f32.mrf.mxu0
        %v8714 = vadd.f32 %v8701, %v8713
        %v8715 = vpop.f32.mrf.mxu0
        %8716 = vdwg.mxu0
        %8717 = vmatpush.bf16.xpose.msra.mxu0 0
        %8718 = vmatpush.bf16.xpose.msra.mxu0 0
        %8719 = vmatpush.bf16.xpose.msra.mxu0 0
        %8720 = vmatpush.bf16.xpose.msra.mxu0 0
        %8721 = vmatpush.bf16.xpose.msra.mxu0 0
        %8722 = vmatpush.bf16.xpose.msra.mxu0 0
        %8723 = vmatpush.bf16.xpose.msra.mxu0 0
        %8724 = vmatpush.bf16.xpose.msra.mxu0 %v3841
        %8725 = vmatmul.bf16.gmra.mxu0 %v1235
        %v8726 = vpop.f32.mrf.mxu0
        %v8727 = vadd.f32 %v8714, %v8726
        %v8728 = vpop.f32.mrf.mxu0
        %8729 = vdwg.mxu0
        %8730 = vmatpush.bf16.xpose.msra.mxu0 0
        %8731 = vmatpush.bf16.xpose.msra.mxu0 0
        %8732 = vmatpush.bf16.xpose.msra.mxu0 0
        %8733 = vmatpush.bf16.xpose.msra.mxu0 0
        %8734 = vmatpush.bf16.xpose.msra.mxu0 0
        %8735 = vmatpush.bf16.xpose.msra.mxu0 0
        %8736 = vmatpush.bf16.xpose.msra.mxu0 0
        %8737 = vmatpush.bf16.xpose.msra.mxu0 %v3842
        %8738 = vmatmul.bf16.gmra.mxu0 %v1236
        %v8739 = vpop.f32.mrf.mxu0
        %v8740 = vadd.f32 %v8727, %v8739
        %v8741 = vpop.f32.mrf.mxu0
        %8742 = vdwg.mxu0
        %8743 = vmatpush.bf16.xpose.msra.mxu0 0
        %8744 = vmatpush.bf16.xpose.msra.mxu0 0
        %8745 = vmatpush.bf16.xpose.msra.mxu0 0
        %8746 = vmatpush.bf16.xpose.msra.mxu0 0
        %8747 = vmatpush.bf16.xpose.msra.mxu0 0
        %8748 = vmatpush.bf16.xpose.msra.mxu0 0
        %8749 = vmatpush.bf16.xpose.msra.mxu0 0
        %8750 = vmatpush.bf16.xpose.msra.mxu0 %v3843
        %8751 = vmatmul.bf16.gmra.mxu0 %v1237
        %v8752 = vpop.f32.mrf.mxu0
        %v8753 = vadd.f32 %v8740, %v8752
        %v8754 = vpop.f32.mrf.mxu0
        %8755 = vdwg.mxu0
        %8756 = vmatpush.bf16.xpose.msra.mxu0 0
        %8757 = vmatpush.bf16.xpose.msra.mxu0 0
        %8758 = vmatpush.bf16.xpose.msra.mxu0 0
        %8759 = vmatpush.bf16.xpose.msra.mxu0 0
        %8760 = vmatpush.bf16.xpose.msra.mxu0 0
        %8761 = vmatpush.bf16.xpose.msra.mxu0 0
        %8762 = vmatpush.bf16.xpose.msra.mxu0 0
        %8763 = vmatpush.bf16.xpose.msra.mxu0 %v3844
        %8764 = vmatmul.bf16.gmra.mxu0 %v1238
        %v8765 = vpop.f32.mrf.mxu0
        %v8766 = vadd.f32 %v8753, %v8765
        %v8767 = vpop.f32.mrf.mxu0
        %8768 = vdwg.mxu0
        %8769 = vmatpush.bf16.xpose.msra.mxu0 0
        %8770 = vmatpush.bf16.xpose.msra.mxu0 0
        %8771 = vmatpush.bf16.xpose.msra.mxu0 0
        %8772 = vmatpush.bf16.xpose.msra.mxu0 0
        %8773 = vmatpush.bf16.xpose.msra.mxu0 0
        %8774 = vmatpush.bf16.xpose.msra.mxu0 0
        %8775 = vmatpush.bf16.xpose.msra.mxu0 0
        %8776 = vmatpush.bf16.xpose.msra.mxu0 %v3845
        %8777 = vmatmul.bf16.gmra.mxu0 %v1239
        %v8778 = vpop.f32.mrf.mxu0
        %v8779 = vadd.f32 %v8766, %v8778
        %v8780 = vpop.f32.mrf.mxu0
        %8781 = vdwg.mxu0
        %8782 = vmatpush.bf16.xpose.msra.mxu0 0
        %8783 = vmatpush.bf16.xpose.msra.mxu0 0
        %8784 = vmatpush.bf16.xpose.msra.mxu0 0
        %8785 = vmatpush.bf16.xpose.msra.mxu0 0
        %8786 = vmatpush.bf16.xpose.msra.mxu0 0
        %8787 = vmatpush.bf16.xpose.msra.mxu0 0
        %8788 = vmatpush.bf16.xpose.msra.mxu0 0
        %8789 = vmatpush.bf16.xpose.msra.mxu0 %v3846
        %8790 = vmatmul.bf16.gmra.mxu0 %v1240
        %v8791 = vpop.f32.mrf.mxu0
        %v8792 = vadd.f32 %v8779, %v8791
        %v8793 = vpop.f32.mrf.mxu0
        %8794 = vdwg.mxu0
        %8795 = vmatpush.bf16.xpose.msra.mxu0 0
        %8796 = vmatpush.bf16.xpose.msra.mxu0 0
        %8797 = vmatpush.bf16.xpose.msra.mxu0 0
        %8798 = vmatpush.bf16.xpose.msra.mxu0 0
        %8799 = vmatpush.bf16.xpose.msra.mxu0 0
        %8800 = vmatpush.bf16.xpose.msra.mxu0 0
        %8801 = vmatpush.bf16.xpose.msra.mxu0 0
        %8802 = vmatpush.bf16.xpose.msra.mxu0 %v3847
        %8803 = vmatmul.bf16.gmra.mxu0 %v1241
        %v8804 = vpop.f32.mrf.mxu0
        %v8805 = vadd.f32 %v8792, %v8804
        %v8806 = vpop.f32.mrf.mxu0
        %8807 = vdwg.mxu0
        %8808 = vmatpush.bf16.xpose.msra.mxu0 0
        %8809 = vmatpush.bf16.xpose.msra.mxu0 0
        %8810 = vmatpush.bf16.xpose.msra.mxu0 0
        %8811 = vmatpush.bf16.xpose.msra.mxu0 0
        %8812 = vmatpush.bf16.xpose.msra.mxu0 0
        %8813 = vmatpush.bf16.xpose.msra.mxu0 0
        %8814 = vmatpush.bf16.xpose.msra.mxu0 0
        %8815 = vmatpush.bf16.xpose.msra.mxu0 %v3848
        %8816 = vmatmul.bf16.gmra.mxu0 %v1244
        %v8817 = vpop.f32.mrf.mxu0
        %v8818 = vadd.f32 %v8805, %v8817
        %v8819 = vpop.f32.mrf.mxu0
        %8820 = vdwg.mxu0
        %8821 = vmatpush.bf16.xpose.msra.mxu0 0
        %8822 = vmatpush.bf16.xpose.msra.mxu0 0
        %8823 = vmatpush.bf16.xpose.msra.mxu0 0
        %8824 = vmatpush.bf16.xpose.msra.mxu0 0
        %8825 = vmatpush.bf16.xpose.msra.mxu0 0
        %8826 = vmatpush.bf16.xpose.msra.mxu0 0
        %8827 = vmatpush.bf16.xpose.msra.mxu0 0
        %8828 = vmatpush.bf16.xpose.msra.mxu0 %v3849
        %8829 = vmatmul.bf16.gmra.mxu0 %v1245
        %v8830 = vpop.f32.mrf.mxu0
        %v8831 = vadd.f32 %v8818, %v8830
        %v8832 = vpop.f32.mrf.mxu0
        %8833 = vdwg.mxu0
        %8834 = vmatpush.bf16.xpose.msra.mxu0 0
        %8835 = vmatpush.bf16.xpose.msra.mxu0 0
        %8836 = vmatpush.bf16.xpose.msra.mxu0 0
        %8837 = vmatpush.bf16.xpose.msra.mxu0 0
        %8838 = vmatpush.bf16.xpose.msra.mxu0 0
        %8839 = vmatpush.bf16.xpose.msra.mxu0 0
        %8840 = vmatpush.bf16.xpose.msra.mxu0 0
        %8841 = vmatpush.bf16.xpose.msra.mxu0 %v3850
        %8842 = vmatmul.bf16.gmra.mxu0 %v1246
        %v8843 = vpop.f32.mrf.mxu0
        %v8844 = vadd.f32 %v8831, %v8843
        %v8845 = vpop.f32.mrf.mxu0
        %8846 = vdwg.mxu0
        %8847 = vmatpush.bf16.xpose.msra.mxu0 0
        %8848 = vmatpush.bf16.xpose.msra.mxu0 0
        %8849 = vmatpush.bf16.xpose.msra.mxu0 0
        %8850 = vmatpush.bf16.xpose.msra.mxu0 0
        %8851 = vmatpush.bf16.xpose.msra.mxu0 0
        %8852 = vmatpush.bf16.xpose.msra.mxu0 0
        %8853 = vmatpush.bf16.xpose.msra.mxu0 0
        %8854 = vmatpush.bf16.xpose.msra.mxu0 %v3851
        %8855 = vmatmul.bf16.gmra.mxu0 %v1247
        %v8856 = vpop.f32.mrf.mxu0
        %v8857 = vadd.f32 %v8844, %v8856
        %v8858 = vpop.f32.mrf.mxu0
        %8859 = vdwg.mxu0
        %8860 = vmatpush.bf16.xpose.msra.mxu0 0
        %8861 = vmatpush.bf16.xpose.msra.mxu0 0
        %8862 = vmatpush.bf16.xpose.msra.mxu0 0
        %8863 = vmatpush.bf16.xpose.msra.mxu0 0
        %8864 = vmatpush.bf16.xpose.msra.mxu0 0
        %8865 = vmatpush.bf16.xpose.msra.mxu0 0
        %8866 = vmatpush.bf16.xpose.msra.mxu0 0
        %8867 = vmatpush.bf16.xpose.msra.mxu0 %v3852
        %8868 = vmatmul.bf16.gmra.mxu0 %v1248
        %v8869 = vpop.f32.mrf.mxu0
        %v8870 = vadd.f32 %v8857, %v8869
        %v8871 = vpop.f32.mrf.mxu0
        %8872 = vdwg.mxu0
        %8873 = vmatpush.bf16.xpose.msra.mxu0 0
        %8874 = vmatpush.bf16.xpose.msra.mxu0 0
        %8875 = vmatpush.bf16.xpose.msra.mxu0 0
        %8876 = vmatpush.bf16.xpose.msra.mxu0 0
        %8877 = vmatpush.bf16.xpose.msra.mxu0 0
        %8878 = vmatpush.bf16.xpose.msra.mxu0 0
        %8879 = vmatpush.bf16.xpose.msra.mxu0 0
        %8880 = vmatpush.bf16.xpose.msra.mxu0 %v3853
        %8881 = vmatmul.bf16.gmra.mxu0 %v1249
        %v8882 = vpop.f32.mrf.mxu0
        %v8883 = vadd.f32 %v8870, %v8882
        %v8884 = vpop.f32.mrf.mxu0
        %8885 = vdwg.mxu0
        %8886 = vmatpush.bf16.xpose.msra.mxu0 0
        %8887 = vmatpush.bf16.xpose.msra.mxu0 0
        %8888 = vmatpush.bf16.xpose.msra.mxu0 0
        %8889 = vmatpush.bf16.xpose.msra.mxu0 0
        %8890 = vmatpush.bf16.xpose.msra.mxu0 0
        %8891 = vmatpush.bf16.xpose.msra.mxu0 0
        %8892 = vmatpush.bf16.xpose.msra.mxu0 0
        %8893 = vmatpush.bf16.xpose.msra.mxu0 %v3854
        %8894 = vmatmul.bf16.gmra.mxu0 %v1250
        %v8895 = vpop.f32.mrf.mxu0
        %v8896 = vadd.f32 %v8883, %v8895
        %v8897 = vpop.f32.mrf.mxu0
        %8898 = vdwg.mxu0
        %8899 = vmatpush.bf16.xpose.msra.mxu0 0
        %8900 = vmatpush.bf16.xpose.msra.mxu0 0
        %8901 = vmatpush.bf16.xpose.msra.mxu0 0
        %8902 = vmatpush.bf16.xpose.msra.mxu0 0
        %8903 = vmatpush.bf16.xpose.msra.mxu0 0
        %8904 = vmatpush.bf16.xpose.msra.mxu0 0
        %8905 = vmatpush.bf16.xpose.msra.mxu0 0
        %8906 = vmatpush.bf16.xpose.msra.mxu0 %v3855
        %8907 = vmatmul.bf16.gmra.mxu0 %v1251
        %v8908 = vpop.f32.mrf.mxu0
        %v8909 = vadd.f32 %v8896, %v8908
        %v8910 = vpop.f32.mrf.mxu0
        %8911 = vdwg.mxu0
        %8912 = vmatpush.bf16.xpose.msra.mxu0 0
        %8913 = vmatpush.bf16.xpose.msra.mxu0 0
        %8914 = vmatpush.bf16.xpose.msra.mxu0 0
        %8915 = vmatpush.bf16.xpose.msra.mxu0 0
        %8916 = vmatpush.bf16.xpose.msra.mxu0 0
        %8917 = vmatpush.bf16.xpose.msra.mxu0 0
        %8918 = vmatpush.bf16.xpose.msra.mxu0 0
        %8919 = vmatpush.bf16.xpose.msra.mxu0 %v3856
        %8920 = vmatmul.bf16.gmra.mxu0 %v1254
        %v8921 = vpop.f32.mrf.mxu0
        %v8922 = vadd.f32 %v8909, %v8921
        %v8923 = vpop.f32.mrf.mxu0
        %8924 = vdwg.mxu0
        %8925 = vmatpush.bf16.xpose.msra.mxu0 0
        %8926 = vmatpush.bf16.xpose.msra.mxu0 0
        %8927 = vmatpush.bf16.xpose.msra.mxu0 0
        %8928 = vmatpush.bf16.xpose.msra.mxu0 0
        %8929 = vmatpush.bf16.xpose.msra.mxu0 0
        %8930 = vmatpush.bf16.xpose.msra.mxu0 0
        %8931 = vmatpush.bf16.xpose.msra.mxu0 0
        %8932 = vmatpush.bf16.xpose.msra.mxu0 %v3857
        %8933 = vmatmul.bf16.gmra.mxu0 %v1255
        %v8934 = vpop.f32.mrf.mxu0
        %v8935 = vadd.f32 %v8922, %v8934
        %v8936 = vpop.f32.mrf.mxu0
        %8937 = vdwg.mxu0
        %8938 = vmatpush.bf16.xpose.msra.mxu0 0
        %8939 = vmatpush.bf16.xpose.msra.mxu0 0
        %8940 = vmatpush.bf16.xpose.msra.mxu0 0
        %8941 = vmatpush.bf16.xpose.msra.mxu0 0
        %8942 = vmatpush.bf16.xpose.msra.mxu0 0
        %8943 = vmatpush.bf16.xpose.msra.mxu0 0
        %8944 = vmatpush.bf16.xpose.msra.mxu0 0
        %8945 = vmatpush.bf16.xpose.msra.mxu0 %v3858
        %8946 = vmatmul.bf16.gmra.mxu0 %v1256
        %v8947 = vpop.f32.mrf.mxu0
        %v8948 = vadd.f32 %v8935, %v8947
        %v8949 = vpop.f32.mrf.mxu0
        %8950 = vdwg.mxu0
        %8951 = vmatpush.bf16.xpose.msra.mxu0 0
        %8952 = vmatpush.bf16.xpose.msra.mxu0 0
        %8953 = vmatpush.bf16.xpose.msra.mxu0 0
        %8954 = vmatpush.bf16.xpose.msra.mxu0 0
        %8955 = vmatpush.bf16.xpose.msra.mxu0 0
        %8956 = vmatpush.bf16.xpose.msra.mxu0 0
        %8957 = vmatpush.bf16.xpose.msra.mxu0 0
        %8958 = vmatpush.bf16.xpose.msra.mxu0 %v3859
        %8959 = vmatmul.bf16.gmra.mxu0 %v1257
        %v8960 = vpop.f32.mrf.mxu0
        %v8961 = vadd.f32 %v8948, %v8960
        %v8962 = vpop.f32.mrf.mxu0
        %8963 = vdwg.mxu0
        %8964 = vmatpush.bf16.xpose.msra.mxu0 0
        %8965 = vmatpush.bf16.xpose.msra.mxu0 0
        %8966 = vmatpush.bf16.xpose.msra.mxu0 0
        %8967 = vmatpush.bf16.xpose.msra.mxu0 0
        %8968 = vmatpush.bf16.xpose.msra.mxu0 0
        %8969 = vmatpush.bf16.xpose.msra.mxu0 0
        %8970 = vmatpush.bf16.xpose.msra.mxu0 0
        %8971 = vmatpush.bf16.xpose.msra.mxu0 %v3860
        %8972 = vmatmul.bf16.gmra.mxu0 %v1258
        %v8973 = vpop.f32.mrf.mxu0
        %v8974 = vadd.f32 %v8961, %v8973
        %v8975 = vpop.f32.mrf.mxu0
        %8976 = vdwg.mxu0
        %8977 = vmatpush.bf16.xpose.msra.mxu0 0
        %8978 = vmatpush.bf16.xpose.msra.mxu0 0
        %8979 = vmatpush.bf16.xpose.msra.mxu0 0
        %8980 = vmatpush.bf16.xpose.msra.mxu0 0
        %8981 = vmatpush.bf16.xpose.msra.mxu0 0
        %8982 = vmatpush.bf16.xpose.msra.mxu0 0
        %8983 = vmatpush.bf16.xpose.msra.mxu0 0
        %8984 = vmatpush.bf16.xpose.msra.mxu0 %v3861
        %8985 = vmatmul.bf16.gmra.mxu0 %v1259
        %v8986 = vpop.f32.mrf.mxu0
        %v8987 = vadd.f32 %v8974, %v8986
        %v8988 = vpop.f32.mrf.mxu0
        %8989 = vdwg.mxu0
        %8990 = vmatpush.bf16.xpose.msra.mxu0 0
        %8991 = vmatpush.bf16.xpose.msra.mxu0 0
        %8992 = vmatpush.bf16.xpose.msra.mxu0 0
        %8993 = vmatpush.bf16.xpose.msra.mxu0 0
        %8994 = vmatpush.bf16.xpose.msra.mxu0 0
        %8995 = vmatpush.bf16.xpose.msra.mxu0 0
        %8996 = vmatpush.bf16.xpose.msra.mxu0 0
        %8997 = vmatpush.bf16.xpose.msra.mxu0 %v3862
        %8998 = vmatmul.bf16.gmra.mxu0 %v1260
        %v8999 = vpop.f32.mrf.mxu0
        %v9000 = vadd.f32 %v8987, %v8999
        %v9001 = vpop.f32.mrf.mxu0
        %9002 = vdwg.mxu0
        %9003 = vmatpush.bf16.xpose.msra.mxu0 0
        %9004 = vmatpush.bf16.xpose.msra.mxu0 0
        %9005 = vmatpush.bf16.xpose.msra.mxu0 0
        %9006 = vmatpush.bf16.xpose.msra.mxu0 0
        %9007 = vmatpush.bf16.xpose.msra.mxu0 0
        %9008 = vmatpush.bf16.xpose.msra.mxu0 0
        %9009 = vmatpush.bf16.xpose.msra.mxu0 0
        %9010 = vmatpush.bf16.xpose.msra.mxu0 %v3863
        %9011 = vmatmul.bf16.gmra.mxu0 %v1261
        %v9012 = vpop.f32.mrf.mxu0
        %v9013 = vadd.f32 %v9000, %v9012
        %v9014 = vpop.f32.mrf.mxu0
        %9015 = vdwg.mxu0
        %9016 = vmatpush.bf16.xpose.msra.mxu0 0
        %9017 = vmatpush.bf16.xpose.msra.mxu0 0
        %9018 = vmatpush.bf16.xpose.msra.mxu0 0
        %9019 = vmatpush.bf16.xpose.msra.mxu0 0
        %9020 = vmatpush.bf16.xpose.msra.mxu0 0
        %9021 = vmatpush.bf16.xpose.msra.mxu0 0
        %9022 = vmatpush.bf16.xpose.msra.mxu0 0
        %9023 = vmatpush.bf16.xpose.msra.mxu0 %v3864
        %9024 = vmatmul.bf16.gmra.mxu0 %v1264
        %v9025 = vpop.f32.mrf.mxu0
        %v9026 = vadd.f32 %v9013, %v9025
        %v9027 = vpop.f32.mrf.mxu0
        %9028 = vdwg.mxu0
        %9029 = vmatpush.bf16.xpose.msra.mxu0 0
        %9030 = vmatpush.bf16.xpose.msra.mxu0 0
        %9031 = vmatpush.bf16.xpose.msra.mxu0 0
        %9032 = vmatpush.bf16.xpose.msra.mxu0 0
        %9033 = vmatpush.bf16.xpose.msra.mxu0 0
        %9034 = vmatpush.bf16.xpose.msra.mxu0 0
        %9035 = vmatpush.bf16.xpose.msra.mxu0 0
        %9036 = vmatpush.bf16.xpose.msra.mxu0 %v3865
        %9037 = vmatmul.bf16.gmra.mxu0 %v1265
        %v9038 = vpop.f32.mrf.mxu0
        %v9039 = vadd.f32 %v9026, %v9038
        %v9040 = vpop.f32.mrf.mxu0
        %9041 = vdwg.mxu0
        %9042 = vmatpush.bf16.xpose.msra.mxu0 0
        %9043 = vmatpush.bf16.xpose.msra.mxu0 0
        %9044 = vmatpush.bf16.xpose.msra.mxu0 0
        %9045 = vmatpush.bf16.xpose.msra.mxu0 0
        %9046 = vmatpush.bf16.xpose.msra.mxu0 0
        %9047 = vmatpush.bf16.xpose.msra.mxu0 0
        %9048 = vmatpush.bf16.xpose.msra.mxu0 0
        %9049 = vmatpush.bf16.xpose.msra.mxu0 %v3866
        %9050 = vmatmul.bf16.gmra.mxu0 %v1266
        %v9051 = vpop.f32.mrf.mxu0
        %v9052 = vadd.f32 %v9039, %v9051
        %v9053 = vpop.f32.mrf.mxu0
        %9054 = vdwg.mxu0
        %9055 = vmatpush.bf16.xpose.msra.mxu0 0
        %9056 = vmatpush.bf16.xpose.msra.mxu0 0
        %9057 = vmatpush.bf16.xpose.msra.mxu0 0
        %9058 = vmatpush.bf16.xpose.msra.mxu0 0
        %9059 = vmatpush.bf16.xpose.msra.mxu0 0
        %9060 = vmatpush.bf16.xpose.msra.mxu0 0
        %9061 = vmatpush.bf16.xpose.msra.mxu0 0
        %9062 = vmatpush.bf16.xpose.msra.mxu0 %v3867
        %9063 = vmatmul.bf16.gmra.mxu0 %v1267
        %v9064 = vpop.f32.mrf.mxu0
        %v9065 = vadd.f32 %v9052, %v9064
        %v9066 = vpop.f32.mrf.mxu0
        %9067 = vdwg.mxu0
        %9068 = vmatpush.bf16.xpose.msra.mxu0 0
        %9069 = vmatpush.bf16.xpose.msra.mxu0 0
        %9070 = vmatpush.bf16.xpose.msra.mxu0 0
        %9071 = vmatpush.bf16.xpose.msra.mxu0 0
        %9072 = vmatpush.bf16.xpose.msra.mxu0 0
        %9073 = vmatpush.bf16.xpose.msra.mxu0 0
        %9074 = vmatpush.bf16.xpose.msra.mxu0 0
        %9075 = vmatpush.bf16.xpose.msra.mxu0 %v3868
        %9076 = vmatmul.bf16.gmra.mxu0 %v1268
        %v9077 = vpop.f32.mrf.mxu0
        %v9078 = vadd.f32 %v9065, %v9077
        %v9079 = vpop.f32.mrf.mxu0
        %9080 = vdwg.mxu0
        %9081 = vmatpush.bf16.xpose.msra.mxu0 0
        %9082 = vmatpush.bf16.xpose.msra.mxu0 0
        %9083 = vmatpush.bf16.xpose.msra.mxu0 0
        %9084 = vmatpush.bf16.xpose.msra.mxu0 0
        %9085 = vmatpush.bf16.xpose.msra.mxu0 0
        %9086 = vmatpush.bf16.xpose.msra.mxu0 0
        %9087 = vmatpush.bf16.xpose.msra.mxu0 0
        %9088 = vmatpush.bf16.xpose.msra.mxu0 %v3869
        %9089 = vmatmul.bf16.gmra.mxu0 %v1269
        %v9090 = vpop.f32.mrf.mxu0
        %v9091 = vadd.f32 %v9078, %v9090
        %v9092 = vpop.f32.mrf.mxu0
        %9093 = vdwg.mxu0
        %9094 = vmatpush.bf16.xpose.msra.mxu0 0
        %9095 = vmatpush.bf16.xpose.msra.mxu0 0
        %9096 = vmatpush.bf16.xpose.msra.mxu0 0
        %9097 = vmatpush.bf16.xpose.msra.mxu0 0
        %9098 = vmatpush.bf16.xpose.msra.mxu0 0
        %9099 = vmatpush.bf16.xpose.msra.mxu0 0
        %9100 = vmatpush.bf16.xpose.msra.mxu0 0
        %9101 = vmatpush.bf16.xpose.msra.mxu0 %v3870
        %9102 = vmatmul.bf16.gmra.mxu0 %v1270
        %v9103 = vpop.f32.mrf.mxu0
        %v9104 = vadd.f32 %v9091, %v9103
        %v9105 = vpop.f32.mrf.mxu0
        %9106 = vdwg.mxu0
        %9107 = vmatpush.bf16.xpose.msra.mxu0 0
        %9108 = vmatpush.bf16.xpose.msra.mxu0 0
        %9109 = vmatpush.bf16.xpose.msra.mxu0 0
        %9110 = vmatpush.bf16.xpose.msra.mxu0 0
        %9111 = vmatpush.bf16.xpose.msra.mxu0 0
        %9112 = vmatpush.bf16.xpose.msra.mxu0 0
        %9113 = vmatpush.bf16.xpose.msra.mxu0 0
        %9114 = vmatpush.bf16.xpose.msra.mxu0 %v3871
        %9115 = vmatmul.bf16.gmra.mxu0 %v1271
        %v9116 = vpop.f32.mrf.mxu0
        %v9117 = vadd.f32 %v9104, %v9116
        %v9118 = vpop.f32.mrf.mxu0
        %9119 = vdwg.mxu0
        %9120 = vmatpush.bf16.xpose.msra.mxu0 0
        %9121 = vmatpush.bf16.xpose.msra.mxu0 0
        %9122 = vmatpush.bf16.xpose.msra.mxu0 0
        %9123 = vmatpush.bf16.xpose.msra.mxu0 0
        %9124 = vmatpush.bf16.xpose.msra.mxu0 0
        %9125 = vmatpush.bf16.xpose.msra.mxu0 0
        %9126 = vmatpush.bf16.xpose.msra.mxu0 0
        %9127 = vmatpush.bf16.xpose.msra.mxu0 %v3872
        %9128 = vmatmul.bf16.gmra.mxu0 %v1274
        %v9129 = vpop.f32.mrf.mxu0
        %v9130 = vadd.f32 %v9117, %v9129
        %v9131 = vpop.f32.mrf.mxu0
        %9132 = vdwg.mxu0
        %9133 = vmatpush.bf16.xpose.msra.mxu0 0
        %9134 = vmatpush.bf16.xpose.msra.mxu0 0
        %9135 = vmatpush.bf16.xpose.msra.mxu0 0
        %9136 = vmatpush.bf16.xpose.msra.mxu0 0
        %9137 = vmatpush.bf16.xpose.msra.mxu0 0
        %9138 = vmatpush.bf16.xpose.msra.mxu0 0
        %9139 = vmatpush.bf16.xpose.msra.mxu0 0
        %9140 = vmatpush.bf16.xpose.msra.mxu0 %v3873
        %9141 = vmatmul.bf16.gmra.mxu0 %v1275
        %v9142 = vpop.f32.mrf.mxu0
        %v9143 = vadd.f32 %v9130, %v9142
        %v9144 = vpop.f32.mrf.mxu0
        %9145 = vdwg.mxu0
        %9146 = vmatpush.bf16.xpose.msra.mxu0 0
        %9147 = vmatpush.bf16.xpose.msra.mxu0 0
        %9148 = vmatpush.bf16.xpose.msra.mxu0 0
        %9149 = vmatpush.bf16.xpose.msra.mxu0 0
        %9150 = vmatpush.bf16.xpose.msra.mxu0 0
        %9151 = vmatpush.bf16.xpose.msra.mxu0 0
        %9152 = vmatpush.bf16.xpose.msra.mxu0 0
        %9153 = vmatpush.bf16.xpose.msra.mxu0 %v3874
        %9154 = vmatmul.bf16.gmra.mxu0 %v1276
        %v9155 = vpop.f32.mrf.mxu0
        %v9156 = vadd.f32 %v9143, %v9155
        %v9157 = vpop.f32.mrf.mxu0
        %9158 = vdwg.mxu0
        %9159 = vmatpush.bf16.xpose.msra.mxu0 0
        %9160 = vmatpush.bf16.xpose.msra.mxu0 0
        %9161 = vmatpush.bf16.xpose.msra.mxu0 0
        %9162 = vmatpush.bf16.xpose.msra.mxu0 0
        %9163 = vmatpush.bf16.xpose.msra.mxu0 0
        %9164 = vmatpush.bf16.xpose.msra.mxu0 0
        %9165 = vmatpush.bf16.xpose.msra.mxu0 0
        %9166 = vmatpush.bf16.xpose.msra.mxu0 %v3875
        %9167 = vmatmul.bf16.gmra.mxu0 %v1277
        %v9168 = vpop.f32.mrf.mxu0
        %v9169 = vadd.f32 %v9156, %v9168
        %v9170 = vpop.f32.mrf.mxu0
        %9171 = vdwg.mxu0
        %9172 = vmatpush.bf16.xpose.msra.mxu0 0
        %9173 = vmatpush.bf16.xpose.msra.mxu0 0
        %9174 = vmatpush.bf16.xpose.msra.mxu0 0
        %9175 = vmatpush.bf16.xpose.msra.mxu0 0
        %9176 = vmatpush.bf16.xpose.msra.mxu0 0
        %9177 = vmatpush.bf16.xpose.msra.mxu0 0
        %9178 = vmatpush.bf16.xpose.msra.mxu0 0
        %9179 = vmatpush.bf16.xpose.msra.mxu0 %v3876
        %9180 = vmatmul.bf16.gmra.mxu0 %v1278
        %v9181 = vpop.f32.mrf.mxu0
        %v9182 = vadd.f32 %v9169, %v9181
        %v9183 = vpop.f32.mrf.mxu0
        %9184 = vdwg.mxu0
        %9185 = vmatpush.bf16.xpose.msra.mxu0 0
        %9186 = vmatpush.bf16.xpose.msra.mxu0 0
        %9187 = vmatpush.bf16.xpose.msra.mxu0 0
        %9188 = vmatpush.bf16.xpose.msra.mxu0 0
        %9189 = vmatpush.bf16.xpose.msra.mxu0 0
        %9190 = vmatpush.bf16.xpose.msra.mxu0 0
        %9191 = vmatpush.bf16.xpose.msra.mxu0 0
        %9192 = vmatpush.bf16.xpose.msra.mxu0 %v3877
        %9193 = vmatmul.bf16.gmra.mxu0 %v1279
        %v9194 = vpop.f32.mrf.mxu0
        %v9195 = vadd.f32 %v9182, %v9194
        %v9196 = vpop.f32.mrf.mxu0
        %9197 = vdwg.mxu0
        %9198 = vmatpush.bf16.xpose.msra.mxu0 0
        %9199 = vmatpush.bf16.xpose.msra.mxu0 0
        %9200 = vmatpush.bf16.xpose.msra.mxu0 0
        %9201 = vmatpush.bf16.xpose.msra.mxu0 0
        %9202 = vmatpush.bf16.xpose.msra.mxu0 0
        %9203 = vmatpush.bf16.xpose.msra.mxu0 0
        %9204 = vmatpush.bf16.xpose.msra.mxu0 0
        %9205 = vmatpush.bf16.xpose.msra.mxu0 %v3878
        %9206 = vmatmul.bf16.gmra.mxu0 %v1280
        %v9207 = vpop.f32.mrf.mxu0
        %v9208 = vadd.f32 %v9195, %v9207
        %v9209 = vpop.f32.mrf.mxu0
        %9210 = vdwg.mxu0
        %9211 = vmatpush.bf16.xpose.msra.mxu0 0
        %9212 = vmatpush.bf16.xpose.msra.mxu0 0
        %9213 = vmatpush.bf16.xpose.msra.mxu0 0
        %9214 = vmatpush.bf16.xpose.msra.mxu0 0
        %9215 = vmatpush.bf16.xpose.msra.mxu0 0
        %9216 = vmatpush.bf16.xpose.msra.mxu0 0
        %9217 = vmatpush.bf16.xpose.msra.mxu0 0
        %9218 = vmatpush.bf16.xpose.msra.mxu0 %v3879
        %9219 = vmatmul.bf16.gmra.mxu0 %v1281
        %v9220 = vpop.f32.mrf.mxu0
        %v9221 = vadd.f32 %v9208, %v9220
        %v9222 = vpop.f32.mrf.mxu0
        %9223 = vdwg.mxu0
        %9224 = vmatpush.bf16.xpose.msra.mxu0 0
        %9225 = vmatpush.bf16.xpose.msra.mxu0 0
        %9226 = vmatpush.bf16.xpose.msra.mxu0 0
        %9227 = vmatpush.bf16.xpose.msra.mxu0 0
        %9228 = vmatpush.bf16.xpose.msra.mxu0 0
        %9229 = vmatpush.bf16.xpose.msra.mxu0 0
        %9230 = vmatpush.bf16.xpose.msra.mxu0 0
        %9231 = vmatpush.bf16.xpose.msra.mxu0 %v3880
        %9232 = vmatmul.bf16.gmra.mxu0 %v1284
        %v9233 = vpop.f32.mrf.mxu0
        %v9234 = vadd.f32 %v9221, %v9233
        %v9235 = vpop.f32.mrf.mxu0
        %9236 = vdwg.mxu0
        %9237 = vmatpush.bf16.xpose.msra.mxu0 0
        %9238 = vmatpush.bf16.xpose.msra.mxu0 0
        %9239 = vmatpush.bf16.xpose.msra.mxu0 0
        %9240 = vmatpush.bf16.xpose.msra.mxu0 0
        %9241 = vmatpush.bf16.xpose.msra.mxu0 0
        %9242 = vmatpush.bf16.xpose.msra.mxu0 0
        %9243 = vmatpush.bf16.xpose.msra.mxu0 0
        %9244 = vmatpush.bf16.xpose.msra.mxu0 %v3881
        %9245 = vmatmul.bf16.gmra.mxu0 %v1285
        %v9246 = vpop.f32.mrf.mxu0
        %v9247 = vadd.f32 %v9234, %v9246
        %v9248 = vpop.f32.mrf.mxu0
        %9249 = vdwg.mxu0
        %9250 = vmatpush.bf16.xpose.msra.mxu0 0
        %9251 = vmatpush.bf16.xpose.msra.mxu0 0
        %9252 = vmatpush.bf16.xpose.msra.mxu0 0
        %9253 = vmatpush.bf16.xpose.msra.mxu0 0
        %9254 = vmatpush.bf16.xpose.msra.mxu0 0
        %9255 = vmatpush.bf16.xpose.msra.mxu0 0
        %9256 = vmatpush.bf16.xpose.msra.mxu0 0
        %9257 = vmatpush.bf16.xpose.msra.mxu0 %v3882
        %9258 = vmatmul.bf16.gmra.mxu0 %v1286
        %v9259 = vpop.f32.mrf.mxu0
        %v9260 = vadd.f32 %v9247, %v9259
        %v9261 = vpop.f32.mrf.mxu0
        %9262 = vdwg.mxu0
        %9263 = vmatpush.bf16.xpose.msra.mxu0 0
        %9264 = vmatpush.bf16.xpose.msra.mxu0 0
        %9265 = vmatpush.bf16.xpose.msra.mxu0 0
        %9266 = vmatpush.bf16.xpose.msra.mxu0 0
        %9267 = vmatpush.bf16.xpose.msra.mxu0 0
        %9268 = vmatpush.bf16.xpose.msra.mxu0 0
        %9269 = vmatpush.bf16.xpose.msra.mxu0 0
        %9270 = vmatpush.bf16.xpose.msra.mxu0 %v3883
        %9271 = vmatmul.bf16.gmra.mxu0 %v1287
        %v9272 = vpop.f32.mrf.mxu0
        %v9273 = vadd.f32 %v9260, %v9272
        %v9274 = vpop.f32.mrf.mxu0
        %9275 = vdwg.mxu0
        %9276 = vmatpush.bf16.xpose.msra.mxu0 0
        %9277 = vmatpush.bf16.xpose.msra.mxu0 0
        %9278 = vmatpush.bf16.xpose.msra.mxu0 0
        %9279 = vmatpush.bf16.xpose.msra.mxu0 0
        %9280 = vmatpush.bf16.xpose.msra.mxu0 0
        %9281 = vmatpush.bf16.xpose.msra.mxu0 0
        %9282 = vmatpush.bf16.xpose.msra.mxu0 0
        %9283 = vmatpush.bf16.xpose.msra.mxu0 %v3884
        %9284 = vmatmul.bf16.gmra.mxu0 %v1288
        %v9285 = vpop.f32.mrf.mxu0
        %v9286 = vadd.f32 %v9273, %v9285
        %v9287 = vpop.f32.mrf.mxu0
        %9288 = vdwg.mxu0
        %9289 = vmatpush.bf16.xpose.msra.mxu0 0
        %9290 = vmatpush.bf16.xpose.msra.mxu0 0
        %9291 = vmatpush.bf16.xpose.msra.mxu0 0
        %9292 = vmatpush.bf16.xpose.msra.mxu0 0
        %9293 = vmatpush.bf16.xpose.msra.mxu0 0
        %9294 = vmatpush.bf16.xpose.msra.mxu0 0
        %9295 = vmatpush.bf16.xpose.msra.mxu0 0
        %9296 = vmatpush.bf16.xpose.msra.mxu0 %v3885
        %9297 = vmatmul.bf16.gmra.mxu0 %v1289
        %v9298 = vpop.f32.mrf.mxu0
        %v9299 = vadd.f32 %v9286, %v9298
        %v9300 = vpop.f32.mrf.mxu0
        %9301 = vdwg.mxu0
        %9302 = vmatpush.bf16.xpose.msra.mxu0 0
        %9303 = vmatpush.bf16.xpose.msra.mxu0 0
        %9304 = vmatpush.bf16.xpose.msra.mxu0 0
        %9305 = vmatpush.bf16.xpose.msra.mxu0 0
        %9306 = vmatpush.bf16.xpose.msra.mxu0 0
        %9307 = vmatpush.bf16.xpose.msra.mxu0 0
        %9308 = vmatpush.bf16.xpose.msra.mxu0 0
        %9309 = vmatpush.bf16.xpose.msra.mxu0 %v3886
        %9310 = vmatmul.bf16.gmra.mxu0 %v1290
        %v9311 = vpop.f32.mrf.mxu0
        %v9312 = vadd.f32 %v9299, %v9311
        %v9313 = vpop.f32.mrf.mxu0
        %9314 = vdwg.mxu0
        %9315 = vmatpush.bf16.xpose.msra.mxu0 0
        %9316 = vmatpush.bf16.xpose.msra.mxu0 0
        %9317 = vmatpush.bf16.xpose.msra.mxu0 0
        %9318 = vmatpush.bf16.xpose.msra.mxu0 0
        %9319 = vmatpush.bf16.xpose.msra.mxu0 0
        %9320 = vmatpush.bf16.xpose.msra.mxu0 0
        %9321 = vmatpush.bf16.xpose.msra.mxu0 0
        %9322 = vmatpush.bf16.xpose.msra.mxu0 %v3887
        %9323 = vmatmul.bf16.gmra.mxu0 %v1291
        %v9324 = vpop.f32.mrf.mxu0
        %v9325 = vadd.f32 %v9312, %v9324
        %v9326 = vpop.f32.mrf.mxu0
        %9327 = vdwg.mxu0
        %9328 = vmatpush.bf16.xpose.msra.mxu0 0
        %9329 = vmatpush.bf16.xpose.msra.mxu0 0
        %9330 = vmatpush.bf16.xpose.msra.mxu0 0
        %9331 = vmatpush.bf16.xpose.msra.mxu0 0
        %9332 = vmatpush.bf16.xpose.msra.mxu0 0
        %9333 = vmatpush.bf16.xpose.msra.mxu0 0
        %9334 = vmatpush.bf16.xpose.msra.mxu0 0
        %9335 = vmatpush.bf16.xpose.msra.mxu0 %v3888
        %9336 = vmatmul.bf16.gmra.mxu0 %v1294
        %v9337 = vpop.f32.mrf.mxu0
        %v9338 = vadd.f32 %v9325, %v9337
        %v9339 = vpop.f32.mrf.mxu0
        %9340 = vdwg.mxu0
        %9341 = vmatpush.bf16.xpose.msra.mxu0 0
        %9342 = vmatpush.bf16.xpose.msra.mxu0 0
        %9343 = vmatpush.bf16.xpose.msra.mxu0 0
        %9344 = vmatpush.bf16.xpose.msra.mxu0 0
        %9345 = vmatpush.bf16.xpose.msra.mxu0 0
        %9346 = vmatpush.bf16.xpose.msra.mxu0 0
        %9347 = vmatpush.bf16.xpose.msra.mxu0 0
        %9348 = vmatpush.bf16.xpose.msra.mxu0 %v3889
        %9349 = vmatmul.bf16.gmra.mxu0 %v1295
        %v9350 = vpop.f32.mrf.mxu0
        %v9351 = vadd.f32 %v9338, %v9350
        %v9352 = vpop.f32.mrf.mxu0
        %9353 = vdwg.mxu0
        %9354 = vmatpush.bf16.xpose.msra.mxu0 0
        %9355 = vmatpush.bf16.xpose.msra.mxu0 0
        %9356 = vmatpush.bf16.xpose.msra.mxu0 0
        %9357 = vmatpush.bf16.xpose.msra.mxu0 0
        %9358 = vmatpush.bf16.xpose.msra.mxu0 0
        %9359 = vmatpush.bf16.xpose.msra.mxu0 0
        %9360 = vmatpush.bf16.xpose.msra.mxu0 0
        %9361 = vmatpush.bf16.xpose.msra.mxu0 %v3890
        %9362 = vmatmul.bf16.gmra.mxu0 %v1296
        %v9363 = vpop.f32.mrf.mxu0
        %v9364 = vadd.f32 %v9351, %v9363
        %v9365 = vpop.f32.mrf.mxu0
        %9366 = vdwg.mxu0
        %9367 = vmatpush.bf16.xpose.msra.mxu0 0
        %9368 = vmatpush.bf16.xpose.msra.mxu0 0
        %9369 = vmatpush.bf16.xpose.msra.mxu0 0
        %9370 = vmatpush.bf16.xpose.msra.mxu0 0
        %9371 = vmatpush.bf16.xpose.msra.mxu0 0
        %9372 = vmatpush.bf16.xpose.msra.mxu0 0
        %9373 = vmatpush.bf16.xpose.msra.mxu0 0
        %9374 = vmatpush.bf16.xpose.msra.mxu0 %v3891
        %9375 = vmatmul.bf16.gmra.mxu0 %v1297
        %v9376 = vpop.f32.mrf.mxu0
        %v9377 = vadd.f32 %v9364, %v9376
        %v9378 = vpop.f32.mrf.mxu0
        %9379 = vdwg.mxu0
        %9380 = vmatpush.bf16.xpose.msra.mxu0 0
        %9381 = vmatpush.bf16.xpose.msra.mxu0 0
        %9382 = vmatpush.bf16.xpose.msra.mxu0 0
        %9383 = vmatpush.bf16.xpose.msra.mxu0 0
        %9384 = vmatpush.bf16.xpose.msra.mxu0 0
        %9385 = vmatpush.bf16.xpose.msra.mxu0 0
        %9386 = vmatpush.bf16.xpose.msra.mxu0 0
        %9387 = vmatpush.bf16.xpose.msra.mxu0 %v3892
        %9388 = vmatmul.bf16.gmra.mxu0 %v1298
        %v9389 = vpop.f32.mrf.mxu0
        %v9390 = vadd.f32 %v9377, %v9389
        %v9391 = vpop.f32.mrf.mxu0
        %9392 = vdwg.mxu0
        %9393 = vmatpush.bf16.xpose.msra.mxu0 0
        %9394 = vmatpush.bf16.xpose.msra.mxu0 0
        %9395 = vmatpush.bf16.xpose.msra.mxu0 0
        %9396 = vmatpush.bf16.xpose.msra.mxu0 0
        %9397 = vmatpush.bf16.xpose.msra.mxu0 0
        %9398 = vmatpush.bf16.xpose.msra.mxu0 0
        %9399 = vmatpush.bf16.xpose.msra.mxu0 0
        %9400 = vmatpush.bf16.xpose.msra.mxu0 %v3893
        %9401 = vmatmul.bf16.gmra.mxu0 %v1299
        %v9402 = vpop.f32.mrf.mxu0
        %v9403 = vadd.f32 %v9390, %v9402
        %v9404 = vpop.f32.mrf.mxu0
        %9405 = vdwg.mxu0
        %9406 = vmatpush.bf16.xpose.msra.mxu0 0
        %9407 = vmatpush.bf16.xpose.msra.mxu0 0
        %9408 = vmatpush.bf16.xpose.msra.mxu0 0
        %9409 = vmatpush.bf16.xpose.msra.mxu0 0
        %9410 = vmatpush.bf16.xpose.msra.mxu0 0
        %9411 = vmatpush.bf16.xpose.msra.mxu0 0
        %9412 = vmatpush.bf16.xpose.msra.mxu0 0
        %9413 = vmatpush.bf16.xpose.msra.mxu0 %v3894
        %9414 = vmatmul.bf16.gmra.mxu0 %v1300
        %v9415 = vpop.f32.mrf.mxu0
        %v9416 = vadd.f32 %v9403, %v9415
        %v9417 = vpop.f32.mrf.mxu0
        %9418 = vdwg.mxu0
        %9419 = vmatpush.bf16.xpose.msra.mxu0 0
        %9420 = vmatpush.bf16.xpose.msra.mxu0 0
        %9421 = vmatpush.bf16.xpose.msra.mxu0 0
        %9422 = vmatpush.bf16.xpose.msra.mxu0 0
        %9423 = vmatpush.bf16.xpose.msra.mxu0 0
        %9424 = vmatpush.bf16.xpose.msra.mxu0 0
        %9425 = vmatpush.bf16.xpose.msra.mxu0 0
        %9426 = vmatpush.bf16.xpose.msra.mxu0 %v3895
        %9427 = vmatmul.bf16.gmra.mxu0 %v1301
        %v9428 = vpop.f32.mrf.mxu0
        %v9429 = vadd.f32 %v9416, %v9428
        %v9430 = vpop.f32.mrf.mxu0
        %9431 = vdwg.mxu0
        %9432 = vmatpush.bf16.xpose.msra.mxu0 0
        %9433 = vmatpush.bf16.xpose.msra.mxu0 0
        %9434 = vmatpush.bf16.xpose.msra.mxu0 0
        %9435 = vmatpush.bf16.xpose.msra.mxu0 0
        %9436 = vmatpush.bf16.xpose.msra.mxu0 0
        %9437 = vmatpush.bf16.xpose.msra.mxu0 0
        %9438 = vmatpush.bf16.xpose.msra.mxu0 0
        %9439 = vmatpush.bf16.xpose.msra.mxu0 %v3896
        %9440 = vmatmul.bf16.gmra.mxu0 %v1304
        %v9441 = vpop.f32.mrf.mxu0
        %v9442 = vadd.f32 %v9429, %v9441
        %v9443 = vpop.f32.mrf.mxu0
        %9444 = vdwg.mxu0
        %9445 = vmatpush.bf16.xpose.msra.mxu0 0
        %9446 = vmatpush.bf16.xpose.msra.mxu0 0
        %9447 = vmatpush.bf16.xpose.msra.mxu0 0
        %9448 = vmatpush.bf16.xpose.msra.mxu0 0
        %9449 = vmatpush.bf16.xpose.msra.mxu0 0
        %9450 = vmatpush.bf16.xpose.msra.mxu0 0
        %9451 = vmatpush.bf16.xpose.msra.mxu0 0
        %9452 = vmatpush.bf16.xpose.msra.mxu0 %v3897
        %9453 = vmatmul.bf16.gmra.mxu0 %v1305
        %v9454 = vpop.f32.mrf.mxu0
        %v9455 = vadd.f32 %v9442, %v9454
        %v9456 = vpop.f32.mrf.mxu0
        %9457 = vdwg.mxu0
        %9458 = vmatpush.bf16.xpose.msra.mxu0 0
        %9459 = vmatpush.bf16.xpose.msra.mxu0 0
        %9460 = vmatpush.bf16.xpose.msra.mxu0 0
        %9461 = vmatpush.bf16.xpose.msra.mxu0 0
        %9462 = vmatpush.bf16.xpose.msra.mxu0 0
        %9463 = vmatpush.bf16.xpose.msra.mxu0 0
        %9464 = vmatpush.bf16.xpose.msra.mxu0 0
        %9465 = vmatpush.bf16.xpose.msra.mxu0 %v3898
        %9466 = vmatmul.bf16.gmra.mxu0 %v1306
        %v9467 = vpop.f32.mrf.mxu0
        %v9468 = vadd.f32 %v9455, %v9467
        %v9469 = vpop.f32.mrf.mxu0
        %9470 = vdwg.mxu0
        %9471 = vmatpush.bf16.xpose.msra.mxu0 0
        %9472 = vmatpush.bf16.xpose.msra.mxu0 0
        %9473 = vmatpush.bf16.xpose.msra.mxu0 0
        %9474 = vmatpush.bf16.xpose.msra.mxu0 0
        %9475 = vmatpush.bf16.xpose.msra.mxu0 0
        %9476 = vmatpush.bf16.xpose.msra.mxu0 0
        %9477 = vmatpush.bf16.xpose.msra.mxu0 0
        %9478 = vmatpush.bf16.xpose.msra.mxu0 %v3899
        %9479 = vmatmul.bf16.gmra.mxu0 %v1307
        %v9480 = vpop.f32.mrf.mxu0
        %v9481 = vadd.f32 %v9468, %v9480
        %v9482 = vpop.f32.mrf.mxu0
        %9483 = vdwg.mxu0
        %9484 = vmatpush.bf16.xpose.msra.mxu0 0
        %9485 = vmatpush.bf16.xpose.msra.mxu0 0
        %9486 = vmatpush.bf16.xpose.msra.mxu0 0
        %9487 = vmatpush.bf16.xpose.msra.mxu0 0
        %9488 = vmatpush.bf16.xpose.msra.mxu0 0
        %9489 = vmatpush.bf16.xpose.msra.mxu0 0
        %9490 = vmatpush.bf16.xpose.msra.mxu0 0
        %9491 = vmatpush.bf16.xpose.msra.mxu0 %v3900
        %9492 = vmatmul.bf16.gmra.mxu0 %v1308
        %v9493 = vpop.f32.mrf.mxu0
        %v9494 = vadd.f32 %v9481, %v9493
        %v9495 = vpop.f32.mrf.mxu0
        %9496 = vdwg.mxu0
        %9497 = vmatpush.bf16.xpose.msra.mxu0 0
        %9498 = vmatpush.bf16.xpose.msra.mxu0 0
        %9499 = vmatpush.bf16.xpose.msra.mxu0 0
        %9500 = vmatpush.bf16.xpose.msra.mxu0 0
        %9501 = vmatpush.bf16.xpose.msra.mxu0 0
        %9502 = vmatpush.bf16.xpose.msra.mxu0 0
        %9503 = vmatpush.bf16.xpose.msra.mxu0 0
        %9504 = vmatpush.bf16.xpose.msra.mxu0 %v3901
        %9505 = vmatmul.bf16.gmra.mxu0 %v1309
        %v9506 = vpop.f32.mrf.mxu0
        %v9507 = vadd.f32 %v9494, %v9506
        %v9508 = vpop.f32.mrf.mxu0
        %9509 = vdwg.mxu0
        %9510 = vmatpush.bf16.xpose.msra.mxu0 0
        %9511 = vmatpush.bf16.xpose.msra.mxu0 0
        %9512 = vmatpush.bf16.xpose.msra.mxu0 0
        %9513 = vmatpush.bf16.xpose.msra.mxu0 0
        %9514 = vmatpush.bf16.xpose.msra.mxu0 0
        %9515 = vmatpush.bf16.xpose.msra.mxu0 0
        %9516 = vmatpush.bf16.xpose.msra.mxu0 0
        %9517 = vmatpush.bf16.xpose.msra.mxu0 %v3902
        %9518 = vmatmul.bf16.gmra.mxu0 %v1310
        %v9519 = vpop.f32.mrf.mxu0
        %v9520 = vadd.f32 %v9507, %v9519
        %v9521 = vpop.f32.mrf.mxu0
        %9522 = vdwg.mxu0
        %9523 = vmatpush.bf16.xpose.msra.mxu0 0
        %9524 = vmatpush.bf16.xpose.msra.mxu0 0
        %9525 = vmatpush.bf16.xpose.msra.mxu0 0
        %9526 = vmatpush.bf16.xpose.msra.mxu0 0
        %9527 = vmatpush.bf16.xpose.msra.mxu0 0
        %9528 = vmatpush.bf16.xpose.msra.mxu0 0
        %9529 = vmatpush.bf16.xpose.msra.mxu0 0
        %9530 = vmatpush.bf16.xpose.msra.mxu0 %v3903
        %9531 = vmatmul.bf16.gmra.mxu0 %v1311
        %v9532 = vpop.f32.mrf.mxu0
        %v9533 = vadd.f32 %v9520, %v9532
        %v9534 = vpop.f32.mrf.mxu0
        %9535 = vdwg.mxu0
        %9536 = vmatpush.bf16.xpose.msra.mxu0 0
        %9537 = vmatpush.bf16.xpose.msra.mxu0 0
        %9538 = vmatpush.bf16.xpose.msra.mxu0 0
        %9539 = vmatpush.bf16.xpose.msra.mxu0 0
        %9540 = vmatpush.bf16.xpose.msra.mxu0 0
        %9541 = vmatpush.bf16.xpose.msra.mxu0 0
        %9542 = vmatpush.bf16.xpose.msra.mxu0 0
        %9543 = vmatpush.bf16.xpose.msra.mxu0 %v3904
        %9544 = vmatmul.bf16.gmra.mxu0 %v1314
        %v9545 = vpop.f32.mrf.mxu0
        %v9546 = vadd.f32 %v9533, %v9545
        %v9547 = vpop.f32.mrf.mxu0
        %9548 = vdwg.mxu0
        %9549 = vmatpush.bf16.xpose.msra.mxu0 0
        %9550 = vmatpush.bf16.xpose.msra.mxu0 0
        %9551 = vmatpush.bf16.xpose.msra.mxu0 0
        %9552 = vmatpush.bf16.xpose.msra.mxu0 0
        %9553 = vmatpush.bf16.xpose.msra.mxu0 0
        %9554 = vmatpush.bf16.xpose.msra.mxu0 0
        %9555 = vmatpush.bf16.xpose.msra.mxu0 0
        %9556 = vmatpush.bf16.xpose.msra.mxu0 %v3905
        %9557 = vmatmul.bf16.gmra.mxu0 %v1315
        %v9558 = vpop.f32.mrf.mxu0
        %v9559 = vadd.f32 %v9546, %v9558
        %v9560 = vpop.f32.mrf.mxu0
        %9561 = vdwg.mxu0
        %9562 = vmatpush.bf16.xpose.msra.mxu0 0
        %9563 = vmatpush.bf16.xpose.msra.mxu0 0
        %9564 = vmatpush.bf16.xpose.msra.mxu0 0
        %9565 = vmatpush.bf16.xpose.msra.mxu0 0
        %9566 = vmatpush.bf16.xpose.msra.mxu0 0
        %9567 = vmatpush.bf16.xpose.msra.mxu0 0
        %9568 = vmatpush.bf16.xpose.msra.mxu0 0
        %9569 = vmatpush.bf16.xpose.msra.mxu0 %v3906
        %9570 = vmatmul.bf16.gmra.mxu0 %v1316
        %v9571 = vpop.f32.mrf.mxu0
        %v9572 = vadd.f32 %v9559, %v9571
        %v9573 = vpop.f32.mrf.mxu0
        %9574 = vdwg.mxu0
        %9575 = vmatpush.bf16.xpose.msra.mxu0 0
        %9576 = vmatpush.bf16.xpose.msra.mxu0 0
        %9577 = vmatpush.bf16.xpose.msra.mxu0 0
        %9578 = vmatpush.bf16.xpose.msra.mxu0 0
        %9579 = vmatpush.bf16.xpose.msra.mxu0 0
        %9580 = vmatpush.bf16.xpose.msra.mxu0 0
        %9581 = vmatpush.bf16.xpose.msra.mxu0 0
        %9582 = vmatpush.bf16.xpose.msra.mxu0 %v3907
        %9583 = vmatmul.bf16.gmra.mxu0 %v1317
        %v9584 = vpop.f32.mrf.mxu0
        %v9585 = vadd.f32 %v9572, %v9584
        %v9586 = vpop.f32.mrf.mxu0
        %9587 = vdwg.mxu0
        %9588 = vmatpush.bf16.xpose.msra.mxu0 0
        %9589 = vmatpush.bf16.xpose.msra.mxu0 0
        %9590 = vmatpush.bf16.xpose.msra.mxu0 0
        %9591 = vmatpush.bf16.xpose.msra.mxu0 0
        %9592 = vmatpush.bf16.xpose.msra.mxu0 0
        %9593 = vmatpush.bf16.xpose.msra.mxu0 0
        %9594 = vmatpush.bf16.xpose.msra.mxu0 0
        %9595 = vmatpush.bf16.xpose.msra.mxu0 %v3908
        %9596 = vmatmul.bf16.gmra.mxu0 %v1318
        %v9597 = vpop.f32.mrf.mxu0
        %v9598 = vadd.f32 %v9585, %v9597
        %v9599 = vpop.f32.mrf.mxu0
        %9600 = vdwg.mxu0
        %9601 = vmatpush.bf16.xpose.msra.mxu0 0
        %9602 = vmatpush.bf16.xpose.msra.mxu0 0
        %9603 = vmatpush.bf16.xpose.msra.mxu0 0
        %9604 = vmatpush.bf16.xpose.msra.mxu0 0
        %9605 = vmatpush.bf16.xpose.msra.mxu0 0
        %9606 = vmatpush.bf16.xpose.msra.mxu0 0
        %9607 = vmatpush.bf16.xpose.msra.mxu0 0
        %9608 = vmatpush.bf16.xpose.msra.mxu0 %v3909
        %9609 = vmatmul.bf16.gmra.mxu0 %v1319
        %v9610 = vpop.f32.mrf.mxu0
        %v9611 = vadd.f32 %v9598, %v9610
        %v9612 = vpop.f32.mrf.mxu0
        %9613 = vdwg.mxu0
        %9614 = vmatpush.bf16.xpose.msra.mxu0 0
        %9615 = vmatpush.bf16.xpose.msra.mxu0 0
        %9616 = vmatpush.bf16.xpose.msra.mxu0 0
        %9617 = vmatpush.bf16.xpose.msra.mxu0 0
        %9618 = vmatpush.bf16.xpose.msra.mxu0 0
        %9619 = vmatpush.bf16.xpose.msra.mxu0 0
        %9620 = vmatpush.bf16.xpose.msra.mxu0 0
        %9621 = vmatpush.bf16.xpose.msra.mxu0 %v3910
        %9622 = vmatmul.bf16.gmra.mxu0 %v1320
        %v9623 = vpop.f32.mrf.mxu0
        %v9624 = vadd.f32 %v9611, %v9623
        %v9625 = vpop.f32.mrf.mxu0
        %9626 = vdwg.mxu0
        %9627 = vmatpush.bf16.xpose.msra.mxu0 0
        %9628 = vmatpush.bf16.xpose.msra.mxu0 0
        %9629 = vmatpush.bf16.xpose.msra.mxu0 0
        %9630 = vmatpush.bf16.xpose.msra.mxu0 0
        %9631 = vmatpush.bf16.xpose.msra.mxu0 0
        %9632 = vmatpush.bf16.xpose.msra.mxu0 0
        %9633 = vmatpush.bf16.xpose.msra.mxu0 0
        %9634 = vmatpush.bf16.xpose.msra.mxu0 %v3911
        %9635 = vmatmul.bf16.gmra.mxu0 %v1321
        %v9636 = vpop.f32.mrf.mxu0
        %v9637 = vadd.f32 %v9624, %v9636
        %v9638 = vpop.f32.mrf.mxu0
        %9639 = vdwg.mxu0
        %9640 = vmatpush.bf16.xpose.msra.mxu0 0
        %9641 = vmatpush.bf16.xpose.msra.mxu0 0
        %9642 = vmatpush.bf16.xpose.msra.mxu0 0
        %9643 = vmatpush.bf16.xpose.msra.mxu0 0
        %9644 = vmatpush.bf16.xpose.msra.mxu0 0
        %9645 = vmatpush.bf16.xpose.msra.mxu0 0
        %9646 = vmatpush.bf16.xpose.msra.mxu0 0
        %9647 = vmatpush.bf16.xpose.msra.mxu0 %v3912
        %9648 = vmatmul.bf16.gmra.mxu0 %v1324
        %v9649 = vpop.f32.mrf.mxu0
        %v9650 = vadd.f32 %v9637, %v9649
        %v9651 = vpop.f32.mrf.mxu0
        %9652 = vdwg.mxu0
        %9653 = vmatpush.bf16.xpose.msra.mxu0 0
        %9654 = vmatpush.bf16.xpose.msra.mxu0 0
        %9655 = vmatpush.bf16.xpose.msra.mxu0 0
        %9656 = vmatpush.bf16.xpose.msra.mxu0 0
        %9657 = vmatpush.bf16.xpose.msra.mxu0 0
        %9658 = vmatpush.bf16.xpose.msra.mxu0 0
        %9659 = vmatpush.bf16.xpose.msra.mxu0 0
        %9660 = vmatpush.bf16.xpose.msra.mxu0 %v3913
        %9661 = vmatmul.bf16.gmra.mxu0 %v1325
        %v9662 = vpop.f32.mrf.mxu0
        %v9663 = vadd.f32 %v9650, %v9662
        %v9664 = vpop.f32.mrf.mxu0
        %9665 = vdwg.mxu0
        %9666 = vmatpush.bf16.xpose.msra.mxu0 0
        %9667 = vmatpush.bf16.xpose.msra.mxu0 0
        %9668 = vmatpush.bf16.xpose.msra.mxu0 0
        %9669 = vmatpush.bf16.xpose.msra.mxu0 0
        %9670 = vmatpush.bf16.xpose.msra.mxu0 0
        %9671 = vmatpush.bf16.xpose.msra.mxu0 0
        %9672 = vmatpush.bf16.xpose.msra.mxu0 0
        %9673 = vmatpush.bf16.xpose.msra.mxu0 %v3914
        %9674 = vmatmul.bf16.gmra.mxu0 %v1326
        %v9675 = vpop.f32.mrf.mxu0
        %v9676 = vadd.f32 %v9663, %v9675
        %v9677 = vpop.f32.mrf.mxu0
        %9678 = vdwg.mxu0
        %9679 = vmatpush.bf16.xpose.msra.mxu0 0
        %9680 = vmatpush.bf16.xpose.msra.mxu0 0
        %9681 = vmatpush.bf16.xpose.msra.mxu0 0
        %9682 = vmatpush.bf16.xpose.msra.mxu0 0
        %9683 = vmatpush.bf16.xpose.msra.mxu0 0
        %9684 = vmatpush.bf16.xpose.msra.mxu0 0
        %9685 = vmatpush.bf16.xpose.msra.mxu0 0
        %9686 = vmatpush.bf16.xpose.msra.mxu0 %v3915
        %9687 = vmatmul.bf16.gmra.mxu0 %v1327
        %v9688 = vpop.f32.mrf.mxu0
        %v9689 = vadd.f32 %v9676, %v9688
        %v9690 = vpop.f32.mrf.mxu0
        %9691 = vdwg.mxu0
        %9692 = vmatpush.bf16.xpose.msra.mxu0 0
        %9693 = vmatpush.bf16.xpose.msra.mxu0 0
        %9694 = vmatpush.bf16.xpose.msra.mxu0 0
        %9695 = vmatpush.bf16.xpose.msra.mxu0 0
        %9696 = vmatpush.bf16.xpose.msra.mxu0 0
        %9697 = vmatpush.bf16.xpose.msra.mxu0 0
        %9698 = vmatpush.bf16.xpose.msra.mxu0 0
        %9699 = vmatpush.bf16.xpose.msra.mxu0 %v3916
        %9700 = vmatmul.bf16.gmra.mxu0 %v1328
        %v9701 = vpop.f32.mrf.mxu0
        %v9702 = vadd.f32 %v9689, %v9701
        %v9703 = vpop.f32.mrf.mxu0
        %9704 = vdwg.mxu0
        %9705 = vmatpush.bf16.xpose.msra.mxu0 0
        %9706 = vmatpush.bf16.xpose.msra.mxu0 0
        %9707 = vmatpush.bf16.xpose.msra.mxu0 0
        %9708 = vmatpush.bf16.xpose.msra.mxu0 0
        %9709 = vmatpush.bf16.xpose.msra.mxu0 0
        %9710 = vmatpush.bf16.xpose.msra.mxu0 0
        %9711 = vmatpush.bf16.xpose.msra.mxu0 0
        %9712 = vmatpush.bf16.xpose.msra.mxu0 %v3917
        %9713 = vmatmul.bf16.gmra.mxu0 %v1329
        %v9714 = vpop.f32.mrf.mxu0
        %v9715 = vadd.f32 %v9702, %v9714
        %v9716 = vpop.f32.mrf.mxu0
        %9717 = vdwg.mxu0
        %9718 = vmatpush.bf16.xpose.msra.mxu0 0
        %9719 = vmatpush.bf16.xpose.msra.mxu0 0
        %9720 = vmatpush.bf16.xpose.msra.mxu0 0
        %9721 = vmatpush.bf16.xpose.msra.mxu0 0
        %9722 = vmatpush.bf16.xpose.msra.mxu0 0
        %9723 = vmatpush.bf16.xpose.msra.mxu0 0
        %9724 = vmatpush.bf16.xpose.msra.mxu0 0
        %9725 = vmatpush.bf16.xpose.msra.mxu0 %v3918
        %9726 = vmatmul.bf16.gmra.mxu0 %v1330
        %v9727 = vpop.f32.mrf.mxu0
        %v9728 = vadd.f32 %v9715, %v9727
        %v9729 = vpop.f32.mrf.mxu0
        %9730 = vdwg.mxu0
        %9731 = vmatpush.bf16.xpose.msra.mxu0 0
        %9732 = vmatpush.bf16.xpose.msra.mxu0 0
        %9733 = vmatpush.bf16.xpose.msra.mxu0 0
        %9734 = vmatpush.bf16.xpose.msra.mxu0 0
        %9735 = vmatpush.bf16.xpose.msra.mxu0 0
        %9736 = vmatpush.bf16.xpose.msra.mxu0 0
        %9737 = vmatpush.bf16.xpose.msra.mxu0 0
        %9738 = vmatpush.bf16.xpose.msra.mxu0 %v3919
        %9739 = vmatmul.bf16.gmra.mxu0 %v1331
        %v9740 = vpop.f32.mrf.mxu0
        %v9741 = vadd.f32 %v9728, %v9740
        %v9742 = vpop.f32.mrf.mxu0
        %9743 = vdwg.mxu0
        %9744 = vmatpush.bf16.xpose.msra.mxu0 0
        %9745 = vmatpush.bf16.xpose.msra.mxu0 0
        %9746 = vmatpush.bf16.xpose.msra.mxu0 0
        %9747 = vmatpush.bf16.xpose.msra.mxu0 0
        %9748 = vmatpush.bf16.xpose.msra.mxu0 0
        %9749 = vmatpush.bf16.xpose.msra.mxu0 0
        %9750 = vmatpush.bf16.xpose.msra.mxu0 0
        %9751 = vmatpush.bf16.xpose.msra.mxu0 %v3920
        %9752 = vmatmul.bf16.gmra.mxu0 %v1334
        %v9753 = vpop.f32.mrf.mxu0
        %v9754 = vadd.f32 %v9741, %v9753
        %v9755 = vpop.f32.mrf.mxu0
        %9756 = vdwg.mxu0
        %9757 = vmatpush.bf16.xpose.msra.mxu0 0
        %9758 = vmatpush.bf16.xpose.msra.mxu0 0
        %9759 = vmatpush.bf16.xpose.msra.mxu0 0
        %9760 = vmatpush.bf16.xpose.msra.mxu0 0
        %9761 = vmatpush.bf16.xpose.msra.mxu0 0
        %9762 = vmatpush.bf16.xpose.msra.mxu0 0
        %9763 = vmatpush.bf16.xpose.msra.mxu0 0
        %9764 = vmatpush.bf16.xpose.msra.mxu0 %v3921
        %9765 = vmatmul.bf16.gmra.mxu0 %v1335
        %v9766 = vpop.f32.mrf.mxu0
        %v9767 = vadd.f32 %v9754, %v9766
        %v9768 = vpop.f32.mrf.mxu0
        %9769 = vdwg.mxu0
        %9770 = vmatpush.bf16.xpose.msra.mxu0 0
        %9771 = vmatpush.bf16.xpose.msra.mxu0 0
        %9772 = vmatpush.bf16.xpose.msra.mxu0 0
        %9773 = vmatpush.bf16.xpose.msra.mxu0 0
        %9774 = vmatpush.bf16.xpose.msra.mxu0 0
        %9775 = vmatpush.bf16.xpose.msra.mxu0 0
        %9776 = vmatpush.bf16.xpose.msra.mxu0 0
        %9777 = vmatpush.bf16.xpose.msra.mxu0 %v3922
        %9778 = vmatmul.bf16.gmra.mxu0 %v1336
        %v9779 = vpop.f32.mrf.mxu0
        %v9780 = vadd.f32 %v9767, %v9779
        %v9781 = vpop.f32.mrf.mxu0
        %9782 = vdwg.mxu0
        %9783 = vmatpush.bf16.xpose.msra.mxu0 0
        %9784 = vmatpush.bf16.xpose.msra.mxu0 0
        %9785 = vmatpush.bf16.xpose.msra.mxu0 0
        %9786 = vmatpush.bf16.xpose.msra.mxu0 0
        %9787 = vmatpush.bf16.xpose.msra.mxu0 0
        %9788 = vmatpush.bf16.xpose.msra.mxu0 0
        %9789 = vmatpush.bf16.xpose.msra.mxu0 0
        %9790 = vmatpush.bf16.xpose.msra.mxu0 %v3923
        %9791 = vmatmul.bf16.gmra.mxu0 %v1337
        %v9792 = vpop.f32.mrf.mxu0
        %v9793 = vadd.f32 %v9780, %v9792
        %v9794 = vpop.f32.mrf.mxu0
        %9795 = vdwg.mxu0
        %9796 = vmatpush.bf16.xpose.msra.mxu0 0
        %9797 = vmatpush.bf16.xpose.msra.mxu0 0
        %9798 = vmatpush.bf16.xpose.msra.mxu0 0
        %9799 = vmatpush.bf16.xpose.msra.mxu0 0
        %9800 = vmatpush.bf16.xpose.msra.mxu0 0
        %9801 = vmatpush.bf16.xpose.msra.mxu0 0
        %9802 = vmatpush.bf16.xpose.msra.mxu0 0
        %9803 = vmatpush.bf16.xpose.msra.mxu0 %v3924
        %9804 = vmatmul.bf16.gmra.mxu0 %v1338
        %v9805 = vpop.f32.mrf.mxu0
        %v9806 = vadd.f32 %v9793, %v9805
        %v9807 = vpop.f32.mrf.mxu0
        %9808 = vdwg.mxu0
        %9809 = vmatpush.bf16.xpose.msra.mxu0 0
        %9810 = vmatpush.bf16.xpose.msra.mxu0 0
        %9811 = vmatpush.bf16.xpose.msra.mxu0 0
        %9812 = vmatpush.bf16.xpose.msra.mxu0 0
        %9813 = vmatpush.bf16.xpose.msra.mxu0 0
        %9814 = vmatpush.bf16.xpose.msra.mxu0 0
        %9815 = vmatpush.bf16.xpose.msra.mxu0 0
        %9816 = vmatpush.bf16.xpose.msra.mxu0 %v3925
        %9817 = vmatmul.bf16.gmra.mxu0 %v1339
        %v9818 = vpop.f32.mrf.mxu0
        %v9819 = vadd.f32 %v9806, %v9818
        %v9820 = vpop.f32.mrf.mxu0
        %9821 = vdwg.mxu0
        %9822 = vmatpush.bf16.xpose.msra.mxu0 0
        %9823 = vmatpush.bf16.xpose.msra.mxu0 0
        %9824 = vmatpush.bf16.xpose.msra.mxu0 0
        %9825 = vmatpush.bf16.xpose.msra.mxu0 0
        %9826 = vmatpush.bf16.xpose.msra.mxu0 0
        %9827 = vmatpush.bf16.xpose.msra.mxu0 0
        %9828 = vmatpush.bf16.xpose.msra.mxu0 0
        %9829 = vmatpush.bf16.xpose.msra.mxu0 %v3926
        %9830 = vmatmul.bf16.gmra.mxu0 %v1340
        %v9831 = vpop.f32.mrf.mxu0
        %v9832 = vadd.f32 %v9819, %v9831
        %v9833 = vpop.f32.mrf.mxu0
        %9834 = vdwg.mxu0
        %9835 = vmatpush.bf16.xpose.msra.mxu0 0
        %9836 = vmatpush.bf16.xpose.msra.mxu0 0
        %9837 = vmatpush.bf16.xpose.msra.mxu0 0
        %9838 = vmatpush.bf16.xpose.msra.mxu0 0
        %9839 = vmatpush.bf16.xpose.msra.mxu0 0
        %9840 = vmatpush.bf16.xpose.msra.mxu0 0
        %9841 = vmatpush.bf16.xpose.msra.mxu0 0
        %9842 = vmatpush.bf16.xpose.msra.mxu0 %v3927
        %9843 = vmatmul.bf16.gmra.mxu0 %v1341
        %v9844 = vpop.f32.mrf.mxu0
        %v9845 = vadd.f32 %v9832, %v9844
        %v9846 = vpop.f32.mrf.mxu0
        %9847 = vdwg.mxu0
        %9848 = vmatpush.bf16.xpose.msra.mxu0 0
        %9849 = vmatpush.bf16.xpose.msra.mxu0 0
        %9850 = vmatpush.bf16.xpose.msra.mxu0 0
        %9851 = vmatpush.bf16.xpose.msra.mxu0 0
        %9852 = vmatpush.bf16.xpose.msra.mxu0 0
        %9853 = vmatpush.bf16.xpose.msra.mxu0 0
        %9854 = vmatpush.bf16.xpose.msra.mxu0 0
        %9855 = vmatpush.bf16.xpose.msra.mxu0 %v3928
        %9856 = vmatmul.bf16.gmra.mxu0 %v1344
        %v9857 = vpop.f32.mrf.mxu0
        %v9858 = vadd.f32 %v9845, %v9857
        %v9859 = vpop.f32.mrf.mxu0
        %9860 = vdwg.mxu0
        %9861 = vmatpush.bf16.xpose.msra.mxu0 0
        %9862 = vmatpush.bf16.xpose.msra.mxu0 0
        %9863 = vmatpush.bf16.xpose.msra.mxu0 0
        %9864 = vmatpush.bf16.xpose.msra.mxu0 0
        %9865 = vmatpush.bf16.xpose.msra.mxu0 0
        %9866 = vmatpush.bf16.xpose.msra.mxu0 0
        %9867 = vmatpush.bf16.xpose.msra.mxu0 0
        %9868 = vmatpush.bf16.xpose.msra.mxu0 %v3929
        %9869 = vmatmul.bf16.gmra.mxu0 %v1345
        %v9870 = vpop.f32.mrf.mxu0
        %v9871 = vadd.f32 %v9858, %v9870
        %v9872 = vpop.f32.mrf.mxu0
        %9873 = vdwg.mxu0
        %9874 = vmatpush.bf16.xpose.msra.mxu0 0
        %9875 = vmatpush.bf16.xpose.msra.mxu0 0
        %9876 = vmatpush.bf16.xpose.msra.mxu0 0
        %9877 = vmatpush.bf16.xpose.msra.mxu0 0
        %9878 = vmatpush.bf16.xpose.msra.mxu0 0
        %9879 = vmatpush.bf16.xpose.msra.mxu0 0
        %9880 = vmatpush.bf16.xpose.msra.mxu0 0
        %9881 = vmatpush.bf16.xpose.msra.mxu0 %v3930
        %9882 = vmatmul.bf16.gmra.mxu0 %v1346
        %v9883 = vpop.f32.mrf.mxu0
        %v9884 = vadd.f32 %v9871, %v9883
        %v9885 = vpop.f32.mrf.mxu0
        %9886 = vdwg.mxu0
        %9887 = vmatpush.bf16.xpose.msra.mxu0 0
        %9888 = vmatpush.bf16.xpose.msra.mxu0 0
        %9889 = vmatpush.bf16.xpose.msra.mxu0 0
        %9890 = vmatpush.bf16.xpose.msra.mxu0 0
        %9891 = vmatpush.bf16.xpose.msra.mxu0 0
        %9892 = vmatpush.bf16.xpose.msra.mxu0 0
        %9893 = vmatpush.bf16.xpose.msra.mxu0 0
        %9894 = vmatpush.bf16.xpose.msra.mxu0 %v3931
        %9895 = vmatmul.bf16.gmra.mxu0 %v1347
        %v9896 = vpop.f32.mrf.mxu0
        %v9897 = vadd.f32 %v9884, %v9896
        %v9898 = vpop.f32.mrf.mxu0
        %9899 = vdwg.mxu0
        %9900 = vmatpush.bf16.xpose.msra.mxu0 0
        %9901 = vmatpush.bf16.xpose.msra.mxu0 0
        %9902 = vmatpush.bf16.xpose.msra.mxu0 0
        %9903 = vmatpush.bf16.xpose.msra.mxu0 0
        %9904 = vmatpush.bf16.xpose.msra.mxu0 0
        %9905 = vmatpush.bf16.xpose.msra.mxu0 0
        %9906 = vmatpush.bf16.xpose.msra.mxu0 0
        %9907 = vmatpush.bf16.xpose.msra.mxu0 %v3932
        %9908 = vmatmul.bf16.gmra.mxu0 %v1348
        %v9909 = vpop.f32.mrf.mxu0
        %v9910 = vadd.f32 %v9897, %v9909
        %v9911 = vpop.f32.mrf.mxu0
        %9912 = vdwg.mxu0
        %9913 = vmatpush.bf16.xpose.msra.mxu0 0
        %9914 = vmatpush.bf16.xpose.msra.mxu0 0
        %9915 = vmatpush.bf16.xpose.msra.mxu0 0
        %9916 = vmatpush.bf16.xpose.msra.mxu0 0
        %9917 = vmatpush.bf16.xpose.msra.mxu0 0
        %9918 = vmatpush.bf16.xpose.msra.mxu0 0
        %9919 = vmatpush.bf16.xpose.msra.mxu0 0
        %9920 = vmatpush.bf16.xpose.msra.mxu0 %v3933
        %9921 = vmatmul.bf16.gmra.mxu0 %v1349
        %v9922 = vpop.f32.mrf.mxu0
        %v9923 = vadd.f32 %v9910, %v9922
        %v9924 = vpop.f32.mrf.mxu0
        %9925 = vdwg.mxu0
        %9926 = vmatpush.bf16.xpose.msra.mxu0 0
        %9927 = vmatpush.bf16.xpose.msra.mxu0 0
        %9928 = vmatpush.bf16.xpose.msra.mxu0 0
        %9929 = vmatpush.bf16.xpose.msra.mxu0 0
        %9930 = vmatpush.bf16.xpose.msra.mxu0 0
        %9931 = vmatpush.bf16.xpose.msra.mxu0 0
        %9932 = vmatpush.bf16.xpose.msra.mxu0 0
        %9933 = vmatpush.bf16.xpose.msra.mxu0 %v3934
        %9934 = vmatmul.bf16.gmra.mxu0 %v1350
        %v9935 = vpop.f32.mrf.mxu0
        %v9936 = vadd.f32 %v9923, %v9935
        %v9937 = vpop.f32.mrf.mxu0
        %9938 = vdwg.mxu0
        %9939 = vmatpush.bf16.xpose.msra.mxu0 0
        %9940 = vmatpush.bf16.xpose.msra.mxu0 0
        %9941 = vmatpush.bf16.xpose.msra.mxu0 0
        %9942 = vmatpush.bf16.xpose.msra.mxu0 0
        %9943 = vmatpush.bf16.xpose.msra.mxu0 0
        %9944 = vmatpush.bf16.xpose.msra.mxu0 0
        %9945 = vmatpush.bf16.xpose.msra.mxu0 0
        %9946 = vmatpush.bf16.xpose.msra.mxu0 %v3935
        %9947 = vmatmul.bf16.gmra.mxu0 %v1351
        %v9948 = vpop.f32.mrf.mxu0
        %v9949 = vadd.f32 %v9936, %v9948
        %v9950 = vpop.f32.mrf.mxu0
        %9951 = vdwg.mxu0
        %9952 = vmatpush.bf16.xpose.msra.mxu0 0
        %9953 = vmatpush.bf16.xpose.msra.mxu0 0
        %9954 = vmatpush.bf16.xpose.msra.mxu0 0
        %9955 = vmatpush.bf16.xpose.msra.mxu0 0
        %9956 = vmatpush.bf16.xpose.msra.mxu0 0
        %9957 = vmatpush.bf16.xpose.msra.mxu0 0
        %9958 = vmatpush.bf16.xpose.msra.mxu0 0
        %9959 = vmatpush.bf16.xpose.msra.mxu0 %v3936
        %9960 = vmatmul.bf16.gmra.mxu0 %v1354
        %v9961 = vpop.f32.mrf.mxu0
        %v9962 = vadd.f32 %v9949, %v9961
        %v9963 = vpop.f32.mrf.mxu0
        %9964 = vdwg.mxu0
        %9965 = vmatpush.bf16.xpose.msra.mxu0 0
        %9966 = vmatpush.bf16.xpose.msra.mxu0 0
        %9967 = vmatpush.bf16.xpose.msra.mxu0 0
        %9968 = vmatpush.bf16.xpose.msra.mxu0 0
        %9969 = vmatpush.bf16.xpose.msra.mxu0 0
        %9970 = vmatpush.bf16.xpose.msra.mxu0 0
        %9971 = vmatpush.bf16.xpose.msra.mxu0 0
        %9972 = vmatpush.bf16.xpose.msra.mxu0 %v3937
        %9973 = vmatmul.bf16.gmra.mxu0 %v1355
        %v9974 = vpop.f32.mrf.mxu0
        %v9975 = vadd.f32 %v9962, %v9974
        %v9976 = vpop.f32.mrf.mxu0
        %9977 = vdwg.mxu0
        %9978 = vmatpush.bf16.xpose.msra.mxu0 0
        %9979 = vmatpush.bf16.xpose.msra.mxu0 0
        %9980 = vmatpush.bf16.xpose.msra.mxu0 0
        %9981 = vmatpush.bf16.xpose.msra.mxu0 0
        %9982 = vmatpush.bf16.xpose.msra.mxu0 0
        %9983 = vmatpush.bf16.xpose.msra.mxu0 0
        %9984 = vmatpush.bf16.xpose.msra.mxu0 0
        %9985 = vmatpush.bf16.xpose.msra.mxu0 %v3938
        %9986 = vmatmul.bf16.gmra.mxu0 %v1356
        %v9987 = vpop.f32.mrf.mxu0
        %v9988 = vadd.f32 %v9975, %v9987
        %v9989 = vpop.f32.mrf.mxu0
        %9990 = vdwg.mxu0
        %9991 = vmatpush.bf16.xpose.msra.mxu0 0
        %9992 = vmatpush.bf16.xpose.msra.mxu0 0
        %9993 = vmatpush.bf16.xpose.msra.mxu0 0
        %9994 = vmatpush.bf16.xpose.msra.mxu0 0
        %9995 = vmatpush.bf16.xpose.msra.mxu0 0
        %9996 = vmatpush.bf16.xpose.msra.mxu0 0
        %9997 = vmatpush.bf16.xpose.msra.mxu0 0
        %9998 = vmatpush.bf16.xpose.msra.mxu0 %v3939
        %9999 = vmatmul.bf16.gmra.mxu0 %v1357
        %v10000 = vpop.f32.mrf.mxu0
        %v10001 = vadd.f32 %v9988, %v10000
        %v10002 = vpop.f32.mrf.mxu0
        %10003 = vdwg.mxu0
        %10004 = vmatpush.bf16.xpose.msra.mxu0 0
        %10005 = vmatpush.bf16.xpose.msra.mxu0 0
        %10006 = vmatpush.bf16.xpose.msra.mxu0 0
        %10007 = vmatpush.bf16.xpose.msra.mxu0 0
        %10008 = vmatpush.bf16.xpose.msra.mxu0 0
        %10009 = vmatpush.bf16.xpose.msra.mxu0 0
        %10010 = vmatpush.bf16.xpose.msra.mxu0 0
        %10011 = vmatpush.bf16.xpose.msra.mxu0 %v3940
        %10012 = vmatmul.bf16.gmra.mxu0 %v1358
        %v10013 = vpop.f32.mrf.mxu0
        %v10014 = vadd.f32 %v10001, %v10013
        %v10015 = vpop.f32.mrf.mxu0
        %10016 = vdwg.mxu0
        %10017 = vmatpush.bf16.xpose.msra.mxu0 0
        %10018 = vmatpush.bf16.xpose.msra.mxu0 0
        %10019 = vmatpush.bf16.xpose.msra.mxu0 0
        %10020 = vmatpush.bf16.xpose.msra.mxu0 0
        %10021 = vmatpush.bf16.xpose.msra.mxu0 0
        %10022 = vmatpush.bf16.xpose.msra.mxu0 0
        %10023 = vmatpush.bf16.xpose.msra.mxu0 0
        %10024 = vmatpush.bf16.xpose.msra.mxu0 %v3941
        %10025 = vmatmul.bf16.gmra.mxu0 %v1359
        %v10026 = vpop.f32.mrf.mxu0
        %v10027 = vadd.f32 %v10014, %v10026
        %v10028 = vpop.f32.mrf.mxu0
        %10029 = vdwg.mxu0
        %10030 = vmatpush.bf16.xpose.msra.mxu0 0
        %10031 = vmatpush.bf16.xpose.msra.mxu0 0
        %10032 = vmatpush.bf16.xpose.msra.mxu0 0
        %10033 = vmatpush.bf16.xpose.msra.mxu0 0
        %10034 = vmatpush.bf16.xpose.msra.mxu0 0
        %10035 = vmatpush.bf16.xpose.msra.mxu0 0
        %10036 = vmatpush.bf16.xpose.msra.mxu0 0
        %10037 = vmatpush.bf16.xpose.msra.mxu0 %v3942
        %10038 = vmatmul.bf16.gmra.mxu0 %v1360
        %v10039 = vpop.f32.mrf.mxu0
        %v10040 = vadd.f32 %v10027, %v10039
        %v10041 = vpop.f32.mrf.mxu0
        %10042 = vdwg.mxu0
        %10043 = vmatpush.bf16.xpose.msra.mxu0 0
        %10044 = vmatpush.bf16.xpose.msra.mxu0 0
        %10045 = vmatpush.bf16.xpose.msra.mxu0 0
        %10046 = vmatpush.bf16.xpose.msra.mxu0 0
        %10047 = vmatpush.bf16.xpose.msra.mxu0 0
        %10048 = vmatpush.bf16.xpose.msra.mxu0 0
        %10049 = vmatpush.bf16.xpose.msra.mxu0 0
        %10050 = vmatpush.bf16.xpose.msra.mxu0 %v3943
        %10051 = vmatmul.bf16.gmra.mxu0 %v1361
        %v10052 = vpop.f32.mrf.mxu0
        %v10053 = vadd.f32 %v10040, %v10052
        %v10054 = vpop.f32.mrf.mxu0
        %10055 = vdwg.mxu0
        %10056 = vmatpush.bf16.xpose.msra.mxu0 0
        %10057 = vmatpush.bf16.xpose.msra.mxu0 0
        %10058 = vmatpush.bf16.xpose.msra.mxu0 0
        %10059 = vmatpush.bf16.xpose.msra.mxu0 0
        %10060 = vmatpush.bf16.xpose.msra.mxu0 0
        %10061 = vmatpush.bf16.xpose.msra.mxu0 0
        %10062 = vmatpush.bf16.xpose.msra.mxu0 0
        %10063 = vmatpush.bf16.xpose.msra.mxu0 %v3944
        %10064 = vmatmul.bf16.gmra.mxu0 %v1364
        %v10065 = vpop.f32.mrf.mxu0
        %v10066 = vadd.f32 %v10053, %v10065
        %v10067 = vpop.f32.mrf.mxu0
        %10068 = vdwg.mxu0
        %10069 = vmatpush.bf16.xpose.msra.mxu0 0
        %10070 = vmatpush.bf16.xpose.msra.mxu0 0
        %10071 = vmatpush.bf16.xpose.msra.mxu0 0
        %10072 = vmatpush.bf16.xpose.msra.mxu0 0
        %10073 = vmatpush.bf16.xpose.msra.mxu0 0
        %10074 = vmatpush.bf16.xpose.msra.mxu0 0
        %10075 = vmatpush.bf16.xpose.msra.mxu0 0
        %10076 = vmatpush.bf16.xpose.msra.mxu0 %v3945
        %10077 = vmatmul.bf16.gmra.mxu0 %v1365
        %v10078 = vpop.f32.mrf.mxu0
        %v10079 = vadd.f32 %v10066, %v10078
        %v10080 = vpop.f32.mrf.mxu0
        %10081 = vdwg.mxu0
        %10082 = vmatpush.bf16.xpose.msra.mxu0 0
        %10083 = vmatpush.bf16.xpose.msra.mxu0 0
        %10084 = vmatpush.bf16.xpose.msra.mxu0 0
        %10085 = vmatpush.bf16.xpose.msra.mxu0 0
        %10086 = vmatpush.bf16.xpose.msra.mxu0 0
        %10087 = vmatpush.bf16.xpose.msra.mxu0 0
        %10088 = vmatpush.bf16.xpose.msra.mxu0 0
        %10089 = vmatpush.bf16.xpose.msra.mxu0 %v3946
        %10090 = vmatmul.bf16.gmra.mxu0 %v1366
        %v10091 = vpop.f32.mrf.mxu0
        %v10092 = vadd.f32 %v10079, %v10091
        %v10093 = vpop.f32.mrf.mxu0
        %10094 = vdwg.mxu0
        %10095 = vmatpush.bf16.xpose.msra.mxu0 0
        %10096 = vmatpush.bf16.xpose.msra.mxu0 0
        %10097 = vmatpush.bf16.xpose.msra.mxu0 0
        %10098 = vmatpush.bf16.xpose.msra.mxu0 0
        %10099 = vmatpush.bf16.xpose.msra.mxu0 0
        %10100 = vmatpush.bf16.xpose.msra.mxu0 0
        %10101 = vmatpush.bf16.xpose.msra.mxu0 0
        %10102 = vmatpush.bf16.xpose.msra.mxu0 %v3947
        %10103 = vmatmul.bf16.gmra.mxu0 %v1367
        %v10104 = vpop.f32.mrf.mxu0
        %v10105 = vadd.f32 %v10092, %v10104
        %v10106 = vpop.f32.mrf.mxu0
        %10107 = vdwg.mxu0
        %10108 = vmatpush.bf16.xpose.msra.mxu0 0
        %10109 = vmatpush.bf16.xpose.msra.mxu0 0
        %10110 = vmatpush.bf16.xpose.msra.mxu0 0
        %10111 = vmatpush.bf16.xpose.msra.mxu0 0
        %10112 = vmatpush.bf16.xpose.msra.mxu0 0
        %10113 = vmatpush.bf16.xpose.msra.mxu0 0
        %10114 = vmatpush.bf16.xpose.msra.mxu0 0
        %10115 = vmatpush.bf16.xpose.msra.mxu0 %v3948
        %10116 = vmatmul.bf16.gmra.mxu0 %v1368
        %v10117 = vpop.f32.mrf.mxu0
        %v10118 = vadd.f32 %v10105, %v10117
        %v10119 = vpop.f32.mrf.mxu0
        %10120 = vdwg.mxu0
        %10121 = vmatpush.bf16.xpose.msra.mxu0 0
        %10122 = vmatpush.bf16.xpose.msra.mxu0 0
        %10123 = vmatpush.bf16.xpose.msra.mxu0 0
        %10124 = vmatpush.bf16.xpose.msra.mxu0 0
        %10125 = vmatpush.bf16.xpose.msra.mxu0 0
        %10126 = vmatpush.bf16.xpose.msra.mxu0 0
        %10127 = vmatpush.bf16.xpose.msra.mxu0 0
        %10128 = vmatpush.bf16.xpose.msra.mxu0 %v3949
        %10129 = vmatmul.bf16.gmra.mxu0 %v1369
        %v10130 = vpop.f32.mrf.mxu0
        %v10131 = vadd.f32 %v10118, %v10130
        %v10132 = vpop.f32.mrf.mxu0
        %10133 = vdwg.mxu0
        %10134 = vmatpush.bf16.xpose.msra.mxu0 0
        %10135 = vmatpush.bf16.xpose.msra.mxu0 0
        %10136 = vmatpush.bf16.xpose.msra.mxu0 0
        %10137 = vmatpush.bf16.xpose.msra.mxu0 0
        %10138 = vmatpush.bf16.xpose.msra.mxu0 0
        %10139 = vmatpush.bf16.xpose.msra.mxu0 0
        %10140 = vmatpush.bf16.xpose.msra.mxu0 0
        %10141 = vmatpush.bf16.xpose.msra.mxu0 %v3950
        %10142 = vmatmul.bf16.gmra.mxu0 %v1370
        %v10143 = vpop.f32.mrf.mxu0
        %v10144 = vadd.f32 %v10131, %v10143
        %v10145 = vpop.f32.mrf.mxu0
        %10146 = vdwg.mxu0
        %10147 = vmatpush.bf16.xpose.msra.mxu0 0
        %10148 = vmatpush.bf16.xpose.msra.mxu0 0
        %10149 = vmatpush.bf16.xpose.msra.mxu0 0
        %10150 = vmatpush.bf16.xpose.msra.mxu0 0
        %10151 = vmatpush.bf16.xpose.msra.mxu0 0
        %10152 = vmatpush.bf16.xpose.msra.mxu0 0
        %10153 = vmatpush.bf16.xpose.msra.mxu0 0
        %10154 = vmatpush.bf16.xpose.msra.mxu0 %v3951
        %10155 = vmatmul.bf16.gmra.mxu0 %v1371
        %v10156 = vpop.f32.mrf.mxu0
        %v10157 = vadd.f32 %v10144, %v10156
        %v10158 = vpop.f32.mrf.mxu0
        %10159 = vdwg.mxu0
        %10160 = vmatpush.bf16.xpose.msra.mxu0 0
        %10161 = vmatpush.bf16.xpose.msra.mxu0 0
        %10162 = vmatpush.bf16.xpose.msra.mxu0 0
        %10163 = vmatpush.bf16.xpose.msra.mxu0 0
        %10164 = vmatpush.bf16.xpose.msra.mxu0 0
        %10165 = vmatpush.bf16.xpose.msra.mxu0 0
        %10166 = vmatpush.bf16.xpose.msra.mxu0 0
        %10167 = vmatpush.bf16.xpose.msra.mxu0 %v3952
        %10168 = vmatmul.bf16.gmra.mxu0 %v1374
        %v10169 = vpop.f32.mrf.mxu0
        %v10170 = vadd.f32 %v10157, %v10169
        %v10171 = vpop.f32.mrf.mxu0
        %10172 = vdwg.mxu0
        %10173 = vmatpush.bf16.xpose.msra.mxu0 0
        %10174 = vmatpush.bf16.xpose.msra.mxu0 0
        %10175 = vmatpush.bf16.xpose.msra.mxu0 0
        %10176 = vmatpush.bf16.xpose.msra.mxu0 0
        %10177 = vmatpush.bf16.xpose.msra.mxu0 0
        %10178 = vmatpush.bf16.xpose.msra.mxu0 0
        %10179 = vmatpush.bf16.xpose.msra.mxu0 0
        %10180 = vmatpush.bf16.xpose.msra.mxu0 %v3953
        %10181 = vmatmul.bf16.gmra.mxu0 %v1375
        %v10182 = vpop.f32.mrf.mxu0
        %v10183 = vadd.f32 %v10170, %v10182
        %v10184 = vpop.f32.mrf.mxu0
        %10185 = vdwg.mxu0
        %10186 = vmatpush.bf16.xpose.msra.mxu0 0
        %10187 = vmatpush.bf16.xpose.msra.mxu0 0
        %10188 = vmatpush.bf16.xpose.msra.mxu0 0
        %10189 = vmatpush.bf16.xpose.msra.mxu0 0
        %10190 = vmatpush.bf16.xpose.msra.mxu0 0
        %10191 = vmatpush.bf16.xpose.msra.mxu0 0
        %10192 = vmatpush.bf16.xpose.msra.mxu0 0
        %10193 = vmatpush.bf16.xpose.msra.mxu0 %v3954
        %10194 = vmatmul.bf16.gmra.mxu0 %v1376
        %v10195 = vpop.f32.mrf.mxu0
        %v10196 = vadd.f32 %v10183, %v10195
        %v10197 = vpop.f32.mrf.mxu0
        %10198 = vdwg.mxu0
        %10199 = vmatpush.bf16.xpose.msra.mxu0 0
        %10200 = vmatpush.bf16.xpose.msra.mxu0 0
        %10201 = vmatpush.bf16.xpose.msra.mxu0 0
        %10202 = vmatpush.bf16.xpose.msra.mxu0 0
        %10203 = vmatpush.bf16.xpose.msra.mxu0 0
        %10204 = vmatpush.bf16.xpose.msra.mxu0 0
        %10205 = vmatpush.bf16.xpose.msra.mxu0 0
        %10206 = vmatpush.bf16.xpose.msra.mxu0 %v3955
        %10207 = vmatmul.bf16.gmra.mxu0 %v1377
        %v10208 = vpop.f32.mrf.mxu0
        %v10209 = vadd.f32 %v10196, %v10208
        %v10210 = vpop.f32.mrf.mxu0
        %10211 = vdwg.mxu0
        %10212 = vmatpush.bf16.xpose.msra.mxu0 0
        %10213 = vmatpush.bf16.xpose.msra.mxu0 0
        %10214 = vmatpush.bf16.xpose.msra.mxu0 0
        %10215 = vmatpush.bf16.xpose.msra.mxu0 0
        %10216 = vmatpush.bf16.xpose.msra.mxu0 0
        %10217 = vmatpush.bf16.xpose.msra.mxu0 0
        %10218 = vmatpush.bf16.xpose.msra.mxu0 0
        %10219 = vmatpush.bf16.xpose.msra.mxu0 %v3956
        %10220 = vmatmul.bf16.gmra.mxu0 %v1378
        %v10221 = vpop.f32.mrf.mxu0
        %v10222 = vadd.f32 %v10209, %v10221
        %v10223 = vpop.f32.mrf.mxu0
        %10224 = vdwg.mxu0
        %10225 = vmatpush.bf16.xpose.msra.mxu0 0
        %10226 = vmatpush.bf16.xpose.msra.mxu0 0
        %10227 = vmatpush.bf16.xpose.msra.mxu0 0
        %10228 = vmatpush.bf16.xpose.msra.mxu0 0
        %10229 = vmatpush.bf16.xpose.msra.mxu0 0
        %10230 = vmatpush.bf16.xpose.msra.mxu0 0
        %10231 = vmatpush.bf16.xpose.msra.mxu0 0
        %10232 = vmatpush.bf16.xpose.msra.mxu0 %v3957
        %10233 = vmatmul.bf16.gmra.mxu0 %v1379
        %v10234 = vpop.f32.mrf.mxu0
        %v10235 = vadd.f32 %v10222, %v10234
        %v10236 = vpop.f32.mrf.mxu0
        %10237 = vdwg.mxu0
        %10238 = vmatpush.bf16.xpose.msra.mxu0 0
        %10239 = vmatpush.bf16.xpose.msra.mxu0 0
        %10240 = vmatpush.bf16.xpose.msra.mxu0 0
        %10241 = vmatpush.bf16.xpose.msra.mxu0 0
        %10242 = vmatpush.bf16.xpose.msra.mxu0 0
        %10243 = vmatpush.bf16.xpose.msra.mxu0 0
        %10244 = vmatpush.bf16.xpose.msra.mxu0 0
        %10245 = vmatpush.bf16.xpose.msra.mxu0 %v3958
        %10246 = vmatmul.bf16.gmra.mxu0 %v1380
        %v10247 = vpop.f32.mrf.mxu0
        %v10248 = vadd.f32 %v10235, %v10247
        %v10249 = vpop.f32.mrf.mxu0
        %10250 = vdwg.mxu0
        %10251 = vmatpush.bf16.xpose.msra.mxu0 0
        %10252 = vmatpush.bf16.xpose.msra.mxu0 0
        %10253 = vmatpush.bf16.xpose.msra.mxu0 0
        %10254 = vmatpush.bf16.xpose.msra.mxu0 0
        %10255 = vmatpush.bf16.xpose.msra.mxu0 0
        %10256 = vmatpush.bf16.xpose.msra.mxu0 0
        %10257 = vmatpush.bf16.xpose.msra.mxu0 0
        %10258 = vmatpush.bf16.xpose.msra.mxu0 %v3959
        %10259 = vmatmul.bf16.gmra.mxu0 %v1381
        %v10260 = vpop.f32.mrf.mxu0
        %v10261 = vadd.f32 %v10248, %v10260
        %v10262 = vpop.f32.mrf.mxu0
        %10263 = vdwg.mxu0
        %10264 = vmatpush.bf16.xpose.msra.mxu0 0
        %10265 = vmatpush.bf16.xpose.msra.mxu0 0
        %10266 = vmatpush.bf16.xpose.msra.mxu0 0
        %10267 = vmatpush.bf16.xpose.msra.mxu0 0
        %10268 = vmatpush.bf16.xpose.msra.mxu0 0
        %10269 = vmatpush.bf16.xpose.msra.mxu0 0
        %10270 = vmatpush.bf16.xpose.msra.mxu0 0
        %10271 = vmatpush.bf16.xpose.msra.mxu0 %v3960
        %10272 = vmatmul.bf16.gmra.mxu0 %v1384
        %v10273 = vpop.f32.mrf.mxu0
        %v10274 = vadd.f32 %v10261, %v10273
        %v10275 = vpop.f32.mrf.mxu0
        %10276 = vdwg.mxu0
        %10277 = vmatpush.bf16.xpose.msra.mxu0 0
        %10278 = vmatpush.bf16.xpose.msra.mxu0 0
        %10279 = vmatpush.bf16.xpose.msra.mxu0 0
        %10280 = vmatpush.bf16.xpose.msra.mxu0 0
        %10281 = vmatpush.bf16.xpose.msra.mxu0 0
        %10282 = vmatpush.bf16.xpose.msra.mxu0 0
        %10283 = vmatpush.bf16.xpose.msra.mxu0 0
        %10284 = vmatpush.bf16.xpose.msra.mxu0 %v3961
        %10285 = vmatmul.bf16.gmra.mxu0 %v1385
        %v10286 = vpop.f32.mrf.mxu0
        %v10287 = vadd.f32 %v10274, %v10286
        %v10288 = vpop.f32.mrf.mxu0
        %10289 = vdwg.mxu0
        %10290 = vmatpush.bf16.xpose.msra.mxu0 0
        %10291 = vmatpush.bf16.xpose.msra.mxu0 0
        %10292 = vmatpush.bf16.xpose.msra.mxu0 0
        %10293 = vmatpush.bf16.xpose.msra.mxu0 0
        %10294 = vmatpush.bf16.xpose.msra.mxu0 0
        %10295 = vmatpush.bf16.xpose.msra.mxu0 0
        %10296 = vmatpush.bf16.xpose.msra.mxu0 0
        %10297 = vmatpush.bf16.xpose.msra.mxu0 %v3962
        %10298 = vmatmul.bf16.gmra.mxu0 %v1386
        %v10299 = vpop.f32.mrf.mxu0
        %v10300 = vadd.f32 %v10287, %v10299
        %v10301 = vpop.f32.mrf.mxu0
        %10302 = vdwg.mxu0
        %10303 = vmatpush.bf16.xpose.msra.mxu0 0
        %10304 = vmatpush.bf16.xpose.msra.mxu0 0
        %10305 = vmatpush.bf16.xpose.msra.mxu0 0
        %10306 = vmatpush.bf16.xpose.msra.mxu0 0
        %10307 = vmatpush.bf16.xpose.msra.mxu0 0
        %10308 = vmatpush.bf16.xpose.msra.mxu0 0
        %10309 = vmatpush.bf16.xpose.msra.mxu0 0
        %10310 = vmatpush.bf16.xpose.msra.mxu0 %v3963
        %10311 = vmatmul.bf16.gmra.mxu0 %v1387
        %v10312 = vpop.f32.mrf.mxu0
        %v10313 = vadd.f32 %v10300, %v10312
        %v10314 = vpop.f32.mrf.mxu0
        %10315 = vdwg.mxu0
        %10316 = vmatpush.bf16.xpose.msra.mxu0 0
        %10317 = vmatpush.bf16.xpose.msra.mxu0 0
        %10318 = vmatpush.bf16.xpose.msra.mxu0 0
        %10319 = vmatpush.bf16.xpose.msra.mxu0 0
        %10320 = vmatpush.bf16.xpose.msra.mxu0 0
        %10321 = vmatpush.bf16.xpose.msra.mxu0 0
        %10322 = vmatpush.bf16.xpose.msra.mxu0 0
        %10323 = vmatpush.bf16.xpose.msra.mxu0 %v3964
        %10324 = vmatmul.bf16.gmra.mxu0 %v1388
        %v10325 = vpop.f32.mrf.mxu0
        %v10326 = vadd.f32 %v10313, %v10325
        %v10327 = vpop.f32.mrf.mxu0
        %10328 = vdwg.mxu0
        %10329 = vmatpush.bf16.xpose.msra.mxu0 0
        %10330 = vmatpush.bf16.xpose.msra.mxu0 0
        %10331 = vmatpush.bf16.xpose.msra.mxu0 0
        %10332 = vmatpush.bf16.xpose.msra.mxu0 0
        %10333 = vmatpush.bf16.xpose.msra.mxu0 0
        %10334 = vmatpush.bf16.xpose.msra.mxu0 0
        %10335 = vmatpush.bf16.xpose.msra.mxu0 0
        %10336 = vmatpush.bf16.xpose.msra.mxu0 %v3965
        %10337 = vmatmul.bf16.gmra.mxu0 %v1389
        %v10338 = vpop.f32.mrf.mxu0
        %v10339 = vadd.f32 %v10326, %v10338
        %v10340 = vpop.f32.mrf.mxu0
        %10341 = vdwg.mxu0
        %10342 = vmatpush.bf16.xpose.msra.mxu0 0
        %10343 = vmatpush.bf16.xpose.msra.mxu0 0
        %10344 = vmatpush.bf16.xpose.msra.mxu0 0
        %10345 = vmatpush.bf16.xpose.msra.mxu0 0
        %10346 = vmatpush.bf16.xpose.msra.mxu0 0
        %10347 = vmatpush.bf16.xpose.msra.mxu0 0
        %10348 = vmatpush.bf16.xpose.msra.mxu0 0
        %10349 = vmatpush.bf16.xpose.msra.mxu0 %v3966
        %10350 = vmatmul.bf16.gmra.mxu0 %v1390
        %v10351 = vpop.f32.mrf.mxu0
        %v10352 = vadd.f32 %v10339, %v10351
        %v10353 = vpop.f32.mrf.mxu0
        %10354 = vdwg.mxu0
        %10355 = vmatpush.bf16.xpose.msra.mxu0 0
        %10356 = vmatpush.bf16.xpose.msra.mxu0 0
        %10357 = vmatpush.bf16.xpose.msra.mxu0 0
        %10358 = vmatpush.bf16.xpose.msra.mxu0 0
        %10359 = vmatpush.bf16.xpose.msra.mxu0 0
        %10360 = vmatpush.bf16.xpose.msra.mxu0 0
        %10361 = vmatpush.bf16.xpose.msra.mxu0 0
        %10362 = vmatpush.bf16.xpose.msra.mxu0 %v3967
        %10363 = vmatmul.bf16.gmra.mxu0 %v1391
        %v10364 = vpop.f32.mrf.mxu0
        %v10365 = vadd.f32 %v10352, %v10364
        %v10366 = vpop.f32.mrf.mxu0
        %10367 = vdwg.mxu0
        %10368 = vmatpush.bf16.xpose.msra.mxu0 0
        %10369 = vmatpush.bf16.xpose.msra.mxu0 0
        %10370 = vmatpush.bf16.xpose.msra.mxu0 0
        %10371 = vmatpush.bf16.xpose.msra.mxu0 0
        %10372 = vmatpush.bf16.xpose.msra.mxu0 0
        %10373 = vmatpush.bf16.xpose.msra.mxu0 0
        %10374 = vmatpush.bf16.xpose.msra.mxu0 0
        %10375 = vmatpush.bf16.xpose.msra.mxu0 %v3968
        %10376 = vmatmul.bf16.gmra.mxu0 %v1394
        %v10377 = vpop.f32.mrf.mxu0
        %v10378 = vadd.f32 %v10365, %v10377
        %v10379 = vpop.f32.mrf.mxu0
        %10380 = vdwg.mxu0
        %10381 = vmatpush.bf16.xpose.msra.mxu0 0
        %10382 = vmatpush.bf16.xpose.msra.mxu0 0
        %10383 = vmatpush.bf16.xpose.msra.mxu0 0
        %10384 = vmatpush.bf16.xpose.msra.mxu0 0
        %10385 = vmatpush.bf16.xpose.msra.mxu0 0
        %10386 = vmatpush.bf16.xpose.msra.mxu0 0
        %10387 = vmatpush.bf16.xpose.msra.mxu0 0
        %10388 = vmatpush.bf16.xpose.msra.mxu0 %v3969
        %10389 = vmatmul.bf16.gmra.mxu0 %v1395
        %v10390 = vpop.f32.mrf.mxu0
        %v10391 = vadd.f32 %v10378, %v10390
        %v10392 = vpop.f32.mrf.mxu0
        %10393 = vdwg.mxu0
        %10394 = vmatpush.bf16.xpose.msra.mxu0 0
        %10395 = vmatpush.bf16.xpose.msra.mxu0 0
        %10396 = vmatpush.bf16.xpose.msra.mxu0 0
        %10397 = vmatpush.bf16.xpose.msra.mxu0 0
        %10398 = vmatpush.bf16.xpose.msra.mxu0 0
        %10399 = vmatpush.bf16.xpose.msra.mxu0 0
        %10400 = vmatpush.bf16.xpose.msra.mxu0 0
        %10401 = vmatpush.bf16.xpose.msra.mxu0 %v3970
        %10402 = vmatmul.bf16.gmra.mxu0 %v1396
        %v10403 = vpop.f32.mrf.mxu0
        %v10404 = vadd.f32 %v10391, %v10403
        %v10405 = vpop.f32.mrf.mxu0
        %10406 = vdwg.mxu0
        %10407 = vmatpush.bf16.xpose.msra.mxu0 0
        %10408 = vmatpush.bf16.xpose.msra.mxu0 0
        %10409 = vmatpush.bf16.xpose.msra.mxu0 0
        %10410 = vmatpush.bf16.xpose.msra.mxu0 0
        %10411 = vmatpush.bf16.xpose.msra.mxu0 0
        %10412 = vmatpush.bf16.xpose.msra.mxu0 0
        %10413 = vmatpush.bf16.xpose.msra.mxu0 0
        %10414 = vmatpush.bf16.xpose.msra.mxu0 %v3971
        %10415 = vmatmul.bf16.gmra.mxu0 %v1397
        %v10416 = vpop.f32.mrf.mxu0
        %v10417 = vadd.f32 %v10404, %v10416
        %v10418 = vpop.f32.mrf.mxu0
        %10419 = vdwg.mxu0
        %10420 = vmatpush.bf16.xpose.msra.mxu0 0
        %10421 = vmatpush.bf16.xpose.msra.mxu0 0
        %10422 = vmatpush.bf16.xpose.msra.mxu0 0
        %10423 = vmatpush.bf16.xpose.msra.mxu0 0
        %10424 = vmatpush.bf16.xpose.msra.mxu0 0
        %10425 = vmatpush.bf16.xpose.msra.mxu0 0
        %10426 = vmatpush.bf16.xpose.msra.mxu0 0
        %10427 = vmatpush.bf16.xpose.msra.mxu0 %v3972
        %10428 = vmatmul.bf16.gmra.mxu0 %v1398
        %v10429 = vpop.f32.mrf.mxu0
        %v10430 = vadd.f32 %v10417, %v10429
        %v10431 = vpop.f32.mrf.mxu0
        %10432 = vdwg.mxu0
        %10433 = vmatpush.bf16.xpose.msra.mxu0 0
        %10434 = vmatpush.bf16.xpose.msra.mxu0 0
        %10435 = vmatpush.bf16.xpose.msra.mxu0 0
        %10436 = vmatpush.bf16.xpose.msra.mxu0 0
        %10437 = vmatpush.bf16.xpose.msra.mxu0 0
        %10438 = vmatpush.bf16.xpose.msra.mxu0 0
        %10439 = vmatpush.bf16.xpose.msra.mxu0 0
        %10440 = vmatpush.bf16.xpose.msra.mxu0 %v3973
        %10441 = vmatmul.bf16.gmra.mxu0 %v1399
        %v10442 = vpop.f32.mrf.mxu0
        %v10443 = vadd.f32 %v10430, %v10442
        %v10444 = vpop.f32.mrf.mxu0
        %10445 = vdwg.mxu0
        %10446 = vmatpush.bf16.xpose.msra.mxu0 0
        %10447 = vmatpush.bf16.xpose.msra.mxu0 0
        %10448 = vmatpush.bf16.xpose.msra.mxu0 0
        %10449 = vmatpush.bf16.xpose.msra.mxu0 0
        %10450 = vmatpush.bf16.xpose.msra.mxu0 0
        %10451 = vmatpush.bf16.xpose.msra.mxu0 0
        %10452 = vmatpush.bf16.xpose.msra.mxu0 0
        %10453 = vmatpush.bf16.xpose.msra.mxu0 %v3974
        %10454 = vmatmul.bf16.gmra.mxu0 %v1400
        %v10455 = vpop.f32.mrf.mxu0
        %v10456 = vadd.f32 %v10443, %v10455
        %v10457 = vpop.f32.mrf.mxu0
        %10458 = vdwg.mxu0
        %10459 = vmatpush.bf16.xpose.msra.mxu0 0
        %10460 = vmatpush.bf16.xpose.msra.mxu0 0
        %10461 = vmatpush.bf16.xpose.msra.mxu0 0
        %10462 = vmatpush.bf16.xpose.msra.mxu0 0
        %10463 = vmatpush.bf16.xpose.msra.mxu0 0
        %10464 = vmatpush.bf16.xpose.msra.mxu0 0
        %10465 = vmatpush.bf16.xpose.msra.mxu0 0
        %10466 = vmatpush.bf16.xpose.msra.mxu0 %v3975
        %10467 = vmatmul.bf16.gmra.mxu0 %v1401
        %v10468 = vpop.f32.mrf.mxu0
        %v10469 = vadd.f32 %v10456, %v10468
        %v10470 = vpop.f32.mrf.mxu0
        %10471 = vdwg.mxu0
        %10472 = vmatpush.bf16.xpose.msra.mxu0 0
        %10473 = vmatpush.bf16.xpose.msra.mxu0 0
        %10474 = vmatpush.bf16.xpose.msra.mxu0 0
        %10475 = vmatpush.bf16.xpose.msra.mxu0 0
        %10476 = vmatpush.bf16.xpose.msra.mxu0 0
        %10477 = vmatpush.bf16.xpose.msra.mxu0 0
        %10478 = vmatpush.bf16.xpose.msra.mxu0 0
        %10479 = vmatpush.bf16.xpose.msra.mxu0 %v3976
        %10480 = vmatmul.bf16.gmra.mxu0 %v1404
        %v10481 = vpop.f32.mrf.mxu0
        %v10482 = vadd.f32 %v10469, %v10481
        %v10483 = vpop.f32.mrf.mxu0
        %10484 = vdwg.mxu0
        %10485 = vmatpush.bf16.xpose.msra.mxu0 0
        %10486 = vmatpush.bf16.xpose.msra.mxu0 0
        %10487 = vmatpush.bf16.xpose.msra.mxu0 0
        %10488 = vmatpush.bf16.xpose.msra.mxu0 0
        %10489 = vmatpush.bf16.xpose.msra.mxu0 0
        %10490 = vmatpush.bf16.xpose.msra.mxu0 0
        %10491 = vmatpush.bf16.xpose.msra.mxu0 0
        %10492 = vmatpush.bf16.xpose.msra.mxu0 %v3977
        %10493 = vmatmul.bf16.gmra.mxu0 %v1405
        %v10494 = vpop.f32.mrf.mxu0
        %v10495 = vadd.f32 %v10482, %v10494
        %v10496 = vpop.f32.mrf.mxu0
        %10497 = vdwg.mxu0
        %10498 = vmatpush.bf16.xpose.msra.mxu0 0
        %10499 = vmatpush.bf16.xpose.msra.mxu0 0
        %10500 = vmatpush.bf16.xpose.msra.mxu0 0
        %10501 = vmatpush.bf16.xpose.msra.mxu0 0
        %10502 = vmatpush.bf16.xpose.msra.mxu0 0
        %10503 = vmatpush.bf16.xpose.msra.mxu0 0
        %10504 = vmatpush.bf16.xpose.msra.mxu0 0
        %10505 = vmatpush.bf16.xpose.msra.mxu0 %v3978
        %10506 = vmatmul.bf16.gmra.mxu0 %v1406
        %v10507 = vpop.f32.mrf.mxu0
        %v10508 = vadd.f32 %v10495, %v10507
        %v10509 = vpop.f32.mrf.mxu0
        %10510 = vdwg.mxu0
        %10511 = vmatpush.bf16.xpose.msra.mxu0 0
        %10512 = vmatpush.bf16.xpose.msra.mxu0 0
        %10513 = vmatpush.bf16.xpose.msra.mxu0 0
        %10514 = vmatpush.bf16.xpose.msra.mxu0 0
        %10515 = vmatpush.bf16.xpose.msra.mxu0 0
        %10516 = vmatpush.bf16.xpose.msra.mxu0 0
        %10517 = vmatpush.bf16.xpose.msra.mxu0 0
        %10518 = vmatpush.bf16.xpose.msra.mxu0 %v3979
        %10519 = vmatmul.bf16.gmra.mxu0 %v1407
        %v10520 = vpop.f32.mrf.mxu0
        %v10521 = vadd.f32 %v10508, %v10520
        %v10522 = vpop.f32.mrf.mxu0
        %10523 = vdwg.mxu0
        %10524 = vmatpush.bf16.xpose.msra.mxu0 0
        %10525 = vmatpush.bf16.xpose.msra.mxu0 0
        %10526 = vmatpush.bf16.xpose.msra.mxu0 0
        %10527 = vmatpush.bf16.xpose.msra.mxu0 0
        %10528 = vmatpush.bf16.xpose.msra.mxu0 0
        %10529 = vmatpush.bf16.xpose.msra.mxu0 0
        %10530 = vmatpush.bf16.xpose.msra.mxu0 0
        %10531 = vmatpush.bf16.xpose.msra.mxu0 %v3980
        %10532 = vmatmul.bf16.gmra.mxu0 %v1408
        %v10533 = vpop.f32.mrf.mxu0
        %v10534 = vadd.f32 %v10521, %v10533
        %v10535 = vpop.f32.mrf.mxu0
        %10536 = vdwg.mxu0
        %10537 = vmatpush.bf16.xpose.msra.mxu0 0
        %10538 = vmatpush.bf16.xpose.msra.mxu0 0
        %10539 = vmatpush.bf16.xpose.msra.mxu0 0
        %10540 = vmatpush.bf16.xpose.msra.mxu0 0
        %10541 = vmatpush.bf16.xpose.msra.mxu0 0
        %10542 = vmatpush.bf16.xpose.msra.mxu0 0
        %10543 = vmatpush.bf16.xpose.msra.mxu0 0
        %10544 = vmatpush.bf16.xpose.msra.mxu0 %v3981
        %10545 = vmatmul.bf16.gmra.mxu0 %v1409
        %v10546 = vpop.f32.mrf.mxu0
        %v10547 = vadd.f32 %v10534, %v10546
        %v10548 = vpop.f32.mrf.mxu0
        %10549 = vdwg.mxu0
        %10550 = vmatpush.bf16.xpose.msra.mxu0 0
        %10551 = vmatpush.bf16.xpose.msra.mxu0 0
        %10552 = vmatpush.bf16.xpose.msra.mxu0 0
        %10553 = vmatpush.bf16.xpose.msra.mxu0 0
        %10554 = vmatpush.bf16.xpose.msra.mxu0 0
        %10555 = vmatpush.bf16.xpose.msra.mxu0 0
        %10556 = vmatpush.bf16.xpose.msra.mxu0 0
        %10557 = vmatpush.bf16.xpose.msra.mxu0 %v3982
        %10558 = vmatmul.bf16.gmra.mxu0 %v1410
        %v10559 = vpop.f32.mrf.mxu0
        %v10560 = vadd.f32 %v10547, %v10559
        %v10561 = vpop.f32.mrf.mxu0
        %10562 = vdwg.mxu0
        %10563 = vmatpush.bf16.xpose.msra.mxu0 0
        %10564 = vmatpush.bf16.xpose.msra.mxu0 0
        %10565 = vmatpush.bf16.xpose.msra.mxu0 0
        %10566 = vmatpush.bf16.xpose.msra.mxu0 0
        %10567 = vmatpush.bf16.xpose.msra.mxu0 0
        %10568 = vmatpush.bf16.xpose.msra.mxu0 0
        %10569 = vmatpush.bf16.xpose.msra.mxu0 0
        %10570 = vmatpush.bf16.xpose.msra.mxu0 %v3983
        %10571 = vmatmul.bf16.gmra.mxu0 %v1411
        %v10572 = vpop.f32.mrf.mxu0
        %v10573 = vadd.f32 %v10560, %v10572
        %v10574 = vpop.f32.mrf.mxu0
        %10575 = vdwg.mxu0
        %10576 = vmatpush.bf16.xpose.msra.mxu0 0
        %10577 = vmatpush.bf16.xpose.msra.mxu0 0
        %10578 = vmatpush.bf16.xpose.msra.mxu0 0
        %10579 = vmatpush.bf16.xpose.msra.mxu0 0
        %10580 = vmatpush.bf16.xpose.msra.mxu0 0
        %10581 = vmatpush.bf16.xpose.msra.mxu0 0
        %10582 = vmatpush.bf16.xpose.msra.mxu0 0
        %10583 = vmatpush.bf16.xpose.msra.mxu0 %v3984
        %10584 = vmatmul.bf16.gmra.mxu0 %v1414
        %v10585 = vpop.f32.mrf.mxu0
        %v10586 = vadd.f32 %v10573, %v10585
        %v10587 = vpop.f32.mrf.mxu0
        %10588 = vdwg.mxu0
        %10589 = vmatpush.bf16.xpose.msra.mxu0 0
        %10590 = vmatpush.bf16.xpose.msra.mxu0 0
        %10591 = vmatpush.bf16.xpose.msra.mxu0 0
        %10592 = vmatpush.bf16.xpose.msra.mxu0 0
        %10593 = vmatpush.bf16.xpose.msra.mxu0 0
        %10594 = vmatpush.bf16.xpose.msra.mxu0 0
        %10595 = vmatpush.bf16.xpose.msra.mxu0 0
        %10596 = vmatpush.bf16.xpose.msra.mxu0 %v3985
        %10597 = vmatmul.bf16.gmra.mxu0 %v1415
        %v10598 = vpop.f32.mrf.mxu0
        %v10599 = vadd.f32 %v10586, %v10598
        %v10600 = vpop.f32.mrf.mxu0
        %10601 = vdwg.mxu0
        %10602 = vmatpush.bf16.xpose.msra.mxu0 0
        %10603 = vmatpush.bf16.xpose.msra.mxu0 0
        %10604 = vmatpush.bf16.xpose.msra.mxu0 0
        %10605 = vmatpush.bf16.xpose.msra.mxu0 0
        %10606 = vmatpush.bf16.xpose.msra.mxu0 0
        %10607 = vmatpush.bf16.xpose.msra.mxu0 0
        %10608 = vmatpush.bf16.xpose.msra.mxu0 0
        %10609 = vmatpush.bf16.xpose.msra.mxu0 %v3986
        %10610 = vmatmul.bf16.gmra.mxu0 %v1416
        %v10611 = vpop.f32.mrf.mxu0
        %v10612 = vadd.f32 %v10599, %v10611
        %v10613 = vpop.f32.mrf.mxu0
        %10614 = vdwg.mxu0
        %10615 = vmatpush.bf16.xpose.msra.mxu0 0
        %10616 = vmatpush.bf16.xpose.msra.mxu0 0
        %10617 = vmatpush.bf16.xpose.msra.mxu0 0
        %10618 = vmatpush.bf16.xpose.msra.mxu0 0
        %10619 = vmatpush.bf16.xpose.msra.mxu0 0
        %10620 = vmatpush.bf16.xpose.msra.mxu0 0
        %10621 = vmatpush.bf16.xpose.msra.mxu0 0
        %10622 = vmatpush.bf16.xpose.msra.mxu0 %v3987
        %10623 = vmatmul.bf16.gmra.mxu0 %v1417
        %v10624 = vpop.f32.mrf.mxu0
        %v10625 = vadd.f32 %v10612, %v10624
        %v10626 = vpop.f32.mrf.mxu0
        %10627 = vdwg.mxu0
        %10628 = vmatpush.bf16.xpose.msra.mxu0 0
        %10629 = vmatpush.bf16.xpose.msra.mxu0 0
        %10630 = vmatpush.bf16.xpose.msra.mxu0 0
        %10631 = vmatpush.bf16.xpose.msra.mxu0 0
        %10632 = vmatpush.bf16.xpose.msra.mxu0 0
        %10633 = vmatpush.bf16.xpose.msra.mxu0 0
        %10634 = vmatpush.bf16.xpose.msra.mxu0 0
        %10635 = vmatpush.bf16.xpose.msra.mxu0 %v3988
        %10636 = vmatmul.bf16.gmra.mxu0 %v1418
        %v10637 = vpop.f32.mrf.mxu0
        %v10638 = vadd.f32 %v10625, %v10637
        %v10639 = vpop.f32.mrf.mxu0
        %10640 = vdwg.mxu0
        %10641 = vmatpush.bf16.xpose.msra.mxu0 0
        %10642 = vmatpush.bf16.xpose.msra.mxu0 0
        %10643 = vmatpush.bf16.xpose.msra.mxu0 0
        %10644 = vmatpush.bf16.xpose.msra.mxu0 0
        %10645 = vmatpush.bf16.xpose.msra.mxu0 0
        %10646 = vmatpush.bf16.xpose.msra.mxu0 0
        %10647 = vmatpush.bf16.xpose.msra.mxu0 0
        %10648 = vmatpush.bf16.xpose.msra.mxu0 %v3989
        %10649 = vmatmul.bf16.gmra.mxu0 %v1419
        %v10650 = vpop.f32.mrf.mxu0
        %v10651 = vadd.f32 %v10638, %v10650
        %v10652 = vpop.f32.mrf.mxu0
        %10653 = vdwg.mxu0
        %10654 = vmatpush.bf16.xpose.msra.mxu0 0
        %10655 = vmatpush.bf16.xpose.msra.mxu0 0
        %10656 = vmatpush.bf16.xpose.msra.mxu0 0
        %10657 = vmatpush.bf16.xpose.msra.mxu0 0
        %10658 = vmatpush.bf16.xpose.msra.mxu0 0
        %10659 = vmatpush.bf16.xpose.msra.mxu0 0
        %10660 = vmatpush.bf16.xpose.msra.mxu0 0
        %10661 = vmatpush.bf16.xpose.msra.mxu0 %v3990
        %10662 = vmatmul.bf16.gmra.mxu0 %v1420
        %v10663 = vpop.f32.mrf.mxu0
        %v10664 = vadd.f32 %v10651, %v10663
        %v10665 = vpop.f32.mrf.mxu0
        %10666 = vdwg.mxu0
        %10667 = vmatpush.bf16.xpose.msra.mxu0 0
        %10668 = vmatpush.bf16.xpose.msra.mxu0 0
        %10669 = vmatpush.bf16.xpose.msra.mxu0 0
        %10670 = vmatpush.bf16.xpose.msra.mxu0 0
        %10671 = vmatpush.bf16.xpose.msra.mxu0 0
        %10672 = vmatpush.bf16.xpose.msra.mxu0 0
        %10673 = vmatpush.bf16.xpose.msra.mxu0 0
        %10674 = vmatpush.bf16.xpose.msra.mxu0 %v3991
        %10675 = vmatmul.bf16.gmra.mxu0 %v1421
        %v10676 = vpop.f32.mrf.mxu0
        %v10677 = vadd.f32 %v10664, %v10676
        %v10678 = vpop.f32.mrf.mxu0
        %10679 = vdwg.mxu0
        %10680 = vmatpush.bf16.xpose.msra.mxu0 0
        %10681 = vmatpush.bf16.xpose.msra.mxu0 0
        %10682 = vmatpush.bf16.xpose.msra.mxu0 0
        %10683 = vmatpush.bf16.xpose.msra.mxu0 0
        %10684 = vmatpush.bf16.xpose.msra.mxu0 0
        %10685 = vmatpush.bf16.xpose.msra.mxu0 0
        %10686 = vmatpush.bf16.xpose.msra.mxu0 0
        %10687 = vmatpush.bf16.xpose.msra.mxu0 %v3992
        %10688 = vmatmul.bf16.gmra.mxu0 %v1424
        %v10689 = vpop.f32.mrf.mxu0
        %v10690 = vadd.f32 %v10677, %v10689
        %v10691 = vpop.f32.mrf.mxu0
        %10692 = vdwg.mxu0
        %10693 = vmatpush.bf16.xpose.msra.mxu0 0
        %10694 = vmatpush.bf16.xpose.msra.mxu0 0
        %10695 = vmatpush.bf16.xpose.msra.mxu0 0
        %10696 = vmatpush.bf16.xpose.msra.mxu0 0
        %10697 = vmatpush.bf16.xpose.msra.mxu0 0
        %10698 = vmatpush.bf16.xpose.msra.mxu0 0
        %10699 = vmatpush.bf16.xpose.msra.mxu0 0
        %10700 = vmatpush.bf16.xpose.msra.mxu0 %v3993
        %10701 = vmatmul.bf16.gmra.mxu0 %v1425
        %v10702 = vpop.f32.mrf.mxu0
        %v10703 = vadd.f32 %v10690, %v10702
        %v10704 = vpop.f32.mrf.mxu0
        %10705 = vdwg.mxu0
        %10706 = vmatpush.bf16.xpose.msra.mxu0 0
        %10707 = vmatpush.bf16.xpose.msra.mxu0 0
        %10708 = vmatpush.bf16.xpose.msra.mxu0 0
        %10709 = vmatpush.bf16.xpose.msra.mxu0 0
        %10710 = vmatpush.bf16.xpose.msra.mxu0 0
        %10711 = vmatpush.bf16.xpose.msra.mxu0 0
        %10712 = vmatpush.bf16.xpose.msra.mxu0 0
        %10713 = vmatpush.bf16.xpose.msra.mxu0 %v3994
        %10714 = vmatmul.bf16.gmra.mxu0 %v1426
        %v10715 = vpop.f32.mrf.mxu0
        %v10716 = vadd.f32 %v10703, %v10715
        %v10717 = vpop.f32.mrf.mxu0
        %10718 = vdwg.mxu0
        %10719 = vmatpush.bf16.xpose.msra.mxu0 0
        %10720 = vmatpush.bf16.xpose.msra.mxu0 0
        %10721 = vmatpush.bf16.xpose.msra.mxu0 0
        %10722 = vmatpush.bf16.xpose.msra.mxu0 0
        %10723 = vmatpush.bf16.xpose.msra.mxu0 0
        %10724 = vmatpush.bf16.xpose.msra.mxu0 0
        %10725 = vmatpush.bf16.xpose.msra.mxu0 0
        %10726 = vmatpush.bf16.xpose.msra.mxu0 %v3995
        %10727 = vmatmul.bf16.gmra.mxu0 %v1427
        %v10728 = vpop.f32.mrf.mxu0
        %v10729 = vadd.f32 %v10716, %v10728
        %v10730 = vpop.f32.mrf.mxu0
        %10731 = vdwg.mxu0
        %10732 = vmatpush.bf16.xpose.msra.mxu0 0
        %10733 = vmatpush.bf16.xpose.msra.mxu0 0
        %10734 = vmatpush.bf16.xpose.msra.mxu0 0
        %10735 = vmatpush.bf16.xpose.msra.mxu0 0
        %10736 = vmatpush.bf16.xpose.msra.mxu0 0
        %10737 = vmatpush.bf16.xpose.msra.mxu0 0
        %10738 = vmatpush.bf16.xpose.msra.mxu0 0
        %10739 = vmatpush.bf16.xpose.msra.mxu0 %v3996
        %10740 = vmatmul.bf16.gmra.mxu0 %v1428
        %v10741 = vpop.f32.mrf.mxu0
        %v10742 = vadd.f32 %v10729, %v10741
        %v10743 = vpop.f32.mrf.mxu0
        %10744 = vdwg.mxu0
        %10745 = vmatpush.bf16.xpose.msra.mxu0 0
        %10746 = vmatpush.bf16.xpose.msra.mxu0 0
        %10747 = vmatpush.bf16.xpose.msra.mxu0 0
        %10748 = vmatpush.bf16.xpose.msra.mxu0 0
        %10749 = vmatpush.bf16.xpose.msra.mxu0 0
        %10750 = vmatpush.bf16.xpose.msra.mxu0 0
        %10751 = vmatpush.bf16.xpose.msra.mxu0 0
        %10752 = vmatpush.bf16.xpose.msra.mxu0 %v3997
        %10753 = vmatmul.bf16.gmra.mxu0 %v1429
        %v10754 = vpop.f32.mrf.mxu0
        %v10755 = vadd.f32 %v10742, %v10754
        %v10756 = vpop.f32.mrf.mxu0
        %10757 = vdwg.mxu0
        %10758 = vmatpush.bf16.xpose.msra.mxu0 0
        %10759 = vmatpush.bf16.xpose.msra.mxu0 0
        %10760 = vmatpush.bf16.xpose.msra.mxu0 0
        %10761 = vmatpush.bf16.xpose.msra.mxu0 0
        %10762 = vmatpush.bf16.xpose.msra.mxu0 0
        %10763 = vmatpush.bf16.xpose.msra.mxu0 0
        %10764 = vmatpush.bf16.xpose.msra.mxu0 0
        %10765 = vmatpush.bf16.xpose.msra.mxu0 %v3998
        %10766 = vmatmul.bf16.gmra.mxu0 %v1430
        %v10767 = vpop.f32.mrf.mxu0
        %v10768 = vadd.f32 %v10755, %v10767
        %v10769 = vpop.f32.mrf.mxu0
        %10770 = vdwg.mxu0
        %10771 = vmatpush.bf16.xpose.msra.mxu0 0
        %10772 = vmatpush.bf16.xpose.msra.mxu0 0
        %10773 = vmatpush.bf16.xpose.msra.mxu0 0
        %10774 = vmatpush.bf16.xpose.msra.mxu0 0
        %10775 = vmatpush.bf16.xpose.msra.mxu0 0
        %10776 = vmatpush.bf16.xpose.msra.mxu0 0
        %10777 = vmatpush.bf16.xpose.msra.mxu0 0
        %10778 = vmatpush.bf16.xpose.msra.mxu0 %v3999
        %10779 = vmatmul.bf16.gmra.mxu0 %v1431
        %v10780 = vpop.f32.mrf.mxu0
        %v10781 = vadd.f32 %v10768, %v10780
        %v10782 = vpop.f32.mrf.mxu0
        %10783 = vdwg.mxu0
        %10784 = vmatpush.bf16.xpose.msra.mxu0 0
        %10785 = vmatpush.bf16.xpose.msra.mxu0 0
        %10786 = vmatpush.bf16.xpose.msra.mxu0 0
        %10787 = vmatpush.bf16.xpose.msra.mxu0 0
        %10788 = vmatpush.bf16.xpose.msra.mxu0 0
        %10789 = vmatpush.bf16.xpose.msra.mxu0 0
        %10790 = vmatpush.bf16.xpose.msra.mxu0 0
        %10791 = vmatpush.bf16.xpose.msra.mxu0 %v4000
        %10792 = vmatmul.bf16.gmra.mxu0 %v1434
        %v10793 = vpop.f32.mrf.mxu0
        %v10794 = vadd.f32 %v10781, %v10793
        %v10795 = vpop.f32.mrf.mxu0
        %10796 = vdwg.mxu0
        %10797 = vmatpush.bf16.xpose.msra.mxu0 0
        %10798 = vmatpush.bf16.xpose.msra.mxu0 0
        %10799 = vmatpush.bf16.xpose.msra.mxu0 0
        %10800 = vmatpush.bf16.xpose.msra.mxu0 0
        %10801 = vmatpush.bf16.xpose.msra.mxu0 0
        %10802 = vmatpush.bf16.xpose.msra.mxu0 0
        %10803 = vmatpush.bf16.xpose.msra.mxu0 0
        %10804 = vmatpush.bf16.xpose.msra.mxu0 %v4001
        %10805 = vmatmul.bf16.gmra.mxu0 %v1435
        %v10806 = vpop.f32.mrf.mxu0
        %v10807 = vadd.f32 %v10794, %v10806
        %v10808 = vpop.f32.mrf.mxu0
        %10809 = vdwg.mxu0
        %10810 = vmatpush.bf16.xpose.msra.mxu0 0
        %10811 = vmatpush.bf16.xpose.msra.mxu0 0
        %10812 = vmatpush.bf16.xpose.msra.mxu0 0
        %10813 = vmatpush.bf16.xpose.msra.mxu0 0
        %10814 = vmatpush.bf16.xpose.msra.mxu0 0
        %10815 = vmatpush.bf16.xpose.msra.mxu0 0
        %10816 = vmatpush.bf16.xpose.msra.mxu0 0
        %10817 = vmatpush.bf16.xpose.msra.mxu0 %v4002
        %10818 = vmatmul.bf16.gmra.mxu0 %v1436
        %v10819 = vpop.f32.mrf.mxu0
        %v10820 = vadd.f32 %v10807, %v10819
        %v10821 = vpop.f32.mrf.mxu0
        %10822 = vdwg.mxu0
        %10823 = vmatpush.bf16.xpose.msra.mxu0 0
        %10824 = vmatpush.bf16.xpose.msra.mxu0 0
        %10825 = vmatpush.bf16.xpose.msra.mxu0 0
        %10826 = vmatpush.bf16.xpose.msra.mxu0 0
        %10827 = vmatpush.bf16.xpose.msra.mxu0 0
        %10828 = vmatpush.bf16.xpose.msra.mxu0 0
        %10829 = vmatpush.bf16.xpose.msra.mxu0 0
        %10830 = vmatpush.bf16.xpose.msra.mxu0 %v4003
        %10831 = vmatmul.bf16.gmra.mxu0 %v1437
        %v10832 = vpop.f32.mrf.mxu0
        %v10833 = vadd.f32 %v10820, %v10832
        %v10834 = vpop.f32.mrf.mxu0
        %10835 = vdwg.mxu0
        %10836 = vmatpush.bf16.xpose.msra.mxu0 0
        %10837 = vmatpush.bf16.xpose.msra.mxu0 0
        %10838 = vmatpush.bf16.xpose.msra.mxu0 0
        %10839 = vmatpush.bf16.xpose.msra.mxu0 0
        %10840 = vmatpush.bf16.xpose.msra.mxu0 0
        %10841 = vmatpush.bf16.xpose.msra.mxu0 0
        %10842 = vmatpush.bf16.xpose.msra.mxu0 0
        %10843 = vmatpush.bf16.xpose.msra.mxu0 %v4004
        %10844 = vmatmul.bf16.gmra.mxu0 %v1438
        %v10845 = vpop.f32.mrf.mxu0
        %v10846 = vadd.f32 %v10833, %v10845
        %v10847 = vpop.f32.mrf.mxu0
        %10848 = vdwg.mxu0
        %10849 = vmatpush.bf16.xpose.msra.mxu0 0
        %10850 = vmatpush.bf16.xpose.msra.mxu0 0
        %10851 = vmatpush.bf16.xpose.msra.mxu0 0
        %10852 = vmatpush.bf16.xpose.msra.mxu0 0
        %10853 = vmatpush.bf16.xpose.msra.mxu0 0
        %10854 = vmatpush.bf16.xpose.msra.mxu0 0
        %10855 = vmatpush.bf16.xpose.msra.mxu0 0
        %10856 = vmatpush.bf16.xpose.msra.mxu0 %v4005
        %10857 = vmatmul.bf16.gmra.mxu0 %v1439
        %v10858 = vpop.f32.mrf.mxu0
        %v10859 = vadd.f32 %v10846, %v10858
        %v10860 = vpop.f32.mrf.mxu0
        %10861 = vdwg.mxu0
        %10862 = vmatpush.bf16.xpose.msra.mxu0 0
        %10863 = vmatpush.bf16.xpose.msra.mxu0 0
        %10864 = vmatpush.bf16.xpose.msra.mxu0 0
        %10865 = vmatpush.bf16.xpose.msra.mxu0 0
        %10866 = vmatpush.bf16.xpose.msra.mxu0 0
        %10867 = vmatpush.bf16.xpose.msra.mxu0 0
        %10868 = vmatpush.bf16.xpose.msra.mxu0 0
        %10869 = vmatpush.bf16.xpose.msra.mxu0 %v4006
        %10870 = vmatmul.bf16.gmra.mxu0 %v1440
        %v10871 = vpop.f32.mrf.mxu0
        %v10872 = vadd.f32 %v10859, %v10871
        %v10873 = vpop.f32.mrf.mxu0
        %10874 = vdwg.mxu0
        %10875 = vmatpush.bf16.xpose.msra.mxu0 0
        %10876 = vmatpush.bf16.xpose.msra.mxu0 0
        %10877 = vmatpush.bf16.xpose.msra.mxu0 0
        %10878 = vmatpush.bf16.xpose.msra.mxu0 0
        %10879 = vmatpush.bf16.xpose.msra.mxu0 0
        %10880 = vmatpush.bf16.xpose.msra.mxu0 0
        %10881 = vmatpush.bf16.xpose.msra.mxu0 0
        %10882 = vmatpush.bf16.xpose.msra.mxu0 %v4007
        %10883 = vmatmul.bf16.gmra.mxu0 %v1441
        %v10884 = vpop.f32.mrf.mxu0
        %v10885 = vadd.f32 %v10872, %v10884
        %v10886 = vpop.f32.mrf.mxu0
        %10887 = vdwg.mxu0
        %10888 = vmatpush.bf16.xpose.msra.mxu0 0
        %10889 = vmatpush.bf16.xpose.msra.mxu0 0
        %10890 = vmatpush.bf16.xpose.msra.mxu0 0
        %10891 = vmatpush.bf16.xpose.msra.mxu0 0
        %10892 = vmatpush.bf16.xpose.msra.mxu0 0
        %10893 = vmatpush.bf16.xpose.msra.mxu0 0
        %10894 = vmatpush.bf16.xpose.msra.mxu0 0
        %10895 = vmatpush.bf16.xpose.msra.mxu0 %v4008
        %10896 = vmatmul.bf16.gmra.mxu0 %v1444
        %v10897 = vpop.f32.mrf.mxu0
        %v10898 = vadd.f32 %v10885, %v10897
        %v10899 = vpop.f32.mrf.mxu0
        %10900 = vdwg.mxu0
        %10901 = vmatpush.bf16.xpose.msra.mxu0 0
        %10902 = vmatpush.bf16.xpose.msra.mxu0 0
        %10903 = vmatpush.bf16.xpose.msra.mxu0 0
        %10904 = vmatpush.bf16.xpose.msra.mxu0 0
        %10905 = vmatpush.bf16.xpose.msra.mxu0 0
        %10906 = vmatpush.bf16.xpose.msra.mxu0 0
        %10907 = vmatpush.bf16.xpose.msra.mxu0 0
        %10908 = vmatpush.bf16.xpose.msra.mxu0 %v4009
        %10909 = vmatmul.bf16.gmra.mxu0 %v1445
        %v10910 = vpop.f32.mrf.mxu0
        %v10911 = vadd.f32 %v10898, %v10910
        %v10912 = vpop.f32.mrf.mxu0
        %10913 = vdwg.mxu0
        %10914 = vmatpush.bf16.xpose.msra.mxu0 0
        %10915 = vmatpush.bf16.xpose.msra.mxu0 0
        %10916 = vmatpush.bf16.xpose.msra.mxu0 0
        %10917 = vmatpush.bf16.xpose.msra.mxu0 0
        %10918 = vmatpush.bf16.xpose.msra.mxu0 0
        %10919 = vmatpush.bf16.xpose.msra.mxu0 0
        %10920 = vmatpush.bf16.xpose.msra.mxu0 0
        %10921 = vmatpush.bf16.xpose.msra.mxu0 %v4010
        %10922 = vmatmul.bf16.gmra.mxu0 %v1446
        %v10923 = vpop.f32.mrf.mxu0
        %v10924 = vadd.f32 %v10911, %v10923
        %v10925 = vpop.f32.mrf.mxu0
        %10926 = vdwg.mxu0
        %10927 = vmatpush.bf16.xpose.msra.mxu0 0
        %10928 = vmatpush.bf16.xpose.msra.mxu0 0
        %10929 = vmatpush.bf16.xpose.msra.mxu0 0
        %10930 = vmatpush.bf16.xpose.msra.mxu0 0
        %10931 = vmatpush.bf16.xpose.msra.mxu0 0
        %10932 = vmatpush.bf16.xpose.msra.mxu0 0
        %10933 = vmatpush.bf16.xpose.msra.mxu0 0
        %10934 = vmatpush.bf16.xpose.msra.mxu0 %v4011
        %10935 = vmatmul.bf16.gmra.mxu0 %v1447
        %v10936 = vpop.f32.mrf.mxu0
        %v10937 = vadd.f32 %v10924, %v10936
        %v10938 = vpop.f32.mrf.mxu0
        %10939 = vdwg.mxu0
        %10940 = vmatpush.bf16.xpose.msra.mxu0 0
        %10941 = vmatpush.bf16.xpose.msra.mxu0 0
        %10942 = vmatpush.bf16.xpose.msra.mxu0 0
        %10943 = vmatpush.bf16.xpose.msra.mxu0 0
        %10944 = vmatpush.bf16.xpose.msra.mxu0 0
        %10945 = vmatpush.bf16.xpose.msra.mxu0 0
        %10946 = vmatpush.bf16.xpose.msra.mxu0 0
        %10947 = vmatpush.bf16.xpose.msra.mxu0 %v4012
        %10948 = vmatmul.bf16.gmra.mxu0 %v1448
        %v10949 = vpop.f32.mrf.mxu0
        %v10950 = vadd.f32 %v10937, %v10949
        %v10951 = vpop.f32.mrf.mxu0
        %10952 = vdwg.mxu0
        %10953 = vmatpush.bf16.xpose.msra.mxu0 0
        %10954 = vmatpush.bf16.xpose.msra.mxu0 0
        %10955 = vmatpush.bf16.xpose.msra.mxu0 0
        %10956 = vmatpush.bf16.xpose.msra.mxu0 0
        %10957 = vmatpush.bf16.xpose.msra.mxu0 0
        %10958 = vmatpush.bf16.xpose.msra.mxu0 0
        %10959 = vmatpush.bf16.xpose.msra.mxu0 0
        %10960 = vmatpush.bf16.xpose.msra.mxu0 %v4013
        %10961 = vmatmul.bf16.gmra.mxu0 %v1449
        %v10962 = vpop.f32.mrf.mxu0
        %v10963 = vadd.f32 %v10950, %v10962
        %v10964 = vpop.f32.mrf.mxu0
        %10965 = vdwg.mxu0
        %10966 = vmatpush.bf16.xpose.msra.mxu0 0
        %10967 = vmatpush.bf16.xpose.msra.mxu0 0
        %10968 = vmatpush.bf16.xpose.msra.mxu0 0
        %10969 = vmatpush.bf16.xpose.msra.mxu0 0
        %10970 = vmatpush.bf16.xpose.msra.mxu0 0
        %10971 = vmatpush.bf16.xpose.msra.mxu0 0
        %10972 = vmatpush.bf16.xpose.msra.mxu0 0
        %10973 = vmatpush.bf16.xpose.msra.mxu0 %v4014
        %10974 = vmatmul.bf16.gmra.mxu0 %v1450
        %v10975 = vpop.f32.mrf.mxu0
        %v10976 = vadd.f32 %v10963, %v10975
        %v10977 = vpop.f32.mrf.mxu0
        %10978 = vdwg.mxu0
        %10979 = vmatpush.bf16.xpose.msra.mxu0 0
        %10980 = vmatpush.bf16.xpose.msra.mxu0 0
        %10981 = vmatpush.bf16.xpose.msra.mxu0 0
        %10982 = vmatpush.bf16.xpose.msra.mxu0 0
        %10983 = vmatpush.bf16.xpose.msra.mxu0 0
        %10984 = vmatpush.bf16.xpose.msra.mxu0 0
        %10985 = vmatpush.bf16.xpose.msra.mxu0 0
        %10986 = vmatpush.bf16.xpose.msra.mxu0 %v4015
        %10987 = vmatmul.bf16.gmra.mxu0 %v1451
        %v10988 = vpop.f32.mrf.mxu0
        %v10989 = vadd.f32 %v10976, %v10988
        %v10990 = vpop.f32.mrf.mxu0
        %10991 = vdwg.mxu0
        %10992 = vmatpush.bf16.xpose.msra.mxu0 0
        %10993 = vmatpush.bf16.xpose.msra.mxu0 0
        %10994 = vmatpush.bf16.xpose.msra.mxu0 0
        %10995 = vmatpush.bf16.xpose.msra.mxu0 0
        %10996 = vmatpush.bf16.xpose.msra.mxu0 0
        %10997 = vmatpush.bf16.xpose.msra.mxu0 0
        %10998 = vmatpush.bf16.xpose.msra.mxu0 0
        %10999 = vmatpush.bf16.xpose.msra.mxu0 %v4016
        %11000 = vmatmul.bf16.gmra.mxu0 %v1454
        %v11001 = vpop.f32.mrf.mxu0
        %v11002 = vadd.f32 %v10989, %v11001
        %v11003 = vpop.f32.mrf.mxu0
        %11004 = vdwg.mxu0
        %11005 = vmatpush.bf16.xpose.msra.mxu0 0
        %11006 = vmatpush.bf16.xpose.msra.mxu0 0
        %11007 = vmatpush.bf16.xpose.msra.mxu0 0
        %11008 = vmatpush.bf16.xpose.msra.mxu0 0
        %11009 = vmatpush.bf16.xpose.msra.mxu0 0
        %11010 = vmatpush.bf16.xpose.msra.mxu0 0
        %11011 = vmatpush.bf16.xpose.msra.mxu0 0
        %11012 = vmatpush.bf16.xpose.msra.mxu0 %v4017
        %11013 = vmatmul.bf16.gmra.mxu0 %v1455
        %v11014 = vpop.f32.mrf.mxu0
        %v11015 = vadd.f32 %v11002, %v11014
        %v11016 = vpop.f32.mrf.mxu0
        %11017 = vdwg.mxu0
        %11018 = vmatpush.bf16.xpose.msra.mxu0 0
        %11019 = vmatpush.bf16.xpose.msra.mxu0 0
        %11020 = vmatpush.bf16.xpose.msra.mxu0 0
        %11021 = vmatpush.bf16.xpose.msra.mxu0 0
        %11022 = vmatpush.bf16.xpose.msra.mxu0 0
        %11023 = vmatpush.bf16.xpose.msra.mxu0 0
        %11024 = vmatpush.bf16.xpose.msra.mxu0 0
        %11025 = vmatpush.bf16.xpose.msra.mxu0 %v4018
        %11026 = vmatmul.bf16.gmra.mxu0 %v1456
        %v11027 = vpop.f32.mrf.mxu0
        %v11028 = vadd.f32 %v11015, %v11027
        %v11029 = vpop.f32.mrf.mxu0
        %11030 = vdwg.mxu0
        %11031 = vmatpush.bf16.xpose.msra.mxu0 0
        %11032 = vmatpush.bf16.xpose.msra.mxu0 0
        %11033 = vmatpush.bf16.xpose.msra.mxu0 0
        %11034 = vmatpush.bf16.xpose.msra.mxu0 0
        %11035 = vmatpush.bf16.xpose.msra.mxu0 0
        %11036 = vmatpush.bf16.xpose.msra.mxu0 0
        %11037 = vmatpush.bf16.xpose.msra.mxu0 0
        %11038 = vmatpush.bf16.xpose.msra.mxu0 %v4019
        %11039 = vmatmul.bf16.gmra.mxu0 %v1457
        %v11040 = vpop.f32.mrf.mxu0
        %v11041 = vadd.f32 %v11028, %v11040
        %v11042 = vpop.f32.mrf.mxu0
        %11043 = vdwg.mxu0
        %11044 = vmatpush.bf16.xpose.msra.mxu0 0
        %11045 = vmatpush.bf16.xpose.msra.mxu0 0
        %11046 = vmatpush.bf16.xpose.msra.mxu0 0
        %11047 = vmatpush.bf16.xpose.msra.mxu0 0
        %11048 = vmatpush.bf16.xpose.msra.mxu0 0
        %11049 = vmatpush.bf16.xpose.msra.mxu0 0
        %11050 = vmatpush.bf16.xpose.msra.mxu0 0
        %11051 = vmatpush.bf16.xpose.msra.mxu0 %v4020
        %11052 = vmatmul.bf16.gmra.mxu0 %v1458
        %v11053 = vpop.f32.mrf.mxu0
        %v11054 = vadd.f32 %v11041, %v11053
        %v11055 = vpop.f32.mrf.mxu0
        %11056 = vdwg.mxu0
        %11057 = vmatpush.bf16.xpose.msra.mxu0 0
        %11058 = vmatpush.bf16.xpose.msra.mxu0 0
        %11059 = vmatpush.bf16.xpose.msra.mxu0 0
        %11060 = vmatpush.bf16.xpose.msra.mxu0 0
        %11061 = vmatpush.bf16.xpose.msra.mxu0 0
        %11062 = vmatpush.bf16.xpose.msra.mxu0 0
        %11063 = vmatpush.bf16.xpose.msra.mxu0 0
        %11064 = vmatpush.bf16.xpose.msra.mxu0 %v4021
        %11065 = vmatmul.bf16.gmra.mxu0 %v1459
        %v11066 = vpop.f32.mrf.mxu0
        %v11067 = vadd.f32 %v11054, %v11066
        %v11068 = vpop.f32.mrf.mxu0
        %11069 = vdwg.mxu0
        %11070 = vmatpush.bf16.xpose.msra.mxu0 0
        %11071 = vmatpush.bf16.xpose.msra.mxu0 0
        %11072 = vmatpush.bf16.xpose.msra.mxu0 0
        %11073 = vmatpush.bf16.xpose.msra.mxu0 0
        %11074 = vmatpush.bf16.xpose.msra.mxu0 0
        %11075 = vmatpush.bf16.xpose.msra.mxu0 0
        %11076 = vmatpush.bf16.xpose.msra.mxu0 0
        %11077 = vmatpush.bf16.xpose.msra.mxu0 %v4022
        %11078 = vmatmul.bf16.gmra.mxu0 %v1460
        %v11079 = vpop.f32.mrf.mxu0
        %v11080 = vadd.f32 %v11067, %v11079
        %v11081 = vpop.f32.mrf.mxu0
        %11082 = vdwg.mxu0
        %11083 = vmatpush.bf16.xpose.msra.mxu0 0
        %11084 = vmatpush.bf16.xpose.msra.mxu0 0
        %11085 = vmatpush.bf16.xpose.msra.mxu0 0
        %11086 = vmatpush.bf16.xpose.msra.mxu0 0
        %11087 = vmatpush.bf16.xpose.msra.mxu0 0
        %11088 = vmatpush.bf16.xpose.msra.mxu0 0
        %11089 = vmatpush.bf16.xpose.msra.mxu0 0
        %11090 = vmatpush.bf16.xpose.msra.mxu0 %v4023
        %11091 = vmatmul.bf16.gmra.mxu0 %v1461
        %v11092 = vpop.f32.mrf.mxu0
        %v11093 = vadd.f32 %v11080, %v11092
        %v11094 = vpop.f32.mrf.mxu0
        %11095 = vdwg.mxu0
        %11096 = vmatpush.bf16.xpose.msra.mxu0 0
        %11097 = vmatpush.bf16.xpose.msra.mxu0 0
        %11098 = vmatpush.bf16.xpose.msra.mxu0 0
        %11099 = vmatpush.bf16.xpose.msra.mxu0 0
        %11100 = vmatpush.bf16.xpose.msra.mxu0 0
        %11101 = vmatpush.bf16.xpose.msra.mxu0 0
        %11102 = vmatpush.bf16.xpose.msra.mxu0 0
        %11103 = vmatpush.bf16.xpose.msra.mxu0 %v4024
        %11104 = vmatmul.bf16.gmra.mxu0 %v1464
        %v11105 = vpop.f32.mrf.mxu0
        %v11106 = vadd.f32 %v11093, %v11105
        %v11107 = vpop.f32.mrf.mxu0
        %11108 = vdwg.mxu0
        %11109 = vmatpush.bf16.xpose.msra.mxu0 0
        %11110 = vmatpush.bf16.xpose.msra.mxu0 0
        %11111 = vmatpush.bf16.xpose.msra.mxu0 0
        %11112 = vmatpush.bf16.xpose.msra.mxu0 0
        %11113 = vmatpush.bf16.xpose.msra.mxu0 0
        %11114 = vmatpush.bf16.xpose.msra.mxu0 0
        %11115 = vmatpush.bf16.xpose.msra.mxu0 0
        %11116 = vmatpush.bf16.xpose.msra.mxu0 %v4025
        %11117 = vmatmul.bf16.gmra.mxu0 %v1465
        %v11118 = vpop.f32.mrf.mxu0
        %v11119 = vadd.f32 %v11106, %v11118
        %v11120 = vpop.f32.mrf.mxu0
        %11121 = vdwg.mxu0
        %11122 = vmatpush.bf16.xpose.msra.mxu0 0
        %11123 = vmatpush.bf16.xpose.msra.mxu0 0
        %11124 = vmatpush.bf16.xpose.msra.mxu0 0
        %11125 = vmatpush.bf16.xpose.msra.mxu0 0
        %11126 = vmatpush.bf16.xpose.msra.mxu0 0
        %11127 = vmatpush.bf16.xpose.msra.mxu0 0
        %11128 = vmatpush.bf16.xpose.msra.mxu0 0
        %11129 = vmatpush.bf16.xpose.msra.mxu0 %v4026
        %11130 = vmatmul.bf16.gmra.mxu0 %v1466
        %v11131 = vpop.f32.mrf.mxu0
        %v11132 = vadd.f32 %v11119, %v11131
        %v11133 = vpop.f32.mrf.mxu0
        %11134 = vdwg.mxu0
        %11135 = vmatpush.bf16.xpose.msra.mxu0 0
        %11136 = vmatpush.bf16.xpose.msra.mxu0 0
        %11137 = vmatpush.bf16.xpose.msra.mxu0 0
        %11138 = vmatpush.bf16.xpose.msra.mxu0 0
        %11139 = vmatpush.bf16.xpose.msra.mxu0 0
        %11140 = vmatpush.bf16.xpose.msra.mxu0 0
        %11141 = vmatpush.bf16.xpose.msra.mxu0 0
        %11142 = vmatpush.bf16.xpose.msra.mxu0 %v4027
        %11143 = vmatmul.bf16.gmra.mxu0 %v1467
        %v11144 = vpop.f32.mrf.mxu0
        %v11145 = vadd.f32 %v11132, %v11144
        %v11146 = vpop.f32.mrf.mxu0
        %11147 = vdwg.mxu0
        %11148 = vmatpush.bf16.xpose.msra.mxu0 0
        %11149 = vmatpush.bf16.xpose.msra.mxu0 0
        %11150 = vmatpush.bf16.xpose.msra.mxu0 0
        %11151 = vmatpush.bf16.xpose.msra.mxu0 0
        %11152 = vmatpush.bf16.xpose.msra.mxu0 0
        %11153 = vmatpush.bf16.xpose.msra.mxu0 0
        %11154 = vmatpush.bf16.xpose.msra.mxu0 0
        %11155 = vmatpush.bf16.xpose.msra.mxu0 %v4028
        %11156 = vmatmul.bf16.gmra.mxu0 %v1468
        %v11157 = vpop.f32.mrf.mxu0
        %v11158 = vadd.f32 %v11145, %v11157
        %v11159 = vpop.f32.mrf.mxu0
        %11160 = vdwg.mxu0
        %11161 = vmatpush.bf16.xpose.msra.mxu0 0
        %11162 = vmatpush.bf16.xpose.msra.mxu0 0
        %11163 = vmatpush.bf16.xpose.msra.mxu0 0
        %11164 = vmatpush.bf16.xpose.msra.mxu0 0
        %11165 = vmatpush.bf16.xpose.msra.mxu0 0
        %11166 = vmatpush.bf16.xpose.msra.mxu0 0
        %11167 = vmatpush.bf16.xpose.msra.mxu0 0
        %11168 = vmatpush.bf16.xpose.msra.mxu0 %v4029
        %11169 = vmatmul.bf16.gmra.mxu0 %v1469
        %v11170 = vpop.f32.mrf.mxu0
        %v11171 = vadd.f32 %v11158, %v11170
        %v11172 = vpop.f32.mrf.mxu0
        %11173 = vdwg.mxu0
        %11174 = vmatpush.bf16.xpose.msra.mxu0 0
        %11175 = vmatpush.bf16.xpose.msra.mxu0 0
        %11176 = vmatpush.bf16.xpose.msra.mxu0 0
        %11177 = vmatpush.bf16.xpose.msra.mxu0 0
        %11178 = vmatpush.bf16.xpose.msra.mxu0 0
        %11179 = vmatpush.bf16.xpose.msra.mxu0 0
        %11180 = vmatpush.bf16.xpose.msra.mxu0 0
        %11181 = vmatpush.bf16.xpose.msra.mxu0 %v4030
        %11182 = vmatmul.bf16.gmra.mxu0 %v1470
        %v11183 = vpop.f32.mrf.mxu0
        %v11184 = vadd.f32 %v11171, %v11183
        %v11185 = vpop.f32.mrf.mxu0
        %11186 = vdwg.mxu0
        %11187 = vmatpush.bf16.xpose.msra.mxu0 0
        %11188 = vmatpush.bf16.xpose.msra.mxu0 0
        %11189 = vmatpush.bf16.xpose.msra.mxu0 0
        %11190 = vmatpush.bf16.xpose.msra.mxu0 0
        %11191 = vmatpush.bf16.xpose.msra.mxu0 0
        %11192 = vmatpush.bf16.xpose.msra.mxu0 0
        %11193 = vmatpush.bf16.xpose.msra.mxu0 0
        %11194 = vmatpush.bf16.xpose.msra.mxu0 %v4031
        %11195 = vmatmul.bf16.gmra.mxu0 %v1471
        %v11196 = vpop.f32.mrf.mxu0
        %v11197 = vadd.f32 %v11184, %v11196
        %v11198 = vpop.f32.mrf.mxu0
        %11199 = vdwg.mxu0
        %v11200 = vadd.f32 %v255, %v11197
        %vm11201 = vcmask 74752
        %11202 = vst.msk [vmem:[#allocation7] sm:$0x3] %vm11201, %v11200
        %p11203 = scmp.eq.s32.totalorder %s24, 2
        %p11204 = scmp.eq.s32.totalorder %s23, 0
        %p11205 = pnand %p11203, %p11204
        %p11206 = pneg %p11205
        // Predicated region
        $region45: #{linear_pallas.1} parent=31 // pred_check
          _
        $region46: #{linear_pallas.1} parent=31 // pred_check_branch
          %11208 = sbr.rel (%p11205) target = $region48
        $region47: #{linear_pallas.1} parent=31 // pred_region
          %v11209 = vld [vmem:[#allocation7] sm:$0x3]
          %v11210 = vld [vmem:[#allocation5] sm:$0x1]
          %v11212 = vperm.slane %v11210, 0
          %v11214 = vadd.f32 %v11209, %v11212
          %11215 = vst.msk [vmem:[#allocation7] sm:$0x3] %vm11201, %v11214
        $region48: #{linear_pallas.1} parent=31 // pred_fallthru
          _
        // Predicated region
        $region49: #{linear_pallas.1} parent=31 // pred_check
          %p11216 = pneg %p125
        $region50: #{linear_pallas.1} parent=31 // pred_check_branch
          %11218 = sbr.rel (%p11216) target = $region52
        $region51: #{linear_pallas.1} parent=31 // pred_region
          %11220 = vsyncadd [#allocation4], 0
          %s11222 = sshll.u32 [#allocation7], 4
          %s11223 = int_to_ptr.vmem [resolvable:$true] %s11222
          %s11224 = sshll.u32 %s3, 4
          %s11225 = int_to_ptr.hbm [resolvable:$true] %s11224
          %11227 = dma.vmem_to_hbm [thread:$0]  %s11223, 32, %s11225, [#allocation4]
        $region52: #{linear_pallas.1} parent=31 // pred_fallthru
          _
        // Predicated region
        $region53: #{linear_pallas.1} parent=31 // pred_check
          %p11228 = pneg %p125
        $region54: #{linear_pallas.1} parent=31 // pred_check_branch
          %11230 = sbr.rel (%p11228) target = $region56
        $region55: #{linear_pallas.1} parent=31 // pred_region
          %11232 = dma.done [#allocation4], 32
        $region56: #{linear_pallas.1} parent=31 // pred_fallthru
          _
      $region32: #{linear_pallas.1} parent=5 // pred_fallthru
        _
      %p11233 = scmp.le.s32.totalorder 2, %s14
      // Predicated region
      $region57: #{linear_pallas.1} parent=5 // pred_check
        %p11234 = pneg %p11233
      $region58: #{linear_pallas.1} parent=5 // pred_check_branch
        %11236 = sbr.rel (%p11234) target = $region60
      $region59: #{linear_pallas.1} parent=5 // pred_region
        %s11237 = ssub.s32 %s14, 2
      $region60: #{linear_pallas.1} parent=5 // pred_fallthru
        _
    $region6: #{linear_pallas.1} parent=1 // loop_footer
      %s18 = sadd.s32 1, %s14
    $region7: #{linear_pallas.1} parent=1 // loop_footer_branch
      %13 = sbr.rel target = $region3
    $region8: #{linear_pallas.1} parent=1 // loop_exit
      _
    %11238 = vsyncpa [#allocation3], 1
    %s11239 = scalar_lea.sflag [#allocation3], 1
    %11240 = vsyncpa %s11239, 1
    %11241 = vsyncpa [#allocation6], 1
    %11242 = vsyncpa [#allocation4], 1
    %s11243 = scalar_lea.sflag [#allocation4], 1
    %11244 = vsyncpa %s11243, 1

</llo_original>
